<compile_context>
chip_gen: v7x
topology: tpu7x:2x2x1
jax: 0.10.0
libtpu: 0.0.40
codegen_flags: <defaults>
</compile_context>

<pallas_src>
import numpy as np

import jax
import jax.numpy as jnp
from jax import lax
from jax.experimental import pallas as pl
from jax.experimental.pallas import tpu as pltpu


# ----------------------------------------------------------------------------
# Helpers
# ----------------------------------------------------------------------------
def _bytes(*shape_dtypes):
    total = 0
    for shape, dt in shape_dtypes:
        n = 1
        for d in shape:
            n *= int(d)
        total += n * np.dtype(dt).itemsize
    return total


def _compiler_params(block_bytes):
    # ~2x the live blocks (double buffering) + headroom; capped at 64 MiB so
    # the same setting fits v7x's physical VMEM as well as v5e/v6e's 128 MiB.
    vmem = int(min(64 << 20, max(32 << 20, 2 * block_bytes + (4 << 20))))
    return pltpu.CompilerParams(dimension_semantics=("parallel",),
                                vmem_limit_bytes=vmem)


# ----------------------------------------------------------------------------
# K1: conv1 — 3x3 conv with the stride folded in (polyphase input), emitting a
# pre-padded bf16 output plus per-image BN1 partial statistics.
# ----------------------------------------------------------------------------
def _make_conv1_kernel(P, Ho, Wo, Cin, Cout, stride):
    Hp, Wp = Ho + 2, Wo + 2

    def kernel(x_ref, w_ref, b_ref, o_ref, sum_ref, sq_ref):
        x = x_ref[...]                                 # (P, Ha, Wa, Cin) bf16
        acc = jnp.zeros((Ho * Wo, Cout), jnp.float32)
        for kh in range(3):
            for kw in range(3):
                p = (kh % stride) * stride + (kw % stride)     # phase index
                oh, ow = kh // stride, kw // stride            # phase offset
                patch = x[p, oh:oh + Ho, ow:ow + Wo, :].reshape(Ho * Wo, Cin)
                acc = acc + jnp.dot(patch, w_ref[kh * 3 + kw],
                                    preferred_element_type=jnp.float32)
        acc = acc + b_ref[...]                         # (1, Cout) f32 bias
        # BN1 partial statistics (f32) while the tile is still in VMEM.
        sum_ref[0] = jnp.sum(acc, axis=0, keepdims=True)
        sq_ref[0] = jnp.sum(acc * acc, axis=0, keepdims=True)
        # Emit a pre-padded tile so conv2 needs no jnp.pad in between.
        o_ref[0] = jnp.zeros((Hp, Wp, Cout), o_ref.dtype)
        o_ref[0, 1:Ho + 1, 1:Wo + 1, :] = (
            acc.reshape(Ho, Wo, Cout).astype(o_ref.dtype))

    return kernel


def conv1_pallas(x_ph, w_hwio, bias, *, stride):
    """x_ph: (N*stride^2, Ha, Wa, Cin) bf16, phase-major per image."""
    P = stride * stride
    NP, Ha, Wa, Cin = x_ph.shape
    N = NP // P
    ext = 2 // stride
    Ho, Wo = Ha - ext, Wa - ext
    Hp, Wp = Ho + 2, Wo + 2
    Cout = w_hwio.shape[-1]

    w_flat = w_hwio.reshape(9, Cin, Cout).astype(jnp.bfloat16)
    bias2 = bias.reshape(1, Cout).astype(jnp.float32)

    in_specs = [
        pl.BlockSpec((P, Ha, Wa, Cin), lambda n: (n, 0, 0, 0)),
        pl.BlockSpec((9, Cin, Cout), lambda n: (0, 0, 0)),
        pl.BlockSpec((1, Cout), lambda n: (0, 0)),
    ]
    out_specs = [
        pl.BlockSpec((1, Hp, Wp, Cout), lambda n: (n, 0, 0, 0)),
        pl.BlockSpec((1, 1, Cout), lambda n: (n, 0, 0)),
        pl.BlockSpec((1, 1, Cout), lambda n: (n, 0, 0)),
    ]
    out_shape = (jax.ShapeDtypeStruct((N, Hp, Wp, Cout), jnp.bfloat16),
                 jax.ShapeDtypeStruct((N, 1, Cout), jnp.float32),
                 jax.ShapeDtypeStruct((N, 1, Cout), jnp.float32))

    blk = _bytes(((P, Ha, Wa, Cin), jnp.bfloat16),
                 ((9, Cin, Cout), jnp.bfloat16),
                 ((1, Cout), jnp.float32),
                 ((1, Hp, Wp, Cout), jnp.bfloat16),
                 ((2, Cout), jnp.float32))

    return pl.pallas_call(
        _make_conv1_kernel(P, Ho, Wo, Cin, Cout, stride),
        out_shape=out_shape,
        grid_spec=pltpu.PrefetchScalarGridSpec(
            num_scalar_prefetch=0, grid=(N,),
            in_specs=in_specs, out_specs=out_specs),
        compiler_params=_compiler_params(blk),
    )(x_ph, w_flat, bias2)


# ----------------------------------------------------------------------------
# K2: conv2 — 3x3 conv with BN1 + ReLU + halo re-zero fused onto its input,
# emitting bf16 y2 plus per-image BN2 partial statistics.
# ----------------------------------------------------------------------------
def _make_conv2_kernel(Ho, Wo, Cin, Cout):
    def kernel(x_ref, w_ref, b_ref, scale_ref, shift_ref, mask_ref,
               o_ref, sum_ref, sq_ref):
        # Folded BN1 + ReLU on the (pre-padded) input; the 1-pixel halo must
        # be zero AFTER bn+relu (PyTorch conv2 padding semantics), enforced by
        # a resident multiplicative mask instead of per-step iota/where.
        xb = x_ref[0].astype(jnp.float32) * scale_ref[...] + shift_ref[...]
        xq = (jnp.maximum(xb, 0.0) * mask_ref[...]).astype(jnp.bfloat16)
        acc = jnp.zeros((Ho * Wo, Cout), jnp.float32)
        for kh in range(3):
            for kw in range(3):
                patch = xq[kh:kh + Ho, kw:kw + Wo, :].reshape(Ho * Wo, Cin)
                acc = acc + jnp.dot(patch, w_ref[kh * 3 + kw],
                                    preferred_element_type=jnp.float32)
        acc = acc + b_ref[...]
        sum_ref[0] = jnp.sum(acc, axis=0, keepdims=True)
        sq_ref[0] = jnp.sum(acc * acc, axis=0, keepdims=True)
        o_ref[0] = acc.reshape(Ho, Wo, Cout).astype(o_ref.dtype)

    return kernel


def conv2_pallas(y1_padded, w_hwio, bias, scale, shift, mask):
    N, Hp, Wp, Cin = y1_padded.shape
    Ho, Wo = Hp - 2, Wp - 2
    Cout = w_hwio.shape[-1]

    w_flat = w_hwio.reshape(9, Cin, Cout).astype(jnp.bfloat16)
    bias2 = bias.reshape(1, Cout).astype(jnp.float32)
    scale2 = scale.reshape(1, Cin).astype(jnp.float32)
    shift2 = shift.reshape(1, Cin).astype(jnp.float32)

    in_specs = [
        pl.BlockSpec((1, Hp, Wp, Cin), lambda n: (n, 0, 0, 0)),
        pl.BlockSpec((9, Cin, Cout), lambda n: (0, 0, 0)),
        pl.BlockSpec((1, Cout), lambda n: (0, 0)),
        pl.BlockSpec((1, Cin), lambda n: (0, 0)),
        pl.BlockSpec((1, Cin), lambda n: (0, 0)),
        pl.BlockSpec((Hp, Wp, 1), lambda n: (0, 0, 0)),
    ]
    out_specs = [
        pl.BlockSpec((1, Ho, Wo, Cout), lambda n: (n, 0, 0, 0)),
        pl.BlockSpec((1, 1, Cout), lambda n: (n, 0, 0)),
        pl.BlockSpec((1, 1, Cout), lambda n: (n, 0, 0)),
    ]
    out_shape = (jax.ShapeDtypeStruct((N, Ho, Wo, Cout), jnp.bfloat16),
                 jax.ShapeDtypeStruct((N, 1, Cout), jnp.float32),
                 jax.ShapeDtypeStruct((N, 1, Cout), jnp.float32))

    blk = _bytes(((1, Hp, Wp, Cin), jnp.bfloat16),
                 ((9, Cin, Cout), jnp.bfloat16),
                 ((3, Cout), jnp.float32),
                 ((Hp, Wp, 1), jnp.float32),
                 ((1, Ho, Wo, Cout), jnp.bfloat16),
                 ((2, Cout), jnp.float32))

    return pl.pallas_call(
        _make_conv2_kernel(Ho, Wo, Cin, Cout),
        out_shape=out_shape,
        grid_spec=pltpu.PrefetchScalarGridSpec(
            num_scalar_prefetch=0, grid=(N,),
            in_specs=in_specs, out_specs=out_specs),
        compiler_params=_compiler_params(blk),
    )(y1_padded, w_flat, bias2, scale2, shift2, mask)


# ----------------------------------------------------------------------------
# K3: fused tail — BN2 + (optional 1x1-conv) shortcut + add + ReLU.
# ----------------------------------------------------------------------------
def _make_tail_kernel(Ho, Wo, Cin, Cout, use_1x1conv):
    def kernel(*refs):
        if use_1x1conv:
            y_ref, x_ref, w3_ref, b3_ref, scale_ref, shift_ref, o_ref = refs
        else:
            y_ref, x_ref, scale_ref, shift_ref, o_ref = refs

        bn = y_ref[0].astype(jnp.float32) * scale_ref[...] + shift_ref[...]

        if use_1x1conv:
            xs = x_ref[0].reshape(Ho * Wo, Cin)            # bf16
            sc = jnp.dot(xs, w3_ref[...], preferred_element_type=jnp.float32)
            sc = (sc + b3_ref[...]).reshape(Ho, Wo, Cout)
        else:
            sc = x_ref[0].astype(jnp.float32)              # identity shortcut

        o_ref[0] = jnp.maximum(bn + sc, 0.0).astype(o_ref.dtype)

    return kernel


def tail_pallas(y2, shortcut, scale, shift, *, w3=None, b3=None):
    N, Ho, Wo, Cout = y2.shape
    Cin = shortcut.shape[-1]
    use_1x1 = w3 is not None

    in_specs = [
        pl.BlockSpec((1, Ho, Wo, Cout), lambda n: (n, 0, 0, 0)),
        pl.BlockSpec((1, Ho, Wo, Cin), lambda n: (n, 0, 0, 0)),
    ]
    args = [y2, shortcut]
    if use_1x1:
        in_specs += [pl.BlockSpec((Cin, Cout), lambda n: (0, 0)),
                     pl.BlockSpec((1, Cout), lambda n: (0, 0))]
        args += [w3.astype(jnp.bfloat16),
                 b3.reshape(1, Cout).astype(jnp.float32)]
    in_specs += [pl.BlockSpec((1, Cout), lambda n: (0, 0)),
                 pl.BlockSpec((1, Cout), lambda n: (0, 0))]
    args += [scale.reshape(1, Cout).astype(jnp.float32),
             shift.reshape(1, Cout).astype(jnp.float32)]

    blk = _bytes(((1, Ho, Wo, Cout), jnp.bfloat16),
                 ((1, Ho, Wo, Cin), jnp.float32),
                 ((Cin + 3, Cout), jnp.float32),
                 ((1, Ho, Wo, Cout), jnp.float32))

    return pl.pallas_call(
        _make_tail_kernel(Ho, Wo, Cin, Cout, use_1x1),
        out_shape=jax.ShapeDtypeStruct((N, Ho, Wo, Cout), jnp.float32),
        grid_spec=pltpu.PrefetchScalarGridSpec(
            num_scalar_prefetch=0, grid=(N,),
            in_specs=in_specs,
            out_specs=pl.BlockSpec((1, Ho, Wo, Cout), lambda n: (n, 0, 0, 0))),
        compiler_params=_compiler_params(blk),
    )(*args)


# ----------------------------------------------------------------------------
# Module wrapper (NCHW interface, matching the PyTorch module)
# ----------------------------------------------------------------------------
def residual_forward(params, x_nchw, *, strides=1, use_1x1conv=False, eps=1e-5):
    N, Cin, H, W = x_nchw.shape
    x = jnp.transpose(x_nchw, (0, 2, 3, 1)).astype(jnp.float32)      # -> NHWC

    w1 = jnp.transpose(params["conv1_w"], (2, 3, 1, 0))              # OIHW->HWIO
    w2 = jnp.transpose(params["conv2_w"], (2, 3, 1, 0))

    s = int(strides)
    Ho = (H - 1) // s + 1                                            # k=3, pad=1
    Wo = (W - 1) // s + 1
    ext = 2 // s                                                     # max tap offset
    Ha, Wa = Ho + ext, Wo + ext

    # Polyphase-decomposed zero-padded input: tap (kh,kw) of the strided conv
    # reads phase (kh % s, kw % s) at offset (kh // s, kw // s).  For s == 1
    # this degenerates to the padded input with a singleton phase axis.
    # TODO(synk): fold this single remaining input pad into K1 as well.
    xp = jnp.pad(x, ((0, 0), (1, s * Ha - H - 1), (1, s * Wa - W - 1), (0, 0)))
    phases = [xp[:, a::s, b::s, :][:, :Ha, :Wa, :]
              for a in range(s) for b in range(s)]
    x_ph = jnp.stack(phases, axis=1).reshape(N * s * s, Ha, Wa, Cin)
    x_ph = x_ph.astype(jnp.bfloat16)

    # K1: conv1 (stride folded in) -> pre-padded bf16 y1 + BN1 partial stats.
    y1p, s1, q1 = conv1_pallas(x_ph, w1, params["conv1_b"], stride=s)

    cnt = float(N * Ho * Wo)
    mean1 = jnp.sum(s1, axis=(0, 1)) / cnt
    var1 = jnp.maximum(jnp.sum(q1, axis=(0, 1)) / cnt - mean1 * mean1, 0.0)
    scale1 = params["bn1_gamma"] / jnp.sqrt(var1 + eps)               # biased var
    shift1 = params["bn1_beta"] - mean1 * scale1

    # K2: conv2 with BN1 + ReLU + halo re-zero fused onto its input.
    mask = jnp.pad(jnp.ones((Ho, Wo, 1), jnp.float32), ((1, 1), (1, 1), (0, 0)))
    y2, s2, q2 = conv2_pallas(y1p, w2, params["conv2_b"], scale1, shift1, mask)

    mean2 = jnp.sum(s2, axis=(0, 1)) / cnt
    var2 = jnp.maximum(jnp.sum(q2, axis=(0, 1)) / cnt - mean2 * mean2, 0.0)
    scale2 = params["bn2_gamma"] / jnp.sqrt(var2 + eps)
    shift2 = params["bn2_beta"] - mean2 * scale2

    # K3: BN2 + shortcut (+ optional strided 1x1 conv) + add + ReLU.
    if use_1x1conv:
        xs = x[:, ::s, ::s, :][:, :Ho, :Wo, :].astype(jnp.bfloat16)
        w3 = jnp.transpose(params["conv3_w"][:, :, 0, 0], (1, 0))     # (Cin,Cout)
        out = tail_pallas(y2, xs, scale2, shift2, w3=w3, b3=params["conv3_b"])
    else:
        out = tail_pallas(y2, x, scale2, shift2)

    return jnp.transpose(out, (0, 3, 1, 2))                           # -> NCHW


def init_params(rng, input_channels, num_channels, use_1x1conv):
    ks = jax.random.split(rng, 10)
    p = {
        "conv1_w": 0.2 * jax.random.normal(
            ks[0], (num_channels, input_channels, 3, 3), jnp.float32),
        "conv1_b": 0.1 * jax.random.normal(ks[1], (num_channels,), jnp.float32),
        "conv2_w": 0.2 * jax.random.normal(
            ks[2], (num_channels, num_channels, 3, 3), jnp.float32),
        "conv2_b": 0.1 * jax.random.normal(ks[3], (num_channels,), jnp.float32),
        "bn1_gamma": 1.0 + 0.1 * jax.random.normal(ks[4], (num_channels,), jnp.float32),
        "bn1_beta": 0.1 * jax.random.normal(ks[5], (num_channels,), jnp.float32),
        "bn2_gamma": 1.0 + 0.1 * jax.random.normal(ks[6], (num_channels,), jnp.float32),
        "bn2_beta": 0.1 * jax.random.normal(ks[7], (num_channels,), jnp.float32),
    }
    if use_1x1conv:
        p["conv3_w"] = 0.2 * jax.random.normal(
            ks[8], (num_channels, input_channels, 1, 1), jnp.float32)
        p["conv3_b"] = 0.1 * jax.random.normal(ks[9], (num_channels,), jnp.float32)
    return p


# ----------------------------- pure-JAX reference ----------------------------
def _reference(params, x, *, strides, use_1x1conv, eps=1e-5):
    def conv(z, w, b, stride, pad):
        y = lax.conv_general_dilated(
            z, w, window_strides=(stride, stride),
            padding=((pad, pad), (pad, pad)),
            dimension_numbers=("NCHW", "OIHW", "NCHW"),
            precision=lax.Precision.HIGHEST)
        return y + b[None, :, None, None]

    def bn(z, gamma, beta):
        mean = jnp.mean(z, axis=(0, 2, 3), keepdims=True)
        var = jnp.var(z, axis=(0, 2, 3), keepdims=True)     # biased, as torch
        zh = (z - mean) / jnp.sqrt(var + eps)
        return gamma[None, :, None, None] * zh + beta[None, :, None, None]

    y = jax.nn.relu(bn(conv(x, params["conv1_w"], params["conv1_b"], strides, 1),
                       params["bn1_gamma"], params["bn1_beta"]))
    y = bn(conv(y, params["conv2_w"], params["conv2_b"], 1, 1),
           params["bn2_gamma"], params["bn2_beta"])
    sc = (conv(x, params["conv3_w"], params["conv3_b"], strides, 0)
          if use_1x1conv else x)
    return jax.nn.relu(y + sc)


if __name__ == "__main__":
    root = jax.random.PRNGKey(0)
    k_x, k_p1, k_p2 = jax.random.split(root, 3)

    N, C, H, W = 2, 4, 16, 16
    x = jax.random.normal(k_x, (N, C, H, W), jnp.float32)

    fwd = jax.jit(residual_forward, static_argnames=("strides", "use_1x1conv"))

    def check(out, ref, name):
        # bf16 MXU operands -> tolerance loosened (per the perf review).
        err = float(jnp.max(jnp.abs(out - ref)))
        mag = float(jnp.max(jnp.abs(ref)))
        assert err <= 5e-2 + 2e-2 * mag, (name, err, mag)

    # Config A: identity shortcut (input_channels == num_channels, stride 1).
    params_a = init_params(k_p1, C, C, use_1x1conv=False)
    out_a = jax.block_until_ready(fwd(params_a, x, strides=1, use_1x1conv=False))
    ref_a = _reference(params_a, x, strides=1, use_1x1conv=False)
    assert out_a.shape == (N, C, H, W)
    check(out_a, ref_a, "identity")

    # Config B: 1x1-conv shortcut with stride 2 and a channel change.
    C2 = 8
    params_b = init_params(k_p2, C, C2, use_1x1conv=True)
    out_b = jax.block_until_ready(fwd(params_b, x, strides=2, use_1x1conv=True))
    ref_b = _reference(params_b, x, strides=2, use_1x1conv=True)
    assert out_b.shape == (N, C2, H // 2, W // 2)
    check(out_b, ref_b, "projection")

    print("KERNEL_OK")
</pallas_src>

<mosaic_0001>
module attributes {stable_mosaic.version = 11 : i64} {
  func.func @kernel(%arg0: i32, %arg1: memref<1x18x18x4xbf16, #tpu.memory_space<vmem>>, %arg2: memref<9x4x4xbf16, #tpu.memory_space<vmem>>, %arg3: memref<1x4xf32, #tpu.memory_space<vmem>>, %arg4: memref<1x18x18x4xbf16, #tpu.memory_space<vmem>>, %arg5: memref<1x1x4xf32, #tpu.memory_space<vmem>>, %arg6: memref<1x1x4xf32, #tpu.memory_space<vmem>>) attributes {dimension_semantics = [#tpu.dimension_semantics<parallel>], iteration_bounds = array<i64: 2>, scalar_prefetch = 0 : i64, scratch_operands = 0 : i64, tpu.core_type = #tpu.core_type<tc>, window_params = [{transform_indices = @transform_0, window_bounds = array<i64: 1, 18, 18, 4>}, {pipeline_mode = #tpu.pipeline_mode<synchronous>, transform_indices = @transform_1, window_bounds = array<i64: 9, 4, 4>}, {pipeline_mode = #tpu.pipeline_mode<synchronous>, transform_indices = @transform_2, window_bounds = array<i64: 1, 4>}, {transform_indices = @transform_3, window_bounds = array<i64: 1, 18, 18, 4>}, {transform_indices = @transform_4, window_bounds = array<i64: 1, 1, 4>}, {transform_indices = @transform_5, window_bounds = array<i64: 1, 1, 4>}]} {
    %c0 = arith.constant 0 : index
    %c0_0 = arith.constant 0 : index
    %c0_1 = arith.constant 0 : index
    %c0_2 = arith.constant 0 : index
    %0 = vector.load %arg1[%c0, %c0_0, %c0_1, %c0_2] : memref<1x18x18x4xbf16, #tpu.memory_space<vmem>>, vector<1x18x18x4xbf16>
    %cst = arith.constant 0.000000e+00 : f32
    %1 = vector.broadcast %cst : f32 to vector<256x4xf32>
    %2 = vector.extract_strided_slice %0 {offsets = [0, 0, 0, 0], sizes = [1, 16, 16, 4], strides = [1, 1, 1, 1]} : vector<1x18x18x4xbf16> to vector<1x16x16x4xbf16>
    %3 = vector.shape_cast %2 : vector<1x16x16x4xbf16> to vector<16x16x4xbf16>
    %4 = vector.shape_cast %3 : vector<16x16x4xbf16> to vector<256x4xbf16>
    %c0_3 = arith.constant 0 : index
    %c0_4 = arith.constant 0 : index
    %c0_5 = arith.constant 0 : index
    %5 = vector.load %arg2[%c0_3, %c0_4, %c0_5] : memref<9x4x4xbf16, #tpu.memory_space<vmem>>, vector<1x4x4xbf16>
    %6 = vector.shape_cast %5 : vector<1x4x4xbf16> to vector<4x4xbf16>
    %cst_6 = arith.constant dense<0.000000e+00> : vector<256x4xf32>
    %7 = tpu.matmul %4, %6, %cst_6 {dimension_numbers = #tpu.dot_dimension_numbers<[1], [0], [0], [1], [0, 0, 1, 1], [], []>} : vector<256x4xbf16>, vector<4x4xbf16>, vector<256x4xf32> -> vector<256x4xf32>
    %8 = arith.addf %1, %7 : vector<256x4xf32>
    %9 = vector.extract_strided_slice %0 {offsets = [0, 0, 1, 0], sizes = [1, 16, 16, 4], strides = [1, 1, 1, 1]} : vector<1x18x18x4xbf16> to vector<1x16x16x4xbf16>
    %10 = vector.shape_cast %9 : vector<1x16x16x4xbf16> to vector<16x16x4xbf16>
    %11 = vector.shape_cast %10 : vector<16x16x4xbf16> to vector<256x4xbf16>
    %c1 = arith.constant 1 : index
    %c0_7 = arith.constant 0 : index
    %c0_8 = arith.constant 0 : index
    %12 = vector.load %arg2[%c1, %c0_7, %c0_8] : memref<9x4x4xbf16, #tpu.memory_space<vmem>>, vector<1x4x4xbf16>
    %13 = vector.shape_cast %12 : vector<1x4x4xbf16> to vector<4x4xbf16>
    %cst_9 = arith.constant dense<0.000000e+00> : vector<256x4xf32>
    %14 = tpu.matmul %11, %13, %cst_9 {dimension_numbers = #tpu.dot_dimension_numbers<[1], [0], [0], [1], [0, 0, 1, 1], [], []>} : vector<256x4xbf16>, vector<4x4xbf16>, vector<256x4xf32> -> vector<256x4xf32>
    %15 = arith.addf %8, %14 : vector<256x4xf32>
    %16 = vector.extract_strided_slice %0 {offsets = [0, 0, 2, 0], sizes = [1, 16, 16, 4], strides = [1, 1, 1, 1]} : vector<1x18x18x4xbf16> to vector<1x16x16x4xbf16>
    %17 = vector.shape_cast %16 : vector<1x16x16x4xbf16> to vector<16x16x4xbf16>
    %18 = vector.shape_cast %17 : vector<16x16x4xbf16> to vector<256x4xbf16>
    %c2 = arith.constant 2 : index
    %c0_10 = arith.constant 0 : index
    %c0_11 = arith.constant 0 : index
    %19 = vector.load %arg2[%c2, %c0_10, %c0_11] : memref<9x4x4xbf16, #tpu.memory_space<vmem>>, vector<1x4x4xbf16>
    %20 = vector.shape_cast %19 : vector<1x4x4xbf16> to vector<4x4xbf16>
    %cst_12 = arith.constant dense<0.000000e+00> : vector<256x4xf32>
    %21 = tpu.matmul %18, %20, %cst_12 {dimension_numbers = #tpu.dot_dimension_numbers<[1], [0], [0], [1], [0, 0, 1, 1], [], []>} : vector<256x4xbf16>, vector<4x4xbf16>, vector<256x4xf32> -> vector<256x4xf32>
    %22 = arith.addf %15, %21 : vector<256x4xf32>
    %23 = vector.extract_strided_slice %0 {offsets = [0, 1, 0, 0], sizes = [1, 16, 16, 4], strides = [1, 1, 1, 1]} : vector<1x18x18x4xbf16> to vector<1x16x16x4xbf16>
    %24 = vector.shape_cast %23 : vector<1x16x16x4xbf16> to vector<16x16x4xbf16>
    %25 = vector.shape_cast %24 : vector<16x16x4xbf16> to vector<256x4xbf16>
    %c3 = arith.constant 3 : index
    %c0_13 = arith.constant 0 : index
    %c0_14 = arith.constant 0 : index
    %26 = vector.load %arg2[%c3, %c0_13, %c0_14] : memref<9x4x4xbf16, #tpu.memory_space<vmem>>, vector<1x4x4xbf16>
    %27 = vector.shape_cast %26 : vector<1x4x4xbf16> to vector<4x4xbf16>
    %cst_15 = arith.constant dense<0.000000e+00> : vector<256x4xf32>
    %28 = tpu.matmul %25, %27, %cst_15 {dimension_numbers = #tpu.dot_dimension_numbers<[1], [0], [0], [1], [0, 0, 1, 1], [], []>} : vector<256x4xbf16>, vector<4x4xbf16>, vector<256x4xf32> -> vector<256x4xf32>
    %29 = arith.addf %22, %28 : vector<256x4xf32>
    %30 = vector.extract_strided_slice %0 {offsets = [0, 1, 1, 0], sizes = [1, 16, 16, 4], strides = [1, 1, 1, 1]} : vector<1x18x18x4xbf16> to vector<1x16x16x4xbf16>
    %31 = vector.shape_cast %30 : vector<1x16x16x4xbf16> to vector<16x16x4xbf16>
    %32 = vector.shape_cast %31 : vector<16x16x4xbf16> to vector<256x4xbf16>
    %c4 = arith.constant 4 : index
    %c0_16 = arith.constant 0 : index
    %c0_17 = arith.constant 0 : index
    %33 = vector.load %arg2[%c4, %c0_16, %c0_17] : memref<9x4x4xbf16, #tpu.memory_space<vmem>>, vector<1x4x4xbf16>
    %34 = vector.shape_cast %33 : vector<1x4x4xbf16> to vector<4x4xbf16>
    %cst_18 = arith.constant dense<0.000000e+00> : vector<256x4xf32>
    %35 = tpu.matmul %32, %34, %cst_18 {dimension_numbers = #tpu.dot_dimension_numbers<[1], [0], [0], [1], [0, 0, 1, 1], [], []>} : vector<256x4xbf16>, vector<4x4xbf16>, vector<256x4xf32> -> vector<256x4xf32>
    %36 = arith.addf %29, %35 : vector<256x4xf32>
    %37 = vector.extract_strided_slice %0 {offsets = [0, 1, 2, 0], sizes = [1, 16, 16, 4], strides = [1, 1, 1, 1]} : vector<1x18x18x4xbf16> to vector<1x16x16x4xbf16>
    %38 = vector.shape_cast %37 : vector<1x16x16x4xbf16> to vector<16x16x4xbf16>
    %39 = vector.shape_cast %38 : vector<16x16x4xbf16> to vector<256x4xbf16>
    %c5 = arith.constant 5 : index
    %c0_19 = arith.constant 0 : index
    %c0_20 = arith.constant 0 : index
    %40 = vector.load %arg2[%c5, %c0_19, %c0_20] : memref<9x4x4xbf16, #tpu.memory_space<vmem>>, vector<1x4x4xbf16>
    %41 = vector.shape_cast %40 : vector<1x4x4xbf16> to vector<4x4xbf16>
    %cst_21 = arith.constant dense<0.000000e+00> : vector<256x4xf32>
    %42 = tpu.matmul %39, %41, %cst_21 {dimension_numbers = #tpu.dot_dimension_numbers<[1], [0], [0], [1], [0, 0, 1, 1], [], []>} : vector<256x4xbf16>, vector<4x4xbf16>, vector<256x4xf32> -> vector<256x4xf32>
    %43 = arith.addf %36, %42 : vector<256x4xf32>
    %44 = vector.extract_strided_slice %0 {offsets = [0, 2, 0, 0], sizes = [1, 16, 16, 4], strides = [1, 1, 1, 1]} : vector<1x18x18x4xbf16> to vector<1x16x16x4xbf16>
    %45 = vector.shape_cast %44 : vector<1x16x16x4xbf16> to vector<16x16x4xbf16>
    %46 = vector.shape_cast %45 : vector<16x16x4xbf16> to vector<256x4xbf16>
    %c6 = arith.constant 6 : index
    %c0_22 = arith.constant 0 : index
    %c0_23 = arith.constant 0 : index
    %47 = vector.load %arg2[%c6, %c0_22, %c0_23] : memref<9x4x4xbf16, #tpu.memory_space<vmem>>, vector<1x4x4xbf16>
    %48 = vector.shape_cast %47 : vector<1x4x4xbf16> to vector<4x4xbf16>
    %cst_24 = arith.constant dense<0.000000e+00> : vector<256x4xf32>
    %49 = tpu.matmul %46, %48, %cst_24 {dimension_numbers = #tpu.dot_dimension_numbers<[1], [0], [0], [1], [0, 0, 1, 1], [], []>} : vector<256x4xbf16>, vector<4x4xbf16>, vector<256x4xf32> -> vector<256x4xf32>
    %50 = arith.addf %43, %49 : vector<256x4xf32>
    %51 = vector.extract_strided_slice %0 {offsets = [0, 2, 1, 0], sizes = [1, 16, 16, 4], strides = [1, 1, 1, 1]} : vector<1x18x18x4xbf16> to vector<1x16x16x4xbf16>
    %52 = vector.shape_cast %51 : vector<1x16x16x4xbf16> to vector<16x16x4xbf16>
    %53 = vector.shape_cast %52 : vector<16x16x4xbf16> to vector<256x4xbf16>
    %c7 = arith.constant 7 : index
    %c0_25 = arith.constant 0 : index
    %c0_26 = arith.constant 0 : index
    %54 = vector.load %arg2[%c7, %c0_25, %c0_26] : memref<9x4x4xbf16, #tpu.memory_space<vmem>>, vector<1x4x4xbf16>
    %55 = vector.shape_cast %54 : vector<1x4x4xbf16> to vector<4x4xbf16>
    %cst_27 = arith.constant dense<0.000000e+00> : vector<256x4xf32>
    %56 = tpu.matmul %53, %55, %cst_27 {dimension_numbers = #tpu.dot_dimension_numbers<[1], [0], [0], [1], [0, 0, 1, 1], [], []>} : vector<256x4xbf16>, vector<4x4xbf16>, vector<256x4xf32> -> vector<256x4xf32>
    %57 = arith.addf %50, %56 : vector<256x4xf32>
    %58 = vector.extract_strided_slice %0 {offsets = [0, 2, 2, 0], sizes = [1, 16, 16, 4], strides = [1, 1, 1, 1]} : vector<1x18x18x4xbf16> to vector<1x16x16x4xbf16>
    %59 = vector.shape_cast %58 : vector<1x16x16x4xbf16> to vector<16x16x4xbf16>
    %60 = vector.shape_cast %59 : vector<16x16x4xbf16> to vector<256x4xbf16>
    %c8 = arith.constant 8 : index
    %c0_28 = arith.constant 0 : index
    %c0_29 = arith.constant 0 : index
    %61 = vector.load %arg2[%c8, %c0_28, %c0_29] : memref<9x4x4xbf16, #tpu.memory_space<vmem>>, vector<1x4x4xbf16>
    %62 = vector.shape_cast %61 : vector<1x4x4xbf16> to vector<4x4xbf16>
    %cst_30 = arith.constant dense<0.000000e+00> : vector<256x4xf32>
    %63 = tpu.matmul %60, %62, %cst_30 {dimension_numbers = #tpu.dot_dimension_numbers<[1], [0], [0], [1], [0, 0, 1, 1], [], []>} : vector<256x4xbf16>, vector<4x4xbf16>, vector<256x4xf32> -> vector<256x4xf32>
    %64 = arith.addf %57, %63 : vector<256x4xf32>
    %c0_31 = arith.constant 0 : index
    %c0_32 = arith.constant 0 : index
    %65 = vector.load %arg3[%c0_31, %c0_32] : memref<1x4xf32, #tpu.memory_space<vmem>>, vector<1x4xf32>
    %66 = vector.broadcast %65 : vector<1x4xf32> to vector<256x4xf32>
    %67 = arith.addf %64, %66 : vector<256x4xf32>
    %cst_33 = arith.constant dense<0.000000e+00> : vector<4xf32>
    %68 = vector.multi_reduction <add>, %67, %cst_33 [0] : vector<256x4xf32> to vector<4xf32>
    %69 = vector.shape_cast %68 : vector<4xf32> to vector<1x4xf32>
    %c0_34 = arith.constant 0 : index
    %c0_35 = arith.constant 0 : index
    %c0_36 = arith.constant 0 : index
    %70 = vector.load %arg5[%c0_34, %c0_35, %c0_36] : memref<1x1x4xf32, #tpu.memory_space<vmem>>, vector<1x1x4xf32>
    %71 = vector.shape_cast %70 : vector<1x1x4xf32> to vector<1x4xf32>
    %72 = vector.shape_cast %69 : vector<1x4xf32> to vector<1x1x4xf32>
    tpu.vector_store %arg5[%c0_34, %c0_35, %c0_36], %72 {strides = array<i32>} : memref<1x1x4xf32, #tpu.memory_space<vmem>>, vector<1x1x4xf32>,
    %73 = arith.mulf %67, %67 : vector<256x4xf32>
    %cst_37 = arith.constant dense<0.000000e+00> : vector<4xf32>
    %74 = vector.multi_reduction <add>, %73, %cst_37 [0] : vector<256x4xf32> to vector<4xf32>
    %75 = vector.shape_cast %74 : vector<4xf32> to vector<1x4xf32>
    %c0_38 = arith.constant 0 : index
    %c0_39 = arith.constant 0 : index
    %c0_40 = arith.constant 0 : index
    %76 = vector.load %arg6[%c0_38, %c0_39, %c0_40] : memref<1x1x4xf32, #tpu.memory_space<vmem>>, vector<1x1x4xf32>
    %77 = vector.shape_cast %76 : vector<1x1x4xf32> to vector<1x4xf32>
    %78 = vector.shape_cast %75 : vector<1x4xf32> to vector<1x1x4xf32>
    tpu.vector_store %arg6[%c0_38, %c0_39, %c0_40], %78 {strides = array<i32>} : memref<1x1x4xf32, #tpu.memory_space<vmem>>, vector<1x1x4xf32>,
    %cst_41 = arith.constant 0.000000e+00 : bf16
    %79 = vector.broadcast %cst_41 : bf16 to vector<18x18x4xbf16>
    %c0_42 = arith.constant 0 : index
    %c0_43 = arith.constant 0 : index
    %c0_44 = arith.constant 0 : index
    %c0_45 = arith.constant 0 : index
    %80 = vector.load %arg4[%c0_42, %c0_43, %c0_44, %c0_45] : memref<1x18x18x4xbf16, #tpu.memory_space<vmem>>, vector<1x18x18x4xbf16>
    %81 = vector.shape_cast %80 : vector<1x18x18x4xbf16> to vector<18x18x4xbf16>
    %82 = vector.shape_cast %79 : vector<18x18x4xbf16> to vector<1x18x18x4xbf16>
    tpu.vector_store %arg4[%c0_42, %c0_43, %c0_44, %c0_45], %82 {strides = array<i32>} : memref<1x18x18x4xbf16, #tpu.memory_space<vmem>>, vector<1x18x18x4xbf16>,
    %83 = vector.shape_cast %67 : vector<256x4xf32> to vector<16x16x4xf32>
    %84 = arith.truncf %83 : vector<16x16x4xf32> to vector<16x16x4xbf16>
    %c0_46 = arith.constant 0 : index
    %c1_47 = arith.constant 1 : index
    %c1_48 = arith.constant 1 : index
    %c0_49 = arith.constant 0 : index
    %85 = vector.load %arg4[%c0_46, %c1_47, %c1_48, %c0_49] : memref<1x18x18x4xbf16, #tpu.memory_space<vmem>>, vector<1x16x16x4xbf16>
    %86 = vector.shape_cast %85 : vector<1x16x16x4xbf16> to vector<16x16x4xbf16>
    %87 = vector.shape_cast %84 : vector<16x16x4xbf16> to vector<1x16x16x4xbf16>
    tpu.vector_store %arg4[%c0_46, %c1_47, %c1_48, %c0_49], %87 {strides = array<i32>} : memref<1x18x18x4xbf16, #tpu.memory_space<vmem>>, vector<1x16x16x4xbf16>,
    return
  }
  func.func @transform_0(%arg0: i32) -> (i32, i32, i32, i32) {
    %c0_i32 = arith.constant 0 : i32
    %c0_i32_0 = arith.constant 0 : i32
    %c0_i32_1 = arith.constant 0 : i32
    %c0_i32_2 = arith.constant 0 : i32
    return %arg0, %c0_i32, %c0_i32_0, %c0_i32_1 : i32, i32, i32, i32
  }
  func.func @transform_1(%arg0: i32) -> (i32, i32, i32) {
    %c0_i32 = arith.constant 0 : i32
    %c0_i32_0 = arith.constant 0 : i32
    %c0_i32_1 = arith.constant 0 : i32
    %c0_i32_2 = arith.constant 0 : i32
    return %c0_i32, %c0_i32_0, %c0_i32_1 : i32, i32, i32
  }
  func.func @transform_2(%arg0: i32) -> (i32, i32) {
    %c0_i32 = arith.constant 0 : i32
    %c0_i32_0 = arith.constant 0 : i32
    %c0_i32_1 = arith.constant 0 : i32
    return %c0_i32, %c0_i32_0 : i32, i32
  }
  func.func @transform_3(%arg0: i32) -> (i32, i32, i32, i32) {
    %c0_i32 = arith.constant 0 : i32
    %c0_i32_0 = arith.constant 0 : i32
    %c0_i32_1 = arith.constant 0 : i32
    %c0_i32_2 = arith.constant 0 : i32
    return %arg0, %c0_i32, %c0_i32_0, %c0_i32_1 : i32, i32, i32, i32
  }
  func.func @transform_4(%arg0: i32) -> (i32, i32, i32) {
    %c0_i32 = arith.constant 0 : i32
    %c0_i32_0 = arith.constant 0 : i32
    %c0_i32_1 = arith.constant 0 : i32
    return %arg0, %c0_i32, %c0_i32_0 : i32, i32, i32
  }
  func.func @transform_5(%arg0: i32) -> (i32, i32, i32) {
    %c0_i32 = arith.constant 0 : i32
    %c0_i32_0 = arith.constant 0 : i32
    %c0_i32_1 = arith.constant 0 : i32
    return %arg0, %c0_i32, %c0_i32_0 : i32, i32, i32
  }
}

module attributes {stable_mosaic.version = 11 : i64} {
  func.func @kernel(%arg0: i32, %arg1: memref<1x16x16x4xbf16, #tpu.memory_space<vmem>>, %arg2: memref<1x16x16x4xf32, #tpu.memory_space<vmem>>, %arg3: memref<1x4xf32, #tpu.memory_space<vmem>>, %arg4: memref<1x4xf32, #tpu.memory_space<vmem>>, %arg5: memref<1x16x16x4xf32, #tpu.memory_space<vmem>>) attributes {dimension_semantics = [#tpu.dimension_semantics<parallel>], iteration_bounds = array<i64: 2>, scalar_prefetch = 0 : i64, scratch_operands = 0 : i64, tpu.core_type = #tpu.core_type<tc>, window_params = [{transform_indices = @transform_0, window_bounds = array<i64: 1, 16, 16, 4>}, {transform_indices = @transform_1, window_bounds = array<i64: 1, 16, 16, 4>}, {pipeline_mode = #tpu.pipeline_mode<synchronous>, transform_indices = @transform_2, window_bounds = array<i64: 1, 4>}, {pipeline_mode = #tpu.pipeline_mode<synchronous>, transform_indices = @transform_3, window_bounds = array<i64: 1, 4>}, {transform_indices = @transform_4, window_bounds = array<i64: 1, 16, 16, 4>}]} {
    %c0 = arith.constant 0 : index
    %c0_0 = arith.constant 0 : index
    %c0_1 = arith.constant 0 : index
    %c0_2 = arith.constant 0 : index
    %0 = vector.load %arg1[%c0, %c0_0, %c0_1, %c0_2] : memref<1x16x16x4xbf16, #tpu.memory_space<vmem>>, vector<1x16x16x4xbf16>
    %1 = vector.shape_cast %0 : vector<1x16x16x4xbf16> to vector<16x16x4xbf16>
    %2 = arith.extf %1 : vector<16x16x4xbf16> to vector<16x16x4xf32>
    %c0_3 = arith.constant 0 : index
    %c0_4 = arith.constant 0 : index
    %3 = vector.load %arg3[%c0_3, %c0_4] : memref<1x4xf32, #tpu.memory_space<vmem>>, vector<1x4xf32>
    %4 = vector.shape_cast %3 : vector<1x4xf32> to vector<1x1x4xf32>
    %5 = vector.broadcast %4 : vector<1x1x4xf32> to vector<16x16x4xf32>
    %6 = arith.mulf %2, %5 : vector<16x16x4xf32>
    %c0_5 = arith.constant 0 : index
    %c0_6 = arith.constant 0 : index
    %7 = vector.load %arg4[%c0_5, %c0_6] : memref<1x4xf32, #tpu.memory_space<vmem>>, vector<1x4xf32>
    %8 = vector.shape_cast %7 : vector<1x4xf32> to vector<1x1x4xf32>
    %9 = vector.broadcast %8 : vector<1x1x4xf32> to vector<16x16x4xf32>
    %10 = arith.addf %6, %9 : vector<16x16x4xf32>
    %c0_7 = arith.constant 0 : index
    %c0_8 = arith.constant 0 : index
    %c0_9 = arith.constant 0 : index
    %c0_10 = arith.constant 0 : index
    %11 = vector.load %arg2[%c0_7, %c0_8, %c0_9, %c0_10] : memref<1x16x16x4xf32, #tpu.memory_space<vmem>>, vector<1x16x16x4xf32>
    %12 = vector.shape_cast %11 : vector<1x16x16x4xf32> to vector<16x16x4xf32>
    %13 = arith.addf %10, %12 : vector<16x16x4xf32>
    %cst = arith.constant 0.000000e+00 : f32
    %14 = vector.broadcast %cst : f32 to vector<16x16x4xf32>
    %15 = arith.maximumf %13, %14 : vector<16x16x4xf32>
    %c0_11 = arith.constant 0 : index
    %c0_12 = arith.constant 0 : index
    %c0_13 = arith.constant 0 : index
    %c0_14 = arith.constant 0 : index
    %16 = vector.load %arg5[%c0_11, %c0_12, %c0_13, %c0_14] : memref<1x16x16x4xf32, #tpu.memory_space<vmem>>, vector<1x16x16x4xf32>
    %17 = vector.shape_cast %16 : vector<1x16x16x4xf32> to vector<16x16x4xf32>
    %18 = vector.shape_cast %15 : vector<16x16x4xf32> to vector<1x16x16x4xf32>
    tpu.vector_store %arg5[%c0_11, %c0_12, %c0_13, %c0_14], %18 {strides = array<i32>} : memref<1x16x16x4xf32, #tpu.memory_space<vmem>>, vector<1x16x16x4xf32>,
    return
  }
  func.func @transform_0(%arg0: i32) -> (i32, i32, i32, i32) {
    %c0_i32 = arith.constant 0 : i32
    %c0_i32_0 = arith.constant 0 : i32
    %c0_i32_1 = arith.constant 0 : i32
    %c0_i32_2 = arith.constant 0 : i32
    return %arg0, %c0_i32, %c0_i32_0, %c0_i32_1 : i32, i32, i32, i32
  }
  func.func @transform_1(%arg0: i32) -> (i32, i32, i32, i32) {
    %c0_i32 = arith.constant 0 : i32
    %c0_i32_0 = arith.constant 0 : i32
    %c0_i32_1 = arith.constant 0 : i32
    %c0_i32_2 = arith.constant 0 : i32
    return %arg0, %c0_i32, %c0_i32_0, %c0_i32_1 : i32, i32, i32, i32
  }
  func.func @transform_2(%arg0: i32) -> (i32, i32) {
    %c0_i32 = arith.constant 0 : i32
    %c0_i32_0 = arith.constant 0 : i32
    %c0_i32_1 = arith.constant 0 : i32
    return %c0_i32, %c0_i32_0 : i32, i32
  }
  func.func @transform_3(%arg0: i32) -> (i32, i32) {
    %c0_i32 = arith.constant 0 : i32
    %c0_i32_0 = arith.constant 0 : i32
    %c0_i32_1 = arith.constant 0 : i32
    return %c0_i32, %c0_i32_0 : i32, i32
  }
  func.func @transform_4(%arg0: i32) -> (i32, i32, i32, i32) {
    %c0_i32 = arith.constant 0 : i32
    %c0_i32_0 = arith.constant 0 : i32
    %c0_i32_1 = arith.constant 0 : i32
    %c0_i32_2 = arith.constant 0 : i32
    return %arg0, %c0_i32, %c0_i32_0, %c0_i32_1 : i32, i32, i32, i32
  }
}

module attributes {stable_mosaic.version = 11 : i64} {
  func.func @kernel(%arg0: i32, %arg1: memref<1x18x18x4xbf16, #tpu.memory_space<vmem>>, %arg2: memref<9x4x4xbf16, #tpu.memory_space<vmem>>, %arg3: memref<1x4xf32, #tpu.memory_space<vmem>>, %arg4: memref<1x4xf32, #tpu.memory_space<vmem>>, %arg5: memref<1x4xf32, #tpu.memory_space<vmem>>, %arg6: memref<18x18x1xf32, #tpu.memory_space<vmem>>, %arg7: memref<1x16x16x4xbf16, #tpu.memory_space<vmem>>, %arg8: memref<1x1x4xf32, #tpu.memory_space<vmem>>, %arg9: memref<1x1x4xf32, #tpu.memory_space<vmem>>) attributes {dimension_semantics = [#tpu.dimension_semantics<parallel>], iteration_bounds = array<i64: 2>, scalar_prefetch = 0 : i64, scratch_operands = 0 : i64, tpu.core_type = #tpu.core_type<tc>, window_params = [{transform_indices = @transform_0, window_bounds = array<i64: 1, 18, 18, 4>}, {pipeline_mode = #tpu.pipeline_mode<synchronous>, transform_indices = @transform_1, window_bounds = array<i64: 9, 4, 4>}, {pipeline_mode = #tpu.pipeline_mode<synchronous>, transform_indices = @transform_2, window_bounds = array<i64: 1, 4>}, {pipeline_mode = #tpu.pipeline_mode<synchronous>, transform_indices = @transform_3, window_bounds = array<i64: 1, 4>}, {pipeline_mode = #tpu.pipeline_mode<synchronous>, transform_indices = @transform_4, window_bounds = array<i64: 1, 4>}, {pipeline_mode = #tpu.pipeline_mode<synchronous>, transform_indices = @transform_5, window_bounds = array<i64: 18, 18, 1>}, {transform_indices = @transform_6, window_bounds = array<i64: 1, 16, 16, 4>}, {transform_indices = @transform_7, window_bounds = array<i64: 1, 1, 4>}, {transform_indices = @transform_8, window_bounds = array<i64: 1, 1, 4>}]} {
    %c0 = arith.constant 0 : index
    %c0_0 = arith.constant 0 : index
    %c0_1 = arith.constant 0 : index
    %c0_2 = arith.constant 0 : index
    %0 = vector.load %arg1[%c0, %c0_0, %c0_1, %c0_2] : memref<1x18x18x4xbf16, #tpu.memory_space<vmem>>, vector<1x18x18x4xbf16>
    %1 = vector.shape_cast %0 : vector<1x18x18x4xbf16> to vector<18x18x4xbf16>
    %2 = arith.extf %1 : vector<18x18x4xbf16> to vector<18x18x4xf32>
    %c0_3 = arith.constant 0 : index
    %c0_4 = arith.constant 0 : index
    %3 = vector.load %arg4[%c0_3, %c0_4] : memref<1x4xf32, #tpu.memory_space<vmem>>, vector<1x4xf32>
    %4 = vector.shape_cast %3 : vector<1x4xf32> to vector<1x1x4xf32>
    %5 = vector.broadcast %4 : vector<1x1x4xf32> to vector<18x18x4xf32>
    %6 = arith.mulf %2, %5 : vector<18x18x4xf32>
    %c0_5 = arith.constant 0 : index
    %c0_6 = arith.constant 0 : index
    %7 = vector.load %arg5[%c0_5, %c0_6] : memref<1x4xf32, #tpu.memory_space<vmem>>, vector<1x4xf32>
    %8 = vector.shape_cast %7 : vector<1x4xf32> to vector<1x1x4xf32>
    %9 = vector.broadcast %8 : vector<1x1x4xf32> to vector<18x18x4xf32>
    %10 = arith.addf %6, %9 : vector<18x18x4xf32>
    %cst = arith.constant 0.000000e+00 : f32
    %11 = vector.broadcast %cst : f32 to vector<18x18x4xf32>
    %12 = arith.maximumf %10, %11 : vector<18x18x4xf32>
    %c0_7 = arith.constant 0 : index
    %c0_8 = arith.constant 0 : index
    %c0_9 = arith.constant 0 : index
    %13 = vector.load %arg6[%c0_7, %c0_8, %c0_9] : memref<18x18x1xf32, #tpu.memory_space<vmem>>, vector<18x18x1xf32>
    %14 = vector.broadcast %13 : vector<18x18x1xf32> to vector<18x18x4xf32>
    %15 = arith.mulf %12, %14 : vector<18x18x4xf32>
    %16 = arith.truncf %15 : vector<18x18x4xf32> to vector<18x18x4xbf16>
    %cst_10 = arith.constant 0.000000e+00 : f32
    %17 = vector.broadcast %cst_10 : f32 to vector<256x4xf32>
    %18 = vector.extract_strided_slice %16 {offsets = [0, 0, 0], sizes = [16, 16, 4], strides = [1, 1, 1]} : vector<18x18x4xbf16> to vector<16x16x4xbf16>
    %19 = vector.shape_cast %18 : vector<16x16x4xbf16> to vector<256x4xbf16>
    %c0_11 = arith.constant 0 : index
    %c0_12 = arith.constant 0 : index
    %c0_13 = arith.constant 0 : index
    %20 = vector.load %arg2[%c0_11, %c0_12, %c0_13] : memref<9x4x4xbf16, #tpu.memory_space<vmem>>, vector<1x4x4xbf16>
    %21 = vector.shape_cast %20 : vector<1x4x4xbf16> to vector<4x4xbf16>
    %cst_14 = arith.constant dense<0.000000e+00> : vector<256x4xf32>
    %22 = tpu.matmul %19, %21, %cst_14 {dimension_numbers = #tpu.dot_dimension_numbers<[1], [0], [0], [1], [0, 0, 1, 1], [], []>} : vector<256x4xbf16>, vector<4x4xbf16>, vector<256x4xf32> -> vector<256x4xf32>
    %23 = arith.addf %17, %22 : vector<256x4xf32>
    %24 = vector.extract_strided_slice %16 {offsets = [0, 1, 0], sizes = [16, 16, 4], strides = [1, 1, 1]} : vector<18x18x4xbf16> to vector<16x16x4xbf16>
    %25 = vector.shape_cast %24 : vector<16x16x4xbf16> to vector<256x4xbf16>
    %c1 = arith.constant 1 : index
    %c0_15 = arith.constant 0 : index
    %c0_16 = arith.constant 0 : index
    %26 = vector.load %arg2[%c1, %c0_15, %c0_16] : memref<9x4x4xbf16, #tpu.memory_space<vmem>>, vector<1x4x4xbf16>
    %27 = vector.shape_cast %26 : vector<1x4x4xbf16> to vector<4x4xbf16>
    %cst_17 = arith.constant dense<0.000000e+00> : vector<256x4xf32>
    %28 = tpu.matmul %25, %27, %cst_17 {dimension_numbers = #tpu.dot_dimension_numbers<[1], [0], [0], [1], [0, 0, 1, 1], [], []>} : vector<256x4xbf16>, vector<4x4xbf16>, vector<256x4xf32> -> vector<256x4xf32>
    %29 = arith.addf %23, %28 : vector<256x4xf32>
    %30 = vector.extract_strided_slice %16 {offsets = [0, 2, 0], sizes = [16, 16, 4], strides = [1, 1, 1]} : vector<18x18x4xbf16> to vector<16x16x4xbf16>
    %31 = vector.shape_cast %30 : vector<16x16x4xbf16> to vector<256x4xbf16>
    %c2 = arith.constant 2 : index
    %c0_18 = arith.constant 0 : index
    %c0_19 = arith.constant 0 : index
    %32 = vector.load %arg2[%c2, %c0_18, %c0_19] : memref<9x4x4xbf16, #tpu.memory_space<vmem>>, vector<1x4x4xbf16>
    %33 = vector.shape_cast %32 : vector<1x4x4xbf16> to vector<4x4xbf16>
    %cst_20 = arith.constant dense<0.000000e+00> : vector<256x4xf32>
    %34 = tpu.matmul %31, %33, %cst_20 {dimension_numbers = #tpu.dot_dimension_numbers<[1], [0], [0], [1], [0, 0, 1, 1], [], []>} : vector<256x4xbf16>, vector<4x4xbf16>, vector<256x4xf32> -> vector<256x4xf32>
    %35 = arith.addf %29, %34 : vector<256x4xf32>
    %36 = vector.extract_strided_slice %16 {offsets = [1, 0, 0], sizes = [16, 16, 4], strides = [1, 1, 1]} : vector<18x18x4xbf16> to vector<16x16x4xbf16>
    %37 = vector.shape_cast %36 : vector<16x16x4xbf16> to vector<256x4xbf16>
    %c3 = arith.constant 3 : index
    %c0_21 = arith.constant 0 : index
    %c0_22 = arith.constant 0 : index
    %38 = vector.load %arg2[%c3, %c0_21, %c0_22] : memref<9x4x4xbf16, #tpu.memory_space<vmem>>, vector<1x4x4xbf16>
    %39 = vector.shape_cast %38 : vector<1x4x4xbf16> to vector<4x4xbf16>
    %cst_23 = arith.constant dense<0.000000e+00> : vector<256x4xf32>
    %40 = tpu.matmul %37, %39, %cst_23 {dimension_numbers = #tpu.dot_dimension_numbers<[1], [0], [0], [1], [0, 0, 1, 1], [], []>} : vector<256x4xbf16>, vector<4x4xbf16>, vector<256x4xf32> -> vector<256x4xf32>
    %41 = arith.addf %35, %40 : vector<256x4xf32>
    %42 = vector.extract_strided_slice %16 {offsets = [1, 1, 0], sizes = [16, 16, 4], strides = [1, 1, 1]} : vector<18x18x4xbf16> to vector<16x16x4xbf16>
    %43 = vector.shape_cast %42 : vector<16x16x4xbf16> to vector<256x4xbf16>
    %c4 = arith.constant 4 : index
    %c0_24 = arith.constant 0 : index
    %c0_25 = arith.constant 0 : index
    %44 = vector.load %arg2[%c4, %c0_24, %c0_25] : memref<9x4x4xbf16, #tpu.memory_space<vmem>>, vector<1x4x4xbf16>
    %45 = vector.shape_cast %44 : vector<1x4x4xbf16> to vector<4x4xbf16>
    %cst_26 = arith.constant dense<0.000000e+00> : vector<256x4xf32>
    %46 = tpu.matmul %43, %45, %cst_26 {dimension_numbers = #tpu.dot_dimension_numbers<[1], [0], [0], [1], [0, 0, 1, 1], [], []>} : vector<256x4xbf16>, vector<4x4xbf16>, vector<256x4xf32> -> vector<256x4xf32>
    %47 = arith.addf %41, %46 : vector<256x4xf32>
    %48 = vector.extract_strided_slice %16 {offsets = [1, 2, 0], sizes = [16, 16, 4], strides = [1, 1, 1]} : vector<18x18x4xbf16> to vector<16x16x4xbf16>
    %49 = vector.shape_cast %48 : vector<16x16x4xbf16> to vector<256x4xbf16>
    %c5 = arith.constant 5 : index
    %c0_27 = arith.constant 0 : index
    %c0_28 = arith.constant 0 : index
    %50 = vector.load %arg2[%c5, %c0_27, %c0_28] : memref<9x4x4xbf16, #tpu.memory_space<vmem>>, vector<1x4x4xbf16>
    %51 = vector.shape_cast %50 : vector<1x4x4xbf16> to vector<4x4xbf16>
    %cst_29 = arith.constant dense<0.000000e+00> : vector<256x4xf32>
    %52 = tpu.matmul %49, %51, %cst_29 {dimension_numbers = #tpu.dot_dimension_numbers<[1], [0], [0], [1], [0, 0, 1, 1], [], []>} : vector<256x4xbf16>, vector<4x4xbf16>, vector<256x4xf32> -> vector<256x4xf32>
    %53 = arith.addf %47, %52 : vector<256x4xf32>
    %54 = vector.extract_strided_slice %16 {offsets = [2, 0, 0], sizes = [16, 16, 4], strides = [1, 1, 1]} : vector<18x18x4xbf16> to vector<16x16x4xbf16>
    %55 = vector.shape_cast %54 : vector<16x16x4xbf16> to vector<256x4xbf16>
    %c6 = arith.constant 6 : index
    %c0_30 = arith.constant 0 : index
    %c0_31 = arith.constant 0 : index
    %56 = vector.load %arg2[%c6, %c0_30, %c0_31] : memref<9x4x4xbf16, #tpu.memory_space<vmem>>, vector<1x4x4xbf16>
    %57 = vector.shape_cast %56 : vector<1x4x4xbf16> to vector<4x4xbf16>
    %cst_32 = arith.constant dense<0.000000e+00> : vector<256x4xf32>
    %58 = tpu.matmul %55, %57, %cst_32 {dimension_numbers = #tpu.dot_dimension_numbers<[1], [0], [0], [1], [0, 0, 1, 1], [], []>} : vector<256x4xbf16>, vector<4x4xbf16>, vector<256x4xf32> -> vector<256x4xf32>
    %59 = arith.addf %53, %58 : vector<256x4xf32>
    %60 = vector.extract_strided_slice %16 {offsets = [2, 1, 0], sizes = [16, 16, 4], strides = [1, 1, 1]} : vector<18x18x4xbf16> to vector<16x16x4xbf16>
    %61 = vector.shape_cast %60 : vector<16x16x4xbf16> to vector<256x4xbf16>
    %c7 = arith.constant 7 : index
    %c0_33 = arith.constant 0 : index
    %c0_34 = arith.constant 0 : index
    %62 = vector.load %arg2[%c7, %c0_33, %c0_34] : memref<9x4x4xbf16, #tpu.memory_space<vmem>>, vector<1x4x4xbf16>
    %63 = vector.shape_cast %62 : vector<1x4x4xbf16> to vector<4x4xbf16>
    %cst_35 = arith.constant dense<0.000000e+00> : vector<256x4xf32>
    %64 = tpu.matmul %61, %63, %cst_35 {dimension_numbers = #tpu.dot_dimension_numbers<[1], [0], [0], [1], [0, 0, 1, 1], [], []>} : vector<256x4xbf16>, vector<4x4xbf16>, vector<256x4xf32> -> vector<256x4xf32>
    %65 = arith.addf %59, %64 : vector<256x4xf32>
    %66 = vector.extract_strided_slice %16 {offsets = [2, 2, 0], sizes = [16, 16, 4], strides = [1, 1, 1]} : vector<18x18x4xbf16> to vector<16x16x4xbf16>
    %67 = vector.shape_cast %66 : vector<16x16x4xbf16> to vector<256x4xbf16>
    %c8 = arith.constant 8 : index
    %c0_36 = arith.constant 0 : index
    %c0_37 = arith.constant 0 : index
    %68 = vector.load %arg2[%c8, %c0_36, %c0_37] : memref<9x4x4xbf16, #tpu.memory_space<vmem>>, vector<1x4x4xbf16>
    %69 = vector.shape_cast %68 : vector<1x4x4xbf16> to vector<4x4xbf16>
    %cst_38 = arith.constant dense<0.000000e+00> : vector<256x4xf32>
    %70 = tpu.matmul %67, %69, %cst_38 {dimension_numbers = #tpu.dot_dimension_numbers<[1], [0], [0], [1], [0, 0, 1, 1], [], []>} : vector<256x4xbf16>, vector<4x4xbf16>, vector<256x4xf32> -> vector<256x4xf32>
    %71 = arith.addf %65, %70 : vector<256x4xf32>
    %c0_39 = arith.constant 0 : index
    %c0_40 = arith.constant 0 : index
    %72 = vector.load %arg3[%c0_39, %c0_40] : memref<1x4xf32, #tpu.memory_space<vmem>>, vector<1x4xf32>
    %73 = vector.broadcast %72 : vector<1x4xf32> to vector<256x4xf32>
    %74 = arith.addf %71, %73 : vector<256x4xf32>
    %cst_41 = arith.constant dense<0.000000e+00> : vector<4xf32>
    %75 = vector.multi_reduction <add>, %74, %cst_41 [0] : vector<256x4xf32> to vector<4xf32>
    %76 = vector.shape_cast %75 : vector<4xf32> to vector<1x4xf32>
    %c0_42 = arith.constant 0 : index
    %c0_43 = arith.constant 0 : index
    %c0_44 = arith.constant 0 : index
    %77 = vector.load %arg8[%c0_42, %c0_43, %c0_44] : memref<1x1x4xf32, #tpu.memory_space<vmem>>, vector<1x1x4xf32>
    %78 = vector.shape_cast %77 : vector<1x1x4xf32> to vector<1x4xf32>
    %79 = vector.shape_cast %76 : vector<1x4xf32> to vector<1x1x4xf32>
    tpu.vector_store %arg8[%c0_42, %c0_43, %c0_44], %79 {strides = array<i32>} : memref<1x1x4xf32, #tpu.memory_space<vmem>>, vector<1x1x4xf32>,
    %80 = arith.mulf %74, %74 : vector<256x4xf32>
    %cst_45 = arith.constant dense<0.000000e+00> : vector<4xf32>
    %81 = vector.multi_reduction <add>, %80, %cst_45 [0] : vector<256x4xf32> to vector<4xf32>
    %82 = vector.shape_cast %81 : vector<4xf32> to vector<1x4xf32>
    %c0_46 = arith.constant 0 : index
    %c0_47 = arith.constant 0 : index
    %c0_48 = arith.constant 0 : index
    %83 = vector.load %arg9[%c0_46, %c0_47, %c0_48] : memref<1x1x4xf32, #tpu.memory_space<vmem>>, vector<1x1x4xf32>
    %84 = vector.shape_cast %83 : vector<1x1x4xf32> to vector<1x4xf32>
    %85 = vector.shape_cast %82 : vector<1x4xf32> to vector<1x1x4xf32>
    tpu.vector_store %arg9[%c0_46, %c0_47, %c0_48], %85 {strides = array<i32>} : memref<1x1x4xf32, #tpu.memory_space<vmem>>, vector<1x1x4xf32>,
    %86 = vector.shape_cast %74 : vector<256x4xf32> to vector<16x16x4xf32>
    %87 = arith.truncf %86 : vector<16x16x4xf32> to vector<16x16x4xbf16>
    %c0_49 = arith.constant 0 : index
    %c0_50 = arith.constant 0 : index
    %c0_51 = arith.constant 0 : index
    %c0_52 = arith.constant 0 : index
    %88 = vector.load %arg7[%c0_49, %c0_50, %c0_51, %c0_52] : memref<1x16x16x4xbf16, #tpu.memory_space<vmem>>, vector<1x16x16x4xbf16>
    %89 = vector.shape_cast %88 : vector<1x16x16x4xbf16> to vector<16x16x4xbf16>
    %90 = vector.shape_cast %87 : vector<16x16x4xbf16> to vector<1x16x16x4xbf16>
    tpu.vector_store %arg7[%c0_49, %c0_50, %c0_51, %c0_52], %90 {strides = array<i32>} : memref<1x16x16x4xbf16, #tpu.memory_space<vmem>>, vector<1x16x16x4xbf16>,
    return
  }
  func.func @transform_0(%arg0: i32) -> (i32, i32, i32, i32) {
    %c0_i32 = arith.constant 0 : i32
    %c0_i32_0 = arith.constant 0 : i32
    %c0_i32_1 = arith.constant 0 : i32
    %c0_i32_2 = arith.constant 0 : i32
    return %arg0, %c0_i32, %c0_i32_0, %c0_i32_1 : i32, i32, i32, i32
  }
  func.func @transform_1(%arg0: i32) -> (i32, i32, i32) {
    %c0_i32 = arith.constant 0 : i32
    %c0_i32_0 = arith.constant 0 : i32
    %c0_i32_1 = arith.constant 0 : i32
    %c0_i32_2 = arith.constant 0 : i32
    return %c0_i32, %c0_i32_0, %c0_i32_1 : i32, i32, i32
  }
  func.func @transform_2(%arg0: i32) -> (i32, i32) {
    %c0_i32 = arith.constant 0 : i32
    %c0_i32_0 = arith.constant 0 : i32
    %c0_i32_1 = arith.constant 0 : i32
    return %c0_i32, %c0_i32_0 : i32, i32
  }
  func.func @transform_3(%arg0: i32) -> (i32, i32) {
    %c0_i32 = arith.constant 0 : i32
    %c0_i32_0 = arith.constant 0 : i32
    %c0_i32_1 = arith.constant 0 : i32
    return %c0_i32, %c0_i32_0 : i32, i32
  }
  func.func @transform_4(%arg0: i32) -> (i32, i32) {
    %c0_i32 = arith.constant 0 : i32
    %c0_i32_0 = arith.constant 0 : i32
    %c0_i32_1 = arith.constant 0 : i32
    return %c0_i32, %c0_i32_0 : i32, i32
  }
  func.func @transform_5(%arg0: i32) -> (i32, i32, i32) {
    %c0_i32 = arith.constant 0 : i32
    %c0_i32_0 = arith.constant 0 : i32
    %c0_i32_1 = arith.constant 0 : i32
    %c0_i32_2 = arith.constant 0 : i32
    return %c0_i32, %c0_i32_0, %c0_i32_1 : i32, i32, i32
  }
  func.func @transform_6(%arg0: i32) -> (i32, i32, i32, i32) {
    %c0_i32 = arith.constant 0 : i32
    %c0_i32_0 = arith.constant 0 : i32
    %c0_i32_1 = arith.constant 0 : i32
    %c0_i32_2 = arith.constant 0 : i32
    return %arg0, %c0_i32, %c0_i32_0, %c0_i32_1 : i32, i32, i32, i32
  }
  func.func @transform_7(%arg0: i32) -> (i32, i32, i32) {
    %c0_i32 = arith.constant 0 : i32
    %c0_i32_0 = arith.constant 0 : i32
    %c0_i32_1 = arith.constant 0 : i32
    return %arg0, %c0_i32, %c0_i32_0 : i32, i32, i32
  }
  func.func @transform_8(%arg0: i32) -> (i32, i32, i32) {
    %c0_i32 = arith.constant 0 : i32
    %c0_i32_0 = arith.constant 0 : i32
    %c0_i32_1 = arith.constant 0 : i32
    return %arg0, %c0_i32, %c0_i32_0 : i32, i32, i32
  }
}

</mosaic_0001>

<llo_original>
// kernel: residual_forward.5
$region0: #{residual_forward.5}
  #allocation0 [shape = 'u32[]', space=smem, size = 0x4, offset = 0x4, fixed_abs, tag = 'smem constant byte address 0x4 - core index']
  #allocation1 [shape = 'u32[144,128]{1,0:T(1,128)}', space=vmem, size = 0x12000, scoped, tag = 'internal scratch']
  %s0 = inlined_call_operand.vmem [shape: bf16[2,16,16,4], index: 0, kind: input, shape index: {}]
  %s1 = inlined_call_operand.vmem [shape: f32[2,16,16,4], index: 1, kind: input, shape index: {}]
  %s2 = inlined_call_operand.vmem [shape: f32[1,4], index: 2, kind: input, shape index: {}]
  %s3 = inlined_call_operand.vmem [shape: f32[1,4], index: 3, kind: input, shape index: {}]
  %s4 = inlined_call_operand.vmem [shape: f32[2,16,16,4], index: 4, kind: output, shape index: {}]
  %s5 = sld [smem:[#allocation0]]
  $region49: #{residual_forward.5} parent=0
    _
  %s7 = ssub.s32 1, %s5
  %s8 = scalar_select 0, %s7, %s5
  loop: start=0, step=1, limit=4
  $region2: #{residual_forward.5} parent=0 // loop_pre_header
    _
  $region3: #{residual_forward.5} parent=0 // loop_header
    %s10 = sphi 0, %s14
    %p11 = scmp.ge.s32.totalorder %s10, 4
    %s20 = sphi 0, %s22
    %s23 = sphi 0, %s20
    %s24 = sphi 0, %s23
    %s40 = sphi 0, %s24
    %s46 = sphi 0, %s48
    %s49 = sphi 0, %s46
    %s50 = sphi 0, %s49
    %s66 = sphi 0, %s50
    %s70 = sphi 0, %s70
    %s72 = sphi 0, %s70
    %s73 = sphi 0, %s72
    %s87 = sphi 0, %s73
    %s91 = sphi 0, %s91
    %s93 = sphi 0, %s91
    %s94 = sphi 0, %s93
    %s108 = sphi 0, %s94
    %s114 = sphi 0, %s116
    %s117 = sphi 0, %s114
    %s118 = sphi 0, %s117
    %s134 = sphi 0, %s118
  $region4: #{residual_forward.5} parent=0 // loop_header_branch
    %13 = sbr.rel (%p11) target = $region8
  $region5: #{residual_forward.5} parent=0 // loop_body
    %s15 = ssub.s32 %s10, 1
    %s16 = ssub.s32 %s10, 2
    %s17 = sadd.s32 %s10, 1
    %s18 = ssub.s32 %s10, %s17
    %p19 = scmp.eq.s32.totalorder %s18, 0
    %s21 = sadd.s32 %s20, 1
    %s22 = scalar_select %p19, %s20, %s21
    %p25 = pneg %p19
    %p26 = scmp.eq.s32.totalorder %s10, 1
    %p27 = por %p25, %p26
    %p28 = scmp.ne.s32.totalorder %s20, %s23
    %p29 = scmp.eq.s32.totalorder %s10, 0
    %p30 = por %p28, %p29
    %p31 = scmp.ne.s32.totalorder %s20, %s23
    %p32 = scmp.eq.s32.totalorder %s15, 1
    %p33 = por %p31, %p32
    %p34 = scmp.ne.s32.totalorder %s23, %s24
    %p35 = scmp.eq.s32.totalorder %s15, 0
    %p36 = por %p34, %p35
    %p37 = scmp.ne.s32.totalorder %s23, %s24
    %p38 = scmp.eq.s32.totalorder %s16, 1
    %p39 = por %p37, %p38
    %p41 = scmp.ne.s32.totalorder %s24, %s40
    %p42 = scmp.eq.s32.totalorder %s16, 0
    %p43 = por %p41, %p42
    %s44 = ssub.s32 %s10, %s17
    %p45 = scmp.eq.s32.totalorder %s44, 0
    %s47 = sadd.s32 %s46, 1
    %s48 = scalar_select %p45, %s46, %s47
    %p51 = pneg %p45
    %p52 = scmp.eq.s32.totalorder %s10, 1
    %p53 = por %p51, %p52
    %p54 = scmp.ne.s32.totalorder %s46, %s49
    %p55 = scmp.eq.s32.totalorder %s10, 0
    %p56 = por %p54, %p55
    %p57 = scmp.ne.s32.totalorder %s46, %s49
    %p58 = scmp.eq.s32.totalorder %s15, 1
    %p59 = por %p57, %p58
    %p60 = scmp.ne.s32.totalorder %s49, %s50
    %p61 = scmp.eq.s32.totalorder %s15, 0
    %p62 = por %p60, %p61
    %p63 = scmp.ne.s32.totalorder %s49, %s50
    %p64 = scmp.eq.s32.totalorder %s16, 1
    %p65 = por %p63, %p64
    %p67 = scmp.ne.s32.totalorder %s50, %s66
    %p68 = scmp.eq.s32.totalorder %s16, 0
    %p69 = por %p67, %p68
    %s71 = sadd.s32 %s70, 1
    %p74 = scmp.eq.s32.totalorder %s10, 1
    %p75 = scmp.ne.s32.totalorder %s70, %s72
    %p76 = scmp.eq.s32.totalorder %s10, 0
    %p77 = por %p75, %p76
    %p78 = scmp.ne.s32.totalorder %s70, %s72
    %p79 = scmp.eq.s32.totalorder %s15, 1
    %p80 = por %p78, %p79
    %p81 = scmp.ne.s32.totalorder %s72, %s73
    %p82 = scmp.eq.s32.totalorder %s15, 0
    %p83 = por %p81, %p82
    %p84 = scmp.ne.s32.totalorder %s72, %s73
    %p85 = scmp.eq.s32.totalorder %s16, 1
    %p86 = por %p84, %p85
    %p88 = scmp.ne.s32.totalorder %s73, %s87
    %p89 = scmp.eq.s32.totalorder %s16, 0
    %p90 = por %p88, %p89
    %s92 = sadd.s32 %s91, 1
    %p95 = scmp.eq.s32.totalorder %s10, 1
    %p96 = scmp.ne.s32.totalorder %s91, %s93
    %p97 = scmp.eq.s32.totalorder %s10, 0
    %p98 = por %p96, %p97
    %p99 = scmp.ne.s32.totalorder %s91, %s93
    %p100 = scmp.eq.s32.totalorder %s15, 1
    %p101 = por %p99, %p100
    %p102 = scmp.ne.s32.totalorder %s93, %s94
    %p103 = scmp.eq.s32.totalorder %s15, 0
    %p104 = por %p102, %p103
    %p105 = scmp.ne.s32.totalorder %s93, %s94
    %p106 = scmp.eq.s32.totalorder %s16, 1
    %p107 = por %p105, %p106
    %p109 = scmp.ne.s32.totalorder %s94, %s108
    %p110 = scmp.eq.s32.totalorder %s16, 0
    %p111 = por %p109, %p110
    %s112 = ssub.s32 %s10, %s17
    %p113 = scmp.eq.s32.totalorder %s112, 0
    %s115 = sadd.s32 %s114, 1
    %s116 = scalar_select %p113, %s114, %s115
    %p119 = pneg %p113
    %p120 = scmp.eq.s32.totalorder %s10, 1
    %p121 = por %p119, %p120
    %p122 = scmp.ne.s32.totalorder %s114, %s117
    %p123 = scmp.eq.s32.totalorder %s10, 0
    %p124 = por %p122, %p123
    %p125 = scmp.ne.s32.totalorder %s114, %s117
    %p126 = scmp.eq.s32.totalorder %s15, 1
    %p127 = por %p125, %p126
    %p128 = scmp.ne.s32.totalorder %s117, %s118
    %p129 = scmp.eq.s32.totalorder %s15, 0
    %p130 = por %p128, %p129
    %p131 = scmp.ne.s32.totalorder %s117, %s118
    %p132 = scmp.eq.s32.totalorder %s16, 1
    %p133 = por %p131, %p132
    %p135 = scmp.ne.s32.totalorder %s118, %s134
    %p136 = scmp.eq.s32.totalorder %s16, 0
    %p137 = por %p135, %p136
    %p138 = scmp.le.s32.totalorder 1, %s10
    %p139 = scmp.lt.s32.totalorder %s10, 3
    %p140 = pnand %p138, %p139
    %p141 = pneg %p140
    // Predicated region
    $region9: #{residual_forward.5} parent=5 // pred_check
      _
    $region10: #{residual_forward.5} parent=5 // pred_check_branch
      %143 = sbr.rel (%p140) target = $region12
    $region11: #{residual_forward.5} parent=5 // pred_region
      %s144 = ssub.s32 %s10, 1
      // Predicated region
      $region13: #{residual_forward.5} parent=11 // pred_check
        %p145 = pneg %p83
      $region14: #{residual_forward.5} parent=11 // pred_check_branch
        %147 = sbr.rel (%p145) target = $region16
      $region15: #{residual_forward.5} parent=11 // pred_region
        _
      $region16: #{residual_forward.5} parent=11 // pred_fallthru
        _
      // Predicated region
      $region17: #{residual_forward.5} parent=11 // pred_check
        %p148 = pneg %p104
      $region18: #{residual_forward.5} parent=11 // pred_check_branch
        %150 = sbr.rel (%p148) target = $region20
      $region19: #{residual_forward.5} parent=11 // pred_region
        _
      $region20: #{residual_forward.5} parent=11 // pred_fallthru
        _
    $region12: #{residual_forward.5} parent=5 // pred_fallthru
      _
    %p151 = scmp.lt.s32.totalorder %s10, 2
    // Predicated region
    $region21: #{residual_forward.5} parent=5 // pred_check
      %p152 = pneg %p151
    $region22: #{residual_forward.5} parent=5 // pred_check_branch
      %154 = sbr.rel (%p152) target = $region24
    $region23: #{residual_forward.5} parent=5 // pred_region
      // Predicated region
      $region25: #{residual_forward.5} parent=23 // pred_check
        %p155 = pneg %p30
      $region26: #{residual_forward.5} parent=23 // pred_check_branch
        %157 = sbr.rel (%p155) target = $region28
      $region27: #{residual_forward.5} parent=23 // pred_region
        %p158 = scmp.lt.s32.totalorder %s10, 1
        %s159 = scalar_select %p158, %s10, 1
        %s160 = smul.addr %s159, 32
        %s161 = smul.addr %s160, 4
        %s162 = scalar_lea.vmem %s0, %s161
      $region28: #{residual_forward.5} parent=23 // pred_fallthru
        _
      // Predicated region
      $region29: #{residual_forward.5} parent=23 // pred_check
        %p163 = pneg %p56
      $region30: #{residual_forward.5} parent=23 // pred_check_branch
        %165 = sbr.rel (%p163) target = $region32
      $region31: #{residual_forward.5} parent=23 // pred_region
        %p166 = scmp.lt.s32.totalorder %s10, 1
        %s167 = scalar_select %p166, %s10, 1
        %s168 = smul.addr %s167, 32
        %s169 = smul.addr %s168, 8
        %s170 = scalar_lea.vmem %s1, %s169
      $region32: #{residual_forward.5} parent=23 // pred_fallthru
        _
    $region24: #{residual_forward.5} parent=5 // pred_fallthru
      _
    %p171 = scmp.le.s32.totalorder 1, %s10
    %p172 = scmp.lt.s32.totalorder %s10, 3
    %p173 = pnand %p171, %p172
    %p174 = pneg %p173
    // Predicated region
    $region33: #{residual_forward.5} parent=5 // pred_check
      _
    $region34: #{residual_forward.5} parent=5 // pred_check_branch
      %176 = sbr.rel (%p173) target = $region36
    $region35: #{residual_forward.5} parent=5 // pred_region
      %s177 = ssub.s32 %s10, 1
      %p178 = scmp.lt.s32.totalorder %s15, 1
      %s179 = scalar_select %p178, %s15, 1
      %s180 = smul.addr %s179, 32
      %s181 = smul.addr %s180, 4
      %s182 = scalar_lea.vmem %s0, %s181
      %p183 = pneg %p36
      %p184 = pneg %p33
      %p185 = scmp.lt.s32.totalorder %s15, 1
      %s186 = scalar_select %p185, %s15, 1
      %s187 = smul.addr %s186, 32
      %s188 = smul.addr %s187, 8
      %s189 = scalar_lea.vmem %s1, %s188
      %p190 = pneg %p62
      %p191 = pneg %p59
      %p192 = pneg %p83
      %p193 = pneg %p80
      %p194 = pneg %p104
      %p195 = pneg %p101
      %p196 = pneg %p130
      %p197 = pneg %p127
      %p198 = scmp.lt.s32.totalorder %s15, 1
      %s199 = scalar_select %p198, %s15, 1
      %s200 = smul.addr %s199, 32
      %s201 = smul.addr %s200, 8
      %s202 = scalar_lea.vmem %s4, %s201
      %p203 = scmp.lt.s32.totalorder %s15, 1
      %s204 = scalar_select %p203, %s15, 1
      %s205 = smul.addr %s204, 32
      %s206 = smul.addr %s205, 4
      %s207 = scalar_lea.vmem %s0, %s206
      %p208 = scmp.lt.s32.totalorder %s15, 1
      %s209 = scalar_select %p208, %s15, 1
      %s210 = smul.addr %s209, 32
      %s211 = smul.addr %s210, 8
      %s212 = scalar_lea.vmem %s1, %s211
      %p213 = scmp.lt.s32.totalorder %s15, 1
      %s214 = scalar_select %p213, %s15, 1
      %s215 = smul.addr %s214, 32
      %s216 = smul.addr %s215, 8
      %s217 = scalar_lea.vmem %s4, %s216
      %v218 = vld [vmem:[%s207] sm:$0xf]
      %v219 = vld [vmem:[%s207 + $0x4] sm:$0xf]
      %v220 = vld [vmem:[%s207 + $0x8] sm:$0xf]
      %v221 = vld [vmem:[%s207 + $0xc] sm:$0xf]
      %v222 = vld [vmem:[%s207 + $0x10] sm:$0xf]
      %v223 = vld [vmem:[%s207 + $0x14] sm:$0xf]
      %v224 = vld [vmem:[%s207 + $0x18] sm:$0xf]
      %v225 = vld [vmem:[%s207 + $0x1c] sm:$0xf]
      %v226 = vld [vmem:[%s207 + $0x20] sm:$0xf]
      %v227 = vld [vmem:[%s207 + $0x24] sm:$0xf]
      %v228 = vld [vmem:[%s207 + $0x28] sm:$0xf]
      %v229 = vld [vmem:[%s207 + $0x2c] sm:$0xf]
      %v230 = vld [vmem:[%s207 + $0x30] sm:$0xf]
      %v231 = vld [vmem:[%s207 + $0x34] sm:$0xf]
      %v232 = vld [vmem:[%s207 + $0x38] sm:$0xf]
      %v233 = vld [vmem:[%s207 + $0x3c] sm:$0xf]
      %v234 = vld [vmem:[%s207 + $0x40] sm:$0xf]
      %v235 = vld [vmem:[%s207 + $0x44] sm:$0xf]
      %v236 = vld [vmem:[%s207 + $0x48] sm:$0xf]
      %v237 = vld [vmem:[%s207 + $0x4c] sm:$0xf]
      %v238 = vld [vmem:[%s207 + $0x50] sm:$0xf]
      %v239 = vld [vmem:[%s207 + $0x54] sm:$0xf]
      %v240 = vld [vmem:[%s207 + $0x58] sm:$0xf]
      %v241 = vld [vmem:[%s207 + $0x5c] sm:$0xf]
      %v242 = vld [vmem:[%s207 + $0x60] sm:$0xf]
      %v243 = vld [vmem:[%s207 + $0x64] sm:$0xf]
      %v244 = vld [vmem:[%s207 + $0x68] sm:$0xf]
      %v245 = vld [vmem:[%s207 + $0x6c] sm:$0xf]
      %v246 = vld [vmem:[%s207 + $0x70] sm:$0xf]
      %v247 = vld [vmem:[%s207 + $0x74] sm:$0xf]
      %v248 = vld [vmem:[%s207 + $0x78] sm:$0xf]
      %v249 = vld [vmem:[%s207 + $0x7c] sm:$0xf]
      %v250 = vunpack.c.l.bf16 %v218
      %v251 = vunpack.c.l.bf16 %v219
      %v252 = vunpack.c.l.bf16 %v220
      %v253 = vunpack.c.l.bf16 %v221
      %v254 = vunpack.c.l.bf16 %v222
      %v255 = vunpack.c.l.bf16 %v223
      %v256 = vunpack.c.l.bf16 %v224
      %v257 = vunpack.c.l.bf16 %v225
      %v258 = vunpack.c.l.bf16 %v226
      %v259 = vunpack.c.l.bf16 %v227
      %v260 = vunpack.c.l.bf16 %v228
      %v261 = vunpack.c.l.bf16 %v229
      %v262 = vunpack.c.l.bf16 %v230
      %v263 = vunpack.c.l.bf16 %v231
      %v264 = vunpack.c.l.bf16 %v232
      %v265 = vunpack.c.l.bf16 %v233
      %v266 = vunpack.c.l.bf16 %v234
      %v267 = vunpack.c.l.bf16 %v235
      %v268 = vunpack.c.l.bf16 %v236
      %v269 = vunpack.c.l.bf16 %v237
      %v270 = vunpack.c.l.bf16 %v238
      %v271 = vunpack.c.l.bf16 %v239
      %v272 = vunpack.c.l.bf16 %v240
      %v273 = vunpack.c.l.bf16 %v241
      %v274 = vunpack.c.l.bf16 %v242
      %v275 = vunpack.c.l.bf16 %v243
      %v276 = vunpack.c.l.bf16 %v244
      %v277 = vunpack.c.l.bf16 %v245
      %v278 = vunpack.c.l.bf16 %v246
      %v279 = vunpack.c.l.bf16 %v247
      %v280 = vunpack.c.l.bf16 %v248
      %v281 = vunpack.c.l.bf16 %v249
      %v282 = vld [vmem:[%s2] sm:$0x1]
      %v284 = vlaneseq
      %v285 = vshrl.u32 %v284, 7
      %v286 = vsub.s32 0, %v285
      %v287 = vrot.slane %v282, %v286
      %v289 = vmul.f32 %v250, %v287
      %v290 = vmul.f32 %v251, %v287
      %v291 = vmul.f32 %v252, %v287
      %v292 = vmul.f32 %v253, %v287
      %v293 = vmul.f32 %v254, %v287
      %v294 = vmul.f32 %v255, %v287
      %v295 = vmul.f32 %v256, %v287
      %v296 = vmul.f32 %v257, %v287
      %v297 = vmul.f32 %v258, %v287
      %v298 = vmul.f32 %v259, %v287
      %v299 = vmul.f32 %v260, %v287
      %v300 = vmul.f32 %v261, %v287
      %v301 = vmul.f32 %v262, %v287
      %v302 = vmul.f32 %v263, %v287
      %v303 = vmul.f32 %v264, %v287
      %v304 = vmul.f32 %v265, %v287
      %v305 = vmul.f32 %v266, %v287
      %v306 = vmul.f32 %v267, %v287
      %v307 = vmul.f32 %v268, %v287
      %v308 = vmul.f32 %v269, %v287
      %v309 = vmul.f32 %v270, %v287
      %v310 = vmul.f32 %v271, %v287
      %v311 = vmul.f32 %v272, %v287
      %v312 = vmul.f32 %v273, %v287
      %v313 = vmul.f32 %v274, %v287
      %v314 = vmul.f32 %v275, %v287
      %v315 = vmul.f32 %v276, %v287
      %v316 = vmul.f32 %v277, %v287
      %v317 = vmul.f32 %v278, %v287
      %v318 = vmul.f32 %v279, %v287
      %v319 = vmul.f32 %v280, %v287
      %v320 = vmul.f32 %v281, %v287
      %v321 = vld [vmem:[%s3] sm:$0x1]
      %v323 = vlaneseq
      %v324 = vshrl.u32 %v323, 7
      %v325 = vsub.s32 0, %v324
      %v326 = vrot.slane %v321, %v325
      %v328 = vadd.f32 %v289, %v326
      %v329 = vadd.f32 %v290, %v326
      %v330 = vadd.f32 %v291, %v326
      %v331 = vadd.f32 %v292, %v326
      %v332 = vadd.f32 %v293, %v326
      %v333 = vadd.f32 %v294, %v326
      %v334 = vadd.f32 %v295, %v326
      %v335 = vadd.f32 %v296, %v326
      %v336 = vadd.f32 %v297, %v326
      %v337 = vadd.f32 %v298, %v326
      %v338 = vadd.f32 %v299, %v326
      %v339 = vadd.f32 %v300, %v326
      %v340 = vadd.f32 %v301, %v326
      %v341 = vadd.f32 %v302, %v326
      %v342 = vadd.f32 %v303, %v326
      %v343 = vadd.f32 %v304, %v326
      %v344 = vadd.f32 %v305, %v326
      %v345 = vadd.f32 %v306, %v326
      %v346 = vadd.f32 %v307, %v326
      %v347 = vadd.f32 %v308, %v326
      %v348 = vadd.f32 %v309, %v326
      %v349 = vadd.f32 %v310, %v326
      %v350 = vadd.f32 %v311, %v326
      %v351 = vadd.f32 %v312, %v326
      %v352 = vadd.f32 %v313, %v326
      %v353 = vadd.f32 %v314, %v326
      %v354 = vadd.f32 %v315, %v326
      %v355 = vadd.f32 %v316, %v326
      %v356 = vadd.f32 %v317, %v326
      %v357 = vadd.f32 %v318, %v326
      %v358 = vadd.f32 %v319, %v326
      %v359 = vadd.f32 %v320, %v326
      %v360 = vld [vmem:[%s212] sm:$0xff]
      %v361 = vld [vmem:[%s212 + $0x8] sm:$0xff]
      %v362 = vld [vmem:[%s212 + $0x10] sm:$0xff]
      %v363 = vld [vmem:[%s212 + $0x18] sm:$0xff]
      %v364 = vld [vmem:[%s212 + $0x20] sm:$0xff]
      %v365 = vld [vmem:[%s212 + $0x28] sm:$0xff]
      %v366 = vld [vmem:[%s212 + $0x30] sm:$0xff]
      %v367 = vld [vmem:[%s212 + $0x38] sm:$0xff]
      %v368 = vld [vmem:[%s212 + $0x40] sm:$0xff]
      %v369 = vld [vmem:[%s212 + $0x48] sm:$0xff]
      %v370 = vld [vmem:[%s212 + $0x50] sm:$0xff]
      %v371 = vld [vmem:[%s212 + $0x58] sm:$0xff]
      %v372 = vld [vmem:[%s212 + $0x60] sm:$0xff]
      %v373 = vld [vmem:[%s212 + $0x68] sm:$0xff]
      %v374 = vld [vmem:[%s212 + $0x70] sm:$0xff]
      %v375 = vld [vmem:[%s212 + $0x78] sm:$0xff]
      %v376 = vld [vmem:[%s212 + $0x80] sm:$0xff]
      %v377 = vld [vmem:[%s212 + $0x88] sm:$0xff]
      %v378 = vld [vmem:[%s212 + $0x90] sm:$0xff]
      %v379 = vld [vmem:[%s212 + $0x98] sm:$0xff]
      %v380 = vld [vmem:[%s212 + $0xa0] sm:$0xff]
      %v381 = vld [vmem:[%s212 + $0xa8] sm:$0xff]
      %v382 = vld [vmem:[%s212 + $0xb0] sm:$0xff]
      %v383 = vld [vmem:[%s212 + $0xb8] sm:$0xff]
      %v384 = vld [vmem:[%s212 + $0xc0] sm:$0xff]
      %v385 = vld [vmem:[%s212 + $0xc8] sm:$0xff]
      %v386 = vld [vmem:[%s212 + $0xd0] sm:$0xff]
      %v387 = vld [vmem:[%s212 + $0xd8] sm:$0xff]
      %v388 = vld [vmem:[%s212 + $0xe0] sm:$0xff]
      %v389 = vld [vmem:[%s212 + $0xe8] sm:$0xff]
      %v390 = vld [vmem:[%s212 + $0xf0] sm:$0xff]
      %v391 = vld [vmem:[%s212 + $0xf8] sm:$0xff]
      %v392 = vadd.f32 %v328, %v360
      %v393 = vadd.f32 %v329, %v361
      %v394 = vadd.f32 %v330, %v362
      %v395 = vadd.f32 %v331, %v363
      %v396 = vadd.f32 %v332, %v364
      %v397 = vadd.f32 %v333, %v365
      %v398 = vadd.f32 %v334, %v366
      %v399 = vadd.f32 %v335, %v367
      %v400 = vadd.f32 %v336, %v368
      %v401 = vadd.f32 %v337, %v369
      %v402 = vadd.f32 %v338, %v370
      %v403 = vadd.f32 %v339, %v371
      %v404 = vadd.f32 %v340, %v372
      %v405 = vadd.f32 %v341, %v373
      %v406 = vadd.f32 %v342, %v374
      %v407 = vadd.f32 %v343, %v375
      %v408 = vadd.f32 %v344, %v376
      %v409 = vadd.f32 %v345, %v377
      %v410 = vadd.f32 %v346, %v378
      %v411 = vadd.f32 %v347, %v379
      %v412 = vadd.f32 %v348, %v380
      %v413 = vadd.f32 %v349, %v381
      %v414 = vadd.f32 %v350, %v382
      %v415 = vadd.f32 %v351, %v383
      %v416 = vadd.f32 %v352, %v384
      %v417 = vadd.f32 %v353, %v385
      %v418 = vadd.f32 %v354, %v386
      %v419 = vadd.f32 %v355, %v387
      %v420 = vadd.f32 %v356, %v388
      %v421 = vadd.f32 %v357, %v389
      %v422 = vadd.f32 %v358, %v390
      %v423 = vadd.f32 %v359, %v391
      %v424 = vmax.f32 %v392, 0.0
      %v425 = vmax.f32 %v393, 0.0
      %v426 = vmax.f32 %v394, 0.0
      %v427 = vmax.f32 %v395, 0.0
      %v428 = vmax.f32 %v396, 0.0
      %v429 = vmax.f32 %v397, 0.0
      %v430 = vmax.f32 %v398, 0.0
      %v431 = vmax.f32 %v399, 0.0
      %v432 = vmax.f32 %v400, 0.0
      %v433 = vmax.f32 %v401, 0.0
      %v434 = vmax.f32 %v402, 0.0
      %v435 = vmax.f32 %v403, 0.0
      %v436 = vmax.f32 %v404, 0.0
      %v437 = vmax.f32 %v405, 0.0
      %v438 = vmax.f32 %v406, 0.0
      %v439 = vmax.f32 %v407, 0.0
      %v440 = vmax.f32 %v408, 0.0
      %v441 = vmax.f32 %v409, 0.0
      %v442 = vmax.f32 %v410, 0.0
      %v443 = vmax.f32 %v411, 0.0
      %v444 = vmax.f32 %v412, 0.0
      %v445 = vmax.f32 %v413, 0.0
      %v446 = vmax.f32 %v414, 0.0
      %v447 = vmax.f32 %v415, 0.0
      %v448 = vmax.f32 %v416, 0.0
      %v449 = vmax.f32 %v417, 0.0
      %v450 = vmax.f32 %v418, 0.0
      %v451 = vmax.f32 %v419, 0.0
      %v452 = vmax.f32 %v420, 0.0
      %v453 = vmax.f32 %v421, 0.0
      %v454 = vmax.f32 %v422, 0.0
      %v455 = vmax.f32 %v423, 0.0
      %vm456 = vcmask 31744
      %457 = vst.msk [vmem:[%s217] sm:$0xff] %vm456, %v424
      %458 = vst.msk [vmem:[%s217 + $0x8] sm:$0xff] %vm456, %v425
      %459 = vst.msk [vmem:[%s217 + $0x10] sm:$0xff] %vm456, %v426
      %460 = vst.msk [vmem:[%s217 + $0x18] sm:$0xff] %vm456, %v427
      %461 = vst.msk [vmem:[%s217 + $0x20] sm:$0xff] %vm456, %v428
      %462 = vst.msk [vmem:[%s217 + $0x28] sm:$0xff] %vm456, %v429
      %463 = vst.msk [vmem:[%s217 + $0x30] sm:$0xff] %vm456, %v430
      %464 = vst.msk [vmem:[%s217 + $0x38] sm:$0xff] %vm456, %v431
      %465 = vst.msk [vmem:[%s217 + $0x40] sm:$0xff] %vm456, %v432
      %466 = vst.msk [vmem:[%s217 + $0x48] sm:$0xff] %vm456, %v433
      %467 = vst.msk [vmem:[%s217 + $0x50] sm:$0xff] %vm456, %v434
      %468 = vst.msk [vmem:[%s217 + $0x58] sm:$0xff] %vm456, %v435
      %469 = vst.msk [vmem:[%s217 + $0x60] sm:$0xff] %vm456, %v436
      %470 = vst.msk [vmem:[%s217 + $0x68] sm:$0xff] %vm456, %v437
      %471 = vst.msk [vmem:[%s217 + $0x70] sm:$0xff] %vm456, %v438
      %472 = vst.msk [vmem:[%s217 + $0x78] sm:$0xff] %vm456, %v439
      %473 = vst.msk [vmem:[%s217 + $0x80] sm:$0xff] %vm456, %v440
      %474 = vst.msk [vmem:[%s217 + $0x88] sm:$0xff] %vm456, %v441
      %475 = vst.msk [vmem:[%s217 + $0x90] sm:$0xff] %vm456, %v442
      %476 = vst.msk [vmem:[%s217 + $0x98] sm:$0xff] %vm456, %v443
      %477 = vst.msk [vmem:[%s217 + $0xa0] sm:$0xff] %vm456, %v444
      %478 = vst.msk [vmem:[%s217 + $0xa8] sm:$0xff] %vm456, %v445
      %479 = vst.msk [vmem:[%s217 + $0xb0] sm:$0xff] %vm456, %v446
      %480 = vst.msk [vmem:[%s217 + $0xb8] sm:$0xff] %vm456, %v447
      %481 = vst.msk [vmem:[%s217 + $0xc0] sm:$0xff] %vm456, %v448
      %482 = vst.msk [vmem:[%s217 + $0xc8] sm:$0xff] %vm456, %v449
      %483 = vst.msk [vmem:[%s217 + $0xd0] sm:$0xff] %vm456, %v450
      %484 = vst.msk [vmem:[%s217 + $0xd8] sm:$0xff] %vm456, %v451
      %485 = vst.msk [vmem:[%s217 + $0xe0] sm:$0xff] %vm456, %v452
      %486 = vst.msk [vmem:[%s217 + $0xe8] sm:$0xff] %vm456, %v453
      %487 = vst.msk [vmem:[%s217 + $0xf0] sm:$0xff] %vm456, %v454
      %488 = vst.msk [vmem:[%s217 + $0xf8] sm:$0xff] %vm456, %v455
      %p489 = scmp.lt.s32.totalorder %s15, 1
      %s490 = scalar_select %p489, %s15, 1
      %s491 = smul.addr %s490, 32
      %s492 = smul.addr %s491, 8
      %s493 = scalar_lea.vmem %s4, %s492
      // Predicated region
      $region37: #{residual_forward.5} parent=35 // pred_check
        %p494 = pneg %p127
      $region38: #{residual_forward.5} parent=35 // pred_check_branch
        %496 = sbr.rel (%p494) target = $region40
      $region39: #{residual_forward.5} parent=35 // pred_region
        _
      $region40: #{residual_forward.5} parent=35 // pred_fallthru
        _
    $region36: #{residual_forward.5} parent=5 // pred_fallthru
      _
    %p497 = scmp.le.s32.totalorder 2, %s10
    // Predicated region
    $region41: #{residual_forward.5} parent=5 // pred_check
      %p498 = pneg %p497
    $region42: #{residual_forward.5} parent=5 // pred_check_branch
      %500 = sbr.rel (%p498) target = $region44
    $region43: #{residual_forward.5} parent=5 // pred_region
      %s501 = ssub.s32 %s10, 2
      // Predicated region
      $region45: #{residual_forward.5} parent=43 // pred_check
        %p502 = pneg %p133
      $region46: #{residual_forward.5} parent=43 // pred_check_branch
        %504 = sbr.rel (%p502) target = $region48
      $region47: #{residual_forward.5} parent=43 // pred_region
        %p505 = scmp.lt.s32.totalorder %s16, 1
        %s506 = scalar_select %p505, %s16, 1
        %s507 = smul.addr %s506, 32
        %s508 = smul.addr %s507, 8
        %s509 = scalar_lea.vmem %s4, %s508
      $region48: #{residual_forward.5} parent=43 // pred_fallthru
        _
    $region44: #{residual_forward.5} parent=5 // pred_fallthru
      _
  $region6: #{residual_forward.5} parent=0 // loop_footer
    %s14 = sadd.s32 1, %s10
  $region7: #{residual_forward.5} parent=0 // loop_footer_branch
    %9 = sbr.rel target = $region3
  $region8: #{residual_forward.5} parent=0 // loop_exit
    _

// kernel: residual_forward.4
$region0: #{residual_forward.4}
  #allocation0 [shape = 'u32[]', space=smem, size = 0x4, offset = 0x4, fixed_abs, tag = 'smem constant byte address 0x4 - core index']
  #allocation1 [shape = 'u32[144,128]{1,0:T(1,128)}', space=vmem, size = 0x12000, scoped, tag = 'internal scratch']
  %s0 = inlined_call_operand.vmem [shape: bf16[2,18,18,4], index: 0, kind: input, shape index: {}]
  %s1 = inlined_call_operand.vmem [shape: bf16[9,4,4], index: 1, kind: input, shape index: {}]
  %s2 = inlined_call_operand.vmem [shape: f32[1,4], index: 2, kind: input, shape index: {}]
  %s3 = inlined_call_operand.vmem [shape: f32[1,4], index: 3, kind: input, shape index: {}]
  %s4 = inlined_call_operand.vmem [shape: f32[1,4], index: 4, kind: input, shape index: {}]
  %s5 = inlined_call_operand.vmem [shape: f32[18,18,1], index: 5, kind: input, shape index: {}]
  %s6 = inlined_call_operand.vmem [shape: bf16[2,16,16,4], index: 6, kind: output, shape index: {0}]
  %s7 = inlined_call_operand.vmem [shape: f32[2,1,4], index: 7, kind: output, shape index: {1}]
  %s8 = inlined_call_operand.vmem [shape: f32[2,1,4], index: 8, kind: output, shape index: {2}]
  %9 = xla_tuple %s6, %s7, %s8
  %s10 = sld [smem:[#allocation0]]
  $region73: #{residual_forward.4} parent=0
    _
  %s12 = ssub.s32 1, %s10
  %s13 = scalar_select 0, %s12, %s10
  loop: start=0, step=1, limit=4
  $region2: #{residual_forward.4} parent=0 // loop_pre_header
    _
  $region3: #{residual_forward.4} parent=0 // loop_header
    %s15 = sphi 0, %s19
    %p16 = scmp.ge.s32.totalorder %s15, 4
    %s25 = sphi 0, %s27
    %s28 = sphi 0, %s25
    %s29 = sphi 0, %s28
    %s45 = sphi 0, %s29
    %s49 = sphi 0, %s49
    %s51 = sphi 0, %s49
    %s52 = sphi 0, %s51
    %s66 = sphi 0, %s52
    %s70 = sphi 0, %s70
    %s72 = sphi 0, %s70
    %s73 = sphi 0, %s72
    %s87 = sphi 0, %s73
    %s91 = sphi 0, %s91
    %s93 = sphi 0, %s91
    %s94 = sphi 0, %s93
    %s108 = sphi 0, %s94
    %s112 = sphi 0, %s112
    %s114 = sphi 0, %s112
    %s115 = sphi 0, %s114
    %s129 = sphi 0, %s115
    %s133 = sphi 0, %s133
    %s135 = sphi 0, %s133
    %s136 = sphi 0, %s135
    %s150 = sphi 0, %s136
    %s156 = sphi 0, %s158
    %s159 = sphi 0, %s156
    %s160 = sphi 0, %s159
    %s176 = sphi 0, %s160
    %s182 = sphi 0, %s184
    %s185 = sphi 0, %s182
    %s186 = sphi 0, %s185
    %s202 = sphi 0, %s186
    %s208 = sphi 0, %s210
    %s211 = sphi 0, %s208
    %s212 = sphi 0, %s211
    %s228 = sphi 0, %s212
  $region4: #{residual_forward.4} parent=0 // loop_header_branch
    %18 = sbr.rel (%p16) target = $region8
  $region5: #{residual_forward.4} parent=0 // loop_body
    %s20 = ssub.s32 %s15, 1
    %s21 = ssub.s32 %s15, 2
    %s22 = sadd.s32 %s15, 1
    %s23 = ssub.s32 %s15, %s22
    %p24 = scmp.eq.s32.totalorder %s23, 0
    %s26 = sadd.s32 %s25, 1
    %s27 = scalar_select %p24, %s25, %s26
    %p30 = pneg %p24
    %p31 = scmp.eq.s32.totalorder %s15, 1
    %p32 = por %p30, %p31
    %p33 = scmp.ne.s32.totalorder %s25, %s28
    %p34 = scmp.eq.s32.totalorder %s15, 0
    %p35 = por %p33, %p34
    %p36 = scmp.ne.s32.totalorder %s25, %s28
    %p37 = scmp.eq.s32.totalorder %s20, 1
    %p38 = por %p36, %p37
    %p39 = scmp.ne.s32.totalorder %s28, %s29
    %p40 = scmp.eq.s32.totalorder %s20, 0
    %p41 = por %p39, %p40
    %p42 = scmp.ne.s32.totalorder %s28, %s29
    %p43 = scmp.eq.s32.totalorder %s21, 1
    %p44 = por %p42, %p43
    %p46 = scmp.ne.s32.totalorder %s29, %s45
    %p47 = scmp.eq.s32.totalorder %s21, 0
    %p48 = por %p46, %p47
    %s50 = sadd.s32 %s49, 1
    %p53 = scmp.eq.s32.totalorder %s15, 1
    %p54 = scmp.ne.s32.totalorder %s49, %s51
    %p55 = scmp.eq.s32.totalorder %s15, 0
    %p56 = por %p54, %p55
    %p57 = scmp.ne.s32.totalorder %s49, %s51
    %p58 = scmp.eq.s32.totalorder %s20, 1
    %p59 = por %p57, %p58
    %p60 = scmp.ne.s32.totalorder %s51, %s52
    %p61 = scmp.eq.s32.totalorder %s20, 0
    %p62 = por %p60, %p61
    %p63 = scmp.ne.s32.totalorder %s51, %s52
    %p64 = scmp.eq.s32.totalorder %s21, 1
    %p65 = por %p63, %p64
    %p67 = scmp.ne.s32.totalorder %s52, %s66
    %p68 = scmp.eq.s32.totalorder %s21, 0
    %p69 = por %p67, %p68
    %s71 = sadd.s32 %s70, 1
    %p74 = scmp.eq.s32.totalorder %s15, 1
    %p75 = scmp.ne.s32.totalorder %s70, %s72
    %p76 = scmp.eq.s32.totalorder %s15, 0
    %p77 = por %p75, %p76
    %p78 = scmp.ne.s32.totalorder %s70, %s72
    %p79 = scmp.eq.s32.totalorder %s20, 1
    %p80 = por %p78, %p79
    %p81 = scmp.ne.s32.totalorder %s72, %s73
    %p82 = scmp.eq.s32.totalorder %s20, 0
    %p83 = por %p81, %p82
    %p84 = scmp.ne.s32.totalorder %s72, %s73
    %p85 = scmp.eq.s32.totalorder %s21, 1
    %p86 = por %p84, %p85
    %p88 = scmp.ne.s32.totalorder %s73, %s87
    %p89 = scmp.eq.s32.totalorder %s21, 0
    %p90 = por %p88, %p89
    %s92 = sadd.s32 %s91, 1
    %p95 = scmp.eq.s32.totalorder %s15, 1
    %p96 = scmp.ne.s32.totalorder %s91, %s93
    %p97 = scmp.eq.s32.totalorder %s15, 0
    %p98 = por %p96, %p97
    %p99 = scmp.ne.s32.totalorder %s91, %s93
    %p100 = scmp.eq.s32.totalorder %s20, 1
    %p101 = por %p99, %p100
    %p102 = scmp.ne.s32.totalorder %s93, %s94
    %p103 = scmp.eq.s32.totalorder %s20, 0
    %p104 = por %p102, %p103
    %p105 = scmp.ne.s32.totalorder %s93, %s94
    %p106 = scmp.eq.s32.totalorder %s21, 1
    %p107 = por %p105, %p106
    %p109 = scmp.ne.s32.totalorder %s94, %s108
    %p110 = scmp.eq.s32.totalorder %s21, 0
    %p111 = por %p109, %p110
    %s113 = sadd.s32 %s112, 1
    %p116 = scmp.eq.s32.totalorder %s15, 1
    %p117 = scmp.ne.s32.totalorder %s112, %s114
    %p118 = scmp.eq.s32.totalorder %s15, 0
    %p119 = por %p117, %p118
    %p120 = scmp.ne.s32.totalorder %s112, %s114
    %p121 = scmp.eq.s32.totalorder %s20, 1
    %p122 = por %p120, %p121
    %p123 = scmp.ne.s32.totalorder %s114, %s115
    %p124 = scmp.eq.s32.totalorder %s20, 0
    %p125 = por %p123, %p124
    %p126 = scmp.ne.s32.totalorder %s114, %s115
    %p127 = scmp.eq.s32.totalorder %s21, 1
    %p128 = por %p126, %p127
    %p130 = scmp.ne.s32.totalorder %s115, %s129
    %p131 = scmp.eq.s32.totalorder %s21, 0
    %p132 = por %p130, %p131
    %s134 = sadd.s32 %s133, 1
    %p137 = scmp.eq.s32.totalorder %s15, 1
    %p138 = scmp.ne.s32.totalorder %s133, %s135
    %p139 = scmp.eq.s32.totalorder %s15, 0
    %p140 = por %p138, %p139
    %p141 = scmp.ne.s32.totalorder %s133, %s135
    %p142 = scmp.eq.s32.totalorder %s20, 1
    %p143 = por %p141, %p142
    %p144 = scmp.ne.s32.totalorder %s135, %s136
    %p145 = scmp.eq.s32.totalorder %s20, 0
    %p146 = por %p144, %p145
    %p147 = scmp.ne.s32.totalorder %s135, %s136
    %p148 = scmp.eq.s32.totalorder %s21, 1
    %p149 = por %p147, %p148
    %p151 = scmp.ne.s32.totalorder %s136, %s150
    %p152 = scmp.eq.s32.totalorder %s21, 0
    %p153 = por %p151, %p152
    %s154 = ssub.s32 %s15, %s22
    %p155 = scmp.eq.s32.totalorder %s154, 0
    %s157 = sadd.s32 %s156, 1
    %s158 = scalar_select %p155, %s156, %s157
    %p161 = pneg %p155
    %p162 = scmp.eq.s32.totalorder %s15, 1
    %p163 = por %p161, %p162
    %p164 = scmp.ne.s32.totalorder %s156, %s159
    %p165 = scmp.eq.s32.totalorder %s15, 0
    %p166 = por %p164, %p165
    %p167 = scmp.ne.s32.totalorder %s156, %s159
    %p168 = scmp.eq.s32.totalorder %s20, 1
    %p169 = por %p167, %p168
    %p170 = scmp.ne.s32.totalorder %s159, %s160
    %p171 = scmp.eq.s32.totalorder %s20, 0
    %p172 = por %p170, %p171
    %p173 = scmp.ne.s32.totalorder %s159, %s160
    %p174 = scmp.eq.s32.totalorder %s21, 1
    %p175 = por %p173, %p174
    %p177 = scmp.ne.s32.totalorder %s160, %s176
    %p178 = scmp.eq.s32.totalorder %s21, 0
    %p179 = por %p177, %p178
    %s180 = ssub.s32 %s15, %s22
    %p181 = scmp.eq.s32.totalorder %s180, 0
    %s183 = sadd.s32 %s182, 1
    %s184 = scalar_select %p181, %s182, %s183
    %p187 = pneg %p181
    %p188 = scmp.eq.s32.totalorder %s15, 1
    %p189 = por %p187, %p188
    %p190 = scmp.ne.s32.totalorder %s182, %s185
    %p191 = scmp.eq.s32.totalorder %s15, 0
    %p192 = por %p190, %p191
    %p193 = scmp.ne.s32.totalorder %s182, %s185
    %p194 = scmp.eq.s32.totalorder %s20, 1
    %p195 = por %p193, %p194
    %p196 = scmp.ne.s32.totalorder %s185, %s186
    %p197 = scmp.eq.s32.totalorder %s20, 0
    %p198 = por %p196, %p197
    %p199 = scmp.ne.s32.totalorder %s185, %s186
    %p200 = scmp.eq.s32.totalorder %s21, 1
    %p201 = por %p199, %p200
    %p203 = scmp.ne.s32.totalorder %s186, %s202
    %p204 = scmp.eq.s32.totalorder %s21, 0
    %p205 = por %p203, %p204
    %s206 = ssub.s32 %s15, %s22
    %p207 = scmp.eq.s32.totalorder %s206, 0
    %s209 = sadd.s32 %s208, 1
    %s210 = scalar_select %p207, %s208, %s209
    %p213 = pneg %p207
    %p214 = scmp.eq.s32.totalorder %s15, 1
    %p215 = por %p213, %p214
    %p216 = scmp.ne.s32.totalorder %s208, %s211
    %p217 = scmp.eq.s32.totalorder %s15, 0
    %p218 = por %p216, %p217
    %p219 = scmp.ne.s32.totalorder %s208, %s211
    %p220 = scmp.eq.s32.totalorder %s20, 1
    %p221 = por %p219, %p220
    %p222 = scmp.ne.s32.totalorder %s211, %s212
    %p223 = scmp.eq.s32.totalorder %s20, 0
    %p224 = por %p222, %p223
    %p225 = scmp.ne.s32.totalorder %s211, %s212
    %p226 = scmp.eq.s32.totalorder %s21, 1
    %p227 = por %p225, %p226
    %p229 = scmp.ne.s32.totalorder %s212, %s228
    %p230 = scmp.eq.s32.totalorder %s21, 0
    %p231 = por %p229, %p230
    %p232 = scmp.le.s32.totalorder 1, %s15
    %p233 = scmp.lt.s32.totalorder %s15, 3
    %p234 = pnand %p232, %p233
    %p235 = pneg %p234
    // Predicated region
    $region9: #{residual_forward.4} parent=5 // pred_check
      _
    $region10: #{residual_forward.4} parent=5 // pred_check_branch
      %237 = sbr.rel (%p234) target = $region12
    $region11: #{residual_forward.4} parent=5 // pred_region
      %s238 = ssub.s32 %s15, 1
      // Predicated region
      $region13: #{residual_forward.4} parent=11 // pred_check
        %p239 = pneg %p62
      $region14: #{residual_forward.4} parent=11 // pred_check_branch
        %241 = sbr.rel (%p239) target = $region16
      $region15: #{residual_forward.4} parent=11 // pred_region
        _
      $region16: #{residual_forward.4} parent=11 // pred_fallthru
        _
      // Predicated region
      $region17: #{residual_forward.4} parent=11 // pred_check
        %p242 = pneg %p83
      $region18: #{residual_forward.4} parent=11 // pred_check_branch
        %244 = sbr.rel (%p242) target = $region20
      $region19: #{residual_forward.4} parent=11 // pred_region
        _
      $region20: #{residual_forward.4} parent=11 // pred_fallthru
        _
      // Predicated region
      $region21: #{residual_forward.4} parent=11 // pred_check
        %p245 = pneg %p104
      $region22: #{residual_forward.4} parent=11 // pred_check_branch
        %247 = sbr.rel (%p245) target = $region24
      $region23: #{residual_forward.4} parent=11 // pred_region
        _
      $region24: #{residual_forward.4} parent=11 // pred_fallthru
        _
      // Predicated region
      $region25: #{residual_forward.4} parent=11 // pred_check
        %p248 = pneg %p125
      $region26: #{residual_forward.4} parent=11 // pred_check_branch
        %250 = sbr.rel (%p248) target = $region28
      $region27: #{residual_forward.4} parent=11 // pred_region
        _
      $region28: #{residual_forward.4} parent=11 // pred_fallthru
        _
      // Predicated region
      $region29: #{residual_forward.4} parent=11 // pred_check
        %p251 = pneg %p146
      $region30: #{residual_forward.4} parent=11 // pred_check_branch
        %253 = sbr.rel (%p251) target = $region32
      $region31: #{residual_forward.4} parent=11 // pred_region
        _
      $region32: #{residual_forward.4} parent=11 // pred_fallthru
        _
    $region12: #{residual_forward.4} parent=5 // pred_fallthru
      _
    %p254 = scmp.lt.s32.totalorder %s15, 2
    // Predicated region
    $region33: #{residual_forward.4} parent=5 // pred_check
      %p255 = pneg %p254
    $region34: #{residual_forward.4} parent=5 // pred_check_branch
      %257 = sbr.rel (%p255) target = $region36
    $region35: #{residual_forward.4} parent=5 // pred_region
      // Predicated region
      $region37: #{residual_forward.4} parent=35 // pred_check
        %p258 = pneg %p35
      $region38: #{residual_forward.4} parent=35 // pred_check_branch
        %260 = sbr.rel (%p258) target = $region40
      $region39: #{residual_forward.4} parent=35 // pred_region
        %p261 = scmp.lt.s32.totalorder %s15, 1
        %s262 = scalar_select %p261, %s15, 1
        %s263 = smul.addr %s262, 54
        %s264 = smul.addr %s263, 4
        %s265 = scalar_lea.vmem %s0, %s264
      $region40: #{residual_forward.4} parent=35 // pred_fallthru
        _
    $region36: #{residual_forward.4} parent=5 // pred_fallthru
      _
    %p266 = scmp.le.s32.totalorder 1, %s15
    %p267 = scmp.lt.s32.totalorder %s15, 3
    %p268 = pnand %p266, %p267
    %p269 = pneg %p268
    // Predicated region
    $region41: #{residual_forward.4} parent=5 // pred_check
      _
    $region42: #{residual_forward.4} parent=5 // pred_check_branch
      %271 = sbr.rel (%p268) target = $region44
    $region43: #{residual_forward.4} parent=5 // pred_region
      %s272 = ssub.s32 %s15, 1
      %p273 = scmp.lt.s32.totalorder %s20, 1
      %s274 = scalar_select %p273, %s20, 1
      %s275 = smul.addr %s274, 54
      %s276 = smul.addr %s275, 4
      %s277 = scalar_lea.vmem %s0, %s276
      %p278 = pneg %p41
      %p279 = pneg %p38
      %p280 = pneg %p62
      %p281 = pneg %p59
      %p282 = pneg %p83
      %p283 = pneg %p80
      %p284 = pneg %p104
      %p285 = pneg %p101
      %p286 = pneg %p125
      %p287 = pneg %p122
      %p288 = pneg %p146
      %p289 = pneg %p143
      %p290 = pneg %p172
      %p291 = pneg %p169
      %p292 = scmp.lt.s32.totalorder %s20, 1
      %s293 = scalar_select %p292, %s20, 1
      %s294 = smul.addr %s293, 32
      %s295 = smul.addr %s294, 4
      %s296 = scalar_lea.vmem %s6, %s295
      %p297 = pneg %p198
      %p298 = pneg %p195
      %p299 = scmp.lt.s32.totalorder %s20, 1
      %s300 = scalar_select %p299, %s20, 1
      %s301 = scalar_lea.vmem %s7, %s300
      %p302 = pneg %p224
      %p303 = pneg %p221
      %p304 = scmp.lt.s32.totalorder %s20, 1
      %s305 = scalar_select %p304, %s20, 1
      %s306 = scalar_lea.vmem %s8, %s305
      %p307 = scmp.lt.s32.totalorder %s20, 1
      %s308 = scalar_select %p307, %s20, 1
      %s309 = smul.addr %s308, 54
      %s310 = smul.addr %s309, 4
      %s311 = scalar_lea.vmem %s0, %s310
      %p312 = scmp.lt.s32.totalorder %s20, 1
      %s313 = scalar_select %p312, %s20, 1
      %s314 = smul.addr %s313, 32
      %s315 = smul.addr %s314, 4
      %s316 = scalar_lea.vmem %s6, %s315
      %p317 = scmp.lt.s32.totalorder %s20, 1
      %s318 = scalar_select %p317, %s20, 1
      %s319 = scalar_lea.vmem %s7, %s318
      %p320 = scmp.lt.s32.totalorder %s20, 1
      %s321 = scalar_select %p320, %s20, 1
      %s322 = scalar_lea.vmem %s8, %s321
      %v324 = vld [vmem:[%s311] sm:$0xf]
      %v325 = vld [vmem:[%s311 + $0x4] sm:$0xf]
      %v326 = vld [vmem:[%s311 + $0x8] sm:$0x1]
      %v327 = vld [vmem:[%s311 + $0xc] sm:$0xf]
      %v328 = vld [vmem:[%s311 + $0x10] sm:$0xf]
      %v329 = vld [vmem:[%s311 + $0x14] sm:$0x1]
      %v330 = vld [vmem:[%s311 + $0x18] sm:$0xf]
      %v331 = vld [vmem:[%s311 + $0x1c] sm:$0xf]
      %v332 = vld [vmem:[%s311 + $0x20] sm:$0x1]
      %v333 = vld [vmem:[%s311 + $0x24] sm:$0xf]
      %v334 = vld [vmem:[%s311 + $0x28] sm:$0xf]
      %v335 = vld [vmem:[%s311 + $0x2c] sm:$0x1]
      %v336 = vld [vmem:[%s311 + $0x30] sm:$0xf]
      %v337 = vld [vmem:[%s311 + $0x34] sm:$0xf]
      %v338 = vld [vmem:[%s311 + $0x38] sm:$0x1]
      %v339 = vld [vmem:[%s311 + $0x3c] sm:$0xf]
      %v340 = vld [vmem:[%s311 + $0x40] sm:$0xf]
      %v341 = vld [vmem:[%s311 + $0x44] sm:$0x1]
      %v342 = vld [vmem:[%s311 + $0x48] sm:$0xf]
      %v343 = vld [vmem:[%s311 + $0x4c] sm:$0xf]
      %v344 = vld [vmem:[%s311 + $0x50] sm:$0x1]
      %v345 = vld [vmem:[%s311 + $0x54] sm:$0xf]
      %v346 = vld [vmem:[%s311 + $0x58] sm:$0xf]
      %v347 = vld [vmem:[%s311 + $0x5c] sm:$0x1]
      %v348 = vld [vmem:[%s311 + $0x60] sm:$0xf]
      %v349 = vld [vmem:[%s311 + $0x64] sm:$0xf]
      %v350 = vld [vmem:[%s311 + $0x68] sm:$0x1]
      %v351 = vld [vmem:[%s311 + $0x6c] sm:$0xf]
      %v352 = vld [vmem:[%s311 + $0x70] sm:$0xf]
      %v353 = vld [vmem:[%s311 + $0x74] sm:$0x1]
      %v354 = vld [vmem:[%s311 + $0x78] sm:$0xf]
      %v355 = vld [vmem:[%s311 + $0x7c] sm:$0xf]
      %v356 = vld [vmem:[%s311 + $0x80] sm:$0x1]
      %v357 = vld [vmem:[%s311 + $0x84] sm:$0xf]
      %v358 = vld [vmem:[%s311 + $0x88] sm:$0xf]
      %v359 = vld [vmem:[%s311 + $0x8c] sm:$0x1]
      %v360 = vld [vmem:[%s311 + $0x90] sm:$0xf]
      %v361 = vld [vmem:[%s311 + $0x94] sm:$0xf]
      %v362 = vld [vmem:[%s311 + $0x98] sm:$0x1]
      %v363 = vld [vmem:[%s311 + $0x9c] sm:$0xf]
      %v364 = vld [vmem:[%s311 + $0xa0] sm:$0xf]
      %v365 = vld [vmem:[%s311 + $0xa4] sm:$0x1]
      %v366 = vld [vmem:[%s311 + $0xa8] sm:$0xf]
      %v367 = vld [vmem:[%s311 + $0xac] sm:$0xf]
      %v368 = vld [vmem:[%s311 + $0xb0] sm:$0x1]
      %v369 = vld [vmem:[%s311 + $0xb4] sm:$0xf]
      %v370 = vld [vmem:[%s311 + $0xb8] sm:$0xf]
      %v371 = vld [vmem:[%s311 + $0xbc] sm:$0x1]
      %v372 = vld [vmem:[%s311 + $0xc0] sm:$0xf]
      %v373 = vld [vmem:[%s311 + $0xc4] sm:$0xf]
      %v374 = vld [vmem:[%s311 + $0xc8] sm:$0x1]
      %v375 = vld [vmem:[%s311 + $0xcc] sm:$0xf]
      %v376 = vld [vmem:[%s311 + $0xd0] sm:$0xf]
      %v377 = vld [vmem:[%s311 + $0xd4] sm:$0x1]
      %v378 = vunpack.c.l.bf16 %v324
      %v379 = vunpack.c.l.bf16 %v325
      %v380 = vunpack.c.l.bf16 %v326
      %v381 = vunpack.c.l.bf16 %v327
      %v382 = vunpack.c.l.bf16 %v328
      %v383 = vunpack.c.l.bf16 %v329
      %v384 = vunpack.c.l.bf16 %v330
      %v385 = vunpack.c.l.bf16 %v331
      %v386 = vunpack.c.l.bf16 %v332
      %v387 = vunpack.c.l.bf16 %v333
      %v388 = vunpack.c.l.bf16 %v334
      %v389 = vunpack.c.l.bf16 %v335
      %v390 = vunpack.c.l.bf16 %v336
      %v391 = vunpack.c.l.bf16 %v337
      %v392 = vunpack.c.l.bf16 %v338
      %v393 = vunpack.c.l.bf16 %v339
      %v394 = vunpack.c.l.bf16 %v340
      %v395 = vunpack.c.l.bf16 %v341
      %v396 = vunpack.c.l.bf16 %v342
      %v397 = vunpack.c.l.bf16 %v343
      %v398 = vunpack.c.l.bf16 %v344
      %v399 = vunpack.c.l.bf16 %v345
      %v400 = vunpack.c.l.bf16 %v346
      %v401 = vunpack.c.l.bf16 %v347
      %v402 = vunpack.c.l.bf16 %v348
      %v403 = vunpack.c.l.bf16 %v349
      %v404 = vunpack.c.l.bf16 %v350
      %v405 = vunpack.c.l.bf16 %v351
      %v406 = vunpack.c.l.bf16 %v352
      %v407 = vunpack.c.l.bf16 %v353
      %v408 = vunpack.c.l.bf16 %v354
      %v409 = vunpack.c.l.bf16 %v355
      %v410 = vunpack.c.l.bf16 %v356
      %v411 = vunpack.c.l.bf16 %v357
      %v412 = vunpack.c.l.bf16 %v358
      %v413 = vunpack.c.l.bf16 %v359
      %v414 = vunpack.c.l.bf16 %v360
      %v415 = vunpack.c.l.bf16 %v361
      %v416 = vunpack.c.l.bf16 %v362
      %v417 = vunpack.c.l.bf16 %v363
      %v418 = vunpack.c.l.bf16 %v364
      %v419 = vunpack.c.l.bf16 %v365
      %v420 = vunpack.c.l.bf16 %v366
      %v421 = vunpack.c.l.bf16 %v367
      %v422 = vunpack.c.l.bf16 %v368
      %v423 = vunpack.c.l.bf16 %v369
      %v424 = vunpack.c.l.bf16 %v370
      %v425 = vunpack.c.l.bf16 %v371
      %v426 = vunpack.c.l.bf16 %v372
      %v427 = vunpack.c.l.bf16 %v373
      %v428 = vunpack.c.l.bf16 %v374
      %v429 = vunpack.c.l.bf16 %v375
      %v430 = vunpack.c.l.bf16 %v376
      %v431 = vunpack.c.l.bf16 %v377
      %v432 = vld [vmem:[%s3] sm:$0x1]
      %v434 = vlaneseq
      %v435 = vshrl.u32 %v434, 7
      %v436 = vsub.s32 0, %v435
      %v437 = vrot.slane %v432, %v436
      %v439 = vmul.f32 %v378, %v437
      %v440 = vmul.f32 %v379, %v437
      %v441 = vmul.f32 %v380, %v437
      %v442 = vmul.f32 %v381, %v437
      %v443 = vmul.f32 %v382, %v437
      %v444 = vmul.f32 %v383, %v437
      %v445 = vmul.f32 %v384, %v437
      %v446 = vmul.f32 %v385, %v437
      %v447 = vmul.f32 %v386, %v437
      %v448 = vmul.f32 %v387, %v437
      %v449 = vmul.f32 %v388, %v437
      %v450 = vmul.f32 %v389, %v437
      %v451 = vmul.f32 %v390, %v437
      %v452 = vmul.f32 %v391, %v437
      %v453 = vmul.f32 %v392, %v437
      %v454 = vmul.f32 %v393, %v437
      %v455 = vmul.f32 %v394, %v437
      %v456 = vmul.f32 %v395, %v437
      %v457 = vmul.f32 %v396, %v437
      %v458 = vmul.f32 %v397, %v437
      %v459 = vmul.f32 %v398, %v437
      %v460 = vmul.f32 %v399, %v437
      %v461 = vmul.f32 %v400, %v437
      %v462 = vmul.f32 %v401, %v437
      %v463 = vmul.f32 %v402, %v437
      %v464 = vmul.f32 %v403, %v437
      %v465 = vmul.f32 %v404, %v437
      %v466 = vmul.f32 %v405, %v437
      %v467 = vmul.f32 %v406, %v437
      %v468 = vmul.f32 %v407, %v437
      %v469 = vmul.f32 %v408, %v437
      %v470 = vmul.f32 %v409, %v437
      %v471 = vmul.f32 %v410, %v437
      %v472 = vmul.f32 %v411, %v437
      %v473 = vmul.f32 %v412, %v437
      %v474 = vmul.f32 %v413, %v437
      %v475 = vmul.f32 %v414, %v437
      %v476 = vmul.f32 %v415, %v437
      %v477 = vmul.f32 %v416, %v437
      %v478 = vmul.f32 %v417, %v437
      %v479 = vmul.f32 %v418, %v437
      %v480 = vmul.f32 %v419, %v437
      %v481 = vmul.f32 %v420, %v437
      %v482 = vmul.f32 %v421, %v437
      %v483 = vmul.f32 %v422, %v437
      %v484 = vmul.f32 %v423, %v437
      %v485 = vmul.f32 %v424, %v437
      %v486 = vmul.f32 %v425, %v437
      %v487 = vmul.f32 %v426, %v437
      %v488 = vmul.f32 %v427, %v437
      %v489 = vmul.f32 %v428, %v437
      %v490 = vmul.f32 %v429, %v437
      %v491 = vmul.f32 %v430, %v437
      %v492 = vmul.f32 %v431, %v437
      %v493 = vld [vmem:[%s4] sm:$0x1]
      %v495 = vlaneseq
      %v496 = vshrl.u32 %v495, 7
      %v497 = vsub.s32 0, %v496
      %v498 = vrot.slane %v493, %v497
      %v500 = vadd.f32 %v439, %v498
      %v501 = vadd.f32 %v440, %v498
      %v502 = vadd.f32 %v441, %v498
      %v503 = vadd.f32 %v442, %v498
      %v504 = vadd.f32 %v443, %v498
      %v505 = vadd.f32 %v444, %v498
      %v506 = vadd.f32 %v445, %v498
      %v507 = vadd.f32 %v446, %v498
      %v508 = vadd.f32 %v447, %v498
      %v509 = vadd.f32 %v448, %v498
      %v510 = vadd.f32 %v449, %v498
      %v511 = vadd.f32 %v450, %v498
      %v512 = vadd.f32 %v451, %v498
      %v513 = vadd.f32 %v452, %v498
      %v514 = vadd.f32 %v453, %v498
      %v515 = vadd.f32 %v454, %v498
      %v516 = vadd.f32 %v455, %v498
      %v517 = vadd.f32 %v456, %v498
      %v518 = vadd.f32 %v457, %v498
      %v519 = vadd.f32 %v458, %v498
      %v520 = vadd.f32 %v459, %v498
      %v521 = vadd.f32 %v460, %v498
      %v522 = vadd.f32 %v461, %v498
      %v523 = vadd.f32 %v462, %v498
      %v524 = vadd.f32 %v463, %v498
      %v525 = vadd.f32 %v464, %v498
      %v526 = vadd.f32 %v465, %v498
      %v527 = vadd.f32 %v466, %v498
      %v528 = vadd.f32 %v467, %v498
      %v529 = vadd.f32 %v468, %v498
      %v530 = vadd.f32 %v469, %v498
      %v531 = vadd.f32 %v470, %v498
      %v532 = vadd.f32 %v471, %v498
      %v533 = vadd.f32 %v472, %v498
      %v534 = vadd.f32 %v473, %v498
      %v535 = vadd.f32 %v474, %v498
      %v536 = vadd.f32 %v475, %v498
      %v537 = vadd.f32 %v476, %v498
      %v538 = vadd.f32 %v477, %v498
      %v539 = vadd.f32 %v478, %v498
      %v540 = vadd.f32 %v479, %v498
      %v541 = vadd.f32 %v480, %v498
      %v542 = vadd.f32 %v481, %v498
      %v543 = vadd.f32 %v482, %v498
      %v544 = vadd.f32 %v483, %v498
      %v545 = vadd.f32 %v484, %v498
      %v546 = vadd.f32 %v485, %v498
      %v547 = vadd.f32 %v486, %v498
      %v548 = vadd.f32 %v487, %v498
      %v549 = vadd.f32 %v488, %v498
      %v550 = vadd.f32 %v489, %v498
      %v551 = vadd.f32 %v490, %v498
      %v552 = vadd.f32 %v491, %v498
      %v553 = vadd.f32 %v492, %v498
      %v554 = vmax.f32 %v500, 0.0
      %v555 = vmax.f32 %v501, 0.0
      %v556 = vmax.f32 %v502, 0.0
      %v557 = vmax.f32 %v503, 0.0
      %v558 = vmax.f32 %v504, 0.0
      %v559 = vmax.f32 %v505, 0.0
      %v560 = vmax.f32 %v506, 0.0
      %v561 = vmax.f32 %v507, 0.0
      %v562 = vmax.f32 %v508, 0.0
      %v563 = vmax.f32 %v509, 0.0
      %v564 = vmax.f32 %v510, 0.0
      %v565 = vmax.f32 %v511, 0.0
      %v566 = vmax.f32 %v512, 0.0
      %v567 = vmax.f32 %v513, 0.0
      %v568 = vmax.f32 %v514, 0.0
      %v569 = vmax.f32 %v515, 0.0
      %v570 = vmax.f32 %v516, 0.0
      %v571 = vmax.f32 %v517, 0.0
      %v572 = vmax.f32 %v518, 0.0
      %v573 = vmax.f32 %v519, 0.0
      %v574 = vmax.f32 %v520, 0.0
      %v575 = vmax.f32 %v521, 0.0
      %v576 = vmax.f32 %v522, 0.0
      %v577 = vmax.f32 %v523, 0.0
      %v578 = vmax.f32 %v524, 0.0
      %v579 = vmax.f32 %v525, 0.0
      %v580 = vmax.f32 %v526, 0.0
      %v581 = vmax.f32 %v527, 0.0
      %v582 = vmax.f32 %v528, 0.0
      %v583 = vmax.f32 %v529, 0.0
      %v584 = vmax.f32 %v530, 0.0
      %v585 = vmax.f32 %v531, 0.0
      %v586 = vmax.f32 %v532, 0.0
      %v587 = vmax.f32 %v533, 0.0
      %v588 = vmax.f32 %v534, 0.0
      %v589 = vmax.f32 %v535, 0.0
      %v590 = vmax.f32 %v536, 0.0
      %v591 = vmax.f32 %v537, 0.0
      %v592 = vmax.f32 %v538, 0.0
      %v593 = vmax.f32 %v539, 0.0
      %v594 = vmax.f32 %v540, 0.0
      %v595 = vmax.f32 %v541, 0.0
      %v596 = vmax.f32 %v542, 0.0
      %v597 = vmax.f32 %v543, 0.0
      %v598 = vmax.f32 %v544, 0.0
      %v599 = vmax.f32 %v545, 0.0
      %v600 = vmax.f32 %v546, 0.0
      %v601 = vmax.f32 %v547, 0.0
      %v602 = vmax.f32 %v548, 0.0
      %v603 = vmax.f32 %v549, 0.0
      %v604 = vmax.f32 %v550, 0.0
      %v605 = vmax.f32 %v551, 0.0
      %v606 = vmax.f32 %v552, 0.0
      %v607 = vmax.f32 %v553, 0.0
      %v608 = vld [vmem:[%s5] sm:$0xff]
      %v609 = vld [vmem:[%s5 + $0x8] sm:$0xff]
      %v610 = vld [vmem:[%s5 + $0x10] sm:$0x3]
      %v611 = vld [vmem:[%s5 + $0x18] sm:$0xff]
      %v612 = vld [vmem:[%s5 + $0x20] sm:$0xff]
      %v613 = vld [vmem:[%s5 + $0x28] sm:$0x3]
      %v614 = vld [vmem:[%s5 + $0x30] sm:$0xff]
      %v615 = vld [vmem:[%s5 + $0x38] sm:$0xff]
      %v616 = vld [vmem:[%s5 + $0x40] sm:$0x3]
      %v617 = vld [vmem:[%s5 + $0x48] sm:$0xff]
      %v618 = vld [vmem:[%s5 + $0x50] sm:$0xff]
      %v619 = vld [vmem:[%s5 + $0x58] sm:$0x3]
      %v620 = vld [vmem:[%s5 + $0x60] sm:$0xff]
      %v621 = vld [vmem:[%s5 + $0x68] sm:$0xff]
      %v622 = vld [vmem:[%s5 + $0x70] sm:$0x3]
      %v623 = vld [vmem:[%s5 + $0x78] sm:$0xff]
      %v624 = vld [vmem:[%s5 + $0x80] sm:$0xff]
      %v625 = vld [vmem:[%s5 + $0x88] sm:$0x3]
      %v626 = vld [vmem:[%s5 + $0x90] sm:$0xff]
      %v627 = vld [vmem:[%s5 + $0x98] sm:$0xff]
      %v628 = vld [vmem:[%s5 + $0xa0] sm:$0x3]
      %v629 = vld [vmem:[%s5 + $0xa8] sm:$0xff]
      %v630 = vld [vmem:[%s5 + $0xb0] sm:$0xff]
      %v631 = vld [vmem:[%s5 + $0xb8] sm:$0x3]
      %v632 = vld [vmem:[%s5 + $0xc0] sm:$0xff]
      %v633 = vld [vmem:[%s5 + $0xc8] sm:$0xff]
      %v634 = vld [vmem:[%s5 + $0xd0] sm:$0x3]
      %v635 = vld [vmem:[%s5 + $0xd8] sm:$0xff]
      %v636 = vld [vmem:[%s5 + $0xe0] sm:$0xff]
      %v637 = vld [vmem:[%s5 + $0xe8] sm:$0x3]
      %v638 = vld [vmem:[%s5 + $0xf0] sm:$0xff]
      %v639 = vld [vmem:[%s5 + $0xf8] sm:$0xff]
      %v640 = vld [vmem:[%s5 + $0x100] sm:$0x3]
      %v641 = vld [vmem:[%s5 + $0x108] sm:$0xff]
      %v642 = vld [vmem:[%s5 + $0x110] sm:$0xff]
      %v643 = vld [vmem:[%s5 + $0x118] sm:$0x3]
      %v644 = vld [vmem:[%s5 + $0x120] sm:$0xff]
      %v645 = vld [vmem:[%s5 + $0x128] sm:$0xff]
      %v646 = vld [vmem:[%s5 + $0x130] sm:$0x3]
      %v647 = vld [vmem:[%s5 + $0x138] sm:$0xff]
      %v648 = vld [vmem:[%s5 + $0x140] sm:$0xff]
      %v649 = vld [vmem:[%s5 + $0x148] sm:$0x3]
      %v650 = vld [vmem:[%s5 + $0x150] sm:$0xff]
      %v651 = vld [vmem:[%s5 + $0x158] sm:$0xff]
      %v652 = vld [vmem:[%s5 + $0x160] sm:$0x3]
      %v653 = vld [vmem:[%s5 + $0x168] sm:$0xff]
      %v654 = vld [vmem:[%s5 + $0x170] sm:$0xff]
      %v655 = vld [vmem:[%s5 + $0x178] sm:$0x3]
      %v656 = vld [vmem:[%s5 + $0x180] sm:$0xff]
      %v657 = vld [vmem:[%s5 + $0x188] sm:$0xff]
      %v658 = vld [vmem:[%s5 + $0x190] sm:$0x3]
      %v659 = vld [vmem:[%s5 + $0x198] sm:$0xff]
      %v660 = vld [vmem:[%s5 + $0x1a0] sm:$0xff]
      %v661 = vld [vmem:[%s5 + $0x1a8] sm:$0x3]
      %663 = vset.pattern.permute.xlu0 0
      %664 = vperm.xlu0 %663, %v608
      %v665 = vpop.permute.xlu0 %664
      %668 = vset.pattern.permute.xlu0 0
      %669 = vperm.xlu0 %668, %v609
      %v670 = vpop.permute.xlu0 %669
      %673 = vset.pattern.permute.xlu0 0
      %674 = vperm.xlu0 %673, %v610
      %v675 = vpop.permute.xlu0 %674
      %678 = vset.pattern.permute.xlu0 0
      %679 = vperm.xlu0 %678, %v611
      %v680 = vpop.permute.xlu0 %679
      %683 = vset.pattern.permute.xlu0 0
      %684 = vperm.xlu0 %683, %v612
      %v685 = vpop.permute.xlu0 %684
      %688 = vset.pattern.permute.xlu0 0
      %689 = vperm.xlu0 %688, %v613
      %v690 = vpop.permute.xlu0 %689
      %693 = vset.pattern.permute.xlu0 0
      %694 = vperm.xlu0 %693, %v614
      %v695 = vpop.permute.xlu0 %694
      %698 = vset.pattern.permute.xlu0 0
      %699 = vperm.xlu0 %698, %v615
      %v700 = vpop.permute.xlu0 %699
      %703 = vset.pattern.permute.xlu0 0
      %704 = vperm.xlu0 %703, %v616
      %v705 = vpop.permute.xlu0 %704
      %708 = vset.pattern.permute.xlu0 0
      %709 = vperm.xlu0 %708, %v617
      %v710 = vpop.permute.xlu0 %709
      %713 = vset.pattern.permute.xlu0 0
      %714 = vperm.xlu0 %713, %v618
      %v715 = vpop.permute.xlu0 %714
      %718 = vset.pattern.permute.xlu0 0
      %719 = vperm.xlu0 %718, %v619
      %v720 = vpop.permute.xlu0 %719
      %723 = vset.pattern.permute.xlu0 0
      %724 = vperm.xlu0 %723, %v620
      %v725 = vpop.permute.xlu0 %724
      %728 = vset.pattern.permute.xlu0 0
      %729 = vperm.xlu0 %728, %v621
      %v730 = vpop.permute.xlu0 %729
      %733 = vset.pattern.permute.xlu0 0
      %734 = vperm.xlu0 %733, %v622
      %v735 = vpop.permute.xlu0 %734
      %738 = vset.pattern.permute.xlu0 0
      %739 = vperm.xlu0 %738, %v623
      %v740 = vpop.permute.xlu0 %739
      %743 = vset.pattern.permute.xlu0 0
      %744 = vperm.xlu0 %743, %v624
      %v745 = vpop.permute.xlu0 %744
      %748 = vset.pattern.permute.xlu0 0
      %749 = vperm.xlu0 %748, %v625
      %v750 = vpop.permute.xlu0 %749
      %753 = vset.pattern.permute.xlu0 0
      %754 = vperm.xlu0 %753, %v626
      %v755 = vpop.permute.xlu0 %754
      %758 = vset.pattern.permute.xlu0 0
      %759 = vperm.xlu0 %758, %v627
      %v760 = vpop.permute.xlu0 %759
      %763 = vset.pattern.permute.xlu0 0
      %764 = vperm.xlu0 %763, %v628
      %v765 = vpop.permute.xlu0 %764
      %768 = vset.pattern.permute.xlu0 0
      %769 = vperm.xlu0 %768, %v629
      %v770 = vpop.permute.xlu0 %769
      %773 = vset.pattern.permute.xlu0 0
      %774 = vperm.xlu0 %773, %v630
      %v775 = vpop.permute.xlu0 %774
      %778 = vset.pattern.permute.xlu0 0
      %779 = vperm.xlu0 %778, %v631
      %v780 = vpop.permute.xlu0 %779
      %783 = vset.pattern.permute.xlu0 0
      %784 = vperm.xlu0 %783, %v632
      %v785 = vpop.permute.xlu0 %784
      %788 = vset.pattern.permute.xlu0 0
      %789 = vperm.xlu0 %788, %v633
      %v790 = vpop.permute.xlu0 %789
      %793 = vset.pattern.permute.xlu0 0
      %794 = vperm.xlu0 %793, %v634
      %v795 = vpop.permute.xlu0 %794
      %798 = vset.pattern.permute.xlu0 0
      %799 = vperm.xlu0 %798, %v635
      %v800 = vpop.permute.xlu0 %799
      %803 = vset.pattern.permute.xlu0 0
      %804 = vperm.xlu0 %803, %v636
      %v805 = vpop.permute.xlu0 %804
      %808 = vset.pattern.permute.xlu0 0
      %809 = vperm.xlu0 %808, %v637
      %v810 = vpop.permute.xlu0 %809
      %813 = vset.pattern.permute.xlu0 0
      %814 = vperm.xlu0 %813, %v638
      %v815 = vpop.permute.xlu0 %814
      %818 = vset.pattern.permute.xlu0 0
      %819 = vperm.xlu0 %818, %v639
      %v820 = vpop.permute.xlu0 %819
      %823 = vset.pattern.permute.xlu0 0
      %824 = vperm.xlu0 %823, %v640
      %v825 = vpop.permute.xlu0 %824
      %828 = vset.pattern.permute.xlu0 0
      %829 = vperm.xlu0 %828, %v641
      %v830 = vpop.permute.xlu0 %829
      %833 = vset.pattern.permute.xlu0 0
      %834 = vperm.xlu0 %833, %v642
      %v835 = vpop.permute.xlu0 %834
      %838 = vset.pattern.permute.xlu0 0
      %839 = vperm.xlu0 %838, %v643
      %v840 = vpop.permute.xlu0 %839
      %843 = vset.pattern.permute.xlu0 0
      %844 = vperm.xlu0 %843, %v644
      %v845 = vpop.permute.xlu0 %844
      %848 = vset.pattern.permute.xlu0 0
      %849 = vperm.xlu0 %848, %v645
      %v850 = vpop.permute.xlu0 %849
      %853 = vset.pattern.permute.xlu0 0
      %854 = vperm.xlu0 %853, %v646
      %v855 = vpop.permute.xlu0 %854
      %858 = vset.pattern.permute.xlu0 0
      %859 = vperm.xlu0 %858, %v647
      %v860 = vpop.permute.xlu0 %859
      %863 = vset.pattern.permute.xlu0 0
      %864 = vperm.xlu0 %863, %v648
      %v865 = vpop.permute.xlu0 %864
      %868 = vset.pattern.permute.xlu0 0
      %869 = vperm.xlu0 %868, %v649
      %v870 = vpop.permute.xlu0 %869
      %873 = vset.pattern.permute.xlu0 0
      %874 = vperm.xlu0 %873, %v650
      %v875 = vpop.permute.xlu0 %874
      %878 = vset.pattern.permute.xlu0 0
      %879 = vperm.xlu0 %878, %v651
      %v880 = vpop.permute.xlu0 %879
      %883 = vset.pattern.permute.xlu0 0
      %884 = vperm.xlu0 %883, %v652
      %v885 = vpop.permute.xlu0 %884
      %888 = vset.pattern.permute.xlu0 0
      %889 = vperm.xlu0 %888, %v653
      %v890 = vpop.permute.xlu0 %889
      %893 = vset.pattern.permute.xlu0 0
      %894 = vperm.xlu0 %893, %v654
      %v895 = vpop.permute.xlu0 %894
      %898 = vset.pattern.permute.xlu0 0
      %899 = vperm.xlu0 %898, %v655
      %v900 = vpop.permute.xlu0 %899
      %903 = vset.pattern.permute.xlu0 0
      %904 = vperm.xlu0 %903, %v656
      %v905 = vpop.permute.xlu0 %904
      %908 = vset.pattern.permute.xlu0 0
      %909 = vperm.xlu0 %908, %v657
      %v910 = vpop.permute.xlu0 %909
      %913 = vset.pattern.permute.xlu0 0
      %914 = vperm.xlu0 %913, %v658
      %v915 = vpop.permute.xlu0 %914
      %918 = vset.pattern.permute.xlu0 0
      %919 = vperm.xlu0 %918, %v659
      %v920 = vpop.permute.xlu0 %919
      %923 = vset.pattern.permute.xlu0 0
      %924 = vperm.xlu0 %923, %v660
      %v925 = vpop.permute.xlu0 %924
      %928 = vset.pattern.permute.xlu0 0
      %929 = vperm.xlu0 %928, %v661
      %v930 = vpop.permute.xlu0 %929
      %v932 = vmul.f32 %v554, %v665
      %v933 = vmul.f32 %v555, %v670
      %v934 = vmul.f32 %v556, %v675
      %v935 = vmul.f32 %v557, %v680
      %v936 = vmul.f32 %v558, %v685
      %v937 = vmul.f32 %v559, %v690
      %v938 = vmul.f32 %v560, %v695
      %v939 = vmul.f32 %v561, %v700
      %v940 = vmul.f32 %v562, %v705
      %v941 = vmul.f32 %v563, %v710
      %v942 = vmul.f32 %v564, %v715
      %v943 = vmul.f32 %v565, %v720
      %v944 = vmul.f32 %v566, %v725
      %v945 = vmul.f32 %v567, %v730
      %v946 = vmul.f32 %v568, %v735
      %v947 = vmul.f32 %v569, %v740
      %v948 = vmul.f32 %v570, %v745
      %v949 = vmul.f32 %v571, %v750
      %v950 = vmul.f32 %v572, %v755
      %v951 = vmul.f32 %v573, %v760
      %v952 = vmul.f32 %v574, %v765
      %v953 = vmul.f32 %v575, %v770
      %v954 = vmul.f32 %v576, %v775
      %v955 = vmul.f32 %v577, %v780
      %v956 = vmul.f32 %v578, %v785
      %v957 = vmul.f32 %v579, %v790
      %v958 = vmul.f32 %v580, %v795
      %v959 = vmul.f32 %v581, %v800
      %v960 = vmul.f32 %v582, %v805
      %v961 = vmul.f32 %v583, %v810
      %v962 = vmul.f32 %v584, %v815
      %v963 = vmul.f32 %v585, %v820
      %v964 = vmul.f32 %v586, %v825
      %v965 = vmul.f32 %v587, %v830
      %v966 = vmul.f32 %v588, %v835
      %v967 = vmul.f32 %v589, %v840
      %v968 = vmul.f32 %v590, %v845
      %v969 = vmul.f32 %v591, %v850
      %v970 = vmul.f32 %v592, %v855
      %v971 = vmul.f32 %v593, %v860
      %v972 = vmul.f32 %v594, %v865
      %v973 = vmul.f32 %v595, %v870
      %v974 = vmul.f32 %v596, %v875
      %v975 = vmul.f32 %v597, %v880
      %v976 = vmul.f32 %v598, %v885
      %v977 = vmul.f32 %v599, %v890
      %v978 = vmul.f32 %v600, %v895
      %v979 = vmul.f32 %v601, %v900
      %v980 = vmul.f32 %v602, %v905
      %v981 = vmul.f32 %v603, %v910
      %v982 = vmul.f32 %v604, %v915
      %v983 = vmul.f32 %v605, %v920
      %v984 = vmul.f32 %v606, %v925
      %v985 = vmul.f32 %v607, %v930
      %v986 = vpack.c.bf16 %v933, %v932
      %v987 = vpack.c.bf16 %v934, %v934
      %v988 = vpack.c.bf16 %v936, %v935
      %v989 = vpack.c.bf16 %v937, %v937
      %v990 = vpack.c.bf16 %v939, %v938
      %v991 = vpack.c.bf16 %v940, %v940
      %v992 = vpack.c.bf16 %v942, %v941
      %v993 = vpack.c.bf16 %v943, %v943
      %v994 = vpack.c.bf16 %v945, %v944
      %v995 = vpack.c.bf16 %v946, %v946
      %v996 = vpack.c.bf16 %v948, %v947
      %v997 = vpack.c.bf16 %v949, %v949
      %v998 = vpack.c.bf16 %v951, %v950
      %v999 = vpack.c.bf16 %v952, %v952
      %v1000 = vpack.c.bf16 %v954, %v953
      %v1001 = vpack.c.bf16 %v955, %v955
      %v1002 = vpack.c.bf16 %v957, %v956
      %v1003 = vpack.c.bf16 %v958, %v958
      %v1004 = vpack.c.bf16 %v960, %v959
      %v1005 = vpack.c.bf16 %v961, %v961
      %v1006 = vpack.c.bf16 %v963, %v962
      %v1007 = vpack.c.bf16 %v964, %v964
      %v1008 = vpack.c.bf16 %v966, %v965
      %v1009 = vpack.c.bf16 %v967, %v967
      %v1010 = vpack.c.bf16 %v969, %v968
      %v1011 = vpack.c.bf16 %v970, %v970
      %v1012 = vpack.c.bf16 %v972, %v971
      %v1013 = vpack.c.bf16 %v973, %v973
      %v1014 = vpack.c.bf16 %v975, %v974
      %v1015 = vpack.c.bf16 %v976, %v976
      %v1016 = vpack.c.bf16 %v978, %v977
      %v1017 = vpack.c.bf16 %v979, %v979
      %v1018 = vpack.c.bf16 %v981, %v980
      %v1019 = vpack.c.bf16 %v982, %v982
      %v1020 = vpack.c.bf16 %v984, %v983
      %v1021 = vpack.c.bf16 %v985, %v985
      %v1022 = vld [vmem:[%s1] sm:$0x3]
      %vm1023 = vsmask.f32 7424
      %v1025 = vshrl.u32 %v986, 16
      %v1027 = vshll.u32 %v986, 16
      %v1029 = vrot.slane %v1027, 1
      %v1030 = vor.u32 %v1025, %v1029
      %v1032 = vshll.u32 %v987, 16
      %v1034 = vrot.slane %v1032, 1
      %v1035 = vsel %vm1023, %v1030, %v1034
      %v1037 = vshrl.u32 %v988, 16
      %v1039 = vshll.u32 %v988, 16
      %v1041 = vrot.slane %v1039, 1
      %v1042 = vor.u32 %v1037, %v1041
      %v1044 = vshll.u32 %v989, 16
      %v1046 = vrot.slane %v1044, 1
      %v1047 = vsel %vm1023, %v1042, %v1046
      %v1049 = vshrl.u32 %v990, 16
      %v1051 = vshll.u32 %v990, 16
      %v1053 = vrot.slane %v1051, 1
      %v1054 = vor.u32 %v1049, %v1053
      %v1056 = vshll.u32 %v991, 16
      %v1058 = vrot.slane %v1056, 1
      %v1059 = vsel %vm1023, %v1054, %v1058
      %v1061 = vshrl.u32 %v992, 16
      %v1063 = vshll.u32 %v992, 16
      %v1065 = vrot.slane %v1063, 1
      %v1066 = vor.u32 %v1061, %v1065
      %v1068 = vshll.u32 %v993, 16
      %v1070 = vrot.slane %v1068, 1
      %v1071 = vsel %vm1023, %v1066, %v1070
      %v1073 = vshrl.u32 %v994, 16
      %v1075 = vshll.u32 %v994, 16
      %v1077 = vrot.slane %v1075, 1
      %v1078 = vor.u32 %v1073, %v1077
      %v1080 = vshll.u32 %v995, 16
      %v1082 = vrot.slane %v1080, 1
      %v1083 = vsel %vm1023, %v1078, %v1082
      %v1085 = vshrl.u32 %v996, 16
      %v1087 = vshll.u32 %v996, 16
      %v1089 = vrot.slane %v1087, 1
      %v1090 = vor.u32 %v1085, %v1089
      %v1092 = vshll.u32 %v997, 16
      %v1094 = vrot.slane %v1092, 1
      %v1095 = vsel %vm1023, %v1090, %v1094
      %v1097 = vshrl.u32 %v998, 16
      %v1099 = vshll.u32 %v998, 16
      %v1101 = vrot.slane %v1099, 1
      %v1102 = vor.u32 %v1097, %v1101
      %v1104 = vshll.u32 %v999, 16
      %v1106 = vrot.slane %v1104, 1
      %v1107 = vsel %vm1023, %v1102, %v1106
      %v1109 = vshrl.u32 %v1000, 16
      %v1111 = vshll.u32 %v1000, 16
      %v1113 = vrot.slane %v1111, 1
      %v1114 = vor.u32 %v1109, %v1113
      %v1116 = vshll.u32 %v1001, 16
      %v1118 = vrot.slane %v1116, 1
      %v1119 = vsel %vm1023, %v1114, %v1118
      %v1121 = vshrl.u32 %v1002, 16
      %v1123 = vshll.u32 %v1002, 16
      %v1125 = vrot.slane %v1123, 1
      %v1126 = vor.u32 %v1121, %v1125
      %v1128 = vshll.u32 %v1003, 16
      %v1130 = vrot.slane %v1128, 1
      %v1131 = vsel %vm1023, %v1126, %v1130
      %v1133 = vshrl.u32 %v1004, 16
      %v1135 = vshll.u32 %v1004, 16
      %v1137 = vrot.slane %v1135, 1
      %v1138 = vor.u32 %v1133, %v1137
      %v1140 = vshll.u32 %v1005, 16
      %v1142 = vrot.slane %v1140, 1
      %v1143 = vsel %vm1023, %v1138, %v1142
      %v1145 = vshrl.u32 %v1006, 16
      %v1147 = vshll.u32 %v1006, 16
      %v1149 = vrot.slane %v1147, 1
      %v1150 = vor.u32 %v1145, %v1149
      %v1152 = vshll.u32 %v1007, 16
      %v1154 = vrot.slane %v1152, 1
      %v1155 = vsel %vm1023, %v1150, %v1154
      %v1157 = vshrl.u32 %v1008, 16
      %v1159 = vshll.u32 %v1008, 16
      %v1161 = vrot.slane %v1159, 1
      %v1162 = vor.u32 %v1157, %v1161
      %v1164 = vshll.u32 %v1009, 16
      %v1166 = vrot.slane %v1164, 1
      %v1167 = vsel %vm1023, %v1162, %v1166
      %v1169 = vshrl.u32 %v1010, 16
      %v1171 = vshll.u32 %v1010, 16
      %v1173 = vrot.slane %v1171, 1
      %v1174 = vor.u32 %v1169, %v1173
      %v1176 = vshll.u32 %v1011, 16
      %v1178 = vrot.slane %v1176, 1
      %v1179 = vsel %vm1023, %v1174, %v1178
      %v1181 = vshrl.u32 %v1012, 16
      %v1183 = vshll.u32 %v1012, 16
      %v1185 = vrot.slane %v1183, 1
      %v1186 = vor.u32 %v1181, %v1185
      %v1188 = vshll.u32 %v1013, 16
      %v1190 = vrot.slane %v1188, 1
      %v1191 = vsel %vm1023, %v1186, %v1190
      %v1193 = vshrl.u32 %v1014, 16
      %v1195 = vshll.u32 %v1014, 16
      %v1197 = vrot.slane %v1195, 1
      %v1198 = vor.u32 %v1193, %v1197
      %v1200 = vshll.u32 %v1015, 16
      %v1202 = vrot.slane %v1200, 1
      %v1203 = vsel %vm1023, %v1198, %v1202
      %v1205 = vshrl.u32 %v1016, 16
      %v1207 = vshll.u32 %v1016, 16
      %v1209 = vrot.slane %v1207, 1
      %v1210 = vor.u32 %v1205, %v1209
      %v1212 = vshll.u32 %v1017, 16
      %v1214 = vrot.slane %v1212, 1
      %v1215 = vsel %vm1023, %v1210, %v1214
      %s1216 = scalar_lea.vmem %s1, 2
      %v1217 = vld [vmem:[%s1216] sm:$0x3]
      %vm1218 = vcmask 31744
      %v1220 = vsel %vm1218, %v1035, 0
      %v1223 = vsel %vm1218, %v1047, 0
      %v1226 = vsel %vm1218, %v1059, 0
      %v1229 = vsel %vm1218, %v1071, 0
      %v1232 = vsel %vm1218, %v1083, 0
      %v1235 = vsel %vm1218, %v1095, 0
      %v1238 = vsel %vm1218, %v1107, 0
      %v1241 = vsel %vm1218, %v1119, 0
      %v1244 = vsel %vm1218, %v1131, 0
      %v1247 = vsel %vm1218, %v1143, 0
      %v1250 = vsel %vm1218, %v1155, 0
      %v1253 = vsel %vm1218, %v1167, 0
      %v1256 = vsel %vm1218, %v1179, 0
      %v1259 = vsel %vm1218, %v1191, 0
      %v1262 = vsel %vm1218, %v1203, 0
      %v1265 = vsel %vm1218, %v1215, 0
      %vm1267 = vcmask 1041408
      %v1269 = vsel %vm1267, %v1217, 0
      %1271 = vmatprep.subr.bf16.mxu0 0
      %1272 = vmatpush1.bf16.msra.mxu0 %v1269
      %1273 = vmatprep.subr.bf16.mxu0 0
      %1274 = vmatpush1.bf16.msra.mxu0 0
      %1275 = vmatprep.subr.bf16.mxu0 0
      %1276 = vmatpush1.bf16.msra.mxu0 0
      %1277 = vmatprep.subr.bf16.mxu0 0
      %1278 = vmatpush1.bf16.msra.mxu0 0
      %1279 = vmatprep.subr.bf16.mxu0 0
      %1280 = vmatpush1.bf16.msra.mxu0 0
      %1281 = vmatprep.subr.bf16.mxu0 0
      %1282 = vmatpush1.bf16.msra.mxu0 0
      %1283 = vmatprep.subr.bf16.mxu0 0
      %1284 = vmatpush1.bf16.msra.mxu0 0
      %1285 = vmatprep.subr.bf16.mxu0 0
      %1286 = vmatpush1.bf16.msra.mxu0 0
      %1287 = vmatprep.subr.bf16.mxu0 0
      %1288 = vmatpush1.bf16.msra.mxu0 0
      %1289 = vmatprep.subr.bf16.mxu0 0
      %1290 = vmatpush1.bf16.msra.mxu0 0
      %1291 = vmatprep.subr.bf16.mxu0 0
      %1292 = vmatpush1.bf16.msra.mxu0 0
      %1293 = vmatprep.subr.bf16.mxu0 0
      %1294 = vmatpush1.bf16.msra.mxu0 0
      %1295 = vmatprep.subr.bf16.mxu0 0
      %1296 = vmatpush1.bf16.msra.mxu0 0
      %1297 = vmatprep.subr.bf16.mxu0 0
      %1298 = vmatpush1.bf16.msra.mxu0 0
      %1299 = vmatprep.subr.bf16.mxu0 0
      %1300 = vmatpush1.bf16.msra.mxu0 0
      %1301 = vmatprep.subr.bf16.mxu0 0
      %1302 = vmatpush1.bf16.msra.mxu0 0
      %1303 = vmatprep.mubr.bf16.mxu0 0
      %1304 = vmatmul.mubr.bf16.gmra.mrb[0].mxu0 %v1220
      %v1305 = vpop.f32.mrb[0].mxu0
      %v1306 = vadd.f32 0.0, %v1305
      %v1307 = vpop.f32.mrb[0].mxu0
      %v1308 = vpop.f32.mrb[0].mxu0
      %v1309 = vadd.f32 0.0, %v1308
      %v1310 = vpop.f32.mrb[0].mxu0
      %1311 = vmatprep.mubr.bf16.mxu0 0
      %1312 = vmatmul.mubr.bf16.gmra.mrb[0].mxu0 %v1223
      %v1313 = vpop.f32.mrb[0].mxu0
      %v1314 = vadd.f32 0.0, %v1313
      %v1315 = vpop.f32.mrb[0].mxu0
      %v1316 = vpop.f32.mrb[0].mxu0
      %v1317 = vadd.f32 0.0, %v1316
      %v1318 = vpop.f32.mrb[0].mxu0
      %1319 = vmatprep.mubr.bf16.mxu0 0
      %1320 = vmatmul.mubr.bf16.gmra.mrb[0].mxu0 %v1226
      %v1321 = vpop.f32.mrb[0].mxu0
      %v1322 = vadd.f32 0.0, %v1321
      %v1323 = vpop.f32.mrb[0].mxu0
      %v1324 = vpop.f32.mrb[0].mxu0
      %v1325 = vadd.f32 0.0, %v1324
      %v1326 = vpop.f32.mrb[0].mxu0
      %1327 = vmatprep.mubr.bf16.mxu0 0
      %1328 = vmatmul.mubr.bf16.gmra.mrb[0].mxu0 %v1229
      %v1329 = vpop.f32.mrb[0].mxu0
      %v1330 = vadd.f32 0.0, %v1329
      %v1331 = vpop.f32.mrb[0].mxu0
      %v1332 = vpop.f32.mrb[0].mxu0
      %v1333 = vadd.f32 0.0, %v1332
      %v1334 = vpop.f32.mrb[0].mxu0
      %1335 = vmatprep.mubr.bf16.mxu0 0
      %1336 = vmatmul.mubr.bf16.gmra.mrb[0].mxu0 %v1232
      %v1337 = vpop.f32.mrb[0].mxu0
      %v1338 = vadd.f32 0.0, %v1337
      %v1339 = vpop.f32.mrb[0].mxu0
      %v1340 = vpop.f32.mrb[0].mxu0
      %v1341 = vadd.f32 0.0, %v1340
      %v1342 = vpop.f32.mrb[0].mxu0
      %1343 = vmatprep.mubr.bf16.mxu0 0
      %1344 = vmatmul.mubr.bf16.gmra.mrb[0].mxu0 %v1235
      %v1345 = vpop.f32.mrb[0].mxu0
      %v1346 = vadd.f32 0.0, %v1345
      %v1347 = vpop.f32.mrb[0].mxu0
      %v1348 = vpop.f32.mrb[0].mxu0
      %v1349 = vadd.f32 0.0, %v1348
      %v1350 = vpop.f32.mrb[0].mxu0
      %1351 = vmatprep.mubr.bf16.mxu0 0
      %1352 = vmatmul.mubr.bf16.gmra.mrb[0].mxu0 %v1238
      %v1353 = vpop.f32.mrb[0].mxu0
      %v1354 = vadd.f32 0.0, %v1353
      %v1355 = vpop.f32.mrb[0].mxu0
      %v1356 = vpop.f32.mrb[0].mxu0
      %v1357 = vadd.f32 0.0, %v1356
      %v1358 = vpop.f32.mrb[0].mxu0
      %1359 = vmatprep.mubr.bf16.mxu0 0
      %1360 = vmatmul.mubr.bf16.gmra.mrb[0].mxu0 %v1241
      %v1361 = vpop.f32.mrb[0].mxu0
      %v1362 = vadd.f32 0.0, %v1361
      %v1363 = vpop.f32.mrb[0].mxu0
      %v1364 = vpop.f32.mrb[0].mxu0
      %v1365 = vadd.f32 0.0, %v1364
      %v1366 = vpop.f32.mrb[0].mxu0
      %1367 = vmatprep.mubr.bf16.mxu0 0
      %1368 = vmatmul.mubr.bf16.gmra.mrb[0].mxu0 %v1244
      %v1369 = vpop.f32.mrb[0].mxu0
      %v1370 = vadd.f32 0.0, %v1369
      %v1371 = vpop.f32.mrb[0].mxu0
      %v1372 = vpop.f32.mrb[0].mxu0
      %v1373 = vadd.f32 0.0, %v1372
      %v1374 = vpop.f32.mrb[0].mxu0
      %1375 = vmatprep.mubr.bf16.mxu0 0
      %1376 = vmatmul.mubr.bf16.gmra.mrb[0].mxu0 %v1247
      %v1377 = vpop.f32.mrb[0].mxu0
      %v1378 = vadd.f32 0.0, %v1377
      %v1379 = vpop.f32.mrb[0].mxu0
      %v1380 = vpop.f32.mrb[0].mxu0
      %v1381 = vadd.f32 0.0, %v1380
      %v1382 = vpop.f32.mrb[0].mxu0
      %1383 = vmatprep.mubr.bf16.mxu0 0
      %1384 = vmatmul.mubr.bf16.gmra.mrb[0].mxu0 %v1250
      %v1385 = vpop.f32.mrb[0].mxu0
      %v1386 = vadd.f32 0.0, %v1385
      %v1387 = vpop.f32.mrb[0].mxu0
      %v1388 = vpop.f32.mrb[0].mxu0
      %v1389 = vadd.f32 0.0, %v1388
      %v1390 = vpop.f32.mrb[0].mxu0
      %1391 = vmatprep.mubr.bf16.mxu0 0
      %1392 = vmatmul.mubr.bf16.gmra.mrb[0].mxu0 %v1253
      %v1393 = vpop.f32.mrb[0].mxu0
      %v1394 = vadd.f32 0.0, %v1393
      %v1395 = vpop.f32.mrb[0].mxu0
      %v1396 = vpop.f32.mrb[0].mxu0
      %v1397 = vadd.f32 0.0, %v1396
      %v1398 = vpop.f32.mrb[0].mxu0
      %1399 = vmatprep.mubr.bf16.mxu0 0
      %1400 = vmatmul.mubr.bf16.gmra.mrb[0].mxu0 %v1256
      %v1401 = vpop.f32.mrb[0].mxu0
      %v1402 = vadd.f32 0.0, %v1401
      %v1403 = vpop.f32.mrb[0].mxu0
      %v1404 = vpop.f32.mrb[0].mxu0
      %v1405 = vadd.f32 0.0, %v1404
      %v1406 = vpop.f32.mrb[0].mxu0
      %1407 = vmatprep.mubr.bf16.mxu0 0
      %1408 = vmatmul.mubr.bf16.gmra.mrb[0].mxu0 %v1259
      %v1409 = vpop.f32.mrb[0].mxu0
      %v1410 = vadd.f32 0.0, %v1409
      %v1411 = vpop.f32.mrb[0].mxu0
      %v1412 = vpop.f32.mrb[0].mxu0
      %v1413 = vadd.f32 0.0, %v1412
      %v1414 = vpop.f32.mrb[0].mxu0
      %1415 = vmatprep.mubr.bf16.mxu0 0
      %1416 = vmatmul.mubr.bf16.gmra.mrb[0].mxu0 %v1262
      %v1417 = vpop.f32.mrb[0].mxu0
      %v1418 = vadd.f32 0.0, %v1417
      %v1419 = vpop.f32.mrb[0].mxu0
      %v1420 = vpop.f32.mrb[0].mxu0
      %v1421 = vadd.f32 0.0, %v1420
      %v1422 = vpop.f32.mrb[0].mxu0
      %1423 = vmatprep.mubr.bf16.mxu0 0
      %1424 = vmatmul.mubr.bf16.gmra.mrb[0].mxu0 %v1265
      %v1425 = vpop.f32.mrb[0].mxu0
      %v1426 = vadd.f32 0.0, %v1425
      %v1427 = vpop.f32.mrb[0].mxu0
      %v1428 = vpop.f32.mrb[0].mxu0
      %v1429 = vadd.f32 0.0, %v1428
      %v1430 = vpop.f32.mrb[0].mxu0
      %1431 = vdwg.mxu0
      %v1432 = vsel %vm1218, %v986, 0
      %v1434 = vsel %vm1218, %v988, 0
      %v1436 = vsel %vm1218, %v990, 0
      %v1438 = vsel %vm1218, %v992, 0
      %v1440 = vsel %vm1218, %v994, 0
      %v1442 = vsel %vm1218, %v996, 0
      %v1444 = vsel %vm1218, %v998, 0
      %v1446 = vsel %vm1218, %v1000, 0
      %v1448 = vsel %vm1218, %v1002, 0
      %v1450 = vsel %vm1218, %v1004, 0
      %v1452 = vsel %vm1218, %v1006, 0
      %v1454 = vsel %vm1218, %v1008, 0
      %v1456 = vsel %vm1218, %v1010, 0
      %v1458 = vsel %vm1218, %v1012, 0
      %v1460 = vsel %vm1218, %v1014, 0
      %v1462 = vsel %vm1218, %v1016, 0
      %v1465 = vsel %vm1267, %v1022, 0
      %1467 = vmatprep.subr.bf16.mxu0 0
      %1468 = vmatpush1.bf16.msra.mxu0 %v1465
      %1469 = vmatprep.subr.bf16.mxu0 0
      %1470 = vmatpush1.bf16.msra.mxu0 0
      %1471 = vmatprep.subr.bf16.mxu0 0
      %1472 = vmatpush1.bf16.msra.mxu0 0
      %1473 = vmatprep.subr.bf16.mxu0 0
      %1474 = vmatpush1.bf16.msra.mxu0 0
      %1475 = vmatprep.subr.bf16.mxu0 0
      %1476 = vmatpush1.bf16.msra.mxu0 0
      %1477 = vmatprep.subr.bf16.mxu0 0
      %1478 = vmatpush1.bf16.msra.mxu0 0
      %1479 = vmatprep.subr.bf16.mxu0 0
      %1480 = vmatpush1.bf16.msra.mxu0 0
      %1481 = vmatprep.subr.bf16.mxu0 0
      %1482 = vmatpush1.bf16.msra.mxu0 0
      %1483 = vmatprep.subr.bf16.mxu0 0
      %1484 = vmatpush1.bf16.msra.mxu0 0
      %1485 = vmatprep.subr.bf16.mxu0 0
      %1486 = vmatpush1.bf16.msra.mxu0 0
      %1487 = vmatprep.subr.bf16.mxu0 0
      %1488 = vmatpush1.bf16.msra.mxu0 0
      %1489 = vmatprep.subr.bf16.mxu0 0
      %1490 = vmatpush1.bf16.msra.mxu0 0
      %1491 = vmatprep.subr.bf16.mxu0 0
      %1492 = vmatpush1.bf16.msra.mxu0 0
      %1493 = vmatprep.subr.bf16.mxu0 0
      %1494 = vmatpush1.bf16.msra.mxu0 0
      %1495 = vmatprep.subr.bf16.mxu0 0
      %1496 = vmatpush1.bf16.msra.mxu0 0
      %1497 = vmatprep.subr.bf16.mxu0 0
      %1498 = vmatpush1.bf16.msra.mxu0 0
      %1499 = vmatprep.mubr.bf16.mxu0 0
      %1500 = vmatmul.mubr.bf16.gmra.mrb[0].mxu0 %v1432
      %v1501 = vpop.f32.mrb[0].mxu0
      %v1502 = vadd.f32 %v1306, %v1501
      %v1503 = vpop.f32.mrb[0].mxu0
      %v1504 = vpop.f32.mrb[0].mxu0
      %v1505 = vadd.f32 %v1309, %v1504
      %v1506 = vpop.f32.mrb[0].mxu0
      %1507 = vmatprep.mubr.bf16.mxu0 0
      %1508 = vmatmul.mubr.bf16.gmra.mrb[0].mxu0 %v1434
      %v1509 = vpop.f32.mrb[0].mxu0
      %v1510 = vadd.f32 %v1314, %v1509
      %v1511 = vpop.f32.mrb[0].mxu0
      %v1512 = vpop.f32.mrb[0].mxu0
      %v1513 = vadd.f32 %v1317, %v1512
      %v1514 = vpop.f32.mrb[0].mxu0
      %1515 = vmatprep.mubr.bf16.mxu0 0
      %1516 = vmatmul.mubr.bf16.gmra.mrb[0].mxu0 %v1436
      %v1517 = vpop.f32.mrb[0].mxu0
      %v1518 = vadd.f32 %v1322, %v1517
      %v1519 = vpop.f32.mrb[0].mxu0
      %v1520 = vpop.f32.mrb[0].mxu0
      %v1521 = vadd.f32 %v1325, %v1520
      %v1522 = vpop.f32.mrb[0].mxu0
      %1523 = vmatprep.mubr.bf16.mxu0 0
      %1524 = vmatmul.mubr.bf16.gmra.mrb[0].mxu0 %v1438
      %v1525 = vpop.f32.mrb[0].mxu0
      %v1526 = vadd.f32 %v1330, %v1525
      %v1527 = vpop.f32.mrb[0].mxu0
      %v1528 = vpop.f32.mrb[0].mxu0
      %v1529 = vadd.f32 %v1333, %v1528
      %v1530 = vpop.f32.mrb[0].mxu0
      %1531 = vmatprep.mubr.bf16.mxu0 0
      %1532 = vmatmul.mubr.bf16.gmra.mrb[0].mxu0 %v1440
      %v1533 = vpop.f32.mrb[0].mxu0
      %v1534 = vadd.f32 %v1338, %v1533
      %v1535 = vpop.f32.mrb[0].mxu0
      %v1536 = vpop.f32.mrb[0].mxu0
      %v1537 = vadd.f32 %v1341, %v1536
      %v1538 = vpop.f32.mrb[0].mxu0
      %1539 = vmatprep.mubr.bf16.mxu0 0
      %1540 = vmatmul.mubr.bf16.gmra.mrb[0].mxu0 %v1442
      %v1541 = vpop.f32.mrb[0].mxu0
      %v1542 = vadd.f32 %v1346, %v1541
      %v1543 = vpop.f32.mrb[0].mxu0
      %v1544 = vpop.f32.mrb[0].mxu0
      %v1545 = vadd.f32 %v1349, %v1544
      %v1546 = vpop.f32.mrb[0].mxu0
      %1547 = vmatprep.mubr.bf16.mxu0 0
      %1548 = vmatmul.mubr.bf16.gmra.mrb[0].mxu0 %v1444
      %v1549 = vpop.f32.mrb[0].mxu0
      %v1550 = vadd.f32 %v1354, %v1549
      %v1551 = vpop.f32.mrb[0].mxu0
      %v1552 = vpop.f32.mrb[0].mxu0
      %v1553 = vadd.f32 %v1357, %v1552
      %v1554 = vpop.f32.mrb[0].mxu0
      %1555 = vmatprep.mubr.bf16.mxu0 0
      %1556 = vmatmul.mubr.bf16.gmra.mrb[0].mxu0 %v1446
      %v1557 = vpop.f32.mrb[0].mxu0
      %v1558 = vadd.f32 %v1362, %v1557
      %v1559 = vpop.f32.mrb[0].mxu0
      %v1560 = vpop.f32.mrb[0].mxu0
      %v1561 = vadd.f32 %v1365, %v1560
      %v1562 = vpop.f32.mrb[0].mxu0
      %1563 = vmatprep.mubr.bf16.mxu0 0
      %1564 = vmatmul.mubr.bf16.gmra.mrb[0].mxu0 %v1448
      %v1565 = vpop.f32.mrb[0].mxu0
      %v1566 = vadd.f32 %v1370, %v1565
      %v1567 = vpop.f32.mrb[0].mxu0
      %v1568 = vpop.f32.mrb[0].mxu0
      %v1569 = vadd.f32 %v1373, %v1568
      %v1570 = vpop.f32.mrb[0].mxu0
      %1571 = vmatprep.mubr.bf16.mxu0 0
      %1572 = vmatmul.mubr.bf16.gmra.mrb[0].mxu0 %v1450
      %v1573 = vpop.f32.mrb[0].mxu0
      %v1574 = vadd.f32 %v1378, %v1573
      %v1575 = vpop.f32.mrb[0].mxu0
      %v1576 = vpop.f32.mrb[0].mxu0
      %v1577 = vadd.f32 %v1381, %v1576
      %v1578 = vpop.f32.mrb[0].mxu0
      %1579 = vmatprep.mubr.bf16.mxu0 0
      %1580 = vmatmul.mubr.bf16.gmra.mrb[0].mxu0 %v1452
      %v1581 = vpop.f32.mrb[0].mxu0
      %v1582 = vadd.f32 %v1386, %v1581
      %v1583 = vpop.f32.mrb[0].mxu0
      %v1584 = vpop.f32.mrb[0].mxu0
      %v1585 = vadd.f32 %v1389, %v1584
      %v1586 = vpop.f32.mrb[0].mxu0
      %1587 = vmatprep.mubr.bf16.mxu0 0
      %1588 = vmatmul.mubr.bf16.gmra.mrb[0].mxu0 %v1454
      %v1589 = vpop.f32.mrb[0].mxu0
      %v1590 = vadd.f32 %v1394, %v1589
      %v1591 = vpop.f32.mrb[0].mxu0
      %v1592 = vpop.f32.mrb[0].mxu0
      %v1593 = vadd.f32 %v1397, %v1592
      %v1594 = vpop.f32.mrb[0].mxu0
      %1595 = vmatprep.mubr.bf16.mxu0 0
      %1596 = vmatmul.mubr.bf16.gmra.mrb[0].mxu0 %v1456
      %v1597 = vpop.f32.mrb[0].mxu0
      %v1598 = vadd.f32 %v1402, %v1597
      %v1599 = vpop.f32.mrb[0].mxu0
      %v1600 = vpop.f32.mrb[0].mxu0
      %v1601 = vadd.f32 %v1405, %v1600
      %v1602 = vpop.f32.mrb[0].mxu0
      %1603 = vmatprep.mubr.bf16.mxu0 0
      %1604 = vmatmul.mubr.bf16.gmra.mrb[0].mxu0 %v1458
      %v1605 = vpop.f32.mrb[0].mxu0
      %v1606 = vadd.f32 %v1410, %v1605
      %v1607 = vpop.f32.mrb[0].mxu0
      %v1608 = vpop.f32.mrb[0].mxu0
      %v1609 = vadd.f32 %v1413, %v1608
      %v1610 = vpop.f32.mrb[0].mxu0
      %1611 = vmatprep.mubr.bf16.mxu0 0
      %1612 = vmatmul.mubr.bf16.gmra.mrb[0].mxu0 %v1460
      %v1613 = vpop.f32.mrb[0].mxu0
      %v1614 = vadd.f32 %v1418, %v1613
      %v1615 = vpop.f32.mrb[0].mxu0
      %v1616 = vpop.f32.mrb[0].mxu0
      %v1617 = vadd.f32 %v1421, %v1616
      %v1618 = vpop.f32.mrb[0].mxu0
      %1619 = vmatprep.mubr.bf16.mxu0 0
      %1620 = vmatmul.mubr.bf16.gmra.mrb[0].mxu0 %v1462
      %v1621 = vpop.f32.mrb[0].mxu0
      %v1622 = vadd.f32 %v1426, %v1621
      %v1623 = vpop.f32.mrb[0].mxu0
      %v1624 = vpop.f32.mrb[0].mxu0
      %v1625 = vadd.f32 %v1429, %v1624
      %v1626 = vpop.f32.mrb[0].mxu0
      %1627 = vdwg.mxu0
      %vm1660 = vcmask 1046528
      %v1661 = vrot.slane %v986, 1
      %v1662 = vrot.slane %v987, 1
      %v1663 = vsel %vm1660, %v1661, %v1662
      %v1664 = vrot.slane %v988, 1
      %v1665 = vrot.slane %v989, 1
      %v1666 = vsel %vm1660, %v1664, %v1665
      %v1667 = vrot.slane %v990, 1
      %v1668 = vrot.slane %v991, 1
      %v1669 = vsel %vm1660, %v1667, %v1668
      %v1670 = vrot.slane %v992, 1
      %v1671 = vrot.slane %v993, 1
      %v1672 = vsel %vm1660, %v1670, %v1671
      %v1673 = vrot.slane %v994, 1
      %v1674 = vrot.slane %v995, 1
      %v1675 = vsel %vm1660, %v1673, %v1674
      %v1676 = vrot.slane %v996, 1
      %v1677 = vrot.slane %v997, 1
      %v1678 = vsel %vm1660, %v1676, %v1677
      %v1679 = vrot.slane %v998, 1
      %v1680 = vrot.slane %v999, 1
      %v1681 = vsel %vm1660, %v1679, %v1680
      %v1682 = vrot.slane %v1000, 1
      %v1683 = vrot.slane %v1001, 1
      %v1684 = vsel %vm1660, %v1682, %v1683
      %v1685 = vrot.slane %v1002, 1
      %v1686 = vrot.slane %v1003, 1
      %v1687 = vsel %vm1660, %v1685, %v1686
      %v1688 = vrot.slane %v1004, 1
      %v1689 = vrot.slane %v1005, 1
      %v1690 = vsel %vm1660, %v1688, %v1689
      %v1691 = vrot.slane %v1006, 1
      %v1692 = vrot.slane %v1007, 1
      %v1693 = vsel %vm1660, %v1691, %v1692
      %v1694 = vrot.slane %v1008, 1
      %v1695 = vrot.slane %v1009, 1
      %v1696 = vsel %vm1660, %v1694, %v1695
      %v1697 = vrot.slane %v1010, 1
      %v1698 = vrot.slane %v1011, 1
      %v1699 = vsel %vm1660, %v1697, %v1698
      %v1700 = vrot.slane %v1012, 1
      %v1701 = vrot.slane %v1013, 1
      %v1702 = vsel %vm1660, %v1700, %v1701
      %v1703 = vrot.slane %v1014, 1
      %v1704 = vrot.slane %v1015, 1
      %v1705 = vsel %vm1660, %v1703, %v1704
      %v1706 = vrot.slane %v1016, 1
      %v1707 = vrot.slane %v1017, 1
      %v1708 = vsel %vm1660, %v1706, %v1707
      %s1709 = scalar_lea.vmem %s1, 4
      %v1710 = vld [vmem:[%s1709] sm:$0x3]
      %v1712 = vsel %vm1218, %v1663, 0
      %v1715 = vsel %vm1218, %v1666, 0
      %v1718 = vsel %vm1218, %v1669, 0
      %v1721 = vsel %vm1218, %v1672, 0
      %v1724 = vsel %vm1218, %v1675, 0
      %v1727 = vsel %vm1218, %v1678, 0
      %v1730 = vsel %vm1218, %v1681, 0
      %v1733 = vsel %vm1218, %v1684, 0
      %v1736 = vsel %vm1218, %v1687, 0
      %v1739 = vsel %vm1218, %v1690, 0
      %v1742 = vsel %vm1218, %v1693, 0
      %v1745 = vsel %vm1218, %v1696, 0
      %v1748 = vsel %vm1218, %v1699, 0
      %v1751 = vsel %vm1218, %v1702, 0
      %v1754 = vsel %vm1218, %v1705, 0
      %v1757 = vsel %vm1218, %v1708, 0
      %v1760 = vsel %vm1267, %v1710, 0
      %1762 = vmatprep.subr.bf16.mxu0 0
      %1763 = vmatpush1.bf16.msra.mxu0 %v1760
      %1764 = vmatprep.subr.bf16.mxu0 0
      %1765 = vmatpush1.bf16.msra.mxu0 0
      %1766 = vmatprep.subr.bf16.mxu0 0
      %1767 = vmatpush1.bf16.msra.mxu0 0
      %1768 = vmatprep.subr.bf16.mxu0 0
      %1769 = vmatpush1.bf16.msra.mxu0 0
      %1770 = vmatprep.subr.bf16.mxu0 0
      %1771 = vmatpush1.bf16.msra.mxu0 0
      %1772 = vmatprep.subr.bf16.mxu0 0
      %1773 = vmatpush1.bf16.msra.mxu0 0
      %1774 = vmatprep.subr.bf16.mxu0 0
      %1775 = vmatpush1.bf16.msra.mxu0 0
      %1776 = vmatprep.subr.bf16.mxu0 0
      %1777 = vmatpush1.bf16.msra.mxu0 0
      %1778 = vmatprep.subr.bf16.mxu0 0
      %1779 = vmatpush1.bf16.msra.mxu0 0
      %1780 = vmatprep.subr.bf16.mxu0 0
      %1781 = vmatpush1.bf16.msra.mxu0 0
      %1782 = vmatprep.subr.bf16.mxu0 0
      %1783 = vmatpush1.bf16.msra.mxu0 0
      %1784 = vmatprep.subr.bf16.mxu0 0
      %1785 = vmatpush1.bf16.msra.mxu0 0
      %1786 = vmatprep.subr.bf16.mxu0 0
      %1787 = vmatpush1.bf16.msra.mxu0 0
      %1788 = vmatprep.subr.bf16.mxu0 0
      %1789 = vmatpush1.bf16.msra.mxu0 0
      %1790 = vmatprep.subr.bf16.mxu0 0
      %1791 = vmatpush1.bf16.msra.mxu0 0
      %1792 = vmatprep.subr.bf16.mxu0 0
      %1793 = vmatpush1.bf16.msra.mxu0 0
      %1794 = vmatprep.mubr.bf16.mxu0 0
      %1795 = vmatmul.mubr.bf16.gmra.mrb[0].mxu0 %v1712
      %v1796 = vpop.f32.mrb[0].mxu0
      %v1797 = vadd.f32 0.0, %v1796
      %v1798 = vpop.f32.mrb[0].mxu0
      %v1799 = vpop.f32.mrb[0].mxu0
      %v1800 = vadd.f32 0.0, %v1799
      %v1801 = vpop.f32.mrb[0].mxu0
      %1802 = vmatprep.mubr.bf16.mxu0 0
      %1803 = vmatmul.mubr.bf16.gmra.mrb[0].mxu0 %v1715
      %v1804 = vpop.f32.mrb[0].mxu0
      %v1805 = vadd.f32 0.0, %v1804
      %v1806 = vpop.f32.mrb[0].mxu0
      %v1807 = vpop.f32.mrb[0].mxu0
      %v1808 = vadd.f32 0.0, %v1807
      %v1809 = vpop.f32.mrb[0].mxu0
      %1810 = vmatprep.mubr.bf16.mxu0 0
      %1811 = vmatmul.mubr.bf16.gmra.mrb[0].mxu0 %v1718
      %v1812 = vpop.f32.mrb[0].mxu0
      %v1813 = vadd.f32 0.0, %v1812
      %v1814 = vpop.f32.mrb[0].mxu0
      %v1815 = vpop.f32.mrb[0].mxu0
      %v1816 = vadd.f32 0.0, %v1815
      %v1817 = vpop.f32.mrb[0].mxu0
      %1818 = vmatprep.mubr.bf16.mxu0 0
      %1819 = vmatmul.mubr.bf16.gmra.mrb[0].mxu0 %v1721
      %v1820 = vpop.f32.mrb[0].mxu0
      %v1821 = vadd.f32 0.0, %v1820
      %v1822 = vpop.f32.mrb[0].mxu0
      %v1823 = vpop.f32.mrb[0].mxu0
      %v1824 = vadd.f32 0.0, %v1823
      %v1825 = vpop.f32.mrb[0].mxu0
      %1826 = vmatprep.mubr.bf16.mxu0 0
      %1827 = vmatmul.mubr.bf16.gmra.mrb[0].mxu0 %v1724
      %v1828 = vpop.f32.mrb[0].mxu0
      %v1829 = vadd.f32 0.0, %v1828
      %v1830 = vpop.f32.mrb[0].mxu0
      %v1831 = vpop.f32.mrb[0].mxu0
      %v1832 = vadd.f32 0.0, %v1831
      %v1833 = vpop.f32.mrb[0].mxu0
      %1834 = vmatprep.mubr.bf16.mxu0 0
      %1835 = vmatmul.mubr.bf16.gmra.mrb[0].mxu0 %v1727
      %v1836 = vpop.f32.mrb[0].mxu0
      %v1837 = vadd.f32 0.0, %v1836
      %v1838 = vpop.f32.mrb[0].mxu0
      %v1839 = vpop.f32.mrb[0].mxu0
      %v1840 = vadd.f32 0.0, %v1839
      %v1841 = vpop.f32.mrb[0].mxu0
      %1842 = vmatprep.mubr.bf16.mxu0 0
      %1843 = vmatmul.mubr.bf16.gmra.mrb[0].mxu0 %v1730
      %v1844 = vpop.f32.mrb[0].mxu0
      %v1845 = vadd.f32 0.0, %v1844
      %v1846 = vpop.f32.mrb[0].mxu0
      %v1847 = vpop.f32.mrb[0].mxu0
      %v1848 = vadd.f32 0.0, %v1847
      %v1849 = vpop.f32.mrb[0].mxu0
      %1850 = vmatprep.mubr.bf16.mxu0 0
      %1851 = vmatmul.mubr.bf16.gmra.mrb[0].mxu0 %v1733
      %v1852 = vpop.f32.mrb[0].mxu0
      %v1853 = vadd.f32 0.0, %v1852
      %v1854 = vpop.f32.mrb[0].mxu0
      %v1855 = vpop.f32.mrb[0].mxu0
      %v1856 = vadd.f32 0.0, %v1855
      %v1857 = vpop.f32.mrb[0].mxu0
      %1858 = vmatprep.mubr.bf16.mxu0 0
      %1859 = vmatmul.mubr.bf16.gmra.mrb[0].mxu0 %v1736
      %v1860 = vpop.f32.mrb[0].mxu0
      %v1861 = vadd.f32 0.0, %v1860
      %v1862 = vpop.f32.mrb[0].mxu0
      %v1863 = vpop.f32.mrb[0].mxu0
      %v1864 = vadd.f32 0.0, %v1863
      %v1865 = vpop.f32.mrb[0].mxu0
      %1866 = vmatprep.mubr.bf16.mxu0 0
      %1867 = vmatmul.mubr.bf16.gmra.mrb[0].mxu0 %v1739
      %v1868 = vpop.f32.mrb[0].mxu0
      %v1869 = vadd.f32 0.0, %v1868
      %v1870 = vpop.f32.mrb[0].mxu0
      %v1871 = vpop.f32.mrb[0].mxu0
      %v1872 = vadd.f32 0.0, %v1871
      %v1873 = vpop.f32.mrb[0].mxu0
      %1874 = vmatprep.mubr.bf16.mxu0 0
      %1875 = vmatmul.mubr.bf16.gmra.mrb[0].mxu0 %v1742
      %v1876 = vpop.f32.mrb[0].mxu0
      %v1877 = vadd.f32 0.0, %v1876
      %v1878 = vpop.f32.mrb[0].mxu0
      %v1879 = vpop.f32.mrb[0].mxu0
      %v1880 = vadd.f32 0.0, %v1879
      %v1881 = vpop.f32.mrb[0].mxu0
      %1882 = vmatprep.mubr.bf16.mxu0 0
      %1883 = vmatmul.mubr.bf16.gmra.mrb[0].mxu0 %v1745
      %v1884 = vpop.f32.mrb[0].mxu0
      %v1885 = vadd.f32 0.0, %v1884
      %v1886 = vpop.f32.mrb[0].mxu0
      %v1887 = vpop.f32.mrb[0].mxu0
      %v1888 = vadd.f32 0.0, %v1887
      %v1889 = vpop.f32.mrb[0].mxu0
      %1890 = vmatprep.mubr.bf16.mxu0 0
      %1891 = vmatmul.mubr.bf16.gmra.mrb[0].mxu0 %v1748
      %v1892 = vpop.f32.mrb[0].mxu0
      %v1893 = vadd.f32 0.0, %v1892
      %v1894 = vpop.f32.mrb[0].mxu0
      %v1895 = vpop.f32.mrb[0].mxu0
      %v1896 = vadd.f32 0.0, %v1895
      %v1897 = vpop.f32.mrb[0].mxu0
      %1898 = vmatprep.mubr.bf16.mxu0 0
      %1899 = vmatmul.mubr.bf16.gmra.mrb[0].mxu0 %v1751
      %v1900 = vpop.f32.mrb[0].mxu0
      %v1901 = vadd.f32 0.0, %v1900
      %v1902 = vpop.f32.mrb[0].mxu0
      %v1903 = vpop.f32.mrb[0].mxu0
      %v1904 = vadd.f32 0.0, %v1903
      %v1905 = vpop.f32.mrb[0].mxu0
      %1906 = vmatprep.mubr.bf16.mxu0 0
      %1907 = vmatmul.mubr.bf16.gmra.mrb[0].mxu0 %v1754
      %v1908 = vpop.f32.mrb[0].mxu0
      %v1909 = vadd.f32 0.0, %v1908
      %v1910 = vpop.f32.mrb[0].mxu0
      %v1911 = vpop.f32.mrb[0].mxu0
      %v1912 = vadd.f32 0.0, %v1911
      %v1913 = vpop.f32.mrb[0].mxu0
      %1914 = vmatprep.mubr.bf16.mxu0 0
      %1915 = vmatmul.mubr.bf16.gmra.mrb[0].mxu0 %v1757
      %v1916 = vpop.f32.mrb[0].mxu0
      %v1917 = vadd.f32 0.0, %v1916
      %v1918 = vpop.f32.mrb[0].mxu0
      %v1919 = vpop.f32.mrb[0].mxu0
      %v1920 = vadd.f32 0.0, %v1919
      %v1921 = vpop.f32.mrb[0].mxu0
      %1922 = vdwg.mxu0
      %v1923 = vadd.f32 %v1502, %v1797
      %v1924 = vadd.f32 %v1505, %v1800
      %v1925 = vadd.f32 %v1510, %v1805
      %v1926 = vadd.f32 %v1513, %v1808
      %v1927 = vadd.f32 %v1518, %v1813
      %v1928 = vadd.f32 %v1521, %v1816
      %v1929 = vadd.f32 %v1526, %v1821
      %v1930 = vadd.f32 %v1529, %v1824
      %v1931 = vadd.f32 %v1534, %v1829
      %v1932 = vadd.f32 %v1537, %v1832
      %v1933 = vadd.f32 %v1542, %v1837
      %v1934 = vadd.f32 %v1545, %v1840
      %v1935 = vadd.f32 %v1550, %v1845
      %v1936 = vadd.f32 %v1553, %v1848
      %v1937 = vadd.f32 %v1558, %v1853
      %v1938 = vadd.f32 %v1561, %v1856
      %v1939 = vadd.f32 %v1566, %v1861
      %v1940 = vadd.f32 %v1569, %v1864
      %v1941 = vadd.f32 %v1574, %v1869
      %v1942 = vadd.f32 %v1577, %v1872
      %v1943 = vadd.f32 %v1582, %v1877
      %v1944 = vadd.f32 %v1585, %v1880
      %v1945 = vadd.f32 %v1590, %v1885
      %v1946 = vadd.f32 %v1593, %v1888
      %v1947 = vadd.f32 %v1598, %v1893
      %v1948 = vadd.f32 %v1601, %v1896
      %v1949 = vadd.f32 %v1606, %v1901
      %v1950 = vadd.f32 %v1609, %v1904
      %v1951 = vadd.f32 %v1614, %v1909
      %v1952 = vadd.f32 %v1617, %v1912
      %v1953 = vadd.f32 %v1622, %v1917
      %v1954 = vadd.f32 %v1625, %v1920
      %s1955 = scalar_lea.vmem %s1, 6
      %v1956 = vld [vmem:[%s1955] sm:$0x3]
      %v1958 = vsel %vm1218, %v1018, 0
      %v1961 = vsel %vm1267, %v1956, 0
      %1963 = vmatprep.subr.bf16.mxu0 0
      %1964 = vmatpush1.bf16.msra.mxu0 %v1961
      %1965 = vmatprep.subr.bf16.mxu0 0
      %1966 = vmatpush1.bf16.msra.mxu0 0
      %1967 = vmatprep.subr.bf16.mxu0 0
      %1968 = vmatpush1.bf16.msra.mxu0 0
      %1969 = vmatprep.subr.bf16.mxu0 0
      %1970 = vmatpush1.bf16.msra.mxu0 0
      %1971 = vmatprep.subr.bf16.mxu0 0
      %1972 = vmatpush1.bf16.msra.mxu0 0
      %1973 = vmatprep.subr.bf16.mxu0 0
      %1974 = vmatpush1.bf16.msra.mxu0 0
      %1975 = vmatprep.subr.bf16.mxu0 0
      %1976 = vmatpush1.bf16.msra.mxu0 0
      %1977 = vmatprep.subr.bf16.mxu0 0
      %1978 = vmatpush1.bf16.msra.mxu0 0
      %1979 = vmatprep.subr.bf16.mxu0 0
      %1980 = vmatpush1.bf16.msra.mxu0 0
      %1981 = vmatprep.subr.bf16.mxu0 0
      %1982 = vmatpush1.bf16.msra.mxu0 0
      %1983 = vmatprep.subr.bf16.mxu0 0
      %1984 = vmatpush1.bf16.msra.mxu0 0
      %1985 = vmatprep.subr.bf16.mxu0 0
      %1986 = vmatpush1.bf16.msra.mxu0 0
      %1987 = vmatprep.subr.bf16.mxu0 0
      %1988 = vmatpush1.bf16.msra.mxu0 0
      %1989 = vmatprep.subr.bf16.mxu0 0
      %1990 = vmatpush1.bf16.msra.mxu0 0
      %1991 = vmatprep.subr.bf16.mxu0 0
      %1992 = vmatpush1.bf16.msra.mxu0 0
      %1993 = vmatprep.subr.bf16.mxu0 0
      %1994 = vmatpush1.bf16.msra.mxu0 0
      %1995 = vmatprep.mubr.bf16.mxu0 0
      %1996 = vmatmul.mubr.bf16.gmra.mrb[0].mxu0 %v1434
      %v1997 = vpop.f32.mrb[0].mxu0
      %v1998 = vadd.f32 0.0, %v1997
      %v1999 = vpop.f32.mrb[0].mxu0
      %v2000 = vpop.f32.mrb[0].mxu0
      %v2001 = vadd.f32 0.0, %v2000
      %v2002 = vpop.f32.mrb[0].mxu0
      %2003 = vmatprep.mubr.bf16.mxu0 0
      %2004 = vmatmul.mubr.bf16.gmra.mrb[0].mxu0 %v1436
      %v2005 = vpop.f32.mrb[0].mxu0
      %v2006 = vadd.f32 0.0, %v2005
      %v2007 = vpop.f32.mrb[0].mxu0
      %v2008 = vpop.f32.mrb[0].mxu0
      %v2009 = vadd.f32 0.0, %v2008
      %v2010 = vpop.f32.mrb[0].mxu0
      %2011 = vmatprep.mubr.bf16.mxu0 0
      %2012 = vmatmul.mubr.bf16.gmra.mrb[0].mxu0 %v1438
      %v2013 = vpop.f32.mrb[0].mxu0
      %v2014 = vadd.f32 0.0, %v2013
      %v2015 = vpop.f32.mrb[0].mxu0
      %v2016 = vpop.f32.mrb[0].mxu0
      %v2017 = vadd.f32 0.0, %v2016
      %v2018 = vpop.f32.mrb[0].mxu0
      %2019 = vmatprep.mubr.bf16.mxu0 0
      %2020 = vmatmul.mubr.bf16.gmra.mrb[0].mxu0 %v1440
      %v2021 = vpop.f32.mrb[0].mxu0
      %v2022 = vadd.f32 0.0, %v2021
      %v2023 = vpop.f32.mrb[0].mxu0
      %v2024 = vpop.f32.mrb[0].mxu0
      %v2025 = vadd.f32 0.0, %v2024
      %v2026 = vpop.f32.mrb[0].mxu0
      %2027 = vmatprep.mubr.bf16.mxu0 0
      %2028 = vmatmul.mubr.bf16.gmra.mrb[0].mxu0 %v1442
      %v2029 = vpop.f32.mrb[0].mxu0
      %v2030 = vadd.f32 0.0, %v2029
      %v2031 = vpop.f32.mrb[0].mxu0
      %v2032 = vpop.f32.mrb[0].mxu0
      %v2033 = vadd.f32 0.0, %v2032
      %v2034 = vpop.f32.mrb[0].mxu0
      %2035 = vmatprep.mubr.bf16.mxu0 0
      %2036 = vmatmul.mubr.bf16.gmra.mrb[0].mxu0 %v1444
      %v2037 = vpop.f32.mrb[0].mxu0
      %v2038 = vadd.f32 0.0, %v2037
      %v2039 = vpop.f32.mrb[0].mxu0
      %v2040 = vpop.f32.mrb[0].mxu0
      %v2041 = vadd.f32 0.0, %v2040
      %v2042 = vpop.f32.mrb[0].mxu0
      %2043 = vmatprep.mubr.bf16.mxu0 0
      %2044 = vmatmul.mubr.bf16.gmra.mrb[0].mxu0 %v1446
      %v2045 = vpop.f32.mrb[0].mxu0
      %v2046 = vadd.f32 0.0, %v2045
      %v2047 = vpop.f32.mrb[0].mxu0
      %v2048 = vpop.f32.mrb[0].mxu0
      %v2049 = vadd.f32 0.0, %v2048
      %v2050 = vpop.f32.mrb[0].mxu0
      %2051 = vmatprep.mubr.bf16.mxu0 0
      %2052 = vmatmul.mubr.bf16.gmra.mrb[0].mxu0 %v1448
      %v2053 = vpop.f32.mrb[0].mxu0
      %v2054 = vadd.f32 0.0, %v2053
      %v2055 = vpop.f32.mrb[0].mxu0
      %v2056 = vpop.f32.mrb[0].mxu0
      %v2057 = vadd.f32 0.0, %v2056
      %v2058 = vpop.f32.mrb[0].mxu0
      %2059 = vmatprep.mubr.bf16.mxu0 0
      %2060 = vmatmul.mubr.bf16.gmra.mrb[0].mxu0 %v1450
      %v2061 = vpop.f32.mrb[0].mxu0
      %v2062 = vadd.f32 0.0, %v2061
      %v2063 = vpop.f32.mrb[0].mxu0
      %v2064 = vpop.f32.mrb[0].mxu0
      %v2065 = vadd.f32 0.0, %v2064
      %v2066 = vpop.f32.mrb[0].mxu0
      %2067 = vmatprep.mubr.bf16.mxu0 0
      %2068 = vmatmul.mubr.bf16.gmra.mrb[0].mxu0 %v1452
      %v2069 = vpop.f32.mrb[0].mxu0
      %v2070 = vadd.f32 0.0, %v2069
      %v2071 = vpop.f32.mrb[0].mxu0
      %v2072 = vpop.f32.mrb[0].mxu0
      %v2073 = vadd.f32 0.0, %v2072
      %v2074 = vpop.f32.mrb[0].mxu0
      %2075 = vmatprep.mubr.bf16.mxu0 0
      %2076 = vmatmul.mubr.bf16.gmra.mrb[0].mxu0 %v1454
      %v2077 = vpop.f32.mrb[0].mxu0
      %v2078 = vadd.f32 0.0, %v2077
      %v2079 = vpop.f32.mrb[0].mxu0
      %v2080 = vpop.f32.mrb[0].mxu0
      %v2081 = vadd.f32 0.0, %v2080
      %v2082 = vpop.f32.mrb[0].mxu0
      %2083 = vmatprep.mubr.bf16.mxu0 0
      %2084 = vmatmul.mubr.bf16.gmra.mrb[0].mxu0 %v1456
      %v2085 = vpop.f32.mrb[0].mxu0
      %v2086 = vadd.f32 0.0, %v2085
      %v2087 = vpop.f32.mrb[0].mxu0
      %v2088 = vpop.f32.mrb[0].mxu0
      %v2089 = vadd.f32 0.0, %v2088
      %v2090 = vpop.f32.mrb[0].mxu0
      %2091 = vmatprep.mubr.bf16.mxu0 0
      %2092 = vmatmul.mubr.bf16.gmra.mrb[0].mxu0 %v1458
      %v2093 = vpop.f32.mrb[0].mxu0
      %v2094 = vadd.f32 0.0, %v2093
      %v2095 = vpop.f32.mrb[0].mxu0
      %v2096 = vpop.f32.mrb[0].mxu0
      %v2097 = vadd.f32 0.0, %v2096
      %v2098 = vpop.f32.mrb[0].mxu0
      %2099 = vmatprep.mubr.bf16.mxu0 0
      %2100 = vmatmul.mubr.bf16.gmra.mrb[0].mxu0 %v1460
      %v2101 = vpop.f32.mrb[0].mxu0
      %v2102 = vadd.f32 0.0, %v2101
      %v2103 = vpop.f32.mrb[0].mxu0
      %v2104 = vpop.f32.mrb[0].mxu0
      %v2105 = vadd.f32 0.0, %v2104
      %v2106 = vpop.f32.mrb[0].mxu0
      %2107 = vmatprep.mubr.bf16.mxu0 0
      %2108 = vmatmul.mubr.bf16.gmra.mrb[0].mxu0 %v1462
      %v2109 = vpop.f32.mrb[0].mxu0
      %v2110 = vadd.f32 0.0, %v2109
      %v2111 = vpop.f32.mrb[0].mxu0
      %v2112 = vpop.f32.mrb[0].mxu0
      %v2113 = vadd.f32 0.0, %v2112
      %v2114 = vpop.f32.mrb[0].mxu0
      %2115 = vmatprep.mubr.bf16.mxu0 0
      %2116 = vmatmul.mubr.bf16.gmra.mrb[0].mxu0 %v1958
      %v2117 = vpop.f32.mrb[0].mxu0
      %v2118 = vadd.f32 0.0, %v2117
      %v2119 = vpop.f32.mrb[0].mxu0
      %v2120 = vpop.f32.mrb[0].mxu0
      %v2121 = vadd.f32 0.0, %v2120
      %v2122 = vpop.f32.mrb[0].mxu0
      %2123 = vdwg.mxu0
      %v2124 = vadd.f32 %v1923, %v1998
      %v2125 = vadd.f32 %v1924, %v2001
      %v2126 = vadd.f32 %v1925, %v2006
      %v2127 = vadd.f32 %v1926, %v2009
      %v2128 = vadd.f32 %v1927, %v2014
      %v2129 = vadd.f32 %v1928, %v2017
      %v2130 = vadd.f32 %v1929, %v2022
      %v2131 = vadd.f32 %v1930, %v2025
      %v2132 = vadd.f32 %v1931, %v2030
      %v2133 = vadd.f32 %v1932, %v2033
      %v2134 = vadd.f32 %v1933, %v2038
      %v2135 = vadd.f32 %v1934, %v2041
      %v2136 = vadd.f32 %v1935, %v2046
      %v2137 = vadd.f32 %v1936, %v2049
      %v2138 = vadd.f32 %v1937, %v2054
      %v2139 = vadd.f32 %v1938, %v2057
      %v2140 = vadd.f32 %v1939, %v2062
      %v2141 = vadd.f32 %v1940, %v2065
      %v2142 = vadd.f32 %v1941, %v2070
      %v2143 = vadd.f32 %v1942, %v2073
      %v2144 = vadd.f32 %v1943, %v2078
      %v2145 = vadd.f32 %v1944, %v2081
      %v2146 = vadd.f32 %v1945, %v2086
      %v2147 = vadd.f32 %v1946, %v2089
      %v2148 = vadd.f32 %v1947, %v2094
      %v2149 = vadd.f32 %v1948, %v2097
      %v2150 = vadd.f32 %v1949, %v2102
      %v2151 = vadd.f32 %v1950, %v2105
      %v2152 = vadd.f32 %v1951, %v2110
      %v2153 = vadd.f32 %v1952, %v2113
      %v2154 = vadd.f32 %v1953, %v2118
      %v2155 = vadd.f32 %v1954, %v2121
      %v2156 = vshrl.u32 %v1018, 16
      %v2158 = vshll.u32 %v1018, 16
      %v2160 = vrot.slane %v2158, 1
      %v2161 = vor.u32 %v2156, %v2160
      %v2163 = vshll.u32 %v1019, 16
      %v2165 = vrot.slane %v2163, 1
      %v2166 = vsel %vm1023, %v2161, %v2165
      %s2167 = scalar_lea.vmem %s1, 8
      %v2168 = vld [vmem:[%s2167] sm:$0x3]
      %v2170 = vsel %vm1218, %v2166, 0
      %v2173 = vsel %vm1267, %v2168, 0
      %2175 = vmatprep.subr.bf16.mxu0 0
      %2176 = vmatpush1.bf16.msra.mxu0 %v2173
      %2177 = vmatprep.subr.bf16.mxu0 0
      %2178 = vmatpush1.bf16.msra.mxu0 0
      %2179 = vmatprep.subr.bf16.mxu0 0
      %2180 = vmatpush1.bf16.msra.mxu0 0
      %2181 = vmatprep.subr.bf16.mxu0 0
      %2182 = vmatpush1.bf16.msra.mxu0 0
      %2183 = vmatprep.subr.bf16.mxu0 0
      %2184 = vmatpush1.bf16.msra.mxu0 0
      %2185 = vmatprep.subr.bf16.mxu0 0
      %2186 = vmatpush1.bf16.msra.mxu0 0
      %2187 = vmatprep.subr.bf16.mxu0 0
      %2188 = vmatpush1.bf16.msra.mxu0 0
      %2189 = vmatprep.subr.bf16.mxu0 0
      %2190 = vmatpush1.bf16.msra.mxu0 0
      %2191 = vmatprep.subr.bf16.mxu0 0
      %2192 = vmatpush1.bf16.msra.mxu0 0
      %2193 = vmatprep.subr.bf16.mxu0 0
      %2194 = vmatpush1.bf16.msra.mxu0 0
      %2195 = vmatprep.subr.bf16.mxu0 0
      %2196 = vmatpush1.bf16.msra.mxu0 0
      %2197 = vmatprep.subr.bf16.mxu0 0
      %2198 = vmatpush1.bf16.msra.mxu0 0
      %2199 = vmatprep.subr.bf16.mxu0 0
      %2200 = vmatpush1.bf16.msra.mxu0 0
      %2201 = vmatprep.subr.bf16.mxu0 0
      %2202 = vmatpush1.bf16.msra.mxu0 0
      %2203 = vmatprep.subr.bf16.mxu0 0
      %2204 = vmatpush1.bf16.msra.mxu0 0
      %2205 = vmatprep.subr.bf16.mxu0 0
      %2206 = vmatpush1.bf16.msra.mxu0 0
      %2207 = vmatprep.mubr.bf16.mxu0 0
      %2208 = vmatmul.mubr.bf16.gmra.mrb[0].mxu0 %v1223
      %v2209 = vpop.f32.mrb[0].mxu0
      %v2210 = vadd.f32 0.0, %v2209
      %v2211 = vpop.f32.mrb[0].mxu0
      %v2212 = vpop.f32.mrb[0].mxu0
      %v2213 = vadd.f32 0.0, %v2212
      %v2214 = vpop.f32.mrb[0].mxu0
      %2215 = vmatprep.mubr.bf16.mxu0 0
      %2216 = vmatmul.mubr.bf16.gmra.mrb[0].mxu0 %v1226
      %v2217 = vpop.f32.mrb[0].mxu0
      %v2218 = vadd.f32 0.0, %v2217
      %v2219 = vpop.f32.mrb[0].mxu0
      %v2220 = vpop.f32.mrb[0].mxu0
      %v2221 = vadd.f32 0.0, %v2220
      %v2222 = vpop.f32.mrb[0].mxu0
      %2223 = vmatprep.mubr.bf16.mxu0 0
      %2224 = vmatmul.mubr.bf16.gmra.mrb[0].mxu0 %v1229
      %v2225 = vpop.f32.mrb[0].mxu0
      %v2226 = vadd.f32 0.0, %v2225
      %v2227 = vpop.f32.mrb[0].mxu0
      %v2228 = vpop.f32.mrb[0].mxu0
      %v2229 = vadd.f32 0.0, %v2228
      %v2230 = vpop.f32.mrb[0].mxu0
      %2231 = vmatprep.mubr.bf16.mxu0 0
      %2232 = vmatmul.mubr.bf16.gmra.mrb[0].mxu0 %v1232
      %v2233 = vpop.f32.mrb[0].mxu0
      %v2234 = vadd.f32 0.0, %v2233
      %v2235 = vpop.f32.mrb[0].mxu0
      %v2236 = vpop.f32.mrb[0].mxu0
      %v2237 = vadd.f32 0.0, %v2236
      %v2238 = vpop.f32.mrb[0].mxu0
      %2239 = vmatprep.mubr.bf16.mxu0 0
      %2240 = vmatmul.mubr.bf16.gmra.mrb[0].mxu0 %v1235
      %v2241 = vpop.f32.mrb[0].mxu0
      %v2242 = vadd.f32 0.0, %v2241
      %v2243 = vpop.f32.mrb[0].mxu0
      %v2244 = vpop.f32.mrb[0].mxu0
      %v2245 = vadd.f32 0.0, %v2244
      %v2246 = vpop.f32.mrb[0].mxu0
      %2247 = vmatprep.mubr.bf16.mxu0 0
      %2248 = vmatmul.mubr.bf16.gmra.mrb[0].mxu0 %v1238
      %v2249 = vpop.f32.mrb[0].mxu0
      %v2250 = vadd.f32 0.0, %v2249
      %v2251 = vpop.f32.mrb[0].mxu0
      %v2252 = vpop.f32.mrb[0].mxu0
      %v2253 = vadd.f32 0.0, %v2252
      %v2254 = vpop.f32.mrb[0].mxu0
      %2255 = vmatprep.mubr.bf16.mxu0 0
      %2256 = vmatmul.mubr.bf16.gmra.mrb[0].mxu0 %v1241
      %v2257 = vpop.f32.mrb[0].mxu0
      %v2258 = vadd.f32 0.0, %v2257
      %v2259 = vpop.f32.mrb[0].mxu0
      %v2260 = vpop.f32.mrb[0].mxu0
      %v2261 = vadd.f32 0.0, %v2260
      %v2262 = vpop.f32.mrb[0].mxu0
      %2263 = vmatprep.mubr.bf16.mxu0 0
      %2264 = vmatmul.mubr.bf16.gmra.mrb[0].mxu0 %v1244
      %v2265 = vpop.f32.mrb[0].mxu0
      %v2266 = vadd.f32 0.0, %v2265
      %v2267 = vpop.f32.mrb[0].mxu0
      %v2268 = vpop.f32.mrb[0].mxu0
      %v2269 = vadd.f32 0.0, %v2268
      %v2270 = vpop.f32.mrb[0].mxu0
      %2271 = vmatprep.mubr.bf16.mxu0 0
      %2272 = vmatmul.mubr.bf16.gmra.mrb[0].mxu0 %v1247
      %v2273 = vpop.f32.mrb[0].mxu0
      %v2274 = vadd.f32 0.0, %v2273
      %v2275 = vpop.f32.mrb[0].mxu0
      %v2276 = vpop.f32.mrb[0].mxu0
      %v2277 = vadd.f32 0.0, %v2276
      %v2278 = vpop.f32.mrb[0].mxu0
      %2279 = vmatprep.mubr.bf16.mxu0 0
      %2280 = vmatmul.mubr.bf16.gmra.mrb[0].mxu0 %v1250
      %v2281 = vpop.f32.mrb[0].mxu0
      %v2282 = vadd.f32 0.0, %v2281
      %v2283 = vpop.f32.mrb[0].mxu0
      %v2284 = vpop.f32.mrb[0].mxu0
      %v2285 = vadd.f32 0.0, %v2284
      %v2286 = vpop.f32.mrb[0].mxu0
      %2287 = vmatprep.mubr.bf16.mxu0 0
      %2288 = vmatmul.mubr.bf16.gmra.mrb[0].mxu0 %v1253
      %v2289 = vpop.f32.mrb[0].mxu0
      %v2290 = vadd.f32 0.0, %v2289
      %v2291 = vpop.f32.mrb[0].mxu0
      %v2292 = vpop.f32.mrb[0].mxu0
      %v2293 = vadd.f32 0.0, %v2292
      %v2294 = vpop.f32.mrb[0].mxu0
      %2295 = vmatprep.mubr.bf16.mxu0 0
      %2296 = vmatmul.mubr.bf16.gmra.mrb[0].mxu0 %v1256
      %v2297 = vpop.f32.mrb[0].mxu0
      %v2298 = vadd.f32 0.0, %v2297
      %v2299 = vpop.f32.mrb[0].mxu0
      %v2300 = vpop.f32.mrb[0].mxu0
      %v2301 = vadd.f32 0.0, %v2300
      %v2302 = vpop.f32.mrb[0].mxu0
      %2303 = vmatprep.mubr.bf16.mxu0 0
      %2304 = vmatmul.mubr.bf16.gmra.mrb[0].mxu0 %v1259
      %v2305 = vpop.f32.mrb[0].mxu0
      %v2306 = vadd.f32 0.0, %v2305
      %v2307 = vpop.f32.mrb[0].mxu0
      %v2308 = vpop.f32.mrb[0].mxu0
      %v2309 = vadd.f32 0.0, %v2308
      %v2310 = vpop.f32.mrb[0].mxu0
      %2311 = vmatprep.mubr.bf16.mxu0 0
      %2312 = vmatmul.mubr.bf16.gmra.mrb[0].mxu0 %v1262
      %v2313 = vpop.f32.mrb[0].mxu0
      %v2314 = vadd.f32 0.0, %v2313
      %v2315 = vpop.f32.mrb[0].mxu0
      %v2316 = vpop.f32.mrb[0].mxu0
      %v2317 = vadd.f32 0.0, %v2316
      %v2318 = vpop.f32.mrb[0].mxu0
      %2319 = vmatprep.mubr.bf16.mxu0 0
      %2320 = vmatmul.mubr.bf16.gmra.mrb[0].mxu0 %v1265
      %v2321 = vpop.f32.mrb[0].mxu0
      %v2322 = vadd.f32 0.0, %v2321
      %v2323 = vpop.f32.mrb[0].mxu0
      %v2324 = vpop.f32.mrb[0].mxu0
      %v2325 = vadd.f32 0.0, %v2324
      %v2326 = vpop.f32.mrb[0].mxu0
      %2327 = vmatprep.mubr.bf16.mxu0 0
      %2328 = vmatmul.mubr.bf16.gmra.mrb[0].mxu0 %v2170
      %v2329 = vpop.f32.mrb[0].mxu0
      %v2330 = vadd.f32 0.0, %v2329
      %v2331 = vpop.f32.mrb[0].mxu0
      %v2332 = vpop.f32.mrb[0].mxu0
      %v2333 = vadd.f32 0.0, %v2332
      %v2334 = vpop.f32.mrb[0].mxu0
      %2335 = vdwg.mxu0
      %v2336 = vadd.f32 %v2124, %v2210
      %v2337 = vadd.f32 %v2125, %v2213
      %v2338 = vadd.f32 %v2126, %v2218
      %v2339 = vadd.f32 %v2127, %v2221
      %v2340 = vadd.f32 %v2128, %v2226
      %v2341 = vadd.f32 %v2129, %v2229
      %v2342 = vadd.f32 %v2130, %v2234
      %v2343 = vadd.f32 %v2131, %v2237
      %v2344 = vadd.f32 %v2132, %v2242
      %v2345 = vadd.f32 %v2133, %v2245
      %v2346 = vadd.f32 %v2134, %v2250
      %v2347 = vadd.f32 %v2135, %v2253
      %v2348 = vadd.f32 %v2136, %v2258
      %v2349 = vadd.f32 %v2137, %v2261
      %v2350 = vadd.f32 %v2138, %v2266
      %v2351 = vadd.f32 %v2139, %v2269
      %v2352 = vadd.f32 %v2140, %v2274
      %v2353 = vadd.f32 %v2141, %v2277
      %v2354 = vadd.f32 %v2142, %v2282
      %v2355 = vadd.f32 %v2143, %v2285
      %v2356 = vadd.f32 %v2144, %v2290
      %v2357 = vadd.f32 %v2145, %v2293
      %v2358 = vadd.f32 %v2146, %v2298
      %v2359 = vadd.f32 %v2147, %v2301
      %v2360 = vadd.f32 %v2148, %v2306
      %v2361 = vadd.f32 %v2149, %v2309
      %v2362 = vadd.f32 %v2150, %v2314
      %v2363 = vadd.f32 %v2151, %v2317
      %v2364 = vadd.f32 %v2152, %v2322
      %v2365 = vadd.f32 %v2153, %v2325
      %v2366 = vadd.f32 %v2154, %v2330
      %v2367 = vadd.f32 %v2155, %v2333
      %v2370 = vrot.slane %v1018, 1
      %v2371 = vrot.slane %v1019, 1
      %v2372 = vsel %vm1660, %v2370, %v2371
      %s2373 = scalar_lea.vmem %s1, 10
      %v2374 = vld [vmem:[%s2373] sm:$0x3]
      %v2376 = vsel %vm1218, %v2372, 0
      %v2379 = vsel %vm1267, %v2374, 0
      %2381 = vmatprep.subr.bf16.mxu0 0
      %2382 = vmatpush1.bf16.msra.mxu0 %v2379
      %2383 = vmatprep.subr.bf16.mxu0 0
      %2384 = vmatpush1.bf16.msra.mxu0 0
      %2385 = vmatprep.subr.bf16.mxu0 0
      %2386 = vmatpush1.bf16.msra.mxu0 0
      %2387 = vmatprep.subr.bf16.mxu0 0
      %2388 = vmatpush1.bf16.msra.mxu0 0
      %2389 = vmatprep.subr.bf16.mxu0 0
      %2390 = vmatpush1.bf16.msra.mxu0 0
      %2391 = vmatprep.subr.bf16.mxu0 0
      %2392 = vmatpush1.bf16.msra.mxu0 0
      %2393 = vmatprep.subr.bf16.mxu0 0
      %2394 = vmatpush1.bf16.msra.mxu0 0
      %2395 = vmatprep.subr.bf16.mxu0 0
      %2396 = vmatpush1.bf16.msra.mxu0 0
      %2397 = vmatprep.subr.bf16.mxu0 0
      %2398 = vmatpush1.bf16.msra.mxu0 0
      %2399 = vmatprep.subr.bf16.mxu0 0
      %2400 = vmatpush1.bf16.msra.mxu0 0
      %2401 = vmatprep.subr.bf16.mxu0 0
      %2402 = vmatpush1.bf16.msra.mxu0 0
      %2403 = vmatprep.subr.bf16.mxu0 0
      %2404 = vmatpush1.bf16.msra.mxu0 0
      %2405 = vmatprep.subr.bf16.mxu0 0
      %2406 = vmatpush1.bf16.msra.mxu0 0
      %2407 = vmatprep.subr.bf16.mxu0 0
      %2408 = vmatpush1.bf16.msra.mxu0 0
      %2409 = vmatprep.subr.bf16.mxu0 0
      %2410 = vmatpush1.bf16.msra.mxu0 0
      %2411 = vmatprep.subr.bf16.mxu0 0
      %2412 = vmatpush1.bf16.msra.mxu0 0
      %2413 = vmatprep.mubr.bf16.mxu0 0
      %2414 = vmatmul.mubr.bf16.gmra.mrb[0].mxu0 %v1715
      %v2415 = vpop.f32.mrb[0].mxu0
      %v2416 = vadd.f32 0.0, %v2415
      %v2417 = vpop.f32.mrb[0].mxu0
      %v2418 = vpop.f32.mrb[0].mxu0
      %v2419 = vadd.f32 0.0, %v2418
      %v2420 = vpop.f32.mrb[0].mxu0
      %2421 = vmatprep.mubr.bf16.mxu0 0
      %2422 = vmatmul.mubr.bf16.gmra.mrb[0].mxu0 %v1718
      %v2423 = vpop.f32.mrb[0].mxu0
      %v2424 = vadd.f32 0.0, %v2423
      %v2425 = vpop.f32.mrb[0].mxu0
      %v2426 = vpop.f32.mrb[0].mxu0
      %v2427 = vadd.f32 0.0, %v2426
      %v2428 = vpop.f32.mrb[0].mxu0
      %2429 = vmatprep.mubr.bf16.mxu0 0
      %2430 = vmatmul.mubr.bf16.gmra.mrb[0].mxu0 %v1721
      %v2431 = vpop.f32.mrb[0].mxu0
      %v2432 = vadd.f32 0.0, %v2431
      %v2433 = vpop.f32.mrb[0].mxu0
      %v2434 = vpop.f32.mrb[0].mxu0
      %v2435 = vadd.f32 0.0, %v2434
      %v2436 = vpop.f32.mrb[0].mxu0
      %2437 = vmatprep.mubr.bf16.mxu0 0
      %2438 = vmatmul.mubr.bf16.gmra.mrb[0].mxu0 %v1724
      %v2439 = vpop.f32.mrb[0].mxu0
      %v2440 = vadd.f32 0.0, %v2439
      %v2441 = vpop.f32.mrb[0].mxu0
      %v2442 = vpop.f32.mrb[0].mxu0
      %v2443 = vadd.f32 0.0, %v2442
      %v2444 = vpop.f32.mrb[0].mxu0
      %2445 = vmatprep.mubr.bf16.mxu0 0
      %2446 = vmatmul.mubr.bf16.gmra.mrb[0].mxu0 %v1727
      %v2447 = vpop.f32.mrb[0].mxu0
      %v2448 = vadd.f32 0.0, %v2447
      %v2449 = vpop.f32.mrb[0].mxu0
      %v2450 = vpop.f32.mrb[0].mxu0
      %v2451 = vadd.f32 0.0, %v2450
      %v2452 = vpop.f32.mrb[0].mxu0
      %2453 = vmatprep.mubr.bf16.mxu0 0
      %2454 = vmatmul.mubr.bf16.gmra.mrb[0].mxu0 %v1730
      %v2455 = vpop.f32.mrb[0].mxu0
      %v2456 = vadd.f32 0.0, %v2455
      %v2457 = vpop.f32.mrb[0].mxu0
      %v2458 = vpop.f32.mrb[0].mxu0
      %v2459 = vadd.f32 0.0, %v2458
      %v2460 = vpop.f32.mrb[0].mxu0
      %2461 = vmatprep.mubr.bf16.mxu0 0
      %2462 = vmatmul.mubr.bf16.gmra.mrb[0].mxu0 %v1733
      %v2463 = vpop.f32.mrb[0].mxu0
      %v2464 = vadd.f32 0.0, %v2463
      %v2465 = vpop.f32.mrb[0].mxu0
      %v2466 = vpop.f32.mrb[0].mxu0
      %v2467 = vadd.f32 0.0, %v2466
      %v2468 = vpop.f32.mrb[0].mxu0
      %2469 = vmatprep.mubr.bf16.mxu0 0
      %2470 = vmatmul.mubr.bf16.gmra.mrb[0].mxu0 %v1736
      %v2471 = vpop.f32.mrb[0].mxu0
      %v2472 = vadd.f32 0.0, %v2471
      %v2473 = vpop.f32.mrb[0].mxu0
      %v2474 = vpop.f32.mrb[0].mxu0
      %v2475 = vadd.f32 0.0, %v2474
      %v2476 = vpop.f32.mrb[0].mxu0
      %2477 = vmatprep.mubr.bf16.mxu0 0
      %2478 = vmatmul.mubr.bf16.gmra.mrb[0].mxu0 %v1739
      %v2479 = vpop.f32.mrb[0].mxu0
      %v2480 = vadd.f32 0.0, %v2479
      %v2481 = vpop.f32.mrb[0].mxu0
      %v2482 = vpop.f32.mrb[0].mxu0
      %v2483 = vadd.f32 0.0, %v2482
      %v2484 = vpop.f32.mrb[0].mxu0
      %2485 = vmatprep.mubr.bf16.mxu0 0
      %2486 = vmatmul.mubr.bf16.gmra.mrb[0].mxu0 %v1742
      %v2487 = vpop.f32.mrb[0].mxu0
      %v2488 = vadd.f32 0.0, %v2487
      %v2489 = vpop.f32.mrb[0].mxu0
      %v2490 = vpop.f32.mrb[0].mxu0
      %v2491 = vadd.f32 0.0, %v2490
      %v2492 = vpop.f32.mrb[0].mxu0
      %2493 = vmatprep.mubr.bf16.mxu0 0
      %2494 = vmatmul.mubr.bf16.gmra.mrb[0].mxu0 %v1745
      %v2495 = vpop.f32.mrb[0].mxu0
      %v2496 = vadd.f32 0.0, %v2495
      %v2497 = vpop.f32.mrb[0].mxu0
      %v2498 = vpop.f32.mrb[0].mxu0
      %v2499 = vadd.f32 0.0, %v2498
      %v2500 = vpop.f32.mrb[0].mxu0
      %2501 = vmatprep.mubr.bf16.mxu0 0
      %2502 = vmatmul.mubr.bf16.gmra.mrb[0].mxu0 %v1748
      %v2503 = vpop.f32.mrb[0].mxu0
      %v2504 = vadd.f32 0.0, %v2503
      %v2505 = vpop.f32.mrb[0].mxu0
      %v2506 = vpop.f32.mrb[0].mxu0
      %v2507 = vadd.f32 0.0, %v2506
      %v2508 = vpop.f32.mrb[0].mxu0
      %2509 = vmatprep.mubr.bf16.mxu0 0
      %2510 = vmatmul.mubr.bf16.gmra.mrb[0].mxu0 %v1751
      %v2511 = vpop.f32.mrb[0].mxu0
      %v2512 = vadd.f32 0.0, %v2511
      %v2513 = vpop.f32.mrb[0].mxu0
      %v2514 = vpop.f32.mrb[0].mxu0
      %v2515 = vadd.f32 0.0, %v2514
      %v2516 = vpop.f32.mrb[0].mxu0
      %2517 = vmatprep.mubr.bf16.mxu0 0
      %2518 = vmatmul.mubr.bf16.gmra.mrb[0].mxu0 %v1754
      %v2519 = vpop.f32.mrb[0].mxu0
      %v2520 = vadd.f32 0.0, %v2519
      %v2521 = vpop.f32.mrb[0].mxu0
      %v2522 = vpop.f32.mrb[0].mxu0
      %v2523 = vadd.f32 0.0, %v2522
      %v2524 = vpop.f32.mrb[0].mxu0
      %2525 = vmatprep.mubr.bf16.mxu0 0
      %2526 = vmatmul.mubr.bf16.gmra.mrb[0].mxu0 %v1757
      %v2527 = vpop.f32.mrb[0].mxu0
      %v2528 = vadd.f32 0.0, %v2527
      %v2529 = vpop.f32.mrb[0].mxu0
      %v2530 = vpop.f32.mrb[0].mxu0
      %v2531 = vadd.f32 0.0, %v2530
      %v2532 = vpop.f32.mrb[0].mxu0
      %2533 = vmatprep.mubr.bf16.mxu0 0
      %2534 = vmatmul.mubr.bf16.gmra.mrb[0].mxu0 %v2376
      %v2535 = vpop.f32.mrb[0].mxu0
      %v2536 = vadd.f32 0.0, %v2535
      %v2537 = vpop.f32.mrb[0].mxu0
      %v2538 = vpop.f32.mrb[0].mxu0
      %v2539 = vadd.f32 0.0, %v2538
      %v2540 = vpop.f32.mrb[0].mxu0
      %2541 = vdwg.mxu0
      %v2542 = vadd.f32 %v2336, %v2416
      %v2543 = vadd.f32 %v2337, %v2419
      %v2544 = vadd.f32 %v2338, %v2424
      %v2545 = vadd.f32 %v2339, %v2427
      %v2546 = vadd.f32 %v2340, %v2432
      %v2547 = vadd.f32 %v2341, %v2435
      %v2548 = vadd.f32 %v2342, %v2440
      %v2549 = vadd.f32 %v2343, %v2443
      %v2550 = vadd.f32 %v2344, %v2448
      %v2551 = vadd.f32 %v2345, %v2451
      %v2552 = vadd.f32 %v2346, %v2456
      %v2553 = vadd.f32 %v2347, %v2459
      %v2554 = vadd.f32 %v2348, %v2464
      %v2555 = vadd.f32 %v2349, %v2467
      %v2556 = vadd.f32 %v2350, %v2472
      %v2557 = vadd.f32 %v2351, %v2475
      %v2558 = vadd.f32 %v2352, %v2480
      %v2559 = vadd.f32 %v2353, %v2483
      %v2560 = vadd.f32 %v2354, %v2488
      %v2561 = vadd.f32 %v2355, %v2491
      %v2562 = vadd.f32 %v2356, %v2496
      %v2563 = vadd.f32 %v2357, %v2499
      %v2564 = vadd.f32 %v2358, %v2504
      %v2565 = vadd.f32 %v2359, %v2507
      %v2566 = vadd.f32 %v2360, %v2512
      %v2567 = vadd.f32 %v2361, %v2515
      %v2568 = vadd.f32 %v2362, %v2520
      %v2569 = vadd.f32 %v2363, %v2523
      %v2570 = vadd.f32 %v2364, %v2528
      %v2571 = vadd.f32 %v2365, %v2531
      %v2572 = vadd.f32 %v2366, %v2536
      %v2573 = vadd.f32 %v2367, %v2539
      %s2574 = scalar_lea.vmem %s1, 12
      %v2575 = vld [vmem:[%s2574] sm:$0x3]
      %v2577 = vsel %vm1218, %v1020, 0
      %v2580 = vsel %vm1267, %v2575, 0
      %2582 = vmatprep.subr.bf16.mxu0 0
      %2583 = vmatpush1.bf16.msra.mxu0 %v2580
      %2584 = vmatprep.subr.bf16.mxu0 0
      %2585 = vmatpush1.bf16.msra.mxu0 0
      %2586 = vmatprep.subr.bf16.mxu0 0
      %2587 = vmatpush1.bf16.msra.mxu0 0
      %2588 = vmatprep.subr.bf16.mxu0 0
      %2589 = vmatpush1.bf16.msra.mxu0 0
      %2590 = vmatprep.subr.bf16.mxu0 0
      %2591 = vmatpush1.bf16.msra.mxu0 0
      %2592 = vmatprep.subr.bf16.mxu0 0
      %2593 = vmatpush1.bf16.msra.mxu0 0
      %2594 = vmatprep.subr.bf16.mxu0 0
      %2595 = vmatpush1.bf16.msra.mxu0 0
      %2596 = vmatprep.subr.bf16.mxu0 0
      %2597 = vmatpush1.bf16.msra.mxu0 0
      %2598 = vmatprep.subr.bf16.mxu0 0
      %2599 = vmatpush1.bf16.msra.mxu0 0
      %2600 = vmatprep.subr.bf16.mxu0 0
      %2601 = vmatpush1.bf16.msra.mxu0 0
      %2602 = vmatprep.subr.bf16.mxu0 0
      %2603 = vmatpush1.bf16.msra.mxu0 0
      %2604 = vmatprep.subr.bf16.mxu0 0
      %2605 = vmatpush1.bf16.msra.mxu0 0
      %2606 = vmatprep.subr.bf16.mxu0 0
      %2607 = vmatpush1.bf16.msra.mxu0 0
      %2608 = vmatprep.subr.bf16.mxu0 0
      %2609 = vmatpush1.bf16.msra.mxu0 0
      %2610 = vmatprep.subr.bf16.mxu0 0
      %2611 = vmatpush1.bf16.msra.mxu0 0
      %2612 = vmatprep.subr.bf16.mxu0 0
      %2613 = vmatpush1.bf16.msra.mxu0 0
      %2614 = vmatprep.mubr.bf16.mxu0 0
      %2615 = vmatmul.mubr.bf16.gmra.mrb[0].mxu0 %v1436
      %v2616 = vpop.f32.mrb[0].mxu0
      %v2617 = vadd.f32 0.0, %v2616
      %v2618 = vpop.f32.mrb[0].mxu0
      %v2619 = vpop.f32.mrb[0].mxu0
      %v2620 = vadd.f32 0.0, %v2619
      %v2621 = vpop.f32.mrb[0].mxu0
      %2622 = vmatprep.mubr.bf16.mxu0 0
      %2623 = vmatmul.mubr.bf16.gmra.mrb[0].mxu0 %v1438
      %v2624 = vpop.f32.mrb[0].mxu0
      %v2625 = vadd.f32 0.0, %v2624
      %v2626 = vpop.f32.mrb[0].mxu0
      %v2627 = vpop.f32.mrb[0].mxu0
      %v2628 = vadd.f32 0.0, %v2627
      %v2629 = vpop.f32.mrb[0].mxu0
      %2630 = vmatprep.mubr.bf16.mxu0 0
      %2631 = vmatmul.mubr.bf16.gmra.mrb[0].mxu0 %v1440
      %v2632 = vpop.f32.mrb[0].mxu0
      %v2633 = vadd.f32 0.0, %v2632
      %v2634 = vpop.f32.mrb[0].mxu0
      %v2635 = vpop.f32.mrb[0].mxu0
      %v2636 = vadd.f32 0.0, %v2635
      %v2637 = vpop.f32.mrb[0].mxu0
      %2638 = vmatprep.mubr.bf16.mxu0 0
      %2639 = vmatmul.mubr.bf16.gmra.mrb[0].mxu0 %v1442
      %v2640 = vpop.f32.mrb[0].mxu0
      %v2641 = vadd.f32 0.0, %v2640
      %v2642 = vpop.f32.mrb[0].mxu0
      %v2643 = vpop.f32.mrb[0].mxu0
      %v2644 = vadd.f32 0.0, %v2643
      %v2645 = vpop.f32.mrb[0].mxu0
      %2646 = vmatprep.mubr.bf16.mxu0 0
      %2647 = vmatmul.mubr.bf16.gmra.mrb[0].mxu0 %v1444
      %v2648 = vpop.f32.mrb[0].mxu0
      %v2649 = vadd.f32 0.0, %v2648
      %v2650 = vpop.f32.mrb[0].mxu0
      %v2651 = vpop.f32.mrb[0].mxu0
      %v2652 = vadd.f32 0.0, %v2651
      %v2653 = vpop.f32.mrb[0].mxu0
      %2654 = vmatprep.mubr.bf16.mxu0 0
      %2655 = vmatmul.mubr.bf16.gmra.mrb[0].mxu0 %v1446
      %v2656 = vpop.f32.mrb[0].mxu0
      %v2657 = vadd.f32 0.0, %v2656
      %v2658 = vpop.f32.mrb[0].mxu0
      %v2659 = vpop.f32.mrb[0].mxu0
      %v2660 = vadd.f32 0.0, %v2659
      %v2661 = vpop.f32.mrb[0].mxu0
      %2662 = vmatprep.mubr.bf16.mxu0 0
      %2663 = vmatmul.mubr.bf16.gmra.mrb[0].mxu0 %v1448
      %v2664 = vpop.f32.mrb[0].mxu0
      %v2665 = vadd.f32 0.0, %v2664
      %v2666 = vpop.f32.mrb[0].mxu0
      %v2667 = vpop.f32.mrb[0].mxu0
      %v2668 = vadd.f32 0.0, %v2667
      %v2669 = vpop.f32.mrb[0].mxu0
      %2670 = vmatprep.mubr.bf16.mxu0 0
      %2671 = vmatmul.mubr.bf16.gmra.mrb[0].mxu0 %v1450
      %v2672 = vpop.f32.mrb[0].mxu0
      %v2673 = vadd.f32 0.0, %v2672
      %v2674 = vpop.f32.mrb[0].mxu0
      %v2675 = vpop.f32.mrb[0].mxu0
      %v2676 = vadd.f32 0.0, %v2675
      %v2677 = vpop.f32.mrb[0].mxu0
      %2678 = vmatprep.mubr.bf16.mxu0 0
      %2679 = vmatmul.mubr.bf16.gmra.mrb[0].mxu0 %v1452
      %v2680 = vpop.f32.mrb[0].mxu0
      %v2681 = vadd.f32 0.0, %v2680
      %v2682 = vpop.f32.mrb[0].mxu0
      %v2683 = vpop.f32.mrb[0].mxu0
      %v2684 = vadd.f32 0.0, %v2683
      %v2685 = vpop.f32.mrb[0].mxu0
      %2686 = vmatprep.mubr.bf16.mxu0 0
      %2687 = vmatmul.mubr.bf16.gmra.mrb[0].mxu0 %v1454
      %v2688 = vpop.f32.mrb[0].mxu0
      %v2689 = vadd.f32 0.0, %v2688
      %v2690 = vpop.f32.mrb[0].mxu0
      %v2691 = vpop.f32.mrb[0].mxu0
      %v2692 = vadd.f32 0.0, %v2691
      %v2693 = vpop.f32.mrb[0].mxu0
      %2694 = vmatprep.mubr.bf16.mxu0 0
      %2695 = vmatmul.mubr.bf16.gmra.mrb[0].mxu0 %v1456
      %v2696 = vpop.f32.mrb[0].mxu0
      %v2697 = vadd.f32 0.0, %v2696
      %v2698 = vpop.f32.mrb[0].mxu0
      %v2699 = vpop.f32.mrb[0].mxu0
      %v2700 = vadd.f32 0.0, %v2699
      %v2701 = vpop.f32.mrb[0].mxu0
      %2702 = vmatprep.mubr.bf16.mxu0 0
      %2703 = vmatmul.mubr.bf16.gmra.mrb[0].mxu0 %v1458
      %v2704 = vpop.f32.mrb[0].mxu0
      %v2705 = vadd.f32 0.0, %v2704
      %v2706 = vpop.f32.mrb[0].mxu0
      %v2707 = vpop.f32.mrb[0].mxu0
      %v2708 = vadd.f32 0.0, %v2707
      %v2709 = vpop.f32.mrb[0].mxu0
      %2710 = vmatprep.mubr.bf16.mxu0 0
      %2711 = vmatmul.mubr.bf16.gmra.mrb[0].mxu0 %v1460
      %v2712 = vpop.f32.mrb[0].mxu0
      %v2713 = vadd.f32 0.0, %v2712
      %v2714 = vpop.f32.mrb[0].mxu0
      %v2715 = vpop.f32.mrb[0].mxu0
      %v2716 = vadd.f32 0.0, %v2715
      %v2717 = vpop.f32.mrb[0].mxu0
      %2718 = vmatprep.mubr.bf16.mxu0 0
      %2719 = vmatmul.mubr.bf16.gmra.mrb[0].mxu0 %v1462
      %v2720 = vpop.f32.mrb[0].mxu0
      %v2721 = vadd.f32 0.0, %v2720
      %v2722 = vpop.f32.mrb[0].mxu0
      %v2723 = vpop.f32.mrb[0].mxu0
      %v2724 = vadd.f32 0.0, %v2723
      %v2725 = vpop.f32.mrb[0].mxu0
      %2726 = vmatprep.mubr.bf16.mxu0 0
      %2727 = vmatmul.mubr.bf16.gmra.mrb[0].mxu0 %v1958
      %v2728 = vpop.f32.mrb[0].mxu0
      %v2729 = vadd.f32 0.0, %v2728
      %v2730 = vpop.f32.mrb[0].mxu0
      %v2731 = vpop.f32.mrb[0].mxu0
      %v2732 = vadd.f32 0.0, %v2731
      %v2733 = vpop.f32.mrb[0].mxu0
      %2734 = vmatprep.mubr.bf16.mxu0 0
      %2735 = vmatmul.mubr.bf16.gmra.mrb[0].mxu0 %v2577
      %v2736 = vpop.f32.mrb[0].mxu0
      %v2737 = vadd.f32 0.0, %v2736
      %v2738 = vpop.f32.mrb[0].mxu0
      %v2739 = vpop.f32.mrb[0].mxu0
      %v2740 = vadd.f32 0.0, %v2739
      %v2741 = vpop.f32.mrb[0].mxu0
      %2742 = vdwg.mxu0
      %v2743 = vadd.f32 %v2542, %v2617
      %v2744 = vadd.f32 %v2543, %v2620
      %v2745 = vadd.f32 %v2544, %v2625
      %v2746 = vadd.f32 %v2545, %v2628
      %v2747 = vadd.f32 %v2546, %v2633
      %v2748 = vadd.f32 %v2547, %v2636
      %v2749 = vadd.f32 %v2548, %v2641
      %v2750 = vadd.f32 %v2549, %v2644
      %v2751 = vadd.f32 %v2550, %v2649
      %v2752 = vadd.f32 %v2551, %v2652
      %v2753 = vadd.f32 %v2552, %v2657
      %v2754 = vadd.f32 %v2553, %v2660
      %v2755 = vadd.f32 %v2554, %v2665
      %v2756 = vadd.f32 %v2555, %v2668
      %v2757 = vadd.f32 %v2556, %v2673
      %v2758 = vadd.f32 %v2557, %v2676
      %v2759 = vadd.f32 %v2558, %v2681
      %v2760 = vadd.f32 %v2559, %v2684
      %v2761 = vadd.f32 %v2560, %v2689
      %v2762 = vadd.f32 %v2561, %v2692
      %v2763 = vadd.f32 %v2562, %v2697
      %v2764 = vadd.f32 %v2563, %v2700
      %v2765 = vadd.f32 %v2564, %v2705
      %v2766 = vadd.f32 %v2565, %v2708
      %v2767 = vadd.f32 %v2566, %v2713
      %v2768 = vadd.f32 %v2567, %v2716
      %v2769 = vadd.f32 %v2568, %v2721
      %v2770 = vadd.f32 %v2569, %v2724
      %v2771 = vadd.f32 %v2570, %v2729
      %v2772 = vadd.f32 %v2571, %v2732
      %v2773 = vadd.f32 %v2572, %v2737
      %v2774 = vadd.f32 %v2573, %v2740
      %v2775 = vshrl.u32 %v1020, 16
      %v2777 = vshll.u32 %v1020, 16
      %v2779 = vrot.slane %v2777, 1
      %v2780 = vor.u32 %v2775, %v2779
      %v2782 = vshll.u32 %v1021, 16
      %v2784 = vrot.slane %v2782, 1
      %v2785 = vsel %vm1023, %v2780, %v2784
      %s2786 = scalar_lea.vmem %s1, 14
      %v2787 = vld [vmem:[%s2786] sm:$0x3]
      %v2789 = vsel %vm1218, %v2785, 0
      %v2792 = vsel %vm1267, %v2787, 0
      %2794 = vmatprep.subr.bf16.mxu0 0
      %2795 = vmatpush1.bf16.msra.mxu0 %v2792
      %2796 = vmatprep.subr.bf16.mxu0 0
      %2797 = vmatpush1.bf16.msra.mxu0 0
      %2798 = vmatprep.subr.bf16.mxu0 0
      %2799 = vmatpush1.bf16.msra.mxu0 0
      %2800 = vmatprep.subr.bf16.mxu0 0
      %2801 = vmatpush1.bf16.msra.mxu0 0
      %2802 = vmatprep.subr.bf16.mxu0 0
      %2803 = vmatpush1.bf16.msra.mxu0 0
      %2804 = vmatprep.subr.bf16.mxu0 0
      %2805 = vmatpush1.bf16.msra.mxu0 0
      %2806 = vmatprep.subr.bf16.mxu0 0
      %2807 = vmatpush1.bf16.msra.mxu0 0
      %2808 = vmatprep.subr.bf16.mxu0 0
      %2809 = vmatpush1.bf16.msra.mxu0 0
      %2810 = vmatprep.subr.bf16.mxu0 0
      %2811 = vmatpush1.bf16.msra.mxu0 0
      %2812 = vmatprep.subr.bf16.mxu0 0
      %2813 = vmatpush1.bf16.msra.mxu0 0
      %2814 = vmatprep.subr.bf16.mxu0 0
      %2815 = vmatpush1.bf16.msra.mxu0 0
      %2816 = vmatprep.subr.bf16.mxu0 0
      %2817 = vmatpush1.bf16.msra.mxu0 0
      %2818 = vmatprep.subr.bf16.mxu0 0
      %2819 = vmatpush1.bf16.msra.mxu0 0
      %2820 = vmatprep.subr.bf16.mxu0 0
      %2821 = vmatpush1.bf16.msra.mxu0 0
      %2822 = vmatprep.subr.bf16.mxu0 0
      %2823 = vmatpush1.bf16.msra.mxu0 0
      %2824 = vmatprep.subr.bf16.mxu0 0
      %2825 = vmatpush1.bf16.msra.mxu0 0
      %2826 = vmatprep.mubr.bf16.mxu0 0
      %2827 = vmatmul.mubr.bf16.gmra.mrb[0].mxu0 %v1226
      %v2828 = vpop.f32.mrb[0].mxu0
      %v2829 = vadd.f32 0.0, %v2828
      %v2830 = vpop.f32.mrb[0].mxu0
      %v2831 = vpop.f32.mrb[0].mxu0
      %v2832 = vadd.f32 0.0, %v2831
      %v2833 = vpop.f32.mrb[0].mxu0
      %2834 = vmatprep.mubr.bf16.mxu0 0
      %2835 = vmatmul.mubr.bf16.gmra.mrb[0].mxu0 %v1229
      %v2836 = vpop.f32.mrb[0].mxu0
      %v2837 = vadd.f32 0.0, %v2836
      %v2838 = vpop.f32.mrb[0].mxu0
      %v2839 = vpop.f32.mrb[0].mxu0
      %v2840 = vadd.f32 0.0, %v2839
      %v2841 = vpop.f32.mrb[0].mxu0
      %2842 = vmatprep.mubr.bf16.mxu0 0
      %2843 = vmatmul.mubr.bf16.gmra.mrb[0].mxu0 %v1232
      %v2844 = vpop.f32.mrb[0].mxu0
      %v2845 = vadd.f32 0.0, %v2844
      %v2846 = vpop.f32.mrb[0].mxu0
      %v2847 = vpop.f32.mrb[0].mxu0
      %v2848 = vadd.f32 0.0, %v2847
      %v2849 = vpop.f32.mrb[0].mxu0
      %2850 = vmatprep.mubr.bf16.mxu0 0
      %2851 = vmatmul.mubr.bf16.gmra.mrb[0].mxu0 %v1235
      %v2852 = vpop.f32.mrb[0].mxu0
      %v2853 = vadd.f32 0.0, %v2852
      %v2854 = vpop.f32.mrb[0].mxu0
      %v2855 = vpop.f32.mrb[0].mxu0
      %v2856 = vadd.f32 0.0, %v2855
      %v2857 = vpop.f32.mrb[0].mxu0
      %2858 = vmatprep.mubr.bf16.mxu0 0
      %2859 = vmatmul.mubr.bf16.gmra.mrb[0].mxu0 %v1238
      %v2860 = vpop.f32.mrb[0].mxu0
      %v2861 = vadd.f32 0.0, %v2860
      %v2862 = vpop.f32.mrb[0].mxu0
      %v2863 = vpop.f32.mrb[0].mxu0
      %v2864 = vadd.f32 0.0, %v2863
      %v2865 = vpop.f32.mrb[0].mxu0
      %2866 = vmatprep.mubr.bf16.mxu0 0
      %2867 = vmatmul.mubr.bf16.gmra.mrb[0].mxu0 %v1241
      %v2868 = vpop.f32.mrb[0].mxu0
      %v2869 = vadd.f32 0.0, %v2868
      %v2870 = vpop.f32.mrb[0].mxu0
      %v2871 = vpop.f32.mrb[0].mxu0
      %v2872 = vadd.f32 0.0, %v2871
      %v2873 = vpop.f32.mrb[0].mxu0
      %2874 = vmatprep.mubr.bf16.mxu0 0
      %2875 = vmatmul.mubr.bf16.gmra.mrb[0].mxu0 %v1244
      %v2876 = vpop.f32.mrb[0].mxu0
      %v2877 = vadd.f32 0.0, %v2876
      %v2878 = vpop.f32.mrb[0].mxu0
      %v2879 = vpop.f32.mrb[0].mxu0
      %v2880 = vadd.f32 0.0, %v2879
      %v2881 = vpop.f32.mrb[0].mxu0
      %2882 = vmatprep.mubr.bf16.mxu0 0
      %2883 = vmatmul.mubr.bf16.gmra.mrb[0].mxu0 %v1247
      %v2884 = vpop.f32.mrb[0].mxu0
      %v2885 = vadd.f32 0.0, %v2884
      %v2886 = vpop.f32.mrb[0].mxu0
      %v2887 = vpop.f32.mrb[0].mxu0
      %v2888 = vadd.f32 0.0, %v2887
      %v2889 = vpop.f32.mrb[0].mxu0
      %2890 = vmatprep.mubr.bf16.mxu0 0
      %2891 = vmatmul.mubr.bf16.gmra.mrb[0].mxu0 %v1250
      %v2892 = vpop.f32.mrb[0].mxu0
      %v2893 = vadd.f32 0.0, %v2892
      %v2894 = vpop.f32.mrb[0].mxu0
      %v2895 = vpop.f32.mrb[0].mxu0
      %v2896 = vadd.f32 0.0, %v2895
      %v2897 = vpop.f32.mrb[0].mxu0
      %2898 = vmatprep.mubr.bf16.mxu0 0
      %2899 = vmatmul.mubr.bf16.gmra.mrb[0].mxu0 %v1253
      %v2900 = vpop.f32.mrb[0].mxu0
      %v2901 = vadd.f32 0.0, %v2900
      %v2902 = vpop.f32.mrb[0].mxu0
      %v2903 = vpop.f32.mrb[0].mxu0
      %v2904 = vadd.f32 0.0, %v2903
      %v2905 = vpop.f32.mrb[0].mxu0
      %2906 = vmatprep.mubr.bf16.mxu0 0
      %2907 = vmatmul.mubr.bf16.gmra.mrb[0].mxu0 %v1256
      %v2908 = vpop.f32.mrb[0].mxu0
      %v2909 = vadd.f32 0.0, %v2908
      %v2910 = vpop.f32.mrb[0].mxu0
      %v2911 = vpop.f32.mrb[0].mxu0
      %v2912 = vadd.f32 0.0, %v2911
      %v2913 = vpop.f32.mrb[0].mxu0
      %2914 = vmatprep.mubr.bf16.mxu0 0
      %2915 = vmatmul.mubr.bf16.gmra.mrb[0].mxu0 %v1259
      %v2916 = vpop.f32.mrb[0].mxu0
      %v2917 = vadd.f32 0.0, %v2916
      %v2918 = vpop.f32.mrb[0].mxu0
      %v2919 = vpop.f32.mrb[0].mxu0
      %v2920 = vadd.f32 0.0, %v2919
      %v2921 = vpop.f32.mrb[0].mxu0
      %2922 = vmatprep.mubr.bf16.mxu0 0
      %2923 = vmatmul.mubr.bf16.gmra.mrb[0].mxu0 %v1262
      %v2924 = vpop.f32.mrb[0].mxu0
      %v2925 = vadd.f32 0.0, %v2924
      %v2926 = vpop.f32.mrb[0].mxu0
      %v2927 = vpop.f32.mrb[0].mxu0
      %v2928 = vadd.f32 0.0, %v2927
      %v2929 = vpop.f32.mrb[0].mxu0
      %2930 = vmatprep.mubr.bf16.mxu0 0
      %2931 = vmatmul.mubr.bf16.gmra.mrb[0].mxu0 %v1265
      %v2932 = vpop.f32.mrb[0].mxu0
      %v2933 = vadd.f32 0.0, %v2932
      %v2934 = vpop.f32.mrb[0].mxu0
      %v2935 = vpop.f32.mrb[0].mxu0
      %v2936 = vadd.f32 0.0, %v2935
      %v2937 = vpop.f32.mrb[0].mxu0
      %2938 = vmatprep.mubr.bf16.mxu0 0
      %2939 = vmatmul.mubr.bf16.gmra.mrb[0].mxu0 %v2170
      %v2940 = vpop.f32.mrb[0].mxu0
      %v2941 = vadd.f32 0.0, %v2940
      %v2942 = vpop.f32.mrb[0].mxu0
      %v2943 = vpop.f32.mrb[0].mxu0
      %v2944 = vadd.f32 0.0, %v2943
      %v2945 = vpop.f32.mrb[0].mxu0
      %2946 = vmatprep.mubr.bf16.mxu0 0
      %2947 = vmatmul.mubr.bf16.gmra.mrb[0].mxu0 %v2789
      %v2948 = vpop.f32.mrb[0].mxu0
      %v2949 = vadd.f32 0.0, %v2948
      %v2950 = vpop.f32.mrb[0].mxu0
      %v2951 = vpop.f32.mrb[0].mxu0
      %v2952 = vadd.f32 0.0, %v2951
      %v2953 = vpop.f32.mrb[0].mxu0
      %2954 = vdwg.mxu0
      %v2955 = vadd.f32 %v2743, %v2829
      %v2956 = vadd.f32 %v2744, %v2832
      %v2957 = vadd.f32 %v2745, %v2837
      %v2958 = vadd.f32 %v2746, %v2840
      %v2959 = vadd.f32 %v2747, %v2845
      %v2960 = vadd.f32 %v2748, %v2848
      %v2961 = vadd.f32 %v2749, %v2853
      %v2962 = vadd.f32 %v2750, %v2856
      %v2963 = vadd.f32 %v2751, %v2861
      %v2964 = vadd.f32 %v2752, %v2864
      %v2965 = vadd.f32 %v2753, %v2869
      %v2966 = vadd.f32 %v2754, %v2872
      %v2967 = vadd.f32 %v2755, %v2877
      %v2968 = vadd.f32 %v2756, %v2880
      %v2969 = vadd.f32 %v2757, %v2885
      %v2970 = vadd.f32 %v2758, %v2888
      %v2971 = vadd.f32 %v2759, %v2893
      %v2972 = vadd.f32 %v2760, %v2896
      %v2973 = vadd.f32 %v2761, %v2901
      %v2974 = vadd.f32 %v2762, %v2904
      %v2975 = vadd.f32 %v2763, %v2909
      %v2976 = vadd.f32 %v2764, %v2912
      %v2977 = vadd.f32 %v2765, %v2917
      %v2978 = vadd.f32 %v2766, %v2920
      %v2979 = vadd.f32 %v2767, %v2925
      %v2980 = vadd.f32 %v2768, %v2928
      %v2981 = vadd.f32 %v2769, %v2933
      %v2982 = vadd.f32 %v2770, %v2936
      %v2983 = vadd.f32 %v2771, %v2941
      %v2984 = vadd.f32 %v2772, %v2944
      %v2985 = vadd.f32 %v2773, %v2949
      %v2986 = vadd.f32 %v2774, %v2952
      %v2989 = vrot.slane %v1020, 1
      %v2990 = vrot.slane %v1021, 1
      %v2991 = vsel %vm1660, %v2989, %v2990
      %s2992 = scalar_lea.vmem %s1, 16
      %v2993 = vld [vmem:[%s2992] sm:$0x3]
      %v2995 = vsel %vm1218, %v2991, 0
      %v2998 = vsel %vm1267, %v2993, 0
      %3000 = vmatprep.subr.bf16.mxu0 0
      %3001 = vmatpush1.bf16.msra.mxu0 %v2998
      %3002 = vmatprep.subr.bf16.mxu0 0
      %3003 = vmatpush1.bf16.msra.mxu0 0
      %3004 = vmatprep.subr.bf16.mxu0 0
      %3005 = vmatpush1.bf16.msra.mxu0 0
      %3006 = vmatprep.subr.bf16.mxu0 0
      %3007 = vmatpush1.bf16.msra.mxu0 0
      %3008 = vmatprep.subr.bf16.mxu0 0
      %3009 = vmatpush1.bf16.msra.mxu0 0
      %3010 = vmatprep.subr.bf16.mxu0 0
      %3011 = vmatpush1.bf16.msra.mxu0 0
      %3012 = vmatprep.subr.bf16.mxu0 0
      %3013 = vmatpush1.bf16.msra.mxu0 0
      %3014 = vmatprep.subr.bf16.mxu0 0
      %3015 = vmatpush1.bf16.msra.mxu0 0
      %3016 = vmatprep.subr.bf16.mxu0 0
      %3017 = vmatpush1.bf16.msra.mxu0 0
      %3018 = vmatprep.subr.bf16.mxu0 0
      %3019 = vmatpush1.bf16.msra.mxu0 0
      %3020 = vmatprep.subr.bf16.mxu0 0
      %3021 = vmatpush1.bf16.msra.mxu0 0
      %3022 = vmatprep.subr.bf16.mxu0 0
      %3023 = vmatpush1.bf16.msra.mxu0 0
      %3024 = vmatprep.subr.bf16.mxu0 0
      %3025 = vmatpush1.bf16.msra.mxu0 0
      %3026 = vmatprep.subr.bf16.mxu0 0
      %3027 = vmatpush1.bf16.msra.mxu0 0
      %3028 = vmatprep.subr.bf16.mxu0 0
      %3029 = vmatpush1.bf16.msra.mxu0 0
      %3030 = vmatprep.subr.bf16.mxu0 0
      %3031 = vmatpush1.bf16.msra.mxu0 0
      %3032 = vmatprep.mubr.bf16.mxu0 0
      %3033 = vmatmul.mubr.bf16.gmra.mrb[0].mxu0 %v1718
      %v3034 = vpop.f32.mrb[0].mxu0
      %v3035 = vadd.f32 0.0, %v3034
      %v3036 = vpop.f32.mrb[0].mxu0
      %v3037 = vpop.f32.mrb[0].mxu0
      %v3038 = vadd.f32 0.0, %v3037
      %v3039 = vpop.f32.mrb[0].mxu0
      %3040 = vmatprep.mubr.bf16.mxu0 0
      %3041 = vmatmul.mubr.bf16.gmra.mrb[0].mxu0 %v1721
      %v3042 = vpop.f32.mrb[0].mxu0
      %v3043 = vadd.f32 0.0, %v3042
      %v3044 = vpop.f32.mrb[0].mxu0
      %v3045 = vpop.f32.mrb[0].mxu0
      %v3046 = vadd.f32 0.0, %v3045
      %v3047 = vpop.f32.mrb[0].mxu0
      %3048 = vmatprep.mubr.bf16.mxu0 0
      %3049 = vmatmul.mubr.bf16.gmra.mrb[0].mxu0 %v1724
      %v3050 = vpop.f32.mrb[0].mxu0
      %v3051 = vadd.f32 0.0, %v3050
      %v3052 = vpop.f32.mrb[0].mxu0
      %v3053 = vpop.f32.mrb[0].mxu0
      %v3054 = vadd.f32 0.0, %v3053
      %v3055 = vpop.f32.mrb[0].mxu0
      %3056 = vmatprep.mubr.bf16.mxu0 0
      %3057 = vmatmul.mubr.bf16.gmra.mrb[0].mxu0 %v1727
      %v3058 = vpop.f32.mrb[0].mxu0
      %v3059 = vadd.f32 0.0, %v3058
      %v3060 = vpop.f32.mrb[0].mxu0
      %v3061 = vpop.f32.mrb[0].mxu0
      %v3062 = vadd.f32 0.0, %v3061
      %v3063 = vpop.f32.mrb[0].mxu0
      %3064 = vmatprep.mubr.bf16.mxu0 0
      %3065 = vmatmul.mubr.bf16.gmra.mrb[0].mxu0 %v1730
      %v3066 = vpop.f32.mrb[0].mxu0
      %v3067 = vadd.f32 0.0, %v3066
      %v3068 = vpop.f32.mrb[0].mxu0
      %v3069 = vpop.f32.mrb[0].mxu0
      %v3070 = vadd.f32 0.0, %v3069
      %v3071 = vpop.f32.mrb[0].mxu0
      %3072 = vmatprep.mubr.bf16.mxu0 0
      %3073 = vmatmul.mubr.bf16.gmra.mrb[0].mxu0 %v1733
      %v3074 = vpop.f32.mrb[0].mxu0
      %v3075 = vadd.f32 0.0, %v3074
      %v3076 = vpop.f32.mrb[0].mxu0
      %v3077 = vpop.f32.mrb[0].mxu0
      %v3078 = vadd.f32 0.0, %v3077
      %v3079 = vpop.f32.mrb[0].mxu0
      %3080 = vmatprep.mubr.bf16.mxu0 0
      %3081 = vmatmul.mubr.bf16.gmra.mrb[0].mxu0 %v1736
      %v3082 = vpop.f32.mrb[0].mxu0
      %v3083 = vadd.f32 0.0, %v3082
      %v3084 = vpop.f32.mrb[0].mxu0
      %v3085 = vpop.f32.mrb[0].mxu0
      %v3086 = vadd.f32 0.0, %v3085
      %v3087 = vpop.f32.mrb[0].mxu0
      %3088 = vmatprep.mubr.bf16.mxu0 0
      %3089 = vmatmul.mubr.bf16.gmra.mrb[0].mxu0 %v1739
      %v3090 = vpop.f32.mrb[0].mxu0
      %v3091 = vadd.f32 0.0, %v3090
      %v3092 = vpop.f32.mrb[0].mxu0
      %v3093 = vpop.f32.mrb[0].mxu0
      %v3094 = vadd.f32 0.0, %v3093
      %v3095 = vpop.f32.mrb[0].mxu0
      %3096 = vmatprep.mubr.bf16.mxu0 0
      %3097 = vmatmul.mubr.bf16.gmra.mrb[0].mxu0 %v1742
      %v3098 = vpop.f32.mrb[0].mxu0
      %v3099 = vadd.f32 0.0, %v3098
      %v3100 = vpop.f32.mrb[0].mxu0
      %v3101 = vpop.f32.mrb[0].mxu0
      %v3102 = vadd.f32 0.0, %v3101
      %v3103 = vpop.f32.mrb[0].mxu0
      %3104 = vmatprep.mubr.bf16.mxu0 0
      %3105 = vmatmul.mubr.bf16.gmra.mrb[0].mxu0 %v1745
      %v3106 = vpop.f32.mrb[0].mxu0
      %v3107 = vadd.f32 0.0, %v3106
      %v3108 = vpop.f32.mrb[0].mxu0
      %v3109 = vpop.f32.mrb[0].mxu0
      %v3110 = vadd.f32 0.0, %v3109
      %v3111 = vpop.f32.mrb[0].mxu0
      %3112 = vmatprep.mubr.bf16.mxu0 0
      %3113 = vmatmul.mubr.bf16.gmra.mrb[0].mxu0 %v1748
      %v3114 = vpop.f32.mrb[0].mxu0
      %v3115 = vadd.f32 0.0, %v3114
      %v3116 = vpop.f32.mrb[0].mxu0
      %v3117 = vpop.f32.mrb[0].mxu0
      %v3118 = vadd.f32 0.0, %v3117
      %v3119 = vpop.f32.mrb[0].mxu0
      %3120 = vmatprep.mubr.bf16.mxu0 0
      %3121 = vmatmul.mubr.bf16.gmra.mrb[0].mxu0 %v1751
      %v3122 = vpop.f32.mrb[0].mxu0
      %v3123 = vadd.f32 0.0, %v3122
      %v3124 = vpop.f32.mrb[0].mxu0
      %v3125 = vpop.f32.mrb[0].mxu0
      %v3126 = vadd.f32 0.0, %v3125
      %v3127 = vpop.f32.mrb[0].mxu0
      %3128 = vmatprep.mubr.bf16.mxu0 0
      %3129 = vmatmul.mubr.bf16.gmra.mrb[0].mxu0 %v1754
      %v3130 = vpop.f32.mrb[0].mxu0
      %v3131 = vadd.f32 0.0, %v3130
      %v3132 = vpop.f32.mrb[0].mxu0
      %v3133 = vpop.f32.mrb[0].mxu0
      %v3134 = vadd.f32 0.0, %v3133
      %v3135 = vpop.f32.mrb[0].mxu0
      %3136 = vmatprep.mubr.bf16.mxu0 0
      %3137 = vmatmul.mubr.bf16.gmra.mrb[0].mxu0 %v1757
      %v3138 = vpop.f32.mrb[0].mxu0
      %v3139 = vadd.f32 0.0, %v3138
      %v3140 = vpop.f32.mrb[0].mxu0
      %v3141 = vpop.f32.mrb[0].mxu0
      %v3142 = vadd.f32 0.0, %v3141
      %v3143 = vpop.f32.mrb[0].mxu0
      %3144 = vmatprep.mubr.bf16.mxu0 0
      %3145 = vmatmul.mubr.bf16.gmra.mrb[0].mxu0 %v2376
      %v3146 = vpop.f32.mrb[0].mxu0
      %v3147 = vadd.f32 0.0, %v3146
      %v3148 = vpop.f32.mrb[0].mxu0
      %v3149 = vpop.f32.mrb[0].mxu0
      %v3150 = vadd.f32 0.0, %v3149
      %v3151 = vpop.f32.mrb[0].mxu0
      %3152 = vmatprep.mubr.bf16.mxu0 0
      %3153 = vmatmul.mubr.bf16.gmra.mrb[0].mxu0 %v2995
      %v3154 = vpop.f32.mrb[0].mxu0
      %v3155 = vadd.f32 0.0, %v3154
      %v3156 = vpop.f32.mrb[0].mxu0
      %v3157 = vpop.f32.mrb[0].mxu0
      %v3158 = vadd.f32 0.0, %v3157
      %v3159 = vpop.f32.mrb[0].mxu0
      %3160 = vdwg.mxu0
      %v3161 = vadd.f32 %v2955, %v3035
      %v3162 = vadd.f32 %v2956, %v3038
      %v3163 = vadd.f32 %v2957, %v3043
      %v3164 = vadd.f32 %v2958, %v3046
      %v3165 = vadd.f32 %v2959, %v3051
      %v3166 = vadd.f32 %v2960, %v3054
      %v3167 = vadd.f32 %v2961, %v3059
      %v3168 = vadd.f32 %v2962, %v3062
      %v3169 = vadd.f32 %v2963, %v3067
      %v3170 = vadd.f32 %v2964, %v3070
      %v3171 = vadd.f32 %v2965, %v3075
      %v3172 = vadd.f32 %v2966, %v3078
      %v3173 = vadd.f32 %v2967, %v3083
      %v3174 = vadd.f32 %v2968, %v3086
      %v3175 = vadd.f32 %v2969, %v3091
      %v3176 = vadd.f32 %v2970, %v3094
      %v3177 = vadd.f32 %v2971, %v3099
      %v3178 = vadd.f32 %v2972, %v3102
      %v3179 = vadd.f32 %v2973, %v3107
      %v3180 = vadd.f32 %v2974, %v3110
      %v3181 = vadd.f32 %v2975, %v3115
      %v3182 = vadd.f32 %v2976, %v3118
      %v3183 = vadd.f32 %v2977, %v3123
      %v3184 = vadd.f32 %v2978, %v3126
      %v3185 = vadd.f32 %v2979, %v3131
      %v3186 = vadd.f32 %v2980, %v3134
      %v3187 = vadd.f32 %v2981, %v3139
      %v3188 = vadd.f32 %v2982, %v3142
      %v3189 = vadd.f32 %v2983, %v3147
      %v3190 = vadd.f32 %v2984, %v3150
      %v3191 = vadd.f32 %v2985, %v3155
      %v3192 = vadd.f32 %v2986, %v3158
      %v3193 = vld [vmem:[%s2] sm:$0x1]
      %v3195 = vlaneseq
      %v3196 = vshrl.u32 %v3195, 7
      %v3197 = vsub.s32 0, %v3196
      %v3198 = vrot.slane %v3193, %v3197
      %v3200 = vadd.f32 %v3161, %v3198
      %v3201 = vadd.f32 %v3162, %v3198
      %v3202 = vadd.f32 %v3163, %v3198
      %v3203 = vadd.f32 %v3164, %v3198
      %v3204 = vadd.f32 %v3165, %v3198
      %v3205 = vadd.f32 %v3166, %v3198
      %v3206 = vadd.f32 %v3167, %v3198
      %v3207 = vadd.f32 %v3168, %v3198
      %v3208 = vadd.f32 %v3169, %v3198
      %v3209 = vadd.f32 %v3170, %v3198
      %v3210 = vadd.f32 %v3171, %v3198
      %v3211 = vadd.f32 %v3172, %v3198
      %v3212 = vadd.f32 %v3173, %v3198
      %v3213 = vadd.f32 %v3174, %v3198
      %v3214 = vadd.f32 %v3175, %v3198
      %v3215 = vadd.f32 %v3176, %v3198
      %v3216 = vadd.f32 %v3177, %v3198
      %v3217 = vadd.f32 %v3178, %v3198
      %v3218 = vadd.f32 %v3179, %v3198
      %v3219 = vadd.f32 %v3180, %v3198
      %v3220 = vadd.f32 %v3181, %v3198
      %v3221 = vadd.f32 %v3182, %v3198
      %v3222 = vadd.f32 %v3183, %v3198
      %v3223 = vadd.f32 %v3184, %v3198
      %v3224 = vadd.f32 %v3185, %v3198
      %v3225 = vadd.f32 %v3186, %v3198
      %v3226 = vadd.f32 %v3187, %v3198
      %v3227 = vadd.f32 %v3188, %v3198
      %v3228 = vadd.f32 %v3189, %v3198
      %v3229 = vadd.f32 %v3190, %v3198
      %v3230 = vadd.f32 %v3191, %v3198
      %v3231 = vadd.f32 %v3192, %v3198
      %v3232 = vsel %vm1218, %v3200, 0.0
      %v3233 = vsel %vm1218, %v3201, 0.0
      %v3234 = vadd.f32 %v3232, %v3233
      %v3235 = vsel %vm1218, %v3202, 0.0
      %v3236 = vadd.f32 %v3234, %v3235
      %v3237 = vsel %vm1218, %v3203, 0.0
      %v3238 = vadd.f32 %v3236, %v3237
      %v3239 = vsel %vm1218, %v3204, 0.0
      %v3240 = vadd.f32 %v3238, %v3239
      %v3241 = vsel %vm1218, %v3205, 0.0
      %v3242 = vadd.f32 %v3240, %v3241
      %v3243 = vsel %vm1218, %v3206, 0.0
      %v3244 = vadd.f32 %v3242, %v3243
      %v3245 = vsel %vm1218, %v3207, 0.0
      %v3246 = vadd.f32 %v3244, %v3245
      %v3247 = vsel %vm1218, %v3208, 0.0
      %v3248 = vadd.f32 %v3246, %v3247
      %v3249 = vsel %vm1218, %v3209, 0.0
      %v3250 = vadd.f32 %v3248, %v3249
      %v3251 = vsel %vm1218, %v3210, 0.0
      %v3252 = vadd.f32 %v3250, %v3251
      %v3253 = vsel %vm1218, %v3211, 0.0
      %v3254 = vadd.f32 %v3252, %v3253
      %v3255 = vsel %vm1218, %v3212, 0.0
      %v3256 = vadd.f32 %v3254, %v3255
      %v3257 = vsel %vm1218, %v3213, 0.0
      %v3258 = vadd.f32 %v3256, %v3257
      %v3259 = vsel %vm1218, %v3214, 0.0
      %v3260 = vadd.f32 %v3258, %v3259
      %v3261 = vsel %vm1218, %v3215, 0.0
      %v3262 = vadd.f32 %v3260, %v3261
      %v3263 = vsel %vm1218, %v3216, 0.0
      %v3264 = vadd.f32 %v3262, %v3263
      %v3265 = vsel %vm1218, %v3217, 0.0
      %v3266 = vadd.f32 %v3264, %v3265
      %v3267 = vsel %vm1218, %v3218, 0.0
      %v3268 = vadd.f32 %v3266, %v3267
      %v3269 = vsel %vm1218, %v3219, 0.0
      %v3270 = vadd.f32 %v3268, %v3269
      %v3271 = vsel %vm1218, %v3220, 0.0
      %v3272 = vadd.f32 %v3270, %v3271
      %v3273 = vsel %vm1218, %v3221, 0.0
      %v3274 = vadd.f32 %v3272, %v3273
      %v3275 = vsel %vm1218, %v3222, 0.0
      %v3276 = vadd.f32 %v3274, %v3275
      %v3277 = vsel %vm1218, %v3223, 0.0
      %v3278 = vadd.f32 %v3276, %v3277
      %v3279 = vsel %vm1218, %v3224, 0.0
      %v3280 = vadd.f32 %v3278, %v3279
      %v3281 = vsel %vm1218, %v3225, 0.0
      %v3282 = vadd.f32 %v3280, %v3281
      %v3283 = vsel %vm1218, %v3226, 0.0
      %v3284 = vadd.f32 %v3282, %v3283
      %v3285 = vsel %vm1218, %v3227, 0.0
      %v3286 = vadd.f32 %v3284, %v3285
      %v3287 = vsel %vm1218, %v3228, 0.0
      %v3288 = vadd.f32 %v3286, %v3287
      %v3289 = vsel %vm1218, %v3229, 0.0
      %v3290 = vadd.f32 %v3288, %v3289
      %v3291 = vsel %vm1218, %v3230, 0.0
      %v3292 = vadd.f32 %v3290, %v3291
      %v3293 = vsel %vm1218, %v3231, 0.0
      %v3294 = vadd.f32 %v3292, %v3293
      %v3295 = vrot.slane %v3294, 4
      %v3296 = vadd.f32 %v3294, %v3295
      %v3297 = vrot.slane %v3296, 2
      %v3298 = vadd.f32 %v3296, %v3297
      %v3299 = vrot.slane %v3298, 1
      %v3300 = vadd.f32 %v3298, %v3299
      %vm3301 = vcmask 24576
      %3302 = vst.msk [vmem:[%s319] sm:$0x1] %vm3301, %v3300
      %v3303 = vmul.f32 %v3200, %v3200
      %v3304 = vmul.f32 %v3201, %v3201
      %v3305 = vmul.f32 %v3202, %v3202
      %v3306 = vmul.f32 %v3203, %v3203
      %v3307 = vmul.f32 %v3204, %v3204
      %v3308 = vmul.f32 %v3205, %v3205
      %v3309 = vmul.f32 %v3206, %v3206
      %v3310 = vmul.f32 %v3207, %v3207
      %v3311 = vmul.f32 %v3208, %v3208
      %v3312 = vmul.f32 %v3209, %v3209
      %v3313 = vmul.f32 %v3210, %v3210
      %v3314 = vmul.f32 %v3211, %v3211
      %v3315 = vmul.f32 %v3212, %v3212
      %v3316 = vmul.f32 %v3213, %v3213
      %v3317 = vmul.f32 %v3214, %v3214
      %v3318 = vmul.f32 %v3215, %v3215
      %v3319 = vmul.f32 %v3216, %v3216
      %v3320 = vmul.f32 %v3217, %v3217
      %v3321 = vmul.f32 %v3218, %v3218
      %v3322 = vmul.f32 %v3219, %v3219
      %v3323 = vmul.f32 %v3220, %v3220
      %v3324 = vmul.f32 %v3221, %v3221
      %v3325 = vmul.f32 %v3222, %v3222
      %v3326 = vmul.f32 %v3223, %v3223
      %v3327 = vmul.f32 %v3224, %v3224
      %v3328 = vmul.f32 %v3225, %v3225
      %v3329 = vmul.f32 %v3226, %v3226
      %v3330 = vmul.f32 %v3227, %v3227
      %v3331 = vmul.f32 %v3228, %v3228
      %v3332 = vmul.f32 %v3229, %v3229
      %v3333 = vmul.f32 %v3230, %v3230
      %v3334 = vmul.f32 %v3231, %v3231
      %v3335 = vsel %vm1218, %v3303, 0.0
      %v3336 = vsel %vm1218, %v3304, 0.0
      %v3337 = vadd.f32 %v3335, %v3336
      %v3338 = vsel %vm1218, %v3305, 0.0
      %v3339 = vadd.f32 %v3337, %v3338
      %v3340 = vsel %vm1218, %v3306, 0.0
      %v3341 = vadd.f32 %v3339, %v3340
      %v3342 = vsel %vm1218, %v3307, 0.0
      %v3343 = vadd.f32 %v3341, %v3342
      %v3344 = vsel %vm1218, %v3308, 0.0
      %v3345 = vadd.f32 %v3343, %v3344
      %v3346 = vsel %vm1218, %v3309, 0.0
      %v3347 = vadd.f32 %v3345, %v3346
      %v3348 = vsel %vm1218, %v3310, 0.0
      %v3349 = vadd.f32 %v3347, %v3348
      %v3350 = vsel %vm1218, %v3311, 0.0
      %v3351 = vadd.f32 %v3349, %v3350
      %v3352 = vsel %vm1218, %v3312, 0.0
      %v3353 = vadd.f32 %v3351, %v3352
      %v3354 = vsel %vm1218, %v3313, 0.0
      %v3355 = vadd.f32 %v3353, %v3354
      %v3356 = vsel %vm1218, %v3314, 0.0
      %v3357 = vadd.f32 %v3355, %v3356
      %v3358 = vsel %vm1218, %v3315, 0.0
      %v3359 = vadd.f32 %v3357, %v3358
      %v3360 = vsel %vm1218, %v3316, 0.0
      %v3361 = vadd.f32 %v3359, %v3360
      %v3362 = vsel %vm1218, %v3317, 0.0
      %v3363 = vadd.f32 %v3361, %v3362
      %v3364 = vsel %vm1218, %v3318, 0.0
      %v3365 = vadd.f32 %v3363, %v3364
      %v3366 = vsel %vm1218, %v3319, 0.0
      %v3367 = vadd.f32 %v3365, %v3366
      %v3368 = vsel %vm1218, %v3320, 0.0
      %v3369 = vadd.f32 %v3367, %v3368
      %v3370 = vsel %vm1218, %v3321, 0.0
      %v3371 = vadd.f32 %v3369, %v3370
      %v3372 = vsel %vm1218, %v3322, 0.0
      %v3373 = vadd.f32 %v3371, %v3372
      %v3374 = vsel %vm1218, %v3323, 0.0
      %v3375 = vadd.f32 %v3373, %v3374
      %v3376 = vsel %vm1218, %v3324, 0.0
      %v3377 = vadd.f32 %v3375, %v3376
      %v3378 = vsel %vm1218, %v3325, 0.0
      %v3379 = vadd.f32 %v3377, %v3378
      %v3380 = vsel %vm1218, %v3326, 0.0
      %v3381 = vadd.f32 %v3379, %v3380
      %v3382 = vsel %vm1218, %v3327, 0.0
      %v3383 = vadd.f32 %v3381, %v3382
      %v3384 = vsel %vm1218, %v3328, 0.0
      %v3385 = vadd.f32 %v3383, %v3384
      %v3386 = vsel %vm1218, %v3329, 0.0
      %v3387 = vadd.f32 %v3385, %v3386
      %v3388 = vsel %vm1218, %v3330, 0.0
      %v3389 = vadd.f32 %v3387, %v3388
      %v3390 = vsel %vm1218, %v3331, 0.0
      %v3391 = vadd.f32 %v3389, %v3390
      %v3392 = vsel %vm1218, %v3332, 0.0
      %v3393 = vadd.f32 %v3391, %v3392
      %v3394 = vsel %vm1218, %v3333, 0.0
      %v3395 = vadd.f32 %v3393, %v3394
      %v3396 = vsel %vm1218, %v3334, 0.0
      %v3397 = vadd.f32 %v3395, %v3396
      %v3398 = vrot.slane %v3397, 4
      %v3399 = vadd.f32 %v3397, %v3398
      %v3400 = vrot.slane %v3399, 2
      %v3401 = vadd.f32 %v3399, %v3400
      %v3402 = vrot.slane %v3401, 1
      %v3403 = vadd.f32 %v3401, %v3402
      %3404 = vst.msk [vmem:[%s322] sm:$0x1] %vm3301, %v3403
      %v3405 = vpack.c.bf16 %v3201, %v3200
      %v3406 = vpack.c.bf16 %v3203, %v3202
      %v3407 = vpack.c.bf16 %v3205, %v3204
      %v3408 = vpack.c.bf16 %v3207, %v3206
      %v3409 = vpack.c.bf16 %v3209, %v3208
      %v3410 = vpack.c.bf16 %v3211, %v3210
      %v3411 = vpack.c.bf16 %v3213, %v3212
      %v3412 = vpack.c.bf16 %v3215, %v3214
      %v3413 = vpack.c.bf16 %v3217, %v3216
      %v3414 = vpack.c.bf16 %v3219, %v3218
      %v3415 = vpack.c.bf16 %v3221, %v3220
      %v3416 = vpack.c.bf16 %v3223, %v3222
      %v3417 = vpack.c.bf16 %v3225, %v3224
      %v3418 = vpack.c.bf16 %v3227, %v3226
      %v3419 = vpack.c.bf16 %v3229, %v3228
      %v3420 = vpack.c.bf16 %v3231, %v3230
      %v3437 = vunpack.c.l.b16 %v3405
      %v3438 = vunpack.c.h.b16 %v3405
      %v3439 = vunpack.c.l.b16 %v3406
      %v3440 = vunpack.c.h.b16 %v3406
      %v3441 = vunpack.c.l.b16 %v3407
      %v3442 = vunpack.c.h.b16 %v3407
      %v3443 = vunpack.c.l.b16 %v3408
      %v3444 = vunpack.c.h.b16 %v3408
      %v3445 = vunpack.c.l.b16 %v3409
      %v3446 = vunpack.c.h.b16 %v3409
      %v3447 = vunpack.c.l.b16 %v3410
      %v3448 = vunpack.c.h.b16 %v3410
      %v3449 = vunpack.c.l.b16 %v3411
      %v3450 = vunpack.c.h.b16 %v3411
      %v3451 = vunpack.c.l.b16 %v3412
      %v3452 = vunpack.c.h.b16 %v3412
      %v3453 = vunpack.c.l.b16 %v3413
      %v3454 = vunpack.c.h.b16 %v3413
      %v3455 = vunpack.c.l.b16 %v3414
      %v3456 = vunpack.c.h.b16 %v3414
      %v3457 = vunpack.c.l.b16 %v3415
      %v3458 = vunpack.c.h.b16 %v3415
      %v3459 = vunpack.c.l.b16 %v3416
      %v3460 = vunpack.c.h.b16 %v3416
      %v3461 = vunpack.c.l.b16 %v3417
      %v3462 = vunpack.c.h.b16 %v3417
      %v3463 = vunpack.c.l.b16 %v3418
      %v3464 = vunpack.c.h.b16 %v3418
      %v3465 = vunpack.c.l.b16 %v3419
      %v3466 = vunpack.c.h.b16 %v3419
      %v3467 = vunpack.c.l.b16 %v3420
      %v3468 = vunpack.c.h.b16 %v3420
      %v3469 = vpack.c.b16 %v3437, %v3437
      %v3470 = vpack.c.b16 %v3438, %v3438
      %v3471 = vpack.c.b16 %v3439, %v3439
      %v3472 = vpack.c.b16 %v3440, %v3440
      %v3473 = vpack.c.b16 %v3441, %v3441
      %v3474 = vpack.c.b16 %v3442, %v3442
      %v3475 = vpack.c.b16 %v3443, %v3443
      %v3476 = vpack.c.b16 %v3444, %v3444
      %v3477 = vpack.c.b16 %v3445, %v3445
      %v3478 = vpack.c.b16 %v3446, %v3446
      %v3479 = vpack.c.b16 %v3447, %v3447
      %v3480 = vpack.c.b16 %v3448, %v3448
      %v3481 = vpack.c.b16 %v3449, %v3449
      %v3482 = vpack.c.b16 %v3450, %v3450
      %v3483 = vpack.c.b16 %v3451, %v3451
      %v3484 = vpack.c.b16 %v3452, %v3452
      %v3485 = vpack.c.b16 %v3453, %v3453
      %v3486 = vpack.c.b16 %v3454, %v3454
      %v3487 = vpack.c.b16 %v3455, %v3455
      %v3488 = vpack.c.b16 %v3456, %v3456
      %v3489 = vpack.c.b16 %v3457, %v3457
      %v3490 = vpack.c.b16 %v3458, %v3458
      %v3491 = vpack.c.b16 %v3459, %v3459
      %v3492 = vpack.c.b16 %v3460, %v3460
      %v3493 = vpack.c.b16 %v3461, %v3461
      %v3494 = vpack.c.b16 %v3462, %v3462
      %v3495 = vpack.c.b16 %v3463, %v3463
      %v3496 = vpack.c.b16 %v3464, %v3464
      %v3497 = vpack.c.b16 %v3465, %v3465
      %v3498 = vpack.c.b16 %v3466, %v3466
      %v3499 = vpack.c.b16 %v3467, %v3467
      %v3500 = vpack.c.b16 %v3468, %v3468
      %vm3533 = vcmask 27648
      %3534 = vst.msk [vmem:[%s316] sm:$0xf] %vm3533, %v3469
      %3535 = vst.msk [vmem:[%s316 + $0x4] sm:$0xf] %vm3533, %v3470
      %3536 = vst.msk [vmem:[%s316 + $0x8] sm:$0xf] %vm3533, %v3471
      %3537 = vst.msk [vmem:[%s316 + $0xc] sm:$0xf] %vm3533, %v3472
      %3538 = vst.msk [vmem:[%s316 + $0x10] sm:$0xf] %vm3533, %v3473
      %3539 = vst.msk [vmem:[%s316 + $0x14] sm:$0xf] %vm3533, %v3474
      %3540 = vst.msk [vmem:[%s316 + $0x18] sm:$0xf] %vm3533, %v3475
      %3541 = vst.msk [vmem:[%s316 + $0x1c] sm:$0xf] %vm3533, %v3476
      %3542 = vst.msk [vmem:[%s316 + $0x20] sm:$0xf] %vm3533, %v3477
      %3543 = vst.msk [vmem:[%s316 + $0x24] sm:$0xf] %vm3533, %v3478
      %3544 = vst.msk [vmem:[%s316 + $0x28] sm:$0xf] %vm3533, %v3479
      %3545 = vst.msk [vmem:[%s316 + $0x2c] sm:$0xf] %vm3533, %v3480
      %3546 = vst.msk [vmem:[%s316 + $0x30] sm:$0xf] %vm3533, %v3481
      %3547 = vst.msk [vmem:[%s316 + $0x34] sm:$0xf] %vm3533, %v3482
      %3548 = vst.msk [vmem:[%s316 + $0x38] sm:$0xf] %vm3533, %v3483
      %3549 = vst.msk [vmem:[%s316 + $0x3c] sm:$0xf] %vm3533, %v3484
      %3550 = vst.msk [vmem:[%s316 + $0x40] sm:$0xf] %vm3533, %v3485
      %3551 = vst.msk [vmem:[%s316 + $0x44] sm:$0xf] %vm3533, %v3486
      %3552 = vst.msk [vmem:[%s316 + $0x48] sm:$0xf] %vm3533, %v3487
      %3553 = vst.msk [vmem:[%s316 + $0x4c] sm:$0xf] %vm3533, %v3488
      %3554 = vst.msk [vmem:[%s316 + $0x50] sm:$0xf] %vm3533, %v3489
      %3555 = vst.msk [vmem:[%s316 + $0x54] sm:$0xf] %vm3533, %v3490
      %3556 = vst.msk [vmem:[%s316 + $0x58] sm:$0xf] %vm3533, %v3491
      %3557 = vst.msk [vmem:[%s316 + $0x5c] sm:$0xf] %vm3533, %v3492
      %3558 = vst.msk [vmem:[%s316 + $0x60] sm:$0xf] %vm3533, %v3493
      %3559 = vst.msk [vmem:[%s316 + $0x64] sm:$0xf] %vm3533, %v3494
      %3560 = vst.msk [vmem:[%s316 + $0x68] sm:$0xf] %vm3533, %v3495
      %3561 = vst.msk [vmem:[%s316 + $0x6c] sm:$0xf] %vm3533, %v3496
      %3562 = vst.msk [vmem:[%s316 + $0x70] sm:$0xf] %vm3533, %v3497
      %3563 = vst.msk [vmem:[%s316 + $0x74] sm:$0xf] %vm3533, %v3498
      %3564 = vst.msk [vmem:[%s316 + $0x78] sm:$0xf] %vm3533, %v3499
      %3565 = vst.msk [vmem:[%s316 + $0x7c] sm:$0xf] %vm3533, %v3500
      %p3566 = scmp.lt.s32.totalorder %s20, 1
      %s3567 = scalar_select %p3566, %s20, 1
      %s3568 = smul.addr %s3567, 32
      %s3569 = smul.addr %s3568, 4
      %s3570 = scalar_lea.vmem %s6, %s3569
      %p3571 = scmp.lt.s32.totalorder %s20, 1
      %s3572 = scalar_select %p3571, %s20, 1
      %s3573 = scalar_lea.vmem %s7, %s3572
      %p3574 = scmp.lt.s32.totalorder %s20, 1
      %s3575 = scalar_select %p3574, %s20, 1
      %s3576 = scalar_lea.vmem %s8, %s3575
      // Predicated region
      $region45: #{residual_forward.4} parent=43 // pred_check
        %p3577 = pneg %p169
      $region46: #{residual_forward.4} parent=43 // pred_check_branch
        %3579 = sbr.rel (%p3577) target = $region48
      $region47: #{residual_forward.4} parent=43 // pred_region
        _
      $region48: #{residual_forward.4} parent=43 // pred_fallthru
        _
      // Predicated region
      $region49: #{residual_forward.4} parent=43 // pred_check
        %p3580 = pneg %p195
      $region50: #{residual_forward.4} parent=43 // pred_check_branch
        %3582 = sbr.rel (%p3580) target = $region52
      $region51: #{residual_forward.4} parent=43 // pred_region
        _
      $region52: #{residual_forward.4} parent=43 // pred_fallthru
        _
      // Predicated region
      $region53: #{residual_forward.4} parent=43 // pred_check
        %p3583 = pneg %p221
      $region54: #{residual_forward.4} parent=43 // pred_check_branch
        %3585 = sbr.rel (%p3583) target = $region56
      $region55: #{residual_forward.4} parent=43 // pred_region
        _
      $region56: #{residual_forward.4} parent=43 // pred_fallthru
        _
    $region44: #{residual_forward.4} parent=5 // pred_fallthru
      _
    %p3586 = scmp.le.s32.totalorder 2, %s15
    // Predicated region
    $region57: #{residual_forward.4} parent=5 // pred_check
      %p3587 = pneg %p3586
    $region58: #{residual_forward.4} parent=5 // pred_check_branch
      %3589 = sbr.rel (%p3587) target = $region60
    $region59: #{residual_forward.4} parent=5 // pred_region
      %s3590 = ssub.s32 %s15, 2
      // Predicated region
      $region61: #{residual_forward.4} parent=59 // pred_check
        %p3591 = pneg %p175
      $region62: #{residual_forward.4} parent=59 // pred_check_branch
        %3593 = sbr.rel (%p3591) target = $region64
      $region63: #{residual_forward.4} parent=59 // pred_region
        %p3594 = scmp.lt.s32.totalorder %s21, 1
        %s3595 = scalar_select %p3594, %s21, 1
        %s3596 = smul.addr %s3595, 32
        %s3597 = smul.addr %s3596, 4
        %s3598 = scalar_lea.vmem %s6, %s3597
      $region64: #{residual_forward.4} parent=59 // pred_fallthru
        _
      // Predicated region
      $region65: #{residual_forward.4} parent=59 // pred_check
        %p3599 = pneg %p201
      $region66: #{residual_forward.4} parent=59 // pred_check_branch
        %3601 = sbr.rel (%p3599) target = $region68
      $region67: #{residual_forward.4} parent=59 // pred_region
        %p3602 = scmp.lt.s32.totalorder %s21, 1
        %s3603 = scalar_select %p3602, %s21, 1
        %s3604 = scalar_lea.vmem %s7, %s3603
      $region68: #{residual_forward.4} parent=59 // pred_fallthru
        _
      // Predicated region
      $region69: #{residual_forward.4} parent=59 // pred_check
        %p3605 = pneg %p227
      $region70: #{residual_forward.4} parent=59 // pred_check_branch
        %3607 = sbr.rel (%p3605) target = $region72
      $region71: #{residual_forward.4} parent=59 // pred_region
        %p3608 = scmp.lt.s32.totalorder %s21, 1
        %s3609 = scalar_select %p3608, %s21, 1
        %s3610 = scalar_lea.vmem %s8, %s3609
      $region72: #{residual_forward.4} parent=59 // pred_fallthru
        _
    $region60: #{residual_forward.4} parent=5 // pred_fallthru
      _
  $region6: #{residual_forward.4} parent=0 // loop_footer
    %s19 = sadd.s32 1, %s15
  $region7: #{residual_forward.4} parent=0 // loop_footer_branch
    %14 = sbr.rel target = $region3
  $region8: #{residual_forward.4} parent=0 // loop_exit
    _

// kernel: residual_forward.3
$region0: #{residual_forward.3}
  #allocation0 [shape = 'u32[]', space=smem, size = 0x4, offset = 0x4, fixed_abs, tag = 'smem constant byte address 0x4 - core index']
  #allocation1 [shape = 'u32[144,128]{1,0:T(1,128)}', space=vmem, size = 0x12000, scoped, tag = 'internal scratch']
  %s0 = inlined_call_operand.vmem [shape: bf16[2,18,18,4], index: 0, kind: input, shape index: {}]
  %s1 = inlined_call_operand.vmem [shape: bf16[9,4,4], index: 1, kind: input, shape index: {}]
  %s2 = inlined_call_operand.vmem [shape: f32[1,4], index: 2, kind: input, shape index: {}]
  %s3 = inlined_call_operand.vmem [shape: bf16[2,18,18,4], index: 3, kind: output, shape index: {0}]
  %s4 = inlined_call_operand.vmem [shape: f32[2,1,4], index: 4, kind: output, shape index: {1}]
  %s5 = inlined_call_operand.vmem [shape: f32[2,1,4], index: 5, kind: output, shape index: {2}]
  %6 = xla_tuple %s3, %s4, %s5
  %s7 = sld [smem:[#allocation0]]
  $region61: #{residual_forward.3} parent=0
    _
  %s9 = ssub.s32 1, %s7
  %s10 = scalar_select 0, %s9, %s7
  loop: start=0, step=1, limit=4
  $region2: #{residual_forward.3} parent=0 // loop_pre_header
    _
  $region3: #{residual_forward.3} parent=0 // loop_header
    %s12 = sphi 0, %s16
    %p13 = scmp.ge.s32.totalorder %s12, 4
    %s22 = sphi 0, %s24
    %s25 = sphi 0, %s22
    %s26 = sphi 0, %s25
    %s42 = sphi 0, %s26
    %s46 = sphi 0, %s46
    %s48 = sphi 0, %s46
    %s49 = sphi 0, %s48
    %s63 = sphi 0, %s49
    %s67 = sphi 0, %s67
    %s69 = sphi 0, %s67
    %s70 = sphi 0, %s69
    %s84 = sphi 0, %s70
    %s90 = sphi 0, %s92
    %s93 = sphi 0, %s90
    %s94 = sphi 0, %s93
    %s110 = sphi 0, %s94
    %s116 = sphi 0, %s118
    %s119 = sphi 0, %s116
    %s120 = sphi 0, %s119
    %s136 = sphi 0, %s120
    %s142 = sphi 0, %s144
    %s145 = sphi 0, %s142
    %s146 = sphi 0, %s145
    %s162 = sphi 0, %s146
  $region4: #{residual_forward.3} parent=0 // loop_header_branch
    %15 = sbr.rel (%p13) target = $region8
  $region5: #{residual_forward.3} parent=0 // loop_body
    %s17 = ssub.s32 %s12, 1
    %s18 = ssub.s32 %s12, 2
    %s19 = sadd.s32 %s12, 1
    %s20 = ssub.s32 %s12, %s19
    %p21 = scmp.eq.s32.totalorder %s20, 0
    %s23 = sadd.s32 %s22, 1
    %s24 = scalar_select %p21, %s22, %s23
    %p27 = pneg %p21
    %p28 = scmp.eq.s32.totalorder %s12, 1
    %p29 = por %p27, %p28
    %p30 = scmp.ne.s32.totalorder %s22, %s25
    %p31 = scmp.eq.s32.totalorder %s12, 0
    %p32 = por %p30, %p31
    %p33 = scmp.ne.s32.totalorder %s22, %s25
    %p34 = scmp.eq.s32.totalorder %s17, 1
    %p35 = por %p33, %p34
    %p36 = scmp.ne.s32.totalorder %s25, %s26
    %p37 = scmp.eq.s32.totalorder %s17, 0
    %p38 = por %p36, %p37
    %p39 = scmp.ne.s32.totalorder %s25, %s26
    %p40 = scmp.eq.s32.totalorder %s18, 1
    %p41 = por %p39, %p40
    %p43 = scmp.ne.s32.totalorder %s26, %s42
    %p44 = scmp.eq.s32.totalorder %s18, 0
    %p45 = por %p43, %p44
    %s47 = sadd.s32 %s46, 1
    %p50 = scmp.eq.s32.totalorder %s12, 1
    %p51 = scmp.ne.s32.totalorder %s46, %s48
    %p52 = scmp.eq.s32.totalorder %s12, 0
    %p53 = por %p51, %p52
    %p54 = scmp.ne.s32.totalorder %s46, %s48
    %p55 = scmp.eq.s32.totalorder %s17, 1
    %p56 = por %p54, %p55
    %p57 = scmp.ne.s32.totalorder %s48, %s49
    %p58 = scmp.eq.s32.totalorder %s17, 0
    %p59 = por %p57, %p58
    %p60 = scmp.ne.s32.totalorder %s48, %s49
    %p61 = scmp.eq.s32.totalorder %s18, 1
    %p62 = por %p60, %p61
    %p64 = scmp.ne.s32.totalorder %s49, %s63
    %p65 = scmp.eq.s32.totalorder %s18, 0
    %p66 = por %p64, %p65
    %s68 = sadd.s32 %s67, 1
    %p71 = scmp.eq.s32.totalorder %s12, 1
    %p72 = scmp.ne.s32.totalorder %s67, %s69
    %p73 = scmp.eq.s32.totalorder %s12, 0
    %p74 = por %p72, %p73
    %p75 = scmp.ne.s32.totalorder %s67, %s69
    %p76 = scmp.eq.s32.totalorder %s17, 1
    %p77 = por %p75, %p76
    %p78 = scmp.ne.s32.totalorder %s69, %s70
    %p79 = scmp.eq.s32.totalorder %s17, 0
    %p80 = por %p78, %p79
    %p81 = scmp.ne.s32.totalorder %s69, %s70
    %p82 = scmp.eq.s32.totalorder %s18, 1
    %p83 = por %p81, %p82
    %p85 = scmp.ne.s32.totalorder %s70, %s84
    %p86 = scmp.eq.s32.totalorder %s18, 0
    %p87 = por %p85, %p86
    %s88 = ssub.s32 %s12, %s19
    %p89 = scmp.eq.s32.totalorder %s88, 0
    %s91 = sadd.s32 %s90, 1
    %s92 = scalar_select %p89, %s90, %s91
    %p95 = pneg %p89
    %p96 = scmp.eq.s32.totalorder %s12, 1
    %p97 = por %p95, %p96
    %p98 = scmp.ne.s32.totalorder %s90, %s93
    %p99 = scmp.eq.s32.totalorder %s12, 0
    %p100 = por %p98, %p99
    %p101 = scmp.ne.s32.totalorder %s90, %s93
    %p102 = scmp.eq.s32.totalorder %s17, 1
    %p103 = por %p101, %p102
    %p104 = scmp.ne.s32.totalorder %s93, %s94
    %p105 = scmp.eq.s32.totalorder %s17, 0
    %p106 = por %p104, %p105
    %p107 = scmp.ne.s32.totalorder %s93, %s94
    %p108 = scmp.eq.s32.totalorder %s18, 1
    %p109 = por %p107, %p108
    %p111 = scmp.ne.s32.totalorder %s94, %s110
    %p112 = scmp.eq.s32.totalorder %s18, 0
    %p113 = por %p111, %p112
    %s114 = ssub.s32 %s12, %s19
    %p115 = scmp.eq.s32.totalorder %s114, 0
    %s117 = sadd.s32 %s116, 1
    %s118 = scalar_select %p115, %s116, %s117
    %p121 = pneg %p115
    %p122 = scmp.eq.s32.totalorder %s12, 1
    %p123 = por %p121, %p122
    %p124 = scmp.ne.s32.totalorder %s116, %s119
    %p125 = scmp.eq.s32.totalorder %s12, 0
    %p126 = por %p124, %p125
    %p127 = scmp.ne.s32.totalorder %s116, %s119
    %p128 = scmp.eq.s32.totalorder %s17, 1
    %p129 = por %p127, %p128
    %p130 = scmp.ne.s32.totalorder %s119, %s120
    %p131 = scmp.eq.s32.totalorder %s17, 0
    %p132 = por %p130, %p131
    %p133 = scmp.ne.s32.totalorder %s119, %s120
    %p134 = scmp.eq.s32.totalorder %s18, 1
    %p135 = por %p133, %p134
    %p137 = scmp.ne.s32.totalorder %s120, %s136
    %p138 = scmp.eq.s32.totalorder %s18, 0
    %p139 = por %p137, %p138
    %s140 = ssub.s32 %s12, %s19
    %p141 = scmp.eq.s32.totalorder %s140, 0
    %s143 = sadd.s32 %s142, 1
    %s144 = scalar_select %p141, %s142, %s143
    %p147 = pneg %p141
    %p148 = scmp.eq.s32.totalorder %s12, 1
    %p149 = por %p147, %p148
    %p150 = scmp.ne.s32.totalorder %s142, %s145
    %p151 = scmp.eq.s32.totalorder %s12, 0
    %p152 = por %p150, %p151
    %p153 = scmp.ne.s32.totalorder %s142, %s145
    %p154 = scmp.eq.s32.totalorder %s17, 1
    %p155 = por %p153, %p154
    %p156 = scmp.ne.s32.totalorder %s145, %s146
    %p157 = scmp.eq.s32.totalorder %s17, 0
    %p158 = por %p156, %p157
    %p159 = scmp.ne.s32.totalorder %s145, %s146
    %p160 = scmp.eq.s32.totalorder %s18, 1
    %p161 = por %p159, %p160
    %p163 = scmp.ne.s32.totalorder %s146, %s162
    %p164 = scmp.eq.s32.totalorder %s18, 0
    %p165 = por %p163, %p164
    %p166 = scmp.le.s32.totalorder 1, %s12
    %p167 = scmp.lt.s32.totalorder %s12, 3
    %p168 = pnand %p166, %p167
    %p169 = pneg %p168
    // Predicated region
    $region9: #{residual_forward.3} parent=5 // pred_check
      _
    $region10: #{residual_forward.3} parent=5 // pred_check_branch
      %171 = sbr.rel (%p168) target = $region12
    $region11: #{residual_forward.3} parent=5 // pred_region
      %s172 = ssub.s32 %s12, 1
      // Predicated region
      $region13: #{residual_forward.3} parent=11 // pred_check
        %p173 = pneg %p59
      $region14: #{residual_forward.3} parent=11 // pred_check_branch
        %175 = sbr.rel (%p173) target = $region16
      $region15: #{residual_forward.3} parent=11 // pred_region
        _
      $region16: #{residual_forward.3} parent=11 // pred_fallthru
        _
      // Predicated region
      $region17: #{residual_forward.3} parent=11 // pred_check
        %p176 = pneg %p80
      $region18: #{residual_forward.3} parent=11 // pred_check_branch
        %178 = sbr.rel (%p176) target = $region20
      $region19: #{residual_forward.3} parent=11 // pred_region
        _
      $region20: #{residual_forward.3} parent=11 // pred_fallthru
        _
    $region12: #{residual_forward.3} parent=5 // pred_fallthru
      _
    %p179 = scmp.lt.s32.totalorder %s12, 2
    // Predicated region
    $region21: #{residual_forward.3} parent=5 // pred_check
      %p180 = pneg %p179
    $region22: #{residual_forward.3} parent=5 // pred_check_branch
      %182 = sbr.rel (%p180) target = $region24
    $region23: #{residual_forward.3} parent=5 // pred_region
      // Predicated region
      $region25: #{residual_forward.3} parent=23 // pred_check
        %p183 = pneg %p32
      $region26: #{residual_forward.3} parent=23 // pred_check_branch
        %185 = sbr.rel (%p183) target = $region28
      $region27: #{residual_forward.3} parent=23 // pred_region
        %p186 = scmp.lt.s32.totalorder %s12, 1
        %s187 = scalar_select %p186, %s12, 1
        %s188 = smul.addr %s187, 54
        %s189 = smul.addr %s188, 4
        %s190 = scalar_lea.vmem %s0, %s189
      $region28: #{residual_forward.3} parent=23 // pred_fallthru
        _
    $region24: #{residual_forward.3} parent=5 // pred_fallthru
      _
    %p191 = scmp.le.s32.totalorder 1, %s12
    %p192 = scmp.lt.s32.totalorder %s12, 3
    %p193 = pnand %p191, %p192
    %p194 = pneg %p193
    // Predicated region
    $region29: #{residual_forward.3} parent=5 // pred_check
      _
    $region30: #{residual_forward.3} parent=5 // pred_check_branch
      %196 = sbr.rel (%p193) target = $region32
    $region31: #{residual_forward.3} parent=5 // pred_region
      %s197 = ssub.s32 %s12, 1
      %p198 = scmp.lt.s32.totalorder %s17, 1
      %s199 = scalar_select %p198, %s17, 1
      %s200 = smul.addr %s199, 54
      %s201 = smul.addr %s200, 4
      %s202 = scalar_lea.vmem %s0, %s201
      %p203 = pneg %p38
      %p204 = pneg %p35
      %p205 = pneg %p59
      %p206 = pneg %p56
      %p207 = pneg %p80
      %p208 = pneg %p77
      %p209 = pneg %p106
      %p210 = pneg %p103
      %p211 = scmp.lt.s32.totalorder %s17, 1
      %s212 = scalar_select %p211, %s17, 1
      %s213 = smul.addr %s212, 54
      %s214 = smul.addr %s213, 4
      %s215 = scalar_lea.vmem %s3, %s214
      %p216 = pneg %p132
      %p217 = pneg %p129
      %p218 = scmp.lt.s32.totalorder %s17, 1
      %s219 = scalar_select %p218, %s17, 1
      %s220 = scalar_lea.vmem %s4, %s219
      %p221 = pneg %p158
      %p222 = pneg %p155
      %p223 = scmp.lt.s32.totalorder %s17, 1
      %s224 = scalar_select %p223, %s17, 1
      %s225 = scalar_lea.vmem %s5, %s224
      %p226 = scmp.lt.s32.totalorder %s17, 1
      %s227 = scalar_select %p226, %s17, 1
      %s228 = smul.addr %s227, 54
      %s229 = smul.addr %s228, 4
      %s230 = scalar_lea.vmem %s0, %s229
      %p231 = scmp.lt.s32.totalorder %s17, 1
      %s232 = scalar_select %p231, %s17, 1
      %s233 = smul.addr %s232, 54
      %s234 = smul.addr %s233, 4
      %s235 = scalar_lea.vmem %s3, %s234
      %p236 = scmp.lt.s32.totalorder %s17, 1
      %s237 = scalar_select %p236, %s17, 1
      %s238 = scalar_lea.vmem %s4, %s237
      %p239 = scmp.lt.s32.totalorder %s17, 1
      %s240 = scalar_select %p239, %s17, 1
      %s241 = scalar_lea.vmem %s5, %s240
      %v243 = vld [vmem:[%s230] sm:$0xf]
      %v244 = vld [vmem:[%s230 + $0x4] sm:$0xf]
      %v245 = vld [vmem:[%s230 + $0x8] sm:$0x1]
      %v246 = vld [vmem:[%s230 + $0xc] sm:$0xf]
      %v247 = vld [vmem:[%s230 + $0x10] sm:$0xf]
      %v248 = vld [vmem:[%s230 + $0x14] sm:$0x1]
      %v249 = vld [vmem:[%s230 + $0x18] sm:$0xf]
      %v250 = vld [vmem:[%s230 + $0x1c] sm:$0xf]
      %v251 = vld [vmem:[%s230 + $0x20] sm:$0x1]
      %v252 = vld [vmem:[%s230 + $0x24] sm:$0xf]
      %v253 = vld [vmem:[%s230 + $0x28] sm:$0xf]
      %v254 = vld [vmem:[%s230 + $0x2c] sm:$0x1]
      %v255 = vld [vmem:[%s230 + $0x30] sm:$0xf]
      %v256 = vld [vmem:[%s230 + $0x34] sm:$0xf]
      %v257 = vld [vmem:[%s230 + $0x38] sm:$0x1]
      %v258 = vld [vmem:[%s230 + $0x3c] sm:$0xf]
      %v259 = vld [vmem:[%s230 + $0x40] sm:$0xf]
      %v260 = vld [vmem:[%s230 + $0x44] sm:$0x1]
      %v261 = vld [vmem:[%s230 + $0x48] sm:$0xf]
      %v262 = vld [vmem:[%s230 + $0x4c] sm:$0xf]
      %v263 = vld [vmem:[%s230 + $0x50] sm:$0x1]
      %v264 = vld [vmem:[%s230 + $0x54] sm:$0xf]
      %v265 = vld [vmem:[%s230 + $0x58] sm:$0xf]
      %v266 = vld [vmem:[%s230 + $0x5c] sm:$0x1]
      %v267 = vld [vmem:[%s230 + $0x60] sm:$0xf]
      %v268 = vld [vmem:[%s230 + $0x64] sm:$0xf]
      %v269 = vld [vmem:[%s230 + $0x68] sm:$0x1]
      %v270 = vld [vmem:[%s230 + $0x6c] sm:$0xf]
      %v271 = vld [vmem:[%s230 + $0x70] sm:$0xf]
      %v272 = vld [vmem:[%s230 + $0x74] sm:$0x1]
      %v273 = vld [vmem:[%s230 + $0x78] sm:$0xf]
      %v274 = vld [vmem:[%s230 + $0x7c] sm:$0xf]
      %v275 = vld [vmem:[%s230 + $0x80] sm:$0x1]
      %v276 = vld [vmem:[%s230 + $0x84] sm:$0xf]
      %v277 = vld [vmem:[%s230 + $0x88] sm:$0xf]
      %v278 = vld [vmem:[%s230 + $0x8c] sm:$0x1]
      %v279 = vld [vmem:[%s230 + $0x90] sm:$0xf]
      %v280 = vld [vmem:[%s230 + $0x94] sm:$0xf]
      %v281 = vld [vmem:[%s230 + $0x98] sm:$0x1]
      %v282 = vld [vmem:[%s230 + $0x9c] sm:$0xf]
      %v283 = vld [vmem:[%s230 + $0xa0] sm:$0xf]
      %v284 = vld [vmem:[%s230 + $0xa4] sm:$0x1]
      %v285 = vld [vmem:[%s230 + $0xa8] sm:$0xf]
      %v286 = vld [vmem:[%s230 + $0xac] sm:$0xf]
      %v287 = vld [vmem:[%s230 + $0xb0] sm:$0x1]
      %v288 = vld [vmem:[%s230 + $0xb4] sm:$0xf]
      %v289 = vld [vmem:[%s230 + $0xb8] sm:$0xf]
      %v290 = vld [vmem:[%s230 + $0xbc] sm:$0x1]
      %v291 = vld [vmem:[%s230 + $0xc0] sm:$0xf]
      %v292 = vld [vmem:[%s230 + $0xc4] sm:$0xf]
      %v293 = vld [vmem:[%s230 + $0xc8] sm:$0x1]
      %v294 = vld [vmem:[%s230 + $0xcc] sm:$0xf]
      %v295 = vld [vmem:[%s230 + $0xd0] sm:$0xf]
      %v296 = vld [vmem:[%s230 + $0xd4] sm:$0x1]
      %v297 = vld [vmem:[%s1] sm:$0x3]
      %vm298 = vsmask.f32 3328
      %vm299 = vsmask.f32 7440
      %vm300 = vmor %vm298, %vm299
      %v302 = vshrl.u32 %v243, 16
      %v304 = vrot.slane %v302, 4
      %v305 = vshll.u32 %v243, 16
      %v307 = vrot.slane %v305, 5
      %v308 = vor.u32 %v304, %v307
      %v309 = vrot.slane %v308, 4
      %v311 = vshll.u32 %v244, 16
      %v313 = vrot.slane %v311, 5
      %v314 = vsel %vm300, %v309, %v313
      %v315 = vshrl.u32 %v244, 16
      %v317 = vrot.slane %v315, 4
      %v318 = vor.u32 %v317, %v313
      %v319 = vrot.slane %v318, 4
      %v321 = vshll.u32 %v245, 16
      %v323 = vrot.slane %v321, 5
      %v324 = vsel %vm300, %v319, %v323
      %v326 = vshrl.u32 %v246, 16
      %v328 = vrot.slane %v326, 4
      %v329 = vshll.u32 %v246, 16
      %v331 = vrot.slane %v329, 5
      %v332 = vor.u32 %v328, %v331
      %v333 = vrot.slane %v332, 4
      %v335 = vshll.u32 %v247, 16
      %v337 = vrot.slane %v335, 5
      %v338 = vsel %vm300, %v333, %v337
      %v339 = vshrl.u32 %v247, 16
      %v341 = vrot.slane %v339, 4
      %v342 = vor.u32 %v341, %v337
      %v343 = vrot.slane %v342, 4
      %v345 = vshll.u32 %v248, 16
      %v347 = vrot.slane %v345, 5
      %v348 = vsel %vm300, %v343, %v347
      %v350 = vshrl.u32 %v249, 16
      %v352 = vrot.slane %v350, 4
      %v353 = vshll.u32 %v249, 16
      %v355 = vrot.slane %v353, 5
      %v356 = vor.u32 %v352, %v355
      %v357 = vrot.slane %v356, 4
      %v359 = vshll.u32 %v250, 16
      %v361 = vrot.slane %v359, 5
      %v362 = vsel %vm300, %v357, %v361
      %v363 = vshrl.u32 %v250, 16
      %v365 = vrot.slane %v363, 4
      %v366 = vor.u32 %v365, %v361
      %v367 = vrot.slane %v366, 4
      %v369 = vshll.u32 %v251, 16
      %v371 = vrot.slane %v369, 5
      %v372 = vsel %vm300, %v367, %v371
      %v374 = vshrl.u32 %v252, 16
      %v376 = vrot.slane %v374, 4
      %v377 = vshll.u32 %v252, 16
      %v379 = vrot.slane %v377, 5
      %v380 = vor.u32 %v376, %v379
      %v381 = vrot.slane %v380, 4
      %v383 = vshll.u32 %v253, 16
      %v385 = vrot.slane %v383, 5
      %v386 = vsel %vm300, %v381, %v385
      %v387 = vshrl.u32 %v253, 16
      %v389 = vrot.slane %v387, 4
      %v390 = vor.u32 %v389, %v385
      %v391 = vrot.slane %v390, 4
      %v393 = vshll.u32 %v254, 16
      %v395 = vrot.slane %v393, 5
      %v396 = vsel %vm300, %v391, %v395
      %v398 = vshrl.u32 %v255, 16
      %v400 = vrot.slane %v398, 4
      %v401 = vshll.u32 %v255, 16
      %v403 = vrot.slane %v401, 5
      %v404 = vor.u32 %v400, %v403
      %v405 = vrot.slane %v404, 4
      %v407 = vshll.u32 %v256, 16
      %v409 = vrot.slane %v407, 5
      %v410 = vsel %vm300, %v405, %v409
      %v411 = vshrl.u32 %v256, 16
      %v413 = vrot.slane %v411, 4
      %v414 = vor.u32 %v413, %v409
      %v415 = vrot.slane %v414, 4
      %v417 = vshll.u32 %v257, 16
      %v419 = vrot.slane %v417, 5
      %v420 = vsel %vm300, %v415, %v419
      %v422 = vshrl.u32 %v258, 16
      %v424 = vrot.slane %v422, 4
      %v425 = vshll.u32 %v258, 16
      %v427 = vrot.slane %v425, 5
      %v428 = vor.u32 %v424, %v427
      %v429 = vrot.slane %v428, 4
      %v431 = vshll.u32 %v259, 16
      %v433 = vrot.slane %v431, 5
      %v434 = vsel %vm300, %v429, %v433
      %v435 = vshrl.u32 %v259, 16
      %v437 = vrot.slane %v435, 4
      %v438 = vor.u32 %v437, %v433
      %v439 = vrot.slane %v438, 4
      %v441 = vshll.u32 %v260, 16
      %v443 = vrot.slane %v441, 5
      %v444 = vsel %vm300, %v439, %v443
      %v446 = vshrl.u32 %v261, 16
      %v448 = vrot.slane %v446, 4
      %v449 = vshll.u32 %v261, 16
      %v451 = vrot.slane %v449, 5
      %v452 = vor.u32 %v448, %v451
      %v453 = vrot.slane %v452, 4
      %v455 = vshll.u32 %v262, 16
      %v457 = vrot.slane %v455, 5
      %v458 = vsel %vm300, %v453, %v457
      %v459 = vshrl.u32 %v262, 16
      %v461 = vrot.slane %v459, 4
      %v462 = vor.u32 %v461, %v457
      %v463 = vrot.slane %v462, 4
      %v465 = vshll.u32 %v263, 16
      %v467 = vrot.slane %v465, 5
      %v468 = vsel %vm300, %v463, %v467
      %v470 = vshrl.u32 %v264, 16
      %v472 = vrot.slane %v470, 4
      %v473 = vshll.u32 %v264, 16
      %v475 = vrot.slane %v473, 5
      %v476 = vor.u32 %v472, %v475
      %v477 = vrot.slane %v476, 4
      %v479 = vshll.u32 %v265, 16
      %v481 = vrot.slane %v479, 5
      %v482 = vsel %vm300, %v477, %v481
      %v483 = vshrl.u32 %v265, 16
      %v485 = vrot.slane %v483, 4
      %v486 = vor.u32 %v485, %v481
      %v487 = vrot.slane %v486, 4
      %v489 = vshll.u32 %v266, 16
      %v491 = vrot.slane %v489, 5
      %v492 = vsel %vm300, %v487, %v491
      %v494 = vshrl.u32 %v267, 16
      %v496 = vrot.slane %v494, 4
      %v497 = vshll.u32 %v267, 16
      %v499 = vrot.slane %v497, 5
      %v500 = vor.u32 %v496, %v499
      %v501 = vrot.slane %v500, 4
      %v503 = vshll.u32 %v268, 16
      %v505 = vrot.slane %v503, 5
      %v506 = vsel %vm300, %v501, %v505
      %v507 = vshrl.u32 %v268, 16
      %v509 = vrot.slane %v507, 4
      %v510 = vor.u32 %v509, %v505
      %v511 = vrot.slane %v510, 4
      %v513 = vshll.u32 %v269, 16
      %v515 = vrot.slane %v513, 5
      %v516 = vsel %vm300, %v511, %v515
      %v518 = vshrl.u32 %v270, 16
      %v520 = vrot.slane %v518, 4
      %v521 = vshll.u32 %v270, 16
      %v523 = vrot.slane %v521, 5
      %v524 = vor.u32 %v520, %v523
      %v525 = vrot.slane %v524, 4
      %v527 = vshll.u32 %v271, 16
      %v529 = vrot.slane %v527, 5
      %v530 = vsel %vm300, %v525, %v529
      %v531 = vshrl.u32 %v271, 16
      %v533 = vrot.slane %v531, 4
      %v534 = vor.u32 %v533, %v529
      %v535 = vrot.slane %v534, 4
      %v537 = vshll.u32 %v272, 16
      %v539 = vrot.slane %v537, 5
      %v540 = vsel %vm300, %v535, %v539
      %v542 = vshrl.u32 %v273, 16
      %v544 = vrot.slane %v542, 4
      %v545 = vshll.u32 %v273, 16
      %v547 = vrot.slane %v545, 5
      %v548 = vor.u32 %v544, %v547
      %v549 = vrot.slane %v548, 4
      %v551 = vshll.u32 %v274, 16
      %v553 = vrot.slane %v551, 5
      %v554 = vsel %vm300, %v549, %v553
      %v555 = vshrl.u32 %v274, 16
      %v557 = vrot.slane %v555, 4
      %v558 = vor.u32 %v557, %v553
      %v559 = vrot.slane %v558, 4
      %v561 = vshll.u32 %v275, 16
      %v563 = vrot.slane %v561, 5
      %v564 = vsel %vm300, %v559, %v563
      %v566 = vshrl.u32 %v276, 16
      %v568 = vrot.slane %v566, 4
      %v569 = vshll.u32 %v276, 16
      %v571 = vrot.slane %v569, 5
      %v572 = vor.u32 %v568, %v571
      %v573 = vrot.slane %v572, 4
      %v575 = vshll.u32 %v277, 16
      %v577 = vrot.slane %v575, 5
      %v578 = vsel %vm300, %v573, %v577
      %v579 = vshrl.u32 %v277, 16
      %v581 = vrot.slane %v579, 4
      %v582 = vor.u32 %v581, %v577
      %v583 = vrot.slane %v582, 4
      %v585 = vshll.u32 %v278, 16
      %v587 = vrot.slane %v585, 5
      %v588 = vsel %vm300, %v583, %v587
      %v590 = vshrl.u32 %v279, 16
      %v592 = vrot.slane %v590, 4
      %v593 = vshll.u32 %v279, 16
      %v595 = vrot.slane %v593, 5
      %v596 = vor.u32 %v592, %v595
      %v597 = vrot.slane %v596, 4
      %v599 = vshll.u32 %v280, 16
      %v601 = vrot.slane %v599, 5
      %v602 = vsel %vm300, %v597, %v601
      %v603 = vshrl.u32 %v280, 16
      %v605 = vrot.slane %v603, 4
      %v606 = vor.u32 %v605, %v601
      %v607 = vrot.slane %v606, 4
      %v609 = vshll.u32 %v281, 16
      %v611 = vrot.slane %v609, 5
      %v612 = vsel %vm300, %v607, %v611
      %v614 = vshrl.u32 %v282, 16
      %v616 = vrot.slane %v614, 4
      %v617 = vshll.u32 %v282, 16
      %v619 = vrot.slane %v617, 5
      %v620 = vor.u32 %v616, %v619
      %v621 = vrot.slane %v620, 4
      %v623 = vshll.u32 %v283, 16
      %v625 = vrot.slane %v623, 5
      %v626 = vsel %vm300, %v621, %v625
      %v627 = vshrl.u32 %v283, 16
      %v629 = vrot.slane %v627, 4
      %v630 = vor.u32 %v629, %v625
      %v631 = vrot.slane %v630, 4
      %v633 = vshll.u32 %v284, 16
      %v635 = vrot.slane %v633, 5
      %v636 = vsel %vm300, %v631, %v635
      %v638 = vshrl.u32 %v285, 16
      %v640 = vrot.slane %v638, 4
      %v641 = vshll.u32 %v285, 16
      %v643 = vrot.slane %v641, 5
      %v644 = vor.u32 %v640, %v643
      %v645 = vrot.slane %v644, 4
      %v647 = vshll.u32 %v286, 16
      %v649 = vrot.slane %v647, 5
      %v650 = vsel %vm300, %v645, %v649
      %v651 = vshrl.u32 %v286, 16
      %v653 = vrot.slane %v651, 4
      %v654 = vor.u32 %v653, %v649
      %v655 = vrot.slane %v654, 4
      %v657 = vshll.u32 %v287, 16
      %v659 = vrot.slane %v657, 5
      %v660 = vsel %vm300, %v655, %v659
      %v662 = vshrl.u32 %v288, 16
      %v664 = vrot.slane %v662, 4
      %v665 = vshll.u32 %v288, 16
      %v667 = vrot.slane %v665, 5
      %v668 = vor.u32 %v664, %v667
      %v669 = vrot.slane %v668, 4
      %v671 = vshll.u32 %v289, 16
      %v673 = vrot.slane %v671, 5
      %v674 = vsel %vm300, %v669, %v673
      %v675 = vshrl.u32 %v289, 16
      %v677 = vrot.slane %v675, 4
      %v678 = vor.u32 %v677, %v673
      %v679 = vrot.slane %v678, 4
      %v681 = vshll.u32 %v290, 16
      %v683 = vrot.slane %v681, 5
      %v684 = vsel %vm300, %v679, %v683
      %s685 = scalar_lea.vmem %s1, 2
      %v686 = vld [vmem:[%s685] sm:$0x3]
      %v687 = vunpack.c.l.b16 %v314
      %v688 = vunpack.c.l.b16 %v324
      %v689 = vunpack.c.l.b16 %v338
      %v690 = vunpack.c.l.b16 %v348
      %v691 = vunpack.c.l.b16 %v362
      %v692 = vunpack.c.l.b16 %v372
      %v693 = vunpack.c.l.b16 %v386
      %v694 = vunpack.c.l.b16 %v396
      %v695 = vunpack.c.l.b16 %v410
      %v696 = vunpack.c.l.b16 %v420
      %v697 = vunpack.c.l.b16 %v434
      %v698 = vunpack.c.l.b16 %v444
      %v699 = vunpack.c.l.b16 %v458
      %v700 = vunpack.c.l.b16 %v468
      %v701 = vunpack.c.l.b16 %v482
      %v702 = vunpack.c.l.b16 %v492
      %v703 = vunpack.c.l.b16 %v506
      %v704 = vunpack.c.l.b16 %v516
      %v705 = vunpack.c.l.b16 %v530
      %v706 = vunpack.c.l.b16 %v540
      %v707 = vunpack.c.l.b16 %v554
      %v708 = vunpack.c.l.b16 %v564
      %v709 = vunpack.c.l.b16 %v578
      %v710 = vunpack.c.l.b16 %v588
      %v711 = vunpack.c.l.b16 %v602
      %v712 = vunpack.c.l.b16 %v612
      %v713 = vunpack.c.l.b16 %v626
      %v714 = vunpack.c.l.b16 %v636
      %v715 = vunpack.c.l.b16 %v650
      %v716 = vunpack.c.l.b16 %v660
      %v717 = vunpack.c.l.b16 %v674
      %v718 = vunpack.c.l.b16 %v684
      %v719 = vpack.c.b16 %v688, %v687
      %v720 = vpack.c.b16 %v690, %v689
      %v721 = vpack.c.b16 %v692, %v691
      %v722 = vpack.c.b16 %v694, %v693
      %v723 = vpack.c.b16 %v696, %v695
      %v724 = vpack.c.b16 %v698, %v697
      %v725 = vpack.c.b16 %v700, %v699
      %v726 = vpack.c.b16 %v702, %v701
      %v727 = vpack.c.b16 %v704, %v703
      %v728 = vpack.c.b16 %v706, %v705
      %v729 = vpack.c.b16 %v708, %v707
      %v730 = vpack.c.b16 %v710, %v709
      %v731 = vpack.c.b16 %v712, %v711
      %v732 = vpack.c.b16 %v714, %v713
      %v733 = vpack.c.b16 %v716, %v715
      %v734 = vpack.c.b16 %v718, %v717
      %vm735 = vcmask 31744
      %v737 = vsel %vm735, %v719, 0
      %v740 = vsel %vm735, %v720, 0
      %v743 = vsel %vm735, %v721, 0
      %v746 = vsel %vm735, %v722, 0
      %v749 = vsel %vm735, %v723, 0
      %v752 = vsel %vm735, %v724, 0
      %v755 = vsel %vm735, %v725, 0
      %v758 = vsel %vm735, %v726, 0
      %v761 = vsel %vm735, %v727, 0
      %v764 = vsel %vm735, %v728, 0
      %v767 = vsel %vm735, %v729, 0
      %v770 = vsel %vm735, %v730, 0
      %v773 = vsel %vm735, %v731, 0
      %v776 = vsel %vm735, %v732, 0
      %v779 = vsel %vm735, %v733, 0
      %v782 = vsel %vm735, %v734, 0
      %vm784 = vcmask 1041408
      %v786 = vsel %vm784, %v686, 0
      %788 = vmatprep.subr.bf16.mxu0 0
      %789 = vmatpush1.bf16.msra.mxu0 %v786
      %790 = vmatprep.subr.bf16.mxu0 0
      %791 = vmatpush1.bf16.msra.mxu0 0
      %792 = vmatprep.subr.bf16.mxu0 0
      %793 = vmatpush1.bf16.msra.mxu0 0
      %794 = vmatprep.subr.bf16.mxu0 0
      %795 = vmatpush1.bf16.msra.mxu0 0
      %796 = vmatprep.subr.bf16.mxu0 0
      %797 = vmatpush1.bf16.msra.mxu0 0
      %798 = vmatprep.subr.bf16.mxu0 0
      %799 = vmatpush1.bf16.msra.mxu0 0
      %800 = vmatprep.subr.bf16.mxu0 0
      %801 = vmatpush1.bf16.msra.mxu0 0
      %802 = vmatprep.subr.bf16.mxu0 0
      %803 = vmatpush1.bf16.msra.mxu0 0
      %804 = vmatprep.subr.bf16.mxu0 0
      %805 = vmatpush1.bf16.msra.mxu0 0
      %806 = vmatprep.subr.bf16.mxu0 0
      %807 = vmatpush1.bf16.msra.mxu0 0
      %808 = vmatprep.subr.bf16.mxu0 0
      %809 = vmatpush1.bf16.msra.mxu0 0
      %810 = vmatprep.subr.bf16.mxu0 0
      %811 = vmatpush1.bf16.msra.mxu0 0
      %812 = vmatprep.subr.bf16.mxu0 0
      %813 = vmatpush1.bf16.msra.mxu0 0
      %814 = vmatprep.subr.bf16.mxu0 0
      %815 = vmatpush1.bf16.msra.mxu0 0
      %816 = vmatprep.subr.bf16.mxu0 0
      %817 = vmatpush1.bf16.msra.mxu0 0
      %818 = vmatprep.subr.bf16.mxu0 0
      %819 = vmatpush1.bf16.msra.mxu0 0
      %820 = vmatprep.mubr.bf16.mxu0 0
      %821 = vmatmul.mubr.bf16.gmra.mrb[0].mxu0 %v737
      %v822 = vpop.f32.mrb[0].mxu0
      %v823 = vadd.f32 0.0, %v822
      %v824 = vpop.f32.mrb[0].mxu0
      %v825 = vpop.f32.mrb[0].mxu0
      %v826 = vadd.f32 0.0, %v825
      %v827 = vpop.f32.mrb[0].mxu0
      %828 = vmatprep.mubr.bf16.mxu0 0
      %829 = vmatmul.mubr.bf16.gmra.mrb[0].mxu0 %v740
      %v830 = vpop.f32.mrb[0].mxu0
      %v831 = vadd.f32 0.0, %v830
      %v832 = vpop.f32.mrb[0].mxu0
      %v833 = vpop.f32.mrb[0].mxu0
      %v834 = vadd.f32 0.0, %v833
      %v835 = vpop.f32.mrb[0].mxu0
      %836 = vmatprep.mubr.bf16.mxu0 0
      %837 = vmatmul.mubr.bf16.gmra.mrb[0].mxu0 %v743
      %v838 = vpop.f32.mrb[0].mxu0
      %v839 = vadd.f32 0.0, %v838
      %v840 = vpop.f32.mrb[0].mxu0
      %v841 = vpop.f32.mrb[0].mxu0
      %v842 = vadd.f32 0.0, %v841
      %v843 = vpop.f32.mrb[0].mxu0
      %844 = vmatprep.mubr.bf16.mxu0 0
      %845 = vmatmul.mubr.bf16.gmra.mrb[0].mxu0 %v746
      %v846 = vpop.f32.mrb[0].mxu0
      %v847 = vadd.f32 0.0, %v846
      %v848 = vpop.f32.mrb[0].mxu0
      %v849 = vpop.f32.mrb[0].mxu0
      %v850 = vadd.f32 0.0, %v849
      %v851 = vpop.f32.mrb[0].mxu0
      %852 = vmatprep.mubr.bf16.mxu0 0
      %853 = vmatmul.mubr.bf16.gmra.mrb[0].mxu0 %v749
      %v854 = vpop.f32.mrb[0].mxu0
      %v855 = vadd.f32 0.0, %v854
      %v856 = vpop.f32.mrb[0].mxu0
      %v857 = vpop.f32.mrb[0].mxu0
      %v858 = vadd.f32 0.0, %v857
      %v859 = vpop.f32.mrb[0].mxu0
      %860 = vmatprep.mubr.bf16.mxu0 0
      %861 = vmatmul.mubr.bf16.gmra.mrb[0].mxu0 %v752
      %v862 = vpop.f32.mrb[0].mxu0
      %v863 = vadd.f32 0.0, %v862
      %v864 = vpop.f32.mrb[0].mxu0
      %v865 = vpop.f32.mrb[0].mxu0
      %v866 = vadd.f32 0.0, %v865
      %v867 = vpop.f32.mrb[0].mxu0
      %868 = vmatprep.mubr.bf16.mxu0 0
      %869 = vmatmul.mubr.bf16.gmra.mrb[0].mxu0 %v755
      %v870 = vpop.f32.mrb[0].mxu0
      %v871 = vadd.f32 0.0, %v870
      %v872 = vpop.f32.mrb[0].mxu0
      %v873 = vpop.f32.mrb[0].mxu0
      %v874 = vadd.f32 0.0, %v873
      %v875 = vpop.f32.mrb[0].mxu0
      %876 = vmatprep.mubr.bf16.mxu0 0
      %877 = vmatmul.mubr.bf16.gmra.mrb[0].mxu0 %v758
      %v878 = vpop.f32.mrb[0].mxu0
      %v879 = vadd.f32 0.0, %v878
      %v880 = vpop.f32.mrb[0].mxu0
      %v881 = vpop.f32.mrb[0].mxu0
      %v882 = vadd.f32 0.0, %v881
      %v883 = vpop.f32.mrb[0].mxu0
      %884 = vmatprep.mubr.bf16.mxu0 0
      %885 = vmatmul.mubr.bf16.gmra.mrb[0].mxu0 %v761
      %v886 = vpop.f32.mrb[0].mxu0
      %v887 = vadd.f32 0.0, %v886
      %v888 = vpop.f32.mrb[0].mxu0
      %v889 = vpop.f32.mrb[0].mxu0
      %v890 = vadd.f32 0.0, %v889
      %v891 = vpop.f32.mrb[0].mxu0
      %892 = vmatprep.mubr.bf16.mxu0 0
      %893 = vmatmul.mubr.bf16.gmra.mrb[0].mxu0 %v764
      %v894 = vpop.f32.mrb[0].mxu0
      %v895 = vadd.f32 0.0, %v894
      %v896 = vpop.f32.mrb[0].mxu0
      %v897 = vpop.f32.mrb[0].mxu0
      %v898 = vadd.f32 0.0, %v897
      %v899 = vpop.f32.mrb[0].mxu0
      %900 = vmatprep.mubr.bf16.mxu0 0
      %901 = vmatmul.mubr.bf16.gmra.mrb[0].mxu0 %v767
      %v902 = vpop.f32.mrb[0].mxu0
      %v903 = vadd.f32 0.0, %v902
      %v904 = vpop.f32.mrb[0].mxu0
      %v905 = vpop.f32.mrb[0].mxu0
      %v906 = vadd.f32 0.0, %v905
      %v907 = vpop.f32.mrb[0].mxu0
      %908 = vmatprep.mubr.bf16.mxu0 0
      %909 = vmatmul.mubr.bf16.gmra.mrb[0].mxu0 %v770
      %v910 = vpop.f32.mrb[0].mxu0
      %v911 = vadd.f32 0.0, %v910
      %v912 = vpop.f32.mrb[0].mxu0
      %v913 = vpop.f32.mrb[0].mxu0
      %v914 = vadd.f32 0.0, %v913
      %v915 = vpop.f32.mrb[0].mxu0
      %916 = vmatprep.mubr.bf16.mxu0 0
      %917 = vmatmul.mubr.bf16.gmra.mrb[0].mxu0 %v773
      %v918 = vpop.f32.mrb[0].mxu0
      %v919 = vadd.f32 0.0, %v918
      %v920 = vpop.f32.mrb[0].mxu0
      %v921 = vpop.f32.mrb[0].mxu0
      %v922 = vadd.f32 0.0, %v921
      %v923 = vpop.f32.mrb[0].mxu0
      %924 = vmatprep.mubr.bf16.mxu0 0
      %925 = vmatmul.mubr.bf16.gmra.mrb[0].mxu0 %v776
      %v926 = vpop.f32.mrb[0].mxu0
      %v927 = vadd.f32 0.0, %v926
      %v928 = vpop.f32.mrb[0].mxu0
      %v929 = vpop.f32.mrb[0].mxu0
      %v930 = vadd.f32 0.0, %v929
      %v931 = vpop.f32.mrb[0].mxu0
      %932 = vmatprep.mubr.bf16.mxu0 0
      %933 = vmatmul.mubr.bf16.gmra.mrb[0].mxu0 %v779
      %v934 = vpop.f32.mrb[0].mxu0
      %v935 = vadd.f32 0.0, %v934
      %v936 = vpop.f32.mrb[0].mxu0
      %v937 = vpop.f32.mrb[0].mxu0
      %v938 = vadd.f32 0.0, %v937
      %v939 = vpop.f32.mrb[0].mxu0
      %940 = vmatprep.mubr.bf16.mxu0 0
      %941 = vmatmul.mubr.bf16.gmra.mrb[0].mxu0 %v782
      %v942 = vpop.f32.mrb[0].mxu0
      %v943 = vadd.f32 0.0, %v942
      %v944 = vpop.f32.mrb[0].mxu0
      %v945 = vpop.f32.mrb[0].mxu0
      %v946 = vadd.f32 0.0, %v945
      %v947 = vpop.f32.mrb[0].mxu0
      %948 = vdwg.mxu0
      %v981 = vunpack.c.l.b16 %v243
      %v982 = vunpack.c.l.b16 %v244
      %v983 = vunpack.c.l.b16 %v246
      %v984 = vunpack.c.l.b16 %v247
      %v985 = vunpack.c.l.b16 %v249
      %v986 = vunpack.c.l.b16 %v250
      %v987 = vunpack.c.l.b16 %v252
      %v988 = vunpack.c.l.b16 %v253
      %v989 = vunpack.c.l.b16 %v255
      %v990 = vunpack.c.l.b16 %v256
      %v991 = vunpack.c.l.b16 %v258
      %v992 = vunpack.c.l.b16 %v259
      %v993 = vunpack.c.l.b16 %v261
      %v994 = vunpack.c.l.b16 %v262
      %v995 = vunpack.c.l.b16 %v264
      %v996 = vunpack.c.l.b16 %v265
      %v997 = vunpack.c.l.b16 %v267
      %v998 = vunpack.c.l.b16 %v268
      %v999 = vunpack.c.l.b16 %v270
      %v1000 = vunpack.c.l.b16 %v271
      %v1001 = vunpack.c.l.b16 %v273
      %v1002 = vunpack.c.l.b16 %v274
      %v1003 = vunpack.c.l.b16 %v276
      %v1004 = vunpack.c.l.b16 %v277
      %v1005 = vunpack.c.l.b16 %v279
      %v1006 = vunpack.c.l.b16 %v280
      %v1007 = vunpack.c.l.b16 %v282
      %v1008 = vunpack.c.l.b16 %v283
      %v1009 = vunpack.c.l.b16 %v285
      %v1010 = vunpack.c.l.b16 %v286
      %v1011 = vunpack.c.l.b16 %v288
      %v1012 = vunpack.c.l.b16 %v289
      %v1013 = vpack.c.b16 %v982, %v981
      %v1014 = vpack.c.b16 %v984, %v983
      %v1015 = vpack.c.b16 %v986, %v985
      %v1016 = vpack.c.b16 %v988, %v987
      %v1017 = vpack.c.b16 %v990, %v989
      %v1018 = vpack.c.b16 %v992, %v991
      %v1019 = vpack.c.b16 %v994, %v993
      %v1020 = vpack.c.b16 %v996, %v995
      %v1021 = vpack.c.b16 %v998, %v997
      %v1022 = vpack.c.b16 %v1000, %v999
      %v1023 = vpack.c.b16 %v1002, %v1001
      %v1024 = vpack.c.b16 %v1004, %v1003
      %v1025 = vpack.c.b16 %v1006, %v1005
      %v1026 = vpack.c.b16 %v1008, %v1007
      %v1027 = vpack.c.b16 %v1010, %v1009
      %v1028 = vpack.c.b16 %v1012, %v1011
      %v1030 = vsel %vm735, %v1013, 0
      %v1033 = vsel %vm735, %v1014, 0
      %v1036 = vsel %vm735, %v1015, 0
      %v1039 = vsel %vm735, %v1016, 0
      %v1042 = vsel %vm735, %v1017, 0
      %v1045 = vsel %vm735, %v1018, 0
      %v1048 = vsel %vm735, %v1019, 0
      %v1051 = vsel %vm735, %v1020, 0
      %v1054 = vsel %vm735, %v1021, 0
      %v1057 = vsel %vm735, %v1022, 0
      %v1060 = vsel %vm735, %v1023, 0
      %v1063 = vsel %vm735, %v1024, 0
      %v1066 = vsel %vm735, %v1025, 0
      %v1069 = vsel %vm735, %v1026, 0
      %v1072 = vsel %vm735, %v1027, 0
      %v1075 = vsel %vm735, %v1028, 0
      %v1078 = vsel %vm784, %v297, 0
      %1080 = vmatprep.subr.bf16.mxu0 0
      %1081 = vmatpush1.bf16.msra.mxu0 %v1078
      %1082 = vmatprep.subr.bf16.mxu0 0
      %1083 = vmatpush1.bf16.msra.mxu0 0
      %1084 = vmatprep.subr.bf16.mxu0 0
      %1085 = vmatpush1.bf16.msra.mxu0 0
      %1086 = vmatprep.subr.bf16.mxu0 0
      %1087 = vmatpush1.bf16.msra.mxu0 0
      %1088 = vmatprep.subr.bf16.mxu0 0
      %1089 = vmatpush1.bf16.msra.mxu0 0
      %1090 = vmatprep.subr.bf16.mxu0 0
      %1091 = vmatpush1.bf16.msra.mxu0 0
      %1092 = vmatprep.subr.bf16.mxu0 0
      %1093 = vmatpush1.bf16.msra.mxu0 0
      %1094 = vmatprep.subr.bf16.mxu0 0
      %1095 = vmatpush1.bf16.msra.mxu0 0
      %1096 = vmatprep.subr.bf16.mxu0 0
      %1097 = vmatpush1.bf16.msra.mxu0 0
      %1098 = vmatprep.subr.bf16.mxu0 0
      %1099 = vmatpush1.bf16.msra.mxu0 0
      %1100 = vmatprep.subr.bf16.mxu0 0
      %1101 = vmatpush1.bf16.msra.mxu0 0
      %1102 = vmatprep.subr.bf16.mxu0 0
      %1103 = vmatpush1.bf16.msra.mxu0 0
      %1104 = vmatprep.subr.bf16.mxu0 0
      %1105 = vmatpush1.bf16.msra.mxu0 0
      %1106 = vmatprep.subr.bf16.mxu0 0
      %1107 = vmatpush1.bf16.msra.mxu0 0
      %1108 = vmatprep.subr.bf16.mxu0 0
      %1109 = vmatpush1.bf16.msra.mxu0 0
      %1110 = vmatprep.subr.bf16.mxu0 0
      %1111 = vmatpush1.bf16.msra.mxu0 0
      %1112 = vmatprep.mubr.bf16.mxu0 0
      %1113 = vmatmul.mubr.bf16.gmra.mrb[0].mxu0 %v1030
      %v1114 = vpop.f32.mrb[0].mxu0
      %v1115 = vadd.f32 %v823, %v1114
      %v1116 = vpop.f32.mrb[0].mxu0
      %v1117 = vpop.f32.mrb[0].mxu0
      %v1118 = vadd.f32 %v826, %v1117
      %v1119 = vpop.f32.mrb[0].mxu0
      %1120 = vmatprep.mubr.bf16.mxu0 0
      %1121 = vmatmul.mubr.bf16.gmra.mrb[0].mxu0 %v1033
      %v1122 = vpop.f32.mrb[0].mxu0
      %v1123 = vadd.f32 %v831, %v1122
      %v1124 = vpop.f32.mrb[0].mxu0
      %v1125 = vpop.f32.mrb[0].mxu0
      %v1126 = vadd.f32 %v834, %v1125
      %v1127 = vpop.f32.mrb[0].mxu0
      %1128 = vmatprep.mubr.bf16.mxu0 0
      %1129 = vmatmul.mubr.bf16.gmra.mrb[0].mxu0 %v1036
      %v1130 = vpop.f32.mrb[0].mxu0
      %v1131 = vadd.f32 %v839, %v1130
      %v1132 = vpop.f32.mrb[0].mxu0
      %v1133 = vpop.f32.mrb[0].mxu0
      %v1134 = vadd.f32 %v842, %v1133
      %v1135 = vpop.f32.mrb[0].mxu0
      %1136 = vmatprep.mubr.bf16.mxu0 0
      %1137 = vmatmul.mubr.bf16.gmra.mrb[0].mxu0 %v1039
      %v1138 = vpop.f32.mrb[0].mxu0
      %v1139 = vadd.f32 %v847, %v1138
      %v1140 = vpop.f32.mrb[0].mxu0
      %v1141 = vpop.f32.mrb[0].mxu0
      %v1142 = vadd.f32 %v850, %v1141
      %v1143 = vpop.f32.mrb[0].mxu0
      %1144 = vmatprep.mubr.bf16.mxu0 0
      %1145 = vmatmul.mubr.bf16.gmra.mrb[0].mxu0 %v1042
      %v1146 = vpop.f32.mrb[0].mxu0
      %v1147 = vadd.f32 %v855, %v1146
      %v1148 = vpop.f32.mrb[0].mxu0
      %v1149 = vpop.f32.mrb[0].mxu0
      %v1150 = vadd.f32 %v858, %v1149
      %v1151 = vpop.f32.mrb[0].mxu0
      %1152 = vmatprep.mubr.bf16.mxu0 0
      %1153 = vmatmul.mubr.bf16.gmra.mrb[0].mxu0 %v1045
      %v1154 = vpop.f32.mrb[0].mxu0
      %v1155 = vadd.f32 %v863, %v1154
      %v1156 = vpop.f32.mrb[0].mxu0
      %v1157 = vpop.f32.mrb[0].mxu0
      %v1158 = vadd.f32 %v866, %v1157
      %v1159 = vpop.f32.mrb[0].mxu0
      %1160 = vmatprep.mubr.bf16.mxu0 0
      %1161 = vmatmul.mubr.bf16.gmra.mrb[0].mxu0 %v1048
      %v1162 = vpop.f32.mrb[0].mxu0
      %v1163 = vadd.f32 %v871, %v1162
      %v1164 = vpop.f32.mrb[0].mxu0
      %v1165 = vpop.f32.mrb[0].mxu0
      %v1166 = vadd.f32 %v874, %v1165
      %v1167 = vpop.f32.mrb[0].mxu0
      %1168 = vmatprep.mubr.bf16.mxu0 0
      %1169 = vmatmul.mubr.bf16.gmra.mrb[0].mxu0 %v1051
      %v1170 = vpop.f32.mrb[0].mxu0
      %v1171 = vadd.f32 %v879, %v1170
      %v1172 = vpop.f32.mrb[0].mxu0
      %v1173 = vpop.f32.mrb[0].mxu0
      %v1174 = vadd.f32 %v882, %v1173
      %v1175 = vpop.f32.mrb[0].mxu0
      %1176 = vmatprep.mubr.bf16.mxu0 0
      %1177 = vmatmul.mubr.bf16.gmra.mrb[0].mxu0 %v1054
      %v1178 = vpop.f32.mrb[0].mxu0
      %v1179 = vadd.f32 %v887, %v1178
      %v1180 = vpop.f32.mrb[0].mxu0
      %v1181 = vpop.f32.mrb[0].mxu0
      %v1182 = vadd.f32 %v890, %v1181
      %v1183 = vpop.f32.mrb[0].mxu0
      %1184 = vmatprep.mubr.bf16.mxu0 0
      %1185 = vmatmul.mubr.bf16.gmra.mrb[0].mxu0 %v1057
      %v1186 = vpop.f32.mrb[0].mxu0
      %v1187 = vadd.f32 %v895, %v1186
      %v1188 = vpop.f32.mrb[0].mxu0
      %v1189 = vpop.f32.mrb[0].mxu0
      %v1190 = vadd.f32 %v898, %v1189
      %v1191 = vpop.f32.mrb[0].mxu0
      %1192 = vmatprep.mubr.bf16.mxu0 0
      %1193 = vmatmul.mubr.bf16.gmra.mrb[0].mxu0 %v1060
      %v1194 = vpop.f32.mrb[0].mxu0
      %v1195 = vadd.f32 %v903, %v1194
      %v1196 = vpop.f32.mrb[0].mxu0
      %v1197 = vpop.f32.mrb[0].mxu0
      %v1198 = vadd.f32 %v906, %v1197
      %v1199 = vpop.f32.mrb[0].mxu0
      %1200 = vmatprep.mubr.bf16.mxu0 0
      %1201 = vmatmul.mubr.bf16.gmra.mrb[0].mxu0 %v1063
      %v1202 = vpop.f32.mrb[0].mxu0
      %v1203 = vadd.f32 %v911, %v1202
      %v1204 = vpop.f32.mrb[0].mxu0
      %v1205 = vpop.f32.mrb[0].mxu0
      %v1206 = vadd.f32 %v914, %v1205
      %v1207 = vpop.f32.mrb[0].mxu0
      %1208 = vmatprep.mubr.bf16.mxu0 0
      %1209 = vmatmul.mubr.bf16.gmra.mrb[0].mxu0 %v1066
      %v1210 = vpop.f32.mrb[0].mxu0
      %v1211 = vadd.f32 %v919, %v1210
      %v1212 = vpop.f32.mrb[0].mxu0
      %v1213 = vpop.f32.mrb[0].mxu0
      %v1214 = vadd.f32 %v922, %v1213
      %v1215 = vpop.f32.mrb[0].mxu0
      %1216 = vmatprep.mubr.bf16.mxu0 0
      %1217 = vmatmul.mubr.bf16.gmra.mrb[0].mxu0 %v1069
      %v1218 = vpop.f32.mrb[0].mxu0
      %v1219 = vadd.f32 %v927, %v1218
      %v1220 = vpop.f32.mrb[0].mxu0
      %v1221 = vpop.f32.mrb[0].mxu0
      %v1222 = vadd.f32 %v930, %v1221
      %v1223 = vpop.f32.mrb[0].mxu0
      %1224 = vmatprep.mubr.bf16.mxu0 0
      %1225 = vmatmul.mubr.bf16.gmra.mrb[0].mxu0 %v1072
      %v1226 = vpop.f32.mrb[0].mxu0
      %v1227 = vadd.f32 %v935, %v1226
      %v1228 = vpop.f32.mrb[0].mxu0
      %v1229 = vpop.f32.mrb[0].mxu0
      %v1230 = vadd.f32 %v938, %v1229
      %v1231 = vpop.f32.mrb[0].mxu0
      %1232 = vmatprep.mubr.bf16.mxu0 0
      %1233 = vmatmul.mubr.bf16.gmra.mrb[0].mxu0 %v1075
      %v1234 = vpop.f32.mrb[0].mxu0
      %v1235 = vadd.f32 %v943, %v1234
      %v1236 = vpop.f32.mrb[0].mxu0
      %v1237 = vpop.f32.mrb[0].mxu0
      %v1238 = vadd.f32 %v946, %v1237
      %v1239 = vpop.f32.mrb[0].mxu0
      %1240 = vdwg.mxu0
      %vm1257 = vcmask 1042432
      %vm1258 = vcmask 1046532
      %vm1259 = vmor %vm1257, %vm1258
      %v1260 = vrot.slane %v243, 5
      %v1261 = vrot.slane %v1260, 4
      %v1262 = vrot.slane %v244, 5
      %v1263 = vsel %vm1259, %v1261, %v1262
      %v1264 = vrot.slane %v1262, 4
      %v1265 = vrot.slane %v245, 5
      %v1266 = vsel %vm1259, %v1264, %v1265
      %v1267 = vrot.slane %v246, 5
      %v1268 = vrot.slane %v1267, 4
      %v1269 = vrot.slane %v247, 5
      %v1270 = vsel %vm1259, %v1268, %v1269
      %v1271 = vrot.slane %v1269, 4
      %v1272 = vrot.slane %v248, 5
      %v1273 = vsel %vm1259, %v1271, %v1272
      %v1274 = vrot.slane %v249, 5
      %v1275 = vrot.slane %v1274, 4
      %v1276 = vrot.slane %v250, 5
      %v1277 = vsel %vm1259, %v1275, %v1276
      %v1278 = vrot.slane %v1276, 4
      %v1279 = vrot.slane %v251, 5
      %v1280 = vsel %vm1259, %v1278, %v1279
      %v1281 = vrot.slane %v252, 5
      %v1282 = vrot.slane %v1281, 4
      %v1283 = vrot.slane %v253, 5
      %v1284 = vsel %vm1259, %v1282, %v1283
      %v1285 = vrot.slane %v1283, 4
      %v1286 = vrot.slane %v254, 5
      %v1287 = vsel %vm1259, %v1285, %v1286
      %v1288 = vrot.slane %v255, 5
      %v1289 = vrot.slane %v1288, 4
      %v1290 = vrot.slane %v256, 5
      %v1291 = vsel %vm1259, %v1289, %v1290
      %v1292 = vrot.slane %v1290, 4
      %v1293 = vrot.slane %v257, 5
      %v1294 = vsel %vm1259, %v1292, %v1293
      %v1295 = vrot.slane %v258, 5
      %v1296 = vrot.slane %v1295, 4
      %v1297 = vrot.slane %v259, 5
      %v1298 = vsel %vm1259, %v1296, %v1297
      %v1299 = vrot.slane %v1297, 4
      %v1300 = vrot.slane %v260, 5
      %v1301 = vsel %vm1259, %v1299, %v1300
      %v1302 = vrot.slane %v261, 5
      %v1303 = vrot.slane %v1302, 4
      %v1304 = vrot.slane %v262, 5
      %v1305 = vsel %vm1259, %v1303, %v1304
      %v1306 = vrot.slane %v1304, 4
      %v1307 = vrot.slane %v263, 5
      %v1308 = vsel %vm1259, %v1306, %v1307
      %v1309 = vrot.slane %v264, 5
      %v1310 = vrot.slane %v1309, 4
      %v1311 = vrot.slane %v265, 5
      %v1312 = vsel %vm1259, %v1310, %v1311
      %v1313 = vrot.slane %v1311, 4
      %v1314 = vrot.slane %v266, 5
      %v1315 = vsel %vm1259, %v1313, %v1314
      %v1316 = vrot.slane %v267, 5
      %v1317 = vrot.slane %v1316, 4
      %v1318 = vrot.slane %v268, 5
      %v1319 = vsel %vm1259, %v1317, %v1318
      %v1320 = vrot.slane %v1318, 4
      %v1321 = vrot.slane %v269, 5
      %v1322 = vsel %vm1259, %v1320, %v1321
      %v1323 = vrot.slane %v270, 5
      %v1324 = vrot.slane %v1323, 4
      %v1325 = vrot.slane %v271, 5
      %v1326 = vsel %vm1259, %v1324, %v1325
      %v1327 = vrot.slane %v1325, 4
      %v1328 = vrot.slane %v272, 5
      %v1329 = vsel %vm1259, %v1327, %v1328
      %v1330 = vrot.slane %v273, 5
      %v1331 = vrot.slane %v1330, 4
      %v1332 = vrot.slane %v274, 5
      %v1333 = vsel %vm1259, %v1331, %v1332
      %v1334 = vrot.slane %v1332, 4
      %v1335 = vrot.slane %v275, 5
      %v1336 = vsel %vm1259, %v1334, %v1335
      %v1337 = vrot.slane %v276, 5
      %v1338 = vrot.slane %v1337, 4
      %v1339 = vrot.slane %v277, 5
      %v1340 = vsel %vm1259, %v1338, %v1339
      %v1341 = vrot.slane %v1339, 4
      %v1342 = vrot.slane %v278, 5
      %v1343 = vsel %vm1259, %v1341, %v1342
      %v1344 = vrot.slane %v279, 5
      %v1345 = vrot.slane %v1344, 4
      %v1346 = vrot.slane %v280, 5
      %v1347 = vsel %vm1259, %v1345, %v1346
      %v1348 = vrot.slane %v1346, 4
      %v1349 = vrot.slane %v281, 5
      %v1350 = vsel %vm1259, %v1348, %v1349
      %v1351 = vrot.slane %v282, 5
      %v1352 = vrot.slane %v1351, 4
      %v1353 = vrot.slane %v283, 5
      %v1354 = vsel %vm1259, %v1352, %v1353
      %v1355 = vrot.slane %v1353, 4
      %v1356 = vrot.slane %v284, 5
      %v1357 = vsel %vm1259, %v1355, %v1356
      %v1358 = vrot.slane %v285, 5
      %v1359 = vrot.slane %v1358, 4
      %v1360 = vrot.slane %v286, 5
      %v1361 = vsel %vm1259, %v1359, %v1360
      %v1362 = vrot.slane %v1360, 4
      %v1363 = vrot.slane %v287, 5
      %v1364 = vsel %vm1259, %v1362, %v1363
      %v1365 = vrot.slane %v288, 5
      %v1366 = vrot.slane %v1365, 4
      %v1367 = vrot.slane %v289, 5
      %v1368 = vsel %vm1259, %v1366, %v1367
      %v1369 = vrot.slane %v1367, 4
      %v1370 = vrot.slane %v290, 5
      %v1371 = vsel %vm1259, %v1369, %v1370
      %s1372 = scalar_lea.vmem %s1, 4
      %v1373 = vld [vmem:[%s1372] sm:$0x3]
      %v1374 = vunpack.c.l.b16 %v1263
      %v1375 = vunpack.c.l.b16 %v1266
      %v1376 = vunpack.c.l.b16 %v1270
      %v1377 = vunpack.c.l.b16 %v1273
      %v1378 = vunpack.c.l.b16 %v1277
      %v1379 = vunpack.c.l.b16 %v1280
      %v1380 = vunpack.c.l.b16 %v1284
      %v1381 = vunpack.c.l.b16 %v1287
      %v1382 = vunpack.c.l.b16 %v1291
      %v1383 = vunpack.c.l.b16 %v1294
      %v1384 = vunpack.c.l.b16 %v1298
      %v1385 = vunpack.c.l.b16 %v1301
      %v1386 = vunpack.c.l.b16 %v1305
      %v1387 = vunpack.c.l.b16 %v1308
      %v1388 = vunpack.c.l.b16 %v1312
      %v1389 = vunpack.c.l.b16 %v1315
      %v1390 = vunpack.c.l.b16 %v1319
      %v1391 = vunpack.c.l.b16 %v1322
      %v1392 = vunpack.c.l.b16 %v1326
      %v1393 = vunpack.c.l.b16 %v1329
      %v1394 = vunpack.c.l.b16 %v1333
      %v1395 = vunpack.c.l.b16 %v1336
      %v1396 = vunpack.c.l.b16 %v1340
      %v1397 = vunpack.c.l.b16 %v1343
      %v1398 = vunpack.c.l.b16 %v1347
      %v1399 = vunpack.c.l.b16 %v1350
      %v1400 = vunpack.c.l.b16 %v1354
      %v1401 = vunpack.c.l.b16 %v1357
      %v1402 = vunpack.c.l.b16 %v1361
      %v1403 = vunpack.c.l.b16 %v1364
      %v1404 = vunpack.c.l.b16 %v1368
      %v1405 = vunpack.c.l.b16 %v1371
      %v1406 = vpack.c.b16 %v1375, %v1374
      %v1407 = vpack.c.b16 %v1377, %v1376
      %v1408 = vpack.c.b16 %v1379, %v1378
      %v1409 = vpack.c.b16 %v1381, %v1380
      %v1410 = vpack.c.b16 %v1383, %v1382
      %v1411 = vpack.c.b16 %v1385, %v1384
      %v1412 = vpack.c.b16 %v1387, %v1386
      %v1413 = vpack.c.b16 %v1389, %v1388
      %v1414 = vpack.c.b16 %v1391, %v1390
      %v1415 = vpack.c.b16 %v1393, %v1392
      %v1416 = vpack.c.b16 %v1395, %v1394
      %v1417 = vpack.c.b16 %v1397, %v1396
      %v1418 = vpack.c.b16 %v1399, %v1398
      %v1419 = vpack.c.b16 %v1401, %v1400
      %v1420 = vpack.c.b16 %v1403, %v1402
      %v1421 = vpack.c.b16 %v1405, %v1404
      %v1423 = vsel %vm735, %v1406, 0
      %v1426 = vsel %vm735, %v1407, 0
      %v1429 = vsel %vm735, %v1408, 0
      %v1432 = vsel %vm735, %v1409, 0
      %v1435 = vsel %vm735, %v1410, 0
      %v1438 = vsel %vm735, %v1411, 0
      %v1441 = vsel %vm735, %v1412, 0
      %v1444 = vsel %vm735, %v1413, 0
      %v1447 = vsel %vm735, %v1414, 0
      %v1450 = vsel %vm735, %v1415, 0
      %v1453 = vsel %vm735, %v1416, 0
      %v1456 = vsel %vm735, %v1417, 0
      %v1459 = vsel %vm735, %v1418, 0
      %v1462 = vsel %vm735, %v1419, 0
      %v1465 = vsel %vm735, %v1420, 0
      %v1468 = vsel %vm735, %v1421, 0
      %v1471 = vsel %vm784, %v1373, 0
      %1473 = vmatprep.subr.bf16.mxu0 0
      %1474 = vmatpush1.bf16.msra.mxu0 %v1471
      %1475 = vmatprep.subr.bf16.mxu0 0
      %1476 = vmatpush1.bf16.msra.mxu0 0
      %1477 = vmatprep.subr.bf16.mxu0 0
      %1478 = vmatpush1.bf16.msra.mxu0 0
      %1479 = vmatprep.subr.bf16.mxu0 0
      %1480 = vmatpush1.bf16.msra.mxu0 0
      %1481 = vmatprep.subr.bf16.mxu0 0
      %1482 = vmatpush1.bf16.msra.mxu0 0
      %1483 = vmatprep.subr.bf16.mxu0 0
      %1484 = vmatpush1.bf16.msra.mxu0 0
      %1485 = vmatprep.subr.bf16.mxu0 0
      %1486 = vmatpush1.bf16.msra.mxu0 0
      %1487 = vmatprep.subr.bf16.mxu0 0
      %1488 = vmatpush1.bf16.msra.mxu0 0
      %1489 = vmatprep.subr.bf16.mxu0 0
      %1490 = vmatpush1.bf16.msra.mxu0 0
      %1491 = vmatprep.subr.bf16.mxu0 0
      %1492 = vmatpush1.bf16.msra.mxu0 0
      %1493 = vmatprep.subr.bf16.mxu0 0
      %1494 = vmatpush1.bf16.msra.mxu0 0
      %1495 = vmatprep.subr.bf16.mxu0 0
      %1496 = vmatpush1.bf16.msra.mxu0 0
      %1497 = vmatprep.subr.bf16.mxu0 0
      %1498 = vmatpush1.bf16.msra.mxu0 0
      %1499 = vmatprep.subr.bf16.mxu0 0
      %1500 = vmatpush1.bf16.msra.mxu0 0
      %1501 = vmatprep.subr.bf16.mxu0 0
      %1502 = vmatpush1.bf16.msra.mxu0 0
      %1503 = vmatprep.subr.bf16.mxu0 0
      %1504 = vmatpush1.bf16.msra.mxu0 0
      %1505 = vmatprep.mubr.bf16.mxu0 0
      %1506 = vmatmul.mubr.bf16.gmra.mrb[0].mxu0 %v1423
      %v1507 = vpop.f32.mrb[0].mxu0
      %v1508 = vadd.f32 0.0, %v1507
      %v1509 = vpop.f32.mrb[0].mxu0
      %v1510 = vpop.f32.mrb[0].mxu0
      %v1511 = vadd.f32 0.0, %v1510
      %v1512 = vpop.f32.mrb[0].mxu0
      %1513 = vmatprep.mubr.bf16.mxu0 0
      %1514 = vmatmul.mubr.bf16.gmra.mrb[0].mxu0 %v1426
      %v1515 = vpop.f32.mrb[0].mxu0
      %v1516 = vadd.f32 0.0, %v1515
      %v1517 = vpop.f32.mrb[0].mxu0
      %v1518 = vpop.f32.mrb[0].mxu0
      %v1519 = vadd.f32 0.0, %v1518
      %v1520 = vpop.f32.mrb[0].mxu0
      %1521 = vmatprep.mubr.bf16.mxu0 0
      %1522 = vmatmul.mubr.bf16.gmra.mrb[0].mxu0 %v1429
      %v1523 = vpop.f32.mrb[0].mxu0
      %v1524 = vadd.f32 0.0, %v1523
      %v1525 = vpop.f32.mrb[0].mxu0
      %v1526 = vpop.f32.mrb[0].mxu0
      %v1527 = vadd.f32 0.0, %v1526
      %v1528 = vpop.f32.mrb[0].mxu0
      %1529 = vmatprep.mubr.bf16.mxu0 0
      %1530 = vmatmul.mubr.bf16.gmra.mrb[0].mxu0 %v1432
      %v1531 = vpop.f32.mrb[0].mxu0
      %v1532 = vadd.f32 0.0, %v1531
      %v1533 = vpop.f32.mrb[0].mxu0
      %v1534 = vpop.f32.mrb[0].mxu0
      %v1535 = vadd.f32 0.0, %v1534
      %v1536 = vpop.f32.mrb[0].mxu0
      %1537 = vmatprep.mubr.bf16.mxu0 0
      %1538 = vmatmul.mubr.bf16.gmra.mrb[0].mxu0 %v1435
      %v1539 = vpop.f32.mrb[0].mxu0
      %v1540 = vadd.f32 0.0, %v1539
      %v1541 = vpop.f32.mrb[0].mxu0
      %v1542 = vpop.f32.mrb[0].mxu0
      %v1543 = vadd.f32 0.0, %v1542
      %v1544 = vpop.f32.mrb[0].mxu0
      %1545 = vmatprep.mubr.bf16.mxu0 0
      %1546 = vmatmul.mubr.bf16.gmra.mrb[0].mxu0 %v1438
      %v1547 = vpop.f32.mrb[0].mxu0
      %v1548 = vadd.f32 0.0, %v1547
      %v1549 = vpop.f32.mrb[0].mxu0
      %v1550 = vpop.f32.mrb[0].mxu0
      %v1551 = vadd.f32 0.0, %v1550
      %v1552 = vpop.f32.mrb[0].mxu0
      %1553 = vmatprep.mubr.bf16.mxu0 0
      %1554 = vmatmul.mubr.bf16.gmra.mrb[0].mxu0 %v1441
      %v1555 = vpop.f32.mrb[0].mxu0
      %v1556 = vadd.f32 0.0, %v1555
      %v1557 = vpop.f32.mrb[0].mxu0
      %v1558 = vpop.f32.mrb[0].mxu0
      %v1559 = vadd.f32 0.0, %v1558
      %v1560 = vpop.f32.mrb[0].mxu0
      %1561 = vmatprep.mubr.bf16.mxu0 0
      %1562 = vmatmul.mubr.bf16.gmra.mrb[0].mxu0 %v1444
      %v1563 = vpop.f32.mrb[0].mxu0
      %v1564 = vadd.f32 0.0, %v1563
      %v1565 = vpop.f32.mrb[0].mxu0
      %v1566 = vpop.f32.mrb[0].mxu0
      %v1567 = vadd.f32 0.0, %v1566
      %v1568 = vpop.f32.mrb[0].mxu0
      %1569 = vmatprep.mubr.bf16.mxu0 0
      %1570 = vmatmul.mubr.bf16.gmra.mrb[0].mxu0 %v1447
      %v1571 = vpop.f32.mrb[0].mxu0
      %v1572 = vadd.f32 0.0, %v1571
      %v1573 = vpop.f32.mrb[0].mxu0
      %v1574 = vpop.f32.mrb[0].mxu0
      %v1575 = vadd.f32 0.0, %v1574
      %v1576 = vpop.f32.mrb[0].mxu0
      %1577 = vmatprep.mubr.bf16.mxu0 0
      %1578 = vmatmul.mubr.bf16.gmra.mrb[0].mxu0 %v1450
      %v1579 = vpop.f32.mrb[0].mxu0
      %v1580 = vadd.f32 0.0, %v1579
      %v1581 = vpop.f32.mrb[0].mxu0
      %v1582 = vpop.f32.mrb[0].mxu0
      %v1583 = vadd.f32 0.0, %v1582
      %v1584 = vpop.f32.mrb[0].mxu0
      %1585 = vmatprep.mubr.bf16.mxu0 0
      %1586 = vmatmul.mubr.bf16.gmra.mrb[0].mxu0 %v1453
      %v1587 = vpop.f32.mrb[0].mxu0
      %v1588 = vadd.f32 0.0, %v1587
      %v1589 = vpop.f32.mrb[0].mxu0
      %v1590 = vpop.f32.mrb[0].mxu0
      %v1591 = vadd.f32 0.0, %v1590
      %v1592 = vpop.f32.mrb[0].mxu0
      %1593 = vmatprep.mubr.bf16.mxu0 0
      %1594 = vmatmul.mubr.bf16.gmra.mrb[0].mxu0 %v1456
      %v1595 = vpop.f32.mrb[0].mxu0
      %v1596 = vadd.f32 0.0, %v1595
      %v1597 = vpop.f32.mrb[0].mxu0
      %v1598 = vpop.f32.mrb[0].mxu0
      %v1599 = vadd.f32 0.0, %v1598
      %v1600 = vpop.f32.mrb[0].mxu0
      %1601 = vmatprep.mubr.bf16.mxu0 0
      %1602 = vmatmul.mubr.bf16.gmra.mrb[0].mxu0 %v1459
      %v1603 = vpop.f32.mrb[0].mxu0
      %v1604 = vadd.f32 0.0, %v1603
      %v1605 = vpop.f32.mrb[0].mxu0
      %v1606 = vpop.f32.mrb[0].mxu0
      %v1607 = vadd.f32 0.0, %v1606
      %v1608 = vpop.f32.mrb[0].mxu0
      %1609 = vmatprep.mubr.bf16.mxu0 0
      %1610 = vmatmul.mubr.bf16.gmra.mrb[0].mxu0 %v1462
      %v1611 = vpop.f32.mrb[0].mxu0
      %v1612 = vadd.f32 0.0, %v1611
      %v1613 = vpop.f32.mrb[0].mxu0
      %v1614 = vpop.f32.mrb[0].mxu0
      %v1615 = vadd.f32 0.0, %v1614
      %v1616 = vpop.f32.mrb[0].mxu0
      %1617 = vmatprep.mubr.bf16.mxu0 0
      %1618 = vmatmul.mubr.bf16.gmra.mrb[0].mxu0 %v1465
      %v1619 = vpop.f32.mrb[0].mxu0
      %v1620 = vadd.f32 0.0, %v1619
      %v1621 = vpop.f32.mrb[0].mxu0
      %v1622 = vpop.f32.mrb[0].mxu0
      %v1623 = vadd.f32 0.0, %v1622
      %v1624 = vpop.f32.mrb[0].mxu0
      %1625 = vmatprep.mubr.bf16.mxu0 0
      %1626 = vmatmul.mubr.bf16.gmra.mrb[0].mxu0 %v1468
      %v1627 = vpop.f32.mrb[0].mxu0
      %v1628 = vadd.f32 0.0, %v1627
      %v1629 = vpop.f32.mrb[0].mxu0
      %v1630 = vpop.f32.mrb[0].mxu0
      %v1631 = vadd.f32 0.0, %v1630
      %v1632 = vpop.f32.mrb[0].mxu0
      %1633 = vdwg.mxu0
      %v1634 = vadd.f32 %v1115, %v1508
      %v1635 = vadd.f32 %v1118, %v1511
      %v1636 = vadd.f32 %v1123, %v1516
      %v1637 = vadd.f32 %v1126, %v1519
      %v1638 = vadd.f32 %v1131, %v1524
      %v1639 = vadd.f32 %v1134, %v1527
      %v1640 = vadd.f32 %v1139, %v1532
      %v1641 = vadd.f32 %v1142, %v1535
      %v1642 = vadd.f32 %v1147, %v1540
      %v1643 = vadd.f32 %v1150, %v1543
      %v1644 = vadd.f32 %v1155, %v1548
      %v1645 = vadd.f32 %v1158, %v1551
      %v1646 = vadd.f32 %v1163, %v1556
      %v1647 = vadd.f32 %v1166, %v1559
      %v1648 = vadd.f32 %v1171, %v1564
      %v1649 = vadd.f32 %v1174, %v1567
      %v1650 = vadd.f32 %v1179, %v1572
      %v1651 = vadd.f32 %v1182, %v1575
      %v1652 = vadd.f32 %v1187, %v1580
      %v1653 = vadd.f32 %v1190, %v1583
      %v1654 = vadd.f32 %v1195, %v1588
      %v1655 = vadd.f32 %v1198, %v1591
      %v1656 = vadd.f32 %v1203, %v1596
      %v1657 = vadd.f32 %v1206, %v1599
      %v1658 = vadd.f32 %v1211, %v1604
      %v1659 = vadd.f32 %v1214, %v1607
      %v1660 = vadd.f32 %v1219, %v1612
      %v1661 = vadd.f32 %v1222, %v1615
      %v1662 = vadd.f32 %v1227, %v1620
      %v1663 = vadd.f32 %v1230, %v1623
      %v1664 = vadd.f32 %v1235, %v1628
      %v1665 = vadd.f32 %v1238, %v1631
      %s1666 = scalar_lea.vmem %s1, 6
      %v1667 = vld [vmem:[%s1666] sm:$0x3]
      %v1670 = vunpack.c.l.b16 %v291
      %v1671 = vunpack.c.l.b16 %v292
      %v1672 = vpack.c.b16 %v1671, %v1670
      %v1674 = vsel %vm735, %v1672, 0
      %v1677 = vsel %vm784, %v1667, 0
      %1679 = vmatprep.subr.bf16.mxu0 0
      %1680 = vmatpush1.bf16.msra.mxu0 %v1677
      %1681 = vmatprep.subr.bf16.mxu0 0
      %1682 = vmatpush1.bf16.msra.mxu0 0
      %1683 = vmatprep.subr.bf16.mxu0 0
      %1684 = vmatpush1.bf16.msra.mxu0 0
      %1685 = vmatprep.subr.bf16.mxu0 0
      %1686 = vmatpush1.bf16.msra.mxu0 0
      %1687 = vmatprep.subr.bf16.mxu0 0
      %1688 = vmatpush1.bf16.msra.mxu0 0
      %1689 = vmatprep.subr.bf16.mxu0 0
      %1690 = vmatpush1.bf16.msra.mxu0 0
      %1691 = vmatprep.subr.bf16.mxu0 0
      %1692 = vmatpush1.bf16.msra.mxu0 0
      %1693 = vmatprep.subr.bf16.mxu0 0
      %1694 = vmatpush1.bf16.msra.mxu0 0
      %1695 = vmatprep.subr.bf16.mxu0 0
      %1696 = vmatpush1.bf16.msra.mxu0 0
      %1697 = vmatprep.subr.bf16.mxu0 0
      %1698 = vmatpush1.bf16.msra.mxu0 0
      %1699 = vmatprep.subr.bf16.mxu0 0
      %1700 = vmatpush1.bf16.msra.mxu0 0
      %1701 = vmatprep.subr.bf16.mxu0 0
      %1702 = vmatpush1.bf16.msra.mxu0 0
      %1703 = vmatprep.subr.bf16.mxu0 0
      %1704 = vmatpush1.bf16.msra.mxu0 0
      %1705 = vmatprep.subr.bf16.mxu0 0
      %1706 = vmatpush1.bf16.msra.mxu0 0
      %1707 = vmatprep.subr.bf16.mxu0 0
      %1708 = vmatpush1.bf16.msra.mxu0 0
      %1709 = vmatprep.subr.bf16.mxu0 0
      %1710 = vmatpush1.bf16.msra.mxu0 0
      %1711 = vmatprep.mubr.bf16.mxu0 0
      %1712 = vmatmul.mubr.bf16.gmra.mrb[0].mxu0 %v1033
      %v1713 = vpop.f32.mrb[0].mxu0
      %v1714 = vadd.f32 0.0, %v1713
      %v1715 = vpop.f32.mrb[0].mxu0
      %v1716 = vpop.f32.mrb[0].mxu0
      %v1717 = vadd.f32 0.0, %v1716
      %v1718 = vpop.f32.mrb[0].mxu0
      %1719 = vmatprep.mubr.bf16.mxu0 0
      %1720 = vmatmul.mubr.bf16.gmra.mrb[0].mxu0 %v1036
      %v1721 = vpop.f32.mrb[0].mxu0
      %v1722 = vadd.f32 0.0, %v1721
      %v1723 = vpop.f32.mrb[0].mxu0
      %v1724 = vpop.f32.mrb[0].mxu0
      %v1725 = vadd.f32 0.0, %v1724
      %v1726 = vpop.f32.mrb[0].mxu0
      %1727 = vmatprep.mubr.bf16.mxu0 0
      %1728 = vmatmul.mubr.bf16.gmra.mrb[0].mxu0 %v1039
      %v1729 = vpop.f32.mrb[0].mxu0
      %v1730 = vadd.f32 0.0, %v1729
      %v1731 = vpop.f32.mrb[0].mxu0
      %v1732 = vpop.f32.mrb[0].mxu0
      %v1733 = vadd.f32 0.0, %v1732
      %v1734 = vpop.f32.mrb[0].mxu0
      %1735 = vmatprep.mubr.bf16.mxu0 0
      %1736 = vmatmul.mubr.bf16.gmra.mrb[0].mxu0 %v1042
      %v1737 = vpop.f32.mrb[0].mxu0
      %v1738 = vadd.f32 0.0, %v1737
      %v1739 = vpop.f32.mrb[0].mxu0
      %v1740 = vpop.f32.mrb[0].mxu0
      %v1741 = vadd.f32 0.0, %v1740
      %v1742 = vpop.f32.mrb[0].mxu0
      %1743 = vmatprep.mubr.bf16.mxu0 0
      %1744 = vmatmul.mubr.bf16.gmra.mrb[0].mxu0 %v1045
      %v1745 = vpop.f32.mrb[0].mxu0
      %v1746 = vadd.f32 0.0, %v1745
      %v1747 = vpop.f32.mrb[0].mxu0
      %v1748 = vpop.f32.mrb[0].mxu0
      %v1749 = vadd.f32 0.0, %v1748
      %v1750 = vpop.f32.mrb[0].mxu0
      %1751 = vmatprep.mubr.bf16.mxu0 0
      %1752 = vmatmul.mubr.bf16.gmra.mrb[0].mxu0 %v1048
      %v1753 = vpop.f32.mrb[0].mxu0
      %v1754 = vadd.f32 0.0, %v1753
      %v1755 = vpop.f32.mrb[0].mxu0
      %v1756 = vpop.f32.mrb[0].mxu0
      %v1757 = vadd.f32 0.0, %v1756
      %v1758 = vpop.f32.mrb[0].mxu0
      %1759 = vmatprep.mubr.bf16.mxu0 0
      %1760 = vmatmul.mubr.bf16.gmra.mrb[0].mxu0 %v1051
      %v1761 = vpop.f32.mrb[0].mxu0
      %v1762 = vadd.f32 0.0, %v1761
      %v1763 = vpop.f32.mrb[0].mxu0
      %v1764 = vpop.f32.mrb[0].mxu0
      %v1765 = vadd.f32 0.0, %v1764
      %v1766 = vpop.f32.mrb[0].mxu0
      %1767 = vmatprep.mubr.bf16.mxu0 0
      %1768 = vmatmul.mubr.bf16.gmra.mrb[0].mxu0 %v1054
      %v1769 = vpop.f32.mrb[0].mxu0
      %v1770 = vadd.f32 0.0, %v1769
      %v1771 = vpop.f32.mrb[0].mxu0
      %v1772 = vpop.f32.mrb[0].mxu0
      %v1773 = vadd.f32 0.0, %v1772
      %v1774 = vpop.f32.mrb[0].mxu0
      %1775 = vmatprep.mubr.bf16.mxu0 0
      %1776 = vmatmul.mubr.bf16.gmra.mrb[0].mxu0 %v1057
      %v1777 = vpop.f32.mrb[0].mxu0
      %v1778 = vadd.f32 0.0, %v1777
      %v1779 = vpop.f32.mrb[0].mxu0
      %v1780 = vpop.f32.mrb[0].mxu0
      %v1781 = vadd.f32 0.0, %v1780
      %v1782 = vpop.f32.mrb[0].mxu0
      %1783 = vmatprep.mubr.bf16.mxu0 0
      %1784 = vmatmul.mubr.bf16.gmra.mrb[0].mxu0 %v1060
      %v1785 = vpop.f32.mrb[0].mxu0
      %v1786 = vadd.f32 0.0, %v1785
      %v1787 = vpop.f32.mrb[0].mxu0
      %v1788 = vpop.f32.mrb[0].mxu0
      %v1789 = vadd.f32 0.0, %v1788
      %v1790 = vpop.f32.mrb[0].mxu0
      %1791 = vmatprep.mubr.bf16.mxu0 0
      %1792 = vmatmul.mubr.bf16.gmra.mrb[0].mxu0 %v1063
      %v1793 = vpop.f32.mrb[0].mxu0
      %v1794 = vadd.f32 0.0, %v1793
      %v1795 = vpop.f32.mrb[0].mxu0
      %v1796 = vpop.f32.mrb[0].mxu0
      %v1797 = vadd.f32 0.0, %v1796
      %v1798 = vpop.f32.mrb[0].mxu0
      %1799 = vmatprep.mubr.bf16.mxu0 0
      %1800 = vmatmul.mubr.bf16.gmra.mrb[0].mxu0 %v1066
      %v1801 = vpop.f32.mrb[0].mxu0
      %v1802 = vadd.f32 0.0, %v1801
      %v1803 = vpop.f32.mrb[0].mxu0
      %v1804 = vpop.f32.mrb[0].mxu0
      %v1805 = vadd.f32 0.0, %v1804
      %v1806 = vpop.f32.mrb[0].mxu0
      %1807 = vmatprep.mubr.bf16.mxu0 0
      %1808 = vmatmul.mubr.bf16.gmra.mrb[0].mxu0 %v1069
      %v1809 = vpop.f32.mrb[0].mxu0
      %v1810 = vadd.f32 0.0, %v1809
      %v1811 = vpop.f32.mrb[0].mxu0
      %v1812 = vpop.f32.mrb[0].mxu0
      %v1813 = vadd.f32 0.0, %v1812
      %v1814 = vpop.f32.mrb[0].mxu0
      %1815 = vmatprep.mubr.bf16.mxu0 0
      %1816 = vmatmul.mubr.bf16.gmra.mrb[0].mxu0 %v1072
      %v1817 = vpop.f32.mrb[0].mxu0
      %v1818 = vadd.f32 0.0, %v1817
      %v1819 = vpop.f32.mrb[0].mxu0
      %v1820 = vpop.f32.mrb[0].mxu0
      %v1821 = vadd.f32 0.0, %v1820
      %v1822 = vpop.f32.mrb[0].mxu0
      %1823 = vmatprep.mubr.bf16.mxu0 0
      %1824 = vmatmul.mubr.bf16.gmra.mrb[0].mxu0 %v1075
      %v1825 = vpop.f32.mrb[0].mxu0
      %v1826 = vadd.f32 0.0, %v1825
      %v1827 = vpop.f32.mrb[0].mxu0
      %v1828 = vpop.f32.mrb[0].mxu0
      %v1829 = vadd.f32 0.0, %v1828
      %v1830 = vpop.f32.mrb[0].mxu0
      %1831 = vmatprep.mubr.bf16.mxu0 0
      %1832 = vmatmul.mubr.bf16.gmra.mrb[0].mxu0 %v1674
      %v1833 = vpop.f32.mrb[0].mxu0
      %v1834 = vadd.f32 0.0, %v1833
      %v1835 = vpop.f32.mrb[0].mxu0
      %v1836 = vpop.f32.mrb[0].mxu0
      %v1837 = vadd.f32 0.0, %v1836
      %v1838 = vpop.f32.mrb[0].mxu0
      %1839 = vdwg.mxu0
      %v1840 = vadd.f32 %v1634, %v1714
      %v1841 = vadd.f32 %v1635, %v1717
      %v1842 = vadd.f32 %v1636, %v1722
      %v1843 = vadd.f32 %v1637, %v1725
      %v1844 = vadd.f32 %v1638, %v1730
      %v1845 = vadd.f32 %v1639, %v1733
      %v1846 = vadd.f32 %v1640, %v1738
      %v1847 = vadd.f32 %v1641, %v1741
      %v1848 = vadd.f32 %v1642, %v1746
      %v1849 = vadd.f32 %v1643, %v1749
      %v1850 = vadd.f32 %v1644, %v1754
      %v1851 = vadd.f32 %v1645, %v1757
      %v1852 = vadd.f32 %v1646, %v1762
      %v1853 = vadd.f32 %v1647, %v1765
      %v1854 = vadd.f32 %v1648, %v1770
      %v1855 = vadd.f32 %v1649, %v1773
      %v1856 = vadd.f32 %v1650, %v1778
      %v1857 = vadd.f32 %v1651, %v1781
      %v1858 = vadd.f32 %v1652, %v1786
      %v1859 = vadd.f32 %v1653, %v1789
      %v1860 = vadd.f32 %v1654, %v1794
      %v1861 = vadd.f32 %v1655, %v1797
      %v1862 = vadd.f32 %v1656, %v1802
      %v1863 = vadd.f32 %v1657, %v1805
      %v1864 = vadd.f32 %v1658, %v1810
      %v1865 = vadd.f32 %v1659, %v1813
      %v1866 = vadd.f32 %v1660, %v1818
      %v1867 = vadd.f32 %v1661, %v1821
      %v1868 = vadd.f32 %v1662, %v1826
      %v1869 = vadd.f32 %v1663, %v1829
      %v1870 = vadd.f32 %v1664, %v1834
      %v1871 = vadd.f32 %v1665, %v1837
      %v1873 = vshrl.u32 %v291, 16
      %v1875 = vrot.slane %v1873, 4
      %v1876 = vshll.u32 %v291, 16
      %v1878 = vrot.slane %v1876, 5
      %v1879 = vor.u32 %v1875, %v1878
      %v1880 = vrot.slane %v1879, 4
      %v1882 = vshll.u32 %v292, 16
      %v1884 = vrot.slane %v1882, 5
      %v1885 = vsel %vm300, %v1880, %v1884
      %v1886 = vshrl.u32 %v292, 16
      %v1888 = vrot.slane %v1886, 4
      %v1889 = vor.u32 %v1888, %v1884
      %v1890 = vrot.slane %v1889, 4
      %v1892 = vshll.u32 %v293, 16
      %v1894 = vrot.slane %v1892, 5
      %v1895 = vsel %vm300, %v1890, %v1894
      %s1896 = scalar_lea.vmem %s1, 8
      %v1897 = vld [vmem:[%s1896] sm:$0x3]
      %v1898 = vunpack.c.l.b16 %v1885
      %v1899 = vunpack.c.l.b16 %v1895
      %v1900 = vpack.c.b16 %v1899, %v1898
      %v1902 = vsel %vm735, %v1900, 0
      %v1905 = vsel %vm784, %v1897, 0
      %1907 = vmatprep.subr.bf16.mxu0 0
      %1908 = vmatpush1.bf16.msra.mxu0 %v1905
      %1909 = vmatprep.subr.bf16.mxu0 0
      %1910 = vmatpush1.bf16.msra.mxu0 0
      %1911 = vmatprep.subr.bf16.mxu0 0
      %1912 = vmatpush1.bf16.msra.mxu0 0
      %1913 = vmatprep.subr.bf16.mxu0 0
      %1914 = vmatpush1.bf16.msra.mxu0 0
      %1915 = vmatprep.subr.bf16.mxu0 0
      %1916 = vmatpush1.bf16.msra.mxu0 0
      %1917 = vmatprep.subr.bf16.mxu0 0
      %1918 = vmatpush1.bf16.msra.mxu0 0
      %1919 = vmatprep.subr.bf16.mxu0 0
      %1920 = vmatpush1.bf16.msra.mxu0 0
      %1921 = vmatprep.subr.bf16.mxu0 0
      %1922 = vmatpush1.bf16.msra.mxu0 0
      %1923 = vmatprep.subr.bf16.mxu0 0
      %1924 = vmatpush1.bf16.msra.mxu0 0
      %1925 = vmatprep.subr.bf16.mxu0 0
      %1926 = vmatpush1.bf16.msra.mxu0 0
      %1927 = vmatprep.subr.bf16.mxu0 0
      %1928 = vmatpush1.bf16.msra.mxu0 0
      %1929 = vmatprep.subr.bf16.mxu0 0
      %1930 = vmatpush1.bf16.msra.mxu0 0
      %1931 = vmatprep.subr.bf16.mxu0 0
      %1932 = vmatpush1.bf16.msra.mxu0 0
      %1933 = vmatprep.subr.bf16.mxu0 0
      %1934 = vmatpush1.bf16.msra.mxu0 0
      %1935 = vmatprep.subr.bf16.mxu0 0
      %1936 = vmatpush1.bf16.msra.mxu0 0
      %1937 = vmatprep.subr.bf16.mxu0 0
      %1938 = vmatpush1.bf16.msra.mxu0 0
      %1939 = vmatprep.mubr.bf16.mxu0 0
      %1940 = vmatmul.mubr.bf16.gmra.mrb[0].mxu0 %v740
      %v1941 = vpop.f32.mrb[0].mxu0
      %v1942 = vadd.f32 0.0, %v1941
      %v1943 = vpop.f32.mrb[0].mxu0
      %v1944 = vpop.f32.mrb[0].mxu0
      %v1945 = vadd.f32 0.0, %v1944
      %v1946 = vpop.f32.mrb[0].mxu0
      %1947 = vmatprep.mubr.bf16.mxu0 0
      %1948 = vmatmul.mubr.bf16.gmra.mrb[0].mxu0 %v743
      %v1949 = vpop.f32.mrb[0].mxu0
      %v1950 = vadd.f32 0.0, %v1949
      %v1951 = vpop.f32.mrb[0].mxu0
      %v1952 = vpop.f32.mrb[0].mxu0
      %v1953 = vadd.f32 0.0, %v1952
      %v1954 = vpop.f32.mrb[0].mxu0
      %1955 = vmatprep.mubr.bf16.mxu0 0
      %1956 = vmatmul.mubr.bf16.gmra.mrb[0].mxu0 %v746
      %v1957 = vpop.f32.mrb[0].mxu0
      %v1958 = vadd.f32 0.0, %v1957
      %v1959 = vpop.f32.mrb[0].mxu0
      %v1960 = vpop.f32.mrb[0].mxu0
      %v1961 = vadd.f32 0.0, %v1960
      %v1962 = vpop.f32.mrb[0].mxu0
      %1963 = vmatprep.mubr.bf16.mxu0 0
      %1964 = vmatmul.mubr.bf16.gmra.mrb[0].mxu0 %v749
      %v1965 = vpop.f32.mrb[0].mxu0
      %v1966 = vadd.f32 0.0, %v1965
      %v1967 = vpop.f32.mrb[0].mxu0
      %v1968 = vpop.f32.mrb[0].mxu0
      %v1969 = vadd.f32 0.0, %v1968
      %v1970 = vpop.f32.mrb[0].mxu0
      %1971 = vmatprep.mubr.bf16.mxu0 0
      %1972 = vmatmul.mubr.bf16.gmra.mrb[0].mxu0 %v752
      %v1973 = vpop.f32.mrb[0].mxu0
      %v1974 = vadd.f32 0.0, %v1973
      %v1975 = vpop.f32.mrb[0].mxu0
      %v1976 = vpop.f32.mrb[0].mxu0
      %v1977 = vadd.f32 0.0, %v1976
      %v1978 = vpop.f32.mrb[0].mxu0
      %1979 = vmatprep.mubr.bf16.mxu0 0
      %1980 = vmatmul.mubr.bf16.gmra.mrb[0].mxu0 %v755
      %v1981 = vpop.f32.mrb[0].mxu0
      %v1982 = vadd.f32 0.0, %v1981
      %v1983 = vpop.f32.mrb[0].mxu0
      %v1984 = vpop.f32.mrb[0].mxu0
      %v1985 = vadd.f32 0.0, %v1984
      %v1986 = vpop.f32.mrb[0].mxu0
      %1987 = vmatprep.mubr.bf16.mxu0 0
      %1988 = vmatmul.mubr.bf16.gmra.mrb[0].mxu0 %v758
      %v1989 = vpop.f32.mrb[0].mxu0
      %v1990 = vadd.f32 0.0, %v1989
      %v1991 = vpop.f32.mrb[0].mxu0
      %v1992 = vpop.f32.mrb[0].mxu0
      %v1993 = vadd.f32 0.0, %v1992
      %v1994 = vpop.f32.mrb[0].mxu0
      %1995 = vmatprep.mubr.bf16.mxu0 0
      %1996 = vmatmul.mubr.bf16.gmra.mrb[0].mxu0 %v761
      %v1997 = vpop.f32.mrb[0].mxu0
      %v1998 = vadd.f32 0.0, %v1997
      %v1999 = vpop.f32.mrb[0].mxu0
      %v2000 = vpop.f32.mrb[0].mxu0
      %v2001 = vadd.f32 0.0, %v2000
      %v2002 = vpop.f32.mrb[0].mxu0
      %2003 = vmatprep.mubr.bf16.mxu0 0
      %2004 = vmatmul.mubr.bf16.gmra.mrb[0].mxu0 %v764
      %v2005 = vpop.f32.mrb[0].mxu0
      %v2006 = vadd.f32 0.0, %v2005
      %v2007 = vpop.f32.mrb[0].mxu0
      %v2008 = vpop.f32.mrb[0].mxu0
      %v2009 = vadd.f32 0.0, %v2008
      %v2010 = vpop.f32.mrb[0].mxu0
      %2011 = vmatprep.mubr.bf16.mxu0 0
      %2012 = vmatmul.mubr.bf16.gmra.mrb[0].mxu0 %v767
      %v2013 = vpop.f32.mrb[0].mxu0
      %v2014 = vadd.f32 0.0, %v2013
      %v2015 = vpop.f32.mrb[0].mxu0
      %v2016 = vpop.f32.mrb[0].mxu0
      %v2017 = vadd.f32 0.0, %v2016
      %v2018 = vpop.f32.mrb[0].mxu0
      %2019 = vmatprep.mubr.bf16.mxu0 0
      %2020 = vmatmul.mubr.bf16.gmra.mrb[0].mxu0 %v770
      %v2021 = vpop.f32.mrb[0].mxu0
      %v2022 = vadd.f32 0.0, %v2021
      %v2023 = vpop.f32.mrb[0].mxu0
      %v2024 = vpop.f32.mrb[0].mxu0
      %v2025 = vadd.f32 0.0, %v2024
      %v2026 = vpop.f32.mrb[0].mxu0
      %2027 = vmatprep.mubr.bf16.mxu0 0
      %2028 = vmatmul.mubr.bf16.gmra.mrb[0].mxu0 %v773
      %v2029 = vpop.f32.mrb[0].mxu0
      %v2030 = vadd.f32 0.0, %v2029
      %v2031 = vpop.f32.mrb[0].mxu0
      %v2032 = vpop.f32.mrb[0].mxu0
      %v2033 = vadd.f32 0.0, %v2032
      %v2034 = vpop.f32.mrb[0].mxu0
      %2035 = vmatprep.mubr.bf16.mxu0 0
      %2036 = vmatmul.mubr.bf16.gmra.mrb[0].mxu0 %v776
      %v2037 = vpop.f32.mrb[0].mxu0
      %v2038 = vadd.f32 0.0, %v2037
      %v2039 = vpop.f32.mrb[0].mxu0
      %v2040 = vpop.f32.mrb[0].mxu0
      %v2041 = vadd.f32 0.0, %v2040
      %v2042 = vpop.f32.mrb[0].mxu0
      %2043 = vmatprep.mubr.bf16.mxu0 0
      %2044 = vmatmul.mubr.bf16.gmra.mrb[0].mxu0 %v779
      %v2045 = vpop.f32.mrb[0].mxu0
      %v2046 = vadd.f32 0.0, %v2045
      %v2047 = vpop.f32.mrb[0].mxu0
      %v2048 = vpop.f32.mrb[0].mxu0
      %v2049 = vadd.f32 0.0, %v2048
      %v2050 = vpop.f32.mrb[0].mxu0
      %2051 = vmatprep.mubr.bf16.mxu0 0
      %2052 = vmatmul.mubr.bf16.gmra.mrb[0].mxu0 %v782
      %v2053 = vpop.f32.mrb[0].mxu0
      %v2054 = vadd.f32 0.0, %v2053
      %v2055 = vpop.f32.mrb[0].mxu0
      %v2056 = vpop.f32.mrb[0].mxu0
      %v2057 = vadd.f32 0.0, %v2056
      %v2058 = vpop.f32.mrb[0].mxu0
      %2059 = vmatprep.mubr.bf16.mxu0 0
      %2060 = vmatmul.mubr.bf16.gmra.mrb[0].mxu0 %v1902
      %v2061 = vpop.f32.mrb[0].mxu0
      %v2062 = vadd.f32 0.0, %v2061
      %v2063 = vpop.f32.mrb[0].mxu0
      %v2064 = vpop.f32.mrb[0].mxu0
      %v2065 = vadd.f32 0.0, %v2064
      %v2066 = vpop.f32.mrb[0].mxu0
      %2067 = vdwg.mxu0
      %v2068 = vadd.f32 %v1840, %v1942
      %v2069 = vadd.f32 %v1841, %v1945
      %v2070 = vadd.f32 %v1842, %v1950
      %v2071 = vadd.f32 %v1843, %v1953
      %v2072 = vadd.f32 %v1844, %v1958
      %v2073 = vadd.f32 %v1845, %v1961
      %v2074 = vadd.f32 %v1846, %v1966
      %v2075 = vadd.f32 %v1847, %v1969
      %v2076 = vadd.f32 %v1848, %v1974
      %v2077 = vadd.f32 %v1849, %v1977
      %v2078 = vadd.f32 %v1850, %v1982
      %v2079 = vadd.f32 %v1851, %v1985
      %v2080 = vadd.f32 %v1852, %v1990
      %v2081 = vadd.f32 %v1853, %v1993
      %v2082 = vadd.f32 %v1854, %v1998
      %v2083 = vadd.f32 %v1855, %v2001
      %v2084 = vadd.f32 %v1856, %v2006
      %v2085 = vadd.f32 %v1857, %v2009
      %v2086 = vadd.f32 %v1858, %v2014
      %v2087 = vadd.f32 %v1859, %v2017
      %v2088 = vadd.f32 %v1860, %v2022
      %v2089 = vadd.f32 %v1861, %v2025
      %v2090 = vadd.f32 %v1862, %v2030
      %v2091 = vadd.f32 %v1863, %v2033
      %v2092 = vadd.f32 %v1864, %v2038
      %v2093 = vadd.f32 %v1865, %v2041
      %v2094 = vadd.f32 %v1866, %v2046
      %v2095 = vadd.f32 %v1867, %v2049
      %v2096 = vadd.f32 %v1868, %v2054
      %v2097 = vadd.f32 %v1869, %v2057
      %v2098 = vadd.f32 %v1870, %v2062
      %v2099 = vadd.f32 %v1871, %v2065
      %v2101 = vrot.slane %v291, 5
      %v2102 = vrot.slane %v2101, 4
      %v2103 = vrot.slane %v292, 5
      %v2104 = vsel %vm1259, %v2102, %v2103
      %v2105 = vrot.slane %v2103, 4
      %v2106 = vrot.slane %v293, 5
      %v2107 = vsel %vm1259, %v2105, %v2106
      %s2108 = scalar_lea.vmem %s1, 10
      %v2109 = vld [vmem:[%s2108] sm:$0x3]
      %v2110 = vunpack.c.l.b16 %v2104
      %v2111 = vunpack.c.l.b16 %v2107
      %v2112 = vpack.c.b16 %v2111, %v2110
      %v2114 = vsel %vm735, %v2112, 0
      %v2117 = vsel %vm784, %v2109, 0
      %2119 = vmatprep.subr.bf16.mxu0 0
      %2120 = vmatpush1.bf16.msra.mxu0 %v2117
      %2121 = vmatprep.subr.bf16.mxu0 0
      %2122 = vmatpush1.bf16.msra.mxu0 0
      %2123 = vmatprep.subr.bf16.mxu0 0
      %2124 = vmatpush1.bf16.msra.mxu0 0
      %2125 = vmatprep.subr.bf16.mxu0 0
      %2126 = vmatpush1.bf16.msra.mxu0 0
      %2127 = vmatprep.subr.bf16.mxu0 0
      %2128 = vmatpush1.bf16.msra.mxu0 0
      %2129 = vmatprep.subr.bf16.mxu0 0
      %2130 = vmatpush1.bf16.msra.mxu0 0
      %2131 = vmatprep.subr.bf16.mxu0 0
      %2132 = vmatpush1.bf16.msra.mxu0 0
      %2133 = vmatprep.subr.bf16.mxu0 0
      %2134 = vmatpush1.bf16.msra.mxu0 0
      %2135 = vmatprep.subr.bf16.mxu0 0
      %2136 = vmatpush1.bf16.msra.mxu0 0
      %2137 = vmatprep.subr.bf16.mxu0 0
      %2138 = vmatpush1.bf16.msra.mxu0 0
      %2139 = vmatprep.subr.bf16.mxu0 0
      %2140 = vmatpush1.bf16.msra.mxu0 0
      %2141 = vmatprep.subr.bf16.mxu0 0
      %2142 = vmatpush1.bf16.msra.mxu0 0
      %2143 = vmatprep.subr.bf16.mxu0 0
      %2144 = vmatpush1.bf16.msra.mxu0 0
      %2145 = vmatprep.subr.bf16.mxu0 0
      %2146 = vmatpush1.bf16.msra.mxu0 0
      %2147 = vmatprep.subr.bf16.mxu0 0
      %2148 = vmatpush1.bf16.msra.mxu0 0
      %2149 = vmatprep.subr.bf16.mxu0 0
      %2150 = vmatpush1.bf16.msra.mxu0 0
      %2151 = vmatprep.mubr.bf16.mxu0 0
      %2152 = vmatmul.mubr.bf16.gmra.mrb[0].mxu0 %v1426
      %v2153 = vpop.f32.mrb[0].mxu0
      %v2154 = vadd.f32 0.0, %v2153
      %v2155 = vpop.f32.mrb[0].mxu0
      %v2156 = vpop.f32.mrb[0].mxu0
      %v2157 = vadd.f32 0.0, %v2156
      %v2158 = vpop.f32.mrb[0].mxu0
      %2159 = vmatprep.mubr.bf16.mxu0 0
      %2160 = vmatmul.mubr.bf16.gmra.mrb[0].mxu0 %v1429
      %v2161 = vpop.f32.mrb[0].mxu0
      %v2162 = vadd.f32 0.0, %v2161
      %v2163 = vpop.f32.mrb[0].mxu0
      %v2164 = vpop.f32.mrb[0].mxu0
      %v2165 = vadd.f32 0.0, %v2164
      %v2166 = vpop.f32.mrb[0].mxu0
      %2167 = vmatprep.mubr.bf16.mxu0 0
      %2168 = vmatmul.mubr.bf16.gmra.mrb[0].mxu0 %v1432
      %v2169 = vpop.f32.mrb[0].mxu0
      %v2170 = vadd.f32 0.0, %v2169
      %v2171 = vpop.f32.mrb[0].mxu0
      %v2172 = vpop.f32.mrb[0].mxu0
      %v2173 = vadd.f32 0.0, %v2172
      %v2174 = vpop.f32.mrb[0].mxu0
      %2175 = vmatprep.mubr.bf16.mxu0 0
      %2176 = vmatmul.mubr.bf16.gmra.mrb[0].mxu0 %v1435
      %v2177 = vpop.f32.mrb[0].mxu0
      %v2178 = vadd.f32 0.0, %v2177
      %v2179 = vpop.f32.mrb[0].mxu0
      %v2180 = vpop.f32.mrb[0].mxu0
      %v2181 = vadd.f32 0.0, %v2180
      %v2182 = vpop.f32.mrb[0].mxu0
      %2183 = vmatprep.mubr.bf16.mxu0 0
      %2184 = vmatmul.mubr.bf16.gmra.mrb[0].mxu0 %v1438
      %v2185 = vpop.f32.mrb[0].mxu0
      %v2186 = vadd.f32 0.0, %v2185
      %v2187 = vpop.f32.mrb[0].mxu0
      %v2188 = vpop.f32.mrb[0].mxu0
      %v2189 = vadd.f32 0.0, %v2188
      %v2190 = vpop.f32.mrb[0].mxu0
      %2191 = vmatprep.mubr.bf16.mxu0 0
      %2192 = vmatmul.mubr.bf16.gmra.mrb[0].mxu0 %v1441
      %v2193 = vpop.f32.mrb[0].mxu0
      %v2194 = vadd.f32 0.0, %v2193
      %v2195 = vpop.f32.mrb[0].mxu0
      %v2196 = vpop.f32.mrb[0].mxu0
      %v2197 = vadd.f32 0.0, %v2196
      %v2198 = vpop.f32.mrb[0].mxu0
      %2199 = vmatprep.mubr.bf16.mxu0 0
      %2200 = vmatmul.mubr.bf16.gmra.mrb[0].mxu0 %v1444
      %v2201 = vpop.f32.mrb[0].mxu0
      %v2202 = vadd.f32 0.0, %v2201
      %v2203 = vpop.f32.mrb[0].mxu0
      %v2204 = vpop.f32.mrb[0].mxu0
      %v2205 = vadd.f32 0.0, %v2204
      %v2206 = vpop.f32.mrb[0].mxu0
      %2207 = vmatprep.mubr.bf16.mxu0 0
      %2208 = vmatmul.mubr.bf16.gmra.mrb[0].mxu0 %v1447
      %v2209 = vpop.f32.mrb[0].mxu0
      %v2210 = vadd.f32 0.0, %v2209
      %v2211 = vpop.f32.mrb[0].mxu0
      %v2212 = vpop.f32.mrb[0].mxu0
      %v2213 = vadd.f32 0.0, %v2212
      %v2214 = vpop.f32.mrb[0].mxu0
      %2215 = vmatprep.mubr.bf16.mxu0 0
      %2216 = vmatmul.mubr.bf16.gmra.mrb[0].mxu0 %v1450
      %v2217 = vpop.f32.mrb[0].mxu0
      %v2218 = vadd.f32 0.0, %v2217
      %v2219 = vpop.f32.mrb[0].mxu0
      %v2220 = vpop.f32.mrb[0].mxu0
      %v2221 = vadd.f32 0.0, %v2220
      %v2222 = vpop.f32.mrb[0].mxu0
      %2223 = vmatprep.mubr.bf16.mxu0 0
      %2224 = vmatmul.mubr.bf16.gmra.mrb[0].mxu0 %v1453
      %v2225 = vpop.f32.mrb[0].mxu0
      %v2226 = vadd.f32 0.0, %v2225
      %v2227 = vpop.f32.mrb[0].mxu0
      %v2228 = vpop.f32.mrb[0].mxu0
      %v2229 = vadd.f32 0.0, %v2228
      %v2230 = vpop.f32.mrb[0].mxu0
      %2231 = vmatprep.mubr.bf16.mxu0 0
      %2232 = vmatmul.mubr.bf16.gmra.mrb[0].mxu0 %v1456
      %v2233 = vpop.f32.mrb[0].mxu0
      %v2234 = vadd.f32 0.0, %v2233
      %v2235 = vpop.f32.mrb[0].mxu0
      %v2236 = vpop.f32.mrb[0].mxu0
      %v2237 = vadd.f32 0.0, %v2236
      %v2238 = vpop.f32.mrb[0].mxu0
      %2239 = vmatprep.mubr.bf16.mxu0 0
      %2240 = vmatmul.mubr.bf16.gmra.mrb[0].mxu0 %v1459
      %v2241 = vpop.f32.mrb[0].mxu0
      %v2242 = vadd.f32 0.0, %v2241
      %v2243 = vpop.f32.mrb[0].mxu0
      %v2244 = vpop.f32.mrb[0].mxu0
      %v2245 = vadd.f32 0.0, %v2244
      %v2246 = vpop.f32.mrb[0].mxu0
      %2247 = vmatprep.mubr.bf16.mxu0 0
      %2248 = vmatmul.mubr.bf16.gmra.mrb[0].mxu0 %v1462
      %v2249 = vpop.f32.mrb[0].mxu0
      %v2250 = vadd.f32 0.0, %v2249
      %v2251 = vpop.f32.mrb[0].mxu0
      %v2252 = vpop.f32.mrb[0].mxu0
      %v2253 = vadd.f32 0.0, %v2252
      %v2254 = vpop.f32.mrb[0].mxu0
      %2255 = vmatprep.mubr.bf16.mxu0 0
      %2256 = vmatmul.mubr.bf16.gmra.mrb[0].mxu0 %v1465
      %v2257 = vpop.f32.mrb[0].mxu0
      %v2258 = vadd.f32 0.0, %v2257
      %v2259 = vpop.f32.mrb[0].mxu0
      %v2260 = vpop.f32.mrb[0].mxu0
      %v2261 = vadd.f32 0.0, %v2260
      %v2262 = vpop.f32.mrb[0].mxu0
      %2263 = vmatprep.mubr.bf16.mxu0 0
      %2264 = vmatmul.mubr.bf16.gmra.mrb[0].mxu0 %v1468
      %v2265 = vpop.f32.mrb[0].mxu0
      %v2266 = vadd.f32 0.0, %v2265
      %v2267 = vpop.f32.mrb[0].mxu0
      %v2268 = vpop.f32.mrb[0].mxu0
      %v2269 = vadd.f32 0.0, %v2268
      %v2270 = vpop.f32.mrb[0].mxu0
      %2271 = vmatprep.mubr.bf16.mxu0 0
      %2272 = vmatmul.mubr.bf16.gmra.mrb[0].mxu0 %v2114
      %v2273 = vpop.f32.mrb[0].mxu0
      %v2274 = vadd.f32 0.0, %v2273
      %v2275 = vpop.f32.mrb[0].mxu0
      %v2276 = vpop.f32.mrb[0].mxu0
      %v2277 = vadd.f32 0.0, %v2276
      %v2278 = vpop.f32.mrb[0].mxu0
      %2279 = vdwg.mxu0
      %v2280 = vadd.f32 %v2068, %v2154
      %v2281 = vadd.f32 %v2069, %v2157
      %v2282 = vadd.f32 %v2070, %v2162
      %v2283 = vadd.f32 %v2071, %v2165
      %v2284 = vadd.f32 %v2072, %v2170
      %v2285 = vadd.f32 %v2073, %v2173
      %v2286 = vadd.f32 %v2074, %v2178
      %v2287 = vadd.f32 %v2075, %v2181
      %v2288 = vadd.f32 %v2076, %v2186
      %v2289 = vadd.f32 %v2077, %v2189
      %v2290 = vadd.f32 %v2078, %v2194
      %v2291 = vadd.f32 %v2079, %v2197
      %v2292 = vadd.f32 %v2080, %v2202
      %v2293 = vadd.f32 %v2081, %v2205
      %v2294 = vadd.f32 %v2082, %v2210
      %v2295 = vadd.f32 %v2083, %v2213
      %v2296 = vadd.f32 %v2084, %v2218
      %v2297 = vadd.f32 %v2085, %v2221
      %v2298 = vadd.f32 %v2086, %v2226
      %v2299 = vadd.f32 %v2087, %v2229
      %v2300 = vadd.f32 %v2088, %v2234
      %v2301 = vadd.f32 %v2089, %v2237
      %v2302 = vadd.f32 %v2090, %v2242
      %v2303 = vadd.f32 %v2091, %v2245
      %v2304 = vadd.f32 %v2092, %v2250
      %v2305 = vadd.f32 %v2093, %v2253
      %v2306 = vadd.f32 %v2094, %v2258
      %v2307 = vadd.f32 %v2095, %v2261
      %v2308 = vadd.f32 %v2096, %v2266
      %v2309 = vadd.f32 %v2097, %v2269
      %v2310 = vadd.f32 %v2098, %v2274
      %v2311 = vadd.f32 %v2099, %v2277
      %s2312 = scalar_lea.vmem %s1, 12
      %v2313 = vld [vmem:[%s2312] sm:$0x3]
      %v2316 = vunpack.c.l.b16 %v294
      %v2317 = vunpack.c.l.b16 %v295
      %v2318 = vpack.c.b16 %v2317, %v2316
      %v2320 = vsel %vm735, %v2318, 0
      %v2323 = vsel %vm784, %v2313, 0
      %2325 = vmatprep.subr.bf16.mxu0 0
      %2326 = vmatpush1.bf16.msra.mxu0 %v2323
      %2327 = vmatprep.subr.bf16.mxu0 0
      %2328 = vmatpush1.bf16.msra.mxu0 0
      %2329 = vmatprep.subr.bf16.mxu0 0
      %2330 = vmatpush1.bf16.msra.mxu0 0
      %2331 = vmatprep.subr.bf16.mxu0 0
      %2332 = vmatpush1.bf16.msra.mxu0 0
      %2333 = vmatprep.subr.bf16.mxu0 0
      %2334 = vmatpush1.bf16.msra.mxu0 0
      %2335 = vmatprep.subr.bf16.mxu0 0
      %2336 = vmatpush1.bf16.msra.mxu0 0
      %2337 = vmatprep.subr.bf16.mxu0 0
      %2338 = vmatpush1.bf16.msra.mxu0 0
      %2339 = vmatprep.subr.bf16.mxu0 0
      %2340 = vmatpush1.bf16.msra.mxu0 0
      %2341 = vmatprep.subr.bf16.mxu0 0
      %2342 = vmatpush1.bf16.msra.mxu0 0
      %2343 = vmatprep.subr.bf16.mxu0 0
      %2344 = vmatpush1.bf16.msra.mxu0 0
      %2345 = vmatprep.subr.bf16.mxu0 0
      %2346 = vmatpush1.bf16.msra.mxu0 0
      %2347 = vmatprep.subr.bf16.mxu0 0
      %2348 = vmatpush1.bf16.msra.mxu0 0
      %2349 = vmatprep.subr.bf16.mxu0 0
      %2350 = vmatpush1.bf16.msra.mxu0 0
      %2351 = vmatprep.subr.bf16.mxu0 0
      %2352 = vmatpush1.bf16.msra.mxu0 0
      %2353 = vmatprep.subr.bf16.mxu0 0
      %2354 = vmatpush1.bf16.msra.mxu0 0
      %2355 = vmatprep.subr.bf16.mxu0 0
      %2356 = vmatpush1.bf16.msra.mxu0 0
      %2357 = vmatprep.mubr.bf16.mxu0 0
      %2358 = vmatmul.mubr.bf16.gmra.mrb[0].mxu0 %v1036
      %v2359 = vpop.f32.mrb[0].mxu0
      %v2360 = vadd.f32 0.0, %v2359
      %v2361 = vpop.f32.mrb[0].mxu0
      %v2362 = vpop.f32.mrb[0].mxu0
      %v2363 = vadd.f32 0.0, %v2362
      %v2364 = vpop.f32.mrb[0].mxu0
      %2365 = vmatprep.mubr.bf16.mxu0 0
      %2366 = vmatmul.mubr.bf16.gmra.mrb[0].mxu0 %v1039
      %v2367 = vpop.f32.mrb[0].mxu0
      %v2368 = vadd.f32 0.0, %v2367
      %v2369 = vpop.f32.mrb[0].mxu0
      %v2370 = vpop.f32.mrb[0].mxu0
      %v2371 = vadd.f32 0.0, %v2370
      %v2372 = vpop.f32.mrb[0].mxu0
      %2373 = vmatprep.mubr.bf16.mxu0 0
      %2374 = vmatmul.mubr.bf16.gmra.mrb[0].mxu0 %v1042
      %v2375 = vpop.f32.mrb[0].mxu0
      %v2376 = vadd.f32 0.0, %v2375
      %v2377 = vpop.f32.mrb[0].mxu0
      %v2378 = vpop.f32.mrb[0].mxu0
      %v2379 = vadd.f32 0.0, %v2378
      %v2380 = vpop.f32.mrb[0].mxu0
      %2381 = vmatprep.mubr.bf16.mxu0 0
      %2382 = vmatmul.mubr.bf16.gmra.mrb[0].mxu0 %v1045
      %v2383 = vpop.f32.mrb[0].mxu0
      %v2384 = vadd.f32 0.0, %v2383
      %v2385 = vpop.f32.mrb[0].mxu0
      %v2386 = vpop.f32.mrb[0].mxu0
      %v2387 = vadd.f32 0.0, %v2386
      %v2388 = vpop.f32.mrb[0].mxu0
      %2389 = vmatprep.mubr.bf16.mxu0 0
      %2390 = vmatmul.mubr.bf16.gmra.mrb[0].mxu0 %v1048
      %v2391 = vpop.f32.mrb[0].mxu0
      %v2392 = vadd.f32 0.0, %v2391
      %v2393 = vpop.f32.mrb[0].mxu0
      %v2394 = vpop.f32.mrb[0].mxu0
      %v2395 = vadd.f32 0.0, %v2394
      %v2396 = vpop.f32.mrb[0].mxu0
      %2397 = vmatprep.mubr.bf16.mxu0 0
      %2398 = vmatmul.mubr.bf16.gmra.mrb[0].mxu0 %v1051
      %v2399 = vpop.f32.mrb[0].mxu0
      %v2400 = vadd.f32 0.0, %v2399
      %v2401 = vpop.f32.mrb[0].mxu0
      %v2402 = vpop.f32.mrb[0].mxu0
      %v2403 = vadd.f32 0.0, %v2402
      %v2404 = vpop.f32.mrb[0].mxu0
      %2405 = vmatprep.mubr.bf16.mxu0 0
      %2406 = vmatmul.mubr.bf16.gmra.mrb[0].mxu0 %v1054
      %v2407 = vpop.f32.mrb[0].mxu0
      %v2408 = vadd.f32 0.0, %v2407
      %v2409 = vpop.f32.mrb[0].mxu0
      %v2410 = vpop.f32.mrb[0].mxu0
      %v2411 = vadd.f32 0.0, %v2410
      %v2412 = vpop.f32.mrb[0].mxu0
      %2413 = vmatprep.mubr.bf16.mxu0 0
      %2414 = vmatmul.mubr.bf16.gmra.mrb[0].mxu0 %v1057
      %v2415 = vpop.f32.mrb[0].mxu0
      %v2416 = vadd.f32 0.0, %v2415
      %v2417 = vpop.f32.mrb[0].mxu0
      %v2418 = vpop.f32.mrb[0].mxu0
      %v2419 = vadd.f32 0.0, %v2418
      %v2420 = vpop.f32.mrb[0].mxu0
      %2421 = vmatprep.mubr.bf16.mxu0 0
      %2422 = vmatmul.mubr.bf16.gmra.mrb[0].mxu0 %v1060
      %v2423 = vpop.f32.mrb[0].mxu0
      %v2424 = vadd.f32 0.0, %v2423
      %v2425 = vpop.f32.mrb[0].mxu0
      %v2426 = vpop.f32.mrb[0].mxu0
      %v2427 = vadd.f32 0.0, %v2426
      %v2428 = vpop.f32.mrb[0].mxu0
      %2429 = vmatprep.mubr.bf16.mxu0 0
      %2430 = vmatmul.mubr.bf16.gmra.mrb[0].mxu0 %v1063
      %v2431 = vpop.f32.mrb[0].mxu0
      %v2432 = vadd.f32 0.0, %v2431
      %v2433 = vpop.f32.mrb[0].mxu0
      %v2434 = vpop.f32.mrb[0].mxu0
      %v2435 = vadd.f32 0.0, %v2434
      %v2436 = vpop.f32.mrb[0].mxu0
      %2437 = vmatprep.mubr.bf16.mxu0 0
      %2438 = vmatmul.mubr.bf16.gmra.mrb[0].mxu0 %v1066
      %v2439 = vpop.f32.mrb[0].mxu0
      %v2440 = vadd.f32 0.0, %v2439
      %v2441 = vpop.f32.mrb[0].mxu0
      %v2442 = vpop.f32.mrb[0].mxu0
      %v2443 = vadd.f32 0.0, %v2442
      %v2444 = vpop.f32.mrb[0].mxu0
      %2445 = vmatprep.mubr.bf16.mxu0 0
      %2446 = vmatmul.mubr.bf16.gmra.mrb[0].mxu0 %v1069
      %v2447 = vpop.f32.mrb[0].mxu0
      %v2448 = vadd.f32 0.0, %v2447
      %v2449 = vpop.f32.mrb[0].mxu0
      %v2450 = vpop.f32.mrb[0].mxu0
      %v2451 = vadd.f32 0.0, %v2450
      %v2452 = vpop.f32.mrb[0].mxu0
      %2453 = vmatprep.mubr.bf16.mxu0 0
      %2454 = vmatmul.mubr.bf16.gmra.mrb[0].mxu0 %v1072
      %v2455 = vpop.f32.mrb[0].mxu0
      %v2456 = vadd.f32 0.0, %v2455
      %v2457 = vpop.f32.mrb[0].mxu0
      %v2458 = vpop.f32.mrb[0].mxu0
      %v2459 = vadd.f32 0.0, %v2458
      %v2460 = vpop.f32.mrb[0].mxu0
      %2461 = vmatprep.mubr.bf16.mxu0 0
      %2462 = vmatmul.mubr.bf16.gmra.mrb[0].mxu0 %v1075
      %v2463 = vpop.f32.mrb[0].mxu0
      %v2464 = vadd.f32 0.0, %v2463
      %v2465 = vpop.f32.mrb[0].mxu0
      %v2466 = vpop.f32.mrb[0].mxu0
      %v2467 = vadd.f32 0.0, %v2466
      %v2468 = vpop.f32.mrb[0].mxu0
      %2469 = vmatprep.mubr.bf16.mxu0 0
      %2470 = vmatmul.mubr.bf16.gmra.mrb[0].mxu0 %v1674
      %v2471 = vpop.f32.mrb[0].mxu0
      %v2472 = vadd.f32 0.0, %v2471
      %v2473 = vpop.f32.mrb[0].mxu0
      %v2474 = vpop.f32.mrb[0].mxu0
      %v2475 = vadd.f32 0.0, %v2474
      %v2476 = vpop.f32.mrb[0].mxu0
      %2477 = vmatprep.mubr.bf16.mxu0 0
      %2478 = vmatmul.mubr.bf16.gmra.mrb[0].mxu0 %v2320
      %v2479 = vpop.f32.mrb[0].mxu0
      %v2480 = vadd.f32 0.0, %v2479
      %v2481 = vpop.f32.mrb[0].mxu0
      %v2482 = vpop.f32.mrb[0].mxu0
      %v2483 = vadd.f32 0.0, %v2482
      %v2484 = vpop.f32.mrb[0].mxu0
      %2485 = vdwg.mxu0
      %v2486 = vadd.f32 %v2280, %v2360
      %v2487 = vadd.f32 %v2281, %v2363
      %v2488 = vadd.f32 %v2282, %v2368
      %v2489 = vadd.f32 %v2283, %v2371
      %v2490 = vadd.f32 %v2284, %v2376
      %v2491 = vadd.f32 %v2285, %v2379
      %v2492 = vadd.f32 %v2286, %v2384
      %v2493 = vadd.f32 %v2287, %v2387
      %v2494 = vadd.f32 %v2288, %v2392
      %v2495 = vadd.f32 %v2289, %v2395
      %v2496 = vadd.f32 %v2290, %v2400
      %v2497 = vadd.f32 %v2291, %v2403
      %v2498 = vadd.f32 %v2292, %v2408
      %v2499 = vadd.f32 %v2293, %v2411
      %v2500 = vadd.f32 %v2294, %v2416
      %v2501 = vadd.f32 %v2295, %v2419
      %v2502 = vadd.f32 %v2296, %v2424
      %v2503 = vadd.f32 %v2297, %v2427
      %v2504 = vadd.f32 %v2298, %v2432
      %v2505 = vadd.f32 %v2299, %v2435
      %v2506 = vadd.f32 %v2300, %v2440
      %v2507 = vadd.f32 %v2301, %v2443
      %v2508 = vadd.f32 %v2302, %v2448
      %v2509 = vadd.f32 %v2303, %v2451
      %v2510 = vadd.f32 %v2304, %v2456
      %v2511 = vadd.f32 %v2305, %v2459
      %v2512 = vadd.f32 %v2306, %v2464
      %v2513 = vadd.f32 %v2307, %v2467
      %v2514 = vadd.f32 %v2308, %v2472
      %v2515 = vadd.f32 %v2309, %v2475
      %v2516 = vadd.f32 %v2310, %v2480
      %v2517 = vadd.f32 %v2311, %v2483
      %v2519 = vshrl.u32 %v294, 16
      %v2521 = vrot.slane %v2519, 4
      %v2522 = vshll.u32 %v294, 16
      %v2524 = vrot.slane %v2522, 5
      %v2525 = vor.u32 %v2521, %v2524
      %v2526 = vrot.slane %v2525, 4
      %v2528 = vshll.u32 %v295, 16
      %v2530 = vrot.slane %v2528, 5
      %v2531 = vsel %vm300, %v2526, %v2530
      %v2532 = vshrl.u32 %v295, 16
      %v2534 = vrot.slane %v2532, 4
      %v2535 = vor.u32 %v2534, %v2530
      %v2536 = vrot.slane %v2535, 4
      %v2538 = vshll.u32 %v296, 16
      %v2540 = vrot.slane %v2538, 5
      %v2541 = vsel %vm300, %v2536, %v2540
      %s2542 = scalar_lea.vmem %s1, 14
      %v2543 = vld [vmem:[%s2542] sm:$0x3]
      %v2544 = vunpack.c.l.b16 %v2531
      %v2545 = vunpack.c.l.b16 %v2541
      %v2546 = vpack.c.b16 %v2545, %v2544
      %v2548 = vsel %vm735, %v2546, 0
      %v2551 = vsel %vm784, %v2543, 0
      %2553 = vmatprep.subr.bf16.mxu0 0
      %2554 = vmatpush1.bf16.msra.mxu0 %v2551
      %2555 = vmatprep.subr.bf16.mxu0 0
      %2556 = vmatpush1.bf16.msra.mxu0 0
      %2557 = vmatprep.subr.bf16.mxu0 0
      %2558 = vmatpush1.bf16.msra.mxu0 0
      %2559 = vmatprep.subr.bf16.mxu0 0
      %2560 = vmatpush1.bf16.msra.mxu0 0
      %2561 = vmatprep.subr.bf16.mxu0 0
      %2562 = vmatpush1.bf16.msra.mxu0 0
      %2563 = vmatprep.subr.bf16.mxu0 0
      %2564 = vmatpush1.bf16.msra.mxu0 0
      %2565 = vmatprep.subr.bf16.mxu0 0
      %2566 = vmatpush1.bf16.msra.mxu0 0
      %2567 = vmatprep.subr.bf16.mxu0 0
      %2568 = vmatpush1.bf16.msra.mxu0 0
      %2569 = vmatprep.subr.bf16.mxu0 0
      %2570 = vmatpush1.bf16.msra.mxu0 0
      %2571 = vmatprep.subr.bf16.mxu0 0
      %2572 = vmatpush1.bf16.msra.mxu0 0
      %2573 = vmatprep.subr.bf16.mxu0 0
      %2574 = vmatpush1.bf16.msra.mxu0 0
      %2575 = vmatprep.subr.bf16.mxu0 0
      %2576 = vmatpush1.bf16.msra.mxu0 0
      %2577 = vmatprep.subr.bf16.mxu0 0
      %2578 = vmatpush1.bf16.msra.mxu0 0
      %2579 = vmatprep.subr.bf16.mxu0 0
      %2580 = vmatpush1.bf16.msra.mxu0 0
      %2581 = vmatprep.subr.bf16.mxu0 0
      %2582 = vmatpush1.bf16.msra.mxu0 0
      %2583 = vmatprep.subr.bf16.mxu0 0
      %2584 = vmatpush1.bf16.msra.mxu0 0
      %2585 = vmatprep.mubr.bf16.mxu0 0
      %2586 = vmatmul.mubr.bf16.gmra.mrb[0].mxu0 %v743
      %v2587 = vpop.f32.mrb[0].mxu0
      %v2588 = vadd.f32 0.0, %v2587
      %v2589 = vpop.f32.mrb[0].mxu0
      %v2590 = vpop.f32.mrb[0].mxu0
      %v2591 = vadd.f32 0.0, %v2590
      %v2592 = vpop.f32.mrb[0].mxu0
      %2593 = vmatprep.mubr.bf16.mxu0 0
      %2594 = vmatmul.mubr.bf16.gmra.mrb[0].mxu0 %v746
      %v2595 = vpop.f32.mrb[0].mxu0
      %v2596 = vadd.f32 0.0, %v2595
      %v2597 = vpop.f32.mrb[0].mxu0
      %v2598 = vpop.f32.mrb[0].mxu0
      %v2599 = vadd.f32 0.0, %v2598
      %v2600 = vpop.f32.mrb[0].mxu0
      %2601 = vmatprep.mubr.bf16.mxu0 0
      %2602 = vmatmul.mubr.bf16.gmra.mrb[0].mxu0 %v749
      %v2603 = vpop.f32.mrb[0].mxu0
      %v2604 = vadd.f32 0.0, %v2603
      %v2605 = vpop.f32.mrb[0].mxu0
      %v2606 = vpop.f32.mrb[0].mxu0
      %v2607 = vadd.f32 0.0, %v2606
      %v2608 = vpop.f32.mrb[0].mxu0
      %2609 = vmatprep.mubr.bf16.mxu0 0
      %2610 = vmatmul.mubr.bf16.gmra.mrb[0].mxu0 %v752
      %v2611 = vpop.f32.mrb[0].mxu0
      %v2612 = vadd.f32 0.0, %v2611
      %v2613 = vpop.f32.mrb[0].mxu0
      %v2614 = vpop.f32.mrb[0].mxu0
      %v2615 = vadd.f32 0.0, %v2614
      %v2616 = vpop.f32.mrb[0].mxu0
      %2617 = vmatprep.mubr.bf16.mxu0 0
      %2618 = vmatmul.mubr.bf16.gmra.mrb[0].mxu0 %v755
      %v2619 = vpop.f32.mrb[0].mxu0
      %v2620 = vadd.f32 0.0, %v2619
      %v2621 = vpop.f32.mrb[0].mxu0
      %v2622 = vpop.f32.mrb[0].mxu0
      %v2623 = vadd.f32 0.0, %v2622
      %v2624 = vpop.f32.mrb[0].mxu0
      %2625 = vmatprep.mubr.bf16.mxu0 0
      %2626 = vmatmul.mubr.bf16.gmra.mrb[0].mxu0 %v758
      %v2627 = vpop.f32.mrb[0].mxu0
      %v2628 = vadd.f32 0.0, %v2627
      %v2629 = vpop.f32.mrb[0].mxu0
      %v2630 = vpop.f32.mrb[0].mxu0
      %v2631 = vadd.f32 0.0, %v2630
      %v2632 = vpop.f32.mrb[0].mxu0
      %2633 = vmatprep.mubr.bf16.mxu0 0
      %2634 = vmatmul.mubr.bf16.gmra.mrb[0].mxu0 %v761
      %v2635 = vpop.f32.mrb[0].mxu0
      %v2636 = vadd.f32 0.0, %v2635
      %v2637 = vpop.f32.mrb[0].mxu0
      %v2638 = vpop.f32.mrb[0].mxu0
      %v2639 = vadd.f32 0.0, %v2638
      %v2640 = vpop.f32.mrb[0].mxu0
      %2641 = vmatprep.mubr.bf16.mxu0 0
      %2642 = vmatmul.mubr.bf16.gmra.mrb[0].mxu0 %v764
      %v2643 = vpop.f32.mrb[0].mxu0
      %v2644 = vadd.f32 0.0, %v2643
      %v2645 = vpop.f32.mrb[0].mxu0
      %v2646 = vpop.f32.mrb[0].mxu0
      %v2647 = vadd.f32 0.0, %v2646
      %v2648 = vpop.f32.mrb[0].mxu0
      %2649 = vmatprep.mubr.bf16.mxu0 0
      %2650 = vmatmul.mubr.bf16.gmra.mrb[0].mxu0 %v767
      %v2651 = vpop.f32.mrb[0].mxu0
      %v2652 = vadd.f32 0.0, %v2651
      %v2653 = vpop.f32.mrb[0].mxu0
      %v2654 = vpop.f32.mrb[0].mxu0
      %v2655 = vadd.f32 0.0, %v2654
      %v2656 = vpop.f32.mrb[0].mxu0
      %2657 = vmatprep.mubr.bf16.mxu0 0
      %2658 = vmatmul.mubr.bf16.gmra.mrb[0].mxu0 %v770
      %v2659 = vpop.f32.mrb[0].mxu0
      %v2660 = vadd.f32 0.0, %v2659
      %v2661 = vpop.f32.mrb[0].mxu0
      %v2662 = vpop.f32.mrb[0].mxu0
      %v2663 = vadd.f32 0.0, %v2662
      %v2664 = vpop.f32.mrb[0].mxu0
      %2665 = vmatprep.mubr.bf16.mxu0 0
      %2666 = vmatmul.mubr.bf16.gmra.mrb[0].mxu0 %v773
      %v2667 = vpop.f32.mrb[0].mxu0
      %v2668 = vadd.f32 0.0, %v2667
      %v2669 = vpop.f32.mrb[0].mxu0
      %v2670 = vpop.f32.mrb[0].mxu0
      %v2671 = vadd.f32 0.0, %v2670
      %v2672 = vpop.f32.mrb[0].mxu0
      %2673 = vmatprep.mubr.bf16.mxu0 0
      %2674 = vmatmul.mubr.bf16.gmra.mrb[0].mxu0 %v776
      %v2675 = vpop.f32.mrb[0].mxu0
      %v2676 = vadd.f32 0.0, %v2675
      %v2677 = vpop.f32.mrb[0].mxu0
      %v2678 = vpop.f32.mrb[0].mxu0
      %v2679 = vadd.f32 0.0, %v2678
      %v2680 = vpop.f32.mrb[0].mxu0
      %2681 = vmatprep.mubr.bf16.mxu0 0
      %2682 = vmatmul.mubr.bf16.gmra.mrb[0].mxu0 %v779
      %v2683 = vpop.f32.mrb[0].mxu0
      %v2684 = vadd.f32 0.0, %v2683
      %v2685 = vpop.f32.mrb[0].mxu0
      %v2686 = vpop.f32.mrb[0].mxu0
      %v2687 = vadd.f32 0.0, %v2686
      %v2688 = vpop.f32.mrb[0].mxu0
      %2689 = vmatprep.mubr.bf16.mxu0 0
      %2690 = vmatmul.mubr.bf16.gmra.mrb[0].mxu0 %v782
      %v2691 = vpop.f32.mrb[0].mxu0
      %v2692 = vadd.f32 0.0, %v2691
      %v2693 = vpop.f32.mrb[0].mxu0
      %v2694 = vpop.f32.mrb[0].mxu0
      %v2695 = vadd.f32 0.0, %v2694
      %v2696 = vpop.f32.mrb[0].mxu0
      %2697 = vmatprep.mubr.bf16.mxu0 0
      %2698 = vmatmul.mubr.bf16.gmra.mrb[0].mxu0 %v1902
      %v2699 = vpop.f32.mrb[0].mxu0
      %v2700 = vadd.f32 0.0, %v2699
      %v2701 = vpop.f32.mrb[0].mxu0
      %v2702 = vpop.f32.mrb[0].mxu0
      %v2703 = vadd.f32 0.0, %v2702
      %v2704 = vpop.f32.mrb[0].mxu0
      %2705 = vmatprep.mubr.bf16.mxu0 0
      %2706 = vmatmul.mubr.bf16.gmra.mrb[0].mxu0 %v2548
      %v2707 = vpop.f32.mrb[0].mxu0
      %v2708 = vadd.f32 0.0, %v2707
      %v2709 = vpop.f32.mrb[0].mxu0
      %v2710 = vpop.f32.mrb[0].mxu0
      %v2711 = vadd.f32 0.0, %v2710
      %v2712 = vpop.f32.mrb[0].mxu0
      %2713 = vdwg.mxu0
      %v2714 = vadd.f32 %v2486, %v2588
      %v2715 = vadd.f32 %v2487, %v2591
      %v2716 = vadd.f32 %v2488, %v2596
      %v2717 = vadd.f32 %v2489, %v2599
      %v2718 = vadd.f32 %v2490, %v2604
      %v2719 = vadd.f32 %v2491, %v2607
      %v2720 = vadd.f32 %v2492, %v2612
      %v2721 = vadd.f32 %v2493, %v2615
      %v2722 = vadd.f32 %v2494, %v2620
      %v2723 = vadd.f32 %v2495, %v2623
      %v2724 = vadd.f32 %v2496, %v2628
      %v2725 = vadd.f32 %v2497, %v2631
      %v2726 = vadd.f32 %v2498, %v2636
      %v2727 = vadd.f32 %v2499, %v2639
      %v2728 = vadd.f32 %v2500, %v2644
      %v2729 = vadd.f32 %v2501, %v2647
      %v2730 = vadd.f32 %v2502, %v2652
      %v2731 = vadd.f32 %v2503, %v2655
      %v2732 = vadd.f32 %v2504, %v2660
      %v2733 = vadd.f32 %v2505, %v2663
      %v2734 = vadd.f32 %v2506, %v2668
      %v2735 = vadd.f32 %v2507, %v2671
      %v2736 = vadd.f32 %v2508, %v2676
      %v2737 = vadd.f32 %v2509, %v2679
      %v2738 = vadd.f32 %v2510, %v2684
      %v2739 = vadd.f32 %v2511, %v2687
      %v2740 = vadd.f32 %v2512, %v2692
      %v2741 = vadd.f32 %v2513, %v2695
      %v2742 = vadd.f32 %v2514, %v2700
      %v2743 = vadd.f32 %v2515, %v2703
      %v2744 = vadd.f32 %v2516, %v2708
      %v2745 = vadd.f32 %v2517, %v2711
      %v2747 = vrot.slane %v294, 5
      %v2748 = vrot.slane %v2747, 4
      %v2749 = vrot.slane %v295, 5
      %v2750 = vsel %vm1259, %v2748, %v2749
      %v2751 = vrot.slane %v2749, 4
      %v2752 = vrot.slane %v296, 5
      %v2753 = vsel %vm1259, %v2751, %v2752
      %s2754 = scalar_lea.vmem %s1, 16
      %v2755 = vld [vmem:[%s2754] sm:$0x3]
      %v2756 = vunpack.c.l.b16 %v2750
      %v2757 = vunpack.c.l.b16 %v2753
      %v2758 = vpack.c.b16 %v2757, %v2756
      %v2760 = vsel %vm735, %v2758, 0
      %v2763 = vsel %vm784, %v2755, 0
      %2765 = vmatprep.subr.bf16.mxu0 0
      %2766 = vmatpush1.bf16.msra.mxu0 %v2763
      %2767 = vmatprep.subr.bf16.mxu0 0
      %2768 = vmatpush1.bf16.msra.mxu0 0
      %2769 = vmatprep.subr.bf16.mxu0 0
      %2770 = vmatpush1.bf16.msra.mxu0 0
      %2771 = vmatprep.subr.bf16.mxu0 0
      %2772 = vmatpush1.bf16.msra.mxu0 0
      %2773 = vmatprep.subr.bf16.mxu0 0
      %2774 = vmatpush1.bf16.msra.mxu0 0
      %2775 = vmatprep.subr.bf16.mxu0 0
      %2776 = vmatpush1.bf16.msra.mxu0 0
      %2777 = vmatprep.subr.bf16.mxu0 0
      %2778 = vmatpush1.bf16.msra.mxu0 0
      %2779 = vmatprep.subr.bf16.mxu0 0
      %2780 = vmatpush1.bf16.msra.mxu0 0
      %2781 = vmatprep.subr.bf16.mxu0 0
      %2782 = vmatpush1.bf16.msra.mxu0 0
      %2783 = vmatprep.subr.bf16.mxu0 0
      %2784 = vmatpush1.bf16.msra.mxu0 0
      %2785 = vmatprep.subr.bf16.mxu0 0
      %2786 = vmatpush1.bf16.msra.mxu0 0
      %2787 = vmatprep.subr.bf16.mxu0 0
      %2788 = vmatpush1.bf16.msra.mxu0 0
      %2789 = vmatprep.subr.bf16.mxu0 0
      %2790 = vmatpush1.bf16.msra.mxu0 0
      %2791 = vmatprep.subr.bf16.mxu0 0
      %2792 = vmatpush1.bf16.msra.mxu0 0
      %2793 = vmatprep.subr.bf16.mxu0 0
      %2794 = vmatpush1.bf16.msra.mxu0 0
      %2795 = vmatprep.subr.bf16.mxu0 0
      %2796 = vmatpush1.bf16.msra.mxu0 0
      %2797 = vmatprep.mubr.bf16.mxu0 0
      %2798 = vmatmul.mubr.bf16.gmra.mrb[0].mxu0 %v1429
      %v2799 = vpop.f32.mrb[0].mxu0
      %v2800 = vadd.f32 0.0, %v2799
      %v2801 = vpop.f32.mrb[0].mxu0
      %v2802 = vpop.f32.mrb[0].mxu0
      %v2803 = vadd.f32 0.0, %v2802
      %v2804 = vpop.f32.mrb[0].mxu0
      %2805 = vmatprep.mubr.bf16.mxu0 0
      %2806 = vmatmul.mubr.bf16.gmra.mrb[0].mxu0 %v1432
      %v2807 = vpop.f32.mrb[0].mxu0
      %v2808 = vadd.f32 0.0, %v2807
      %v2809 = vpop.f32.mrb[0].mxu0
      %v2810 = vpop.f32.mrb[0].mxu0
      %v2811 = vadd.f32 0.0, %v2810
      %v2812 = vpop.f32.mrb[0].mxu0
      %2813 = vmatprep.mubr.bf16.mxu0 0
      %2814 = vmatmul.mubr.bf16.gmra.mrb[0].mxu0 %v1435
      %v2815 = vpop.f32.mrb[0].mxu0
      %v2816 = vadd.f32 0.0, %v2815
      %v2817 = vpop.f32.mrb[0].mxu0
      %v2818 = vpop.f32.mrb[0].mxu0
      %v2819 = vadd.f32 0.0, %v2818
      %v2820 = vpop.f32.mrb[0].mxu0
      %2821 = vmatprep.mubr.bf16.mxu0 0
      %2822 = vmatmul.mubr.bf16.gmra.mrb[0].mxu0 %v1438
      %v2823 = vpop.f32.mrb[0].mxu0
      %v2824 = vadd.f32 0.0, %v2823
      %v2825 = vpop.f32.mrb[0].mxu0
      %v2826 = vpop.f32.mrb[0].mxu0
      %v2827 = vadd.f32 0.0, %v2826
      %v2828 = vpop.f32.mrb[0].mxu0
      %2829 = vmatprep.mubr.bf16.mxu0 0
      %2830 = vmatmul.mubr.bf16.gmra.mrb[0].mxu0 %v1441
      %v2831 = vpop.f32.mrb[0].mxu0
      %v2832 = vadd.f32 0.0, %v2831
      %v2833 = vpop.f32.mrb[0].mxu0
      %v2834 = vpop.f32.mrb[0].mxu0
      %v2835 = vadd.f32 0.0, %v2834
      %v2836 = vpop.f32.mrb[0].mxu0
      %2837 = vmatprep.mubr.bf16.mxu0 0
      %2838 = vmatmul.mubr.bf16.gmra.mrb[0].mxu0 %v1444
      %v2839 = vpop.f32.mrb[0].mxu0
      %v2840 = vadd.f32 0.0, %v2839
      %v2841 = vpop.f32.mrb[0].mxu0
      %v2842 = vpop.f32.mrb[0].mxu0
      %v2843 = vadd.f32 0.0, %v2842
      %v2844 = vpop.f32.mrb[0].mxu0
      %2845 = vmatprep.mubr.bf16.mxu0 0
      %2846 = vmatmul.mubr.bf16.gmra.mrb[0].mxu0 %v1447
      %v2847 = vpop.f32.mrb[0].mxu0
      %v2848 = vadd.f32 0.0, %v2847
      %v2849 = vpop.f32.mrb[0].mxu0
      %v2850 = vpop.f32.mrb[0].mxu0
      %v2851 = vadd.f32 0.0, %v2850
      %v2852 = vpop.f32.mrb[0].mxu0
      %2853 = vmatprep.mubr.bf16.mxu0 0
      %2854 = vmatmul.mubr.bf16.gmra.mrb[0].mxu0 %v1450
      %v2855 = vpop.f32.mrb[0].mxu0
      %v2856 = vadd.f32 0.0, %v2855
      %v2857 = vpop.f32.mrb[0].mxu0
      %v2858 = vpop.f32.mrb[0].mxu0
      %v2859 = vadd.f32 0.0, %v2858
      %v2860 = vpop.f32.mrb[0].mxu0
      %2861 = vmatprep.mubr.bf16.mxu0 0
      %2862 = vmatmul.mubr.bf16.gmra.mrb[0].mxu0 %v1453
      %v2863 = vpop.f32.mrb[0].mxu0
      %v2864 = vadd.f32 0.0, %v2863
      %v2865 = vpop.f32.mrb[0].mxu0
      %v2866 = vpop.f32.mrb[0].mxu0
      %v2867 = vadd.f32 0.0, %v2866
      %v2868 = vpop.f32.mrb[0].mxu0
      %2869 = vmatprep.mubr.bf16.mxu0 0
      %2870 = vmatmul.mubr.bf16.gmra.mrb[0].mxu0 %v1456
      %v2871 = vpop.f32.mrb[0].mxu0
      %v2872 = vadd.f32 0.0, %v2871
      %v2873 = vpop.f32.mrb[0].mxu0
      %v2874 = vpop.f32.mrb[0].mxu0
      %v2875 = vadd.f32 0.0, %v2874
      %v2876 = vpop.f32.mrb[0].mxu0
      %2877 = vmatprep.mubr.bf16.mxu0 0
      %2878 = vmatmul.mubr.bf16.gmra.mrb[0].mxu0 %v1459
      %v2879 = vpop.f32.mrb[0].mxu0
      %v2880 = vadd.f32 0.0, %v2879
      %v2881 = vpop.f32.mrb[0].mxu0
      %v2882 = vpop.f32.mrb[0].mxu0
      %v2883 = vadd.f32 0.0, %v2882
      %v2884 = vpop.f32.mrb[0].mxu0
      %2885 = vmatprep.mubr.bf16.mxu0 0
      %2886 = vmatmul.mubr.bf16.gmra.mrb[0].mxu0 %v1462
      %v2887 = vpop.f32.mrb[0].mxu0
      %v2888 = vadd.f32 0.0, %v2887
      %v2889 = vpop.f32.mrb[0].mxu0
      %v2890 = vpop.f32.mrb[0].mxu0
      %v2891 = vadd.f32 0.0, %v2890
      %v2892 = vpop.f32.mrb[0].mxu0
      %2893 = vmatprep.mubr.bf16.mxu0 0
      %2894 = vmatmul.mubr.bf16.gmra.mrb[0].mxu0 %v1465
      %v2895 = vpop.f32.mrb[0].mxu0
      %v2896 = vadd.f32 0.0, %v2895
      %v2897 = vpop.f32.mrb[0].mxu0
      %v2898 = vpop.f32.mrb[0].mxu0
      %v2899 = vadd.f32 0.0, %v2898
      %v2900 = vpop.f32.mrb[0].mxu0
      %2901 = vmatprep.mubr.bf16.mxu0 0
      %2902 = vmatmul.mubr.bf16.gmra.mrb[0].mxu0 %v1468
      %v2903 = vpop.f32.mrb[0].mxu0
      %v2904 = vadd.f32 0.0, %v2903
      %v2905 = vpop.f32.mrb[0].mxu0
      %v2906 = vpop.f32.mrb[0].mxu0
      %v2907 = vadd.f32 0.0, %v2906
      %v2908 = vpop.f32.mrb[0].mxu0
      %2909 = vmatprep.mubr.bf16.mxu0 0
      %2910 = vmatmul.mubr.bf16.gmra.mrb[0].mxu0 %v2114
      %v2911 = vpop.f32.mrb[0].mxu0
      %v2912 = vadd.f32 0.0, %v2911
      %v2913 = vpop.f32.mrb[0].mxu0
      %v2914 = vpop.f32.mrb[0].mxu0
      %v2915 = vadd.f32 0.0, %v2914
      %v2916 = vpop.f32.mrb[0].mxu0
      %2917 = vmatprep.mubr.bf16.mxu0 0
      %2918 = vmatmul.mubr.bf16.gmra.mrb[0].mxu0 %v2760
      %v2919 = vpop.f32.mrb[0].mxu0
      %v2920 = vadd.f32 0.0, %v2919
      %v2921 = vpop.f32.mrb[0].mxu0
      %v2922 = vpop.f32.mrb[0].mxu0
      %v2923 = vadd.f32 0.0, %v2922
      %v2924 = vpop.f32.mrb[0].mxu0
      %2925 = vdwg.mxu0
      %v2926 = vadd.f32 %v2714, %v2800
      %v2927 = vadd.f32 %v2715, %v2803
      %v2928 = vadd.f32 %v2716, %v2808
      %v2929 = vadd.f32 %v2717, %v2811
      %v2930 = vadd.f32 %v2718, %v2816
      %v2931 = vadd.f32 %v2719, %v2819
      %v2932 = vadd.f32 %v2720, %v2824
      %v2933 = vadd.f32 %v2721, %v2827
      %v2934 = vadd.f32 %v2722, %v2832
      %v2935 = vadd.f32 %v2723, %v2835
      %v2936 = vadd.f32 %v2724, %v2840
      %v2937 = vadd.f32 %v2725, %v2843
      %v2938 = vadd.f32 %v2726, %v2848
      %v2939 = vadd.f32 %v2727, %v2851
      %v2940 = vadd.f32 %v2728, %v2856
      %v2941 = vadd.f32 %v2729, %v2859
      %v2942 = vadd.f32 %v2730, %v2864
      %v2943 = vadd.f32 %v2731, %v2867
      %v2944 = vadd.f32 %v2732, %v2872
      %v2945 = vadd.f32 %v2733, %v2875
      %v2946 = vadd.f32 %v2734, %v2880
      %v2947 = vadd.f32 %v2735, %v2883
      %v2948 = vadd.f32 %v2736, %v2888
      %v2949 = vadd.f32 %v2737, %v2891
      %v2950 = vadd.f32 %v2738, %v2896
      %v2951 = vadd.f32 %v2739, %v2899
      %v2952 = vadd.f32 %v2740, %v2904
      %v2953 = vadd.f32 %v2741, %v2907
      %v2954 = vadd.f32 %v2742, %v2912
      %v2955 = vadd.f32 %v2743, %v2915
      %v2956 = vadd.f32 %v2744, %v2920
      %v2957 = vadd.f32 %v2745, %v2923
      %v2958 = vld [vmem:[%s2] sm:$0x1]
      %v2960 = vlaneseq
      %v2961 = vshrl.u32 %v2960, 7
      %v2962 = vsub.s32 0, %v2961
      %v2963 = vrot.slane %v2958, %v2962
      %v2965 = vadd.f32 %v2926, %v2963
      %v2966 = vadd.f32 %v2927, %v2963
      %v2967 = vadd.f32 %v2928, %v2963
      %v2968 = vadd.f32 %v2929, %v2963
      %v2969 = vadd.f32 %v2930, %v2963
      %v2970 = vadd.f32 %v2931, %v2963
      %v2971 = vadd.f32 %v2932, %v2963
      %v2972 = vadd.f32 %v2933, %v2963
      %v2973 = vadd.f32 %v2934, %v2963
      %v2974 = vadd.f32 %v2935, %v2963
      %v2975 = vadd.f32 %v2936, %v2963
      %v2976 = vadd.f32 %v2937, %v2963
      %v2977 = vadd.f32 %v2938, %v2963
      %v2978 = vadd.f32 %v2939, %v2963
      %v2979 = vadd.f32 %v2940, %v2963
      %v2980 = vadd.f32 %v2941, %v2963
      %v2981 = vadd.f32 %v2942, %v2963
      %v2982 = vadd.f32 %v2943, %v2963
      %v2983 = vadd.f32 %v2944, %v2963
      %v2984 = vadd.f32 %v2945, %v2963
      %v2985 = vadd.f32 %v2946, %v2963
      %v2986 = vadd.f32 %v2947, %v2963
      %v2987 = vadd.f32 %v2948, %v2963
      %v2988 = vadd.f32 %v2949, %v2963
      %v2989 = vadd.f32 %v2950, %v2963
      %v2990 = vadd.f32 %v2951, %v2963
      %v2991 = vadd.f32 %v2952, %v2963
      %v2992 = vadd.f32 %v2953, %v2963
      %v2993 = vadd.f32 %v2954, %v2963
      %v2994 = vadd.f32 %v2955, %v2963
      %v2995 = vadd.f32 %v2956, %v2963
      %v2996 = vadd.f32 %v2957, %v2963
      %v2997 = vsel %vm735, %v2965, 0.0
      %v2998 = vsel %vm735, %v2966, 0.0
      %v2999 = vadd.f32 %v2997, %v2998
      %v3000 = vsel %vm735, %v2967, 0.0
      %v3001 = vadd.f32 %v2999, %v3000
      %v3002 = vsel %vm735, %v2968, 0.0
      %v3003 = vadd.f32 %v3001, %v3002
      %v3004 = vsel %vm735, %v2969, 0.0
      %v3005 = vadd.f32 %v3003, %v3004
      %v3006 = vsel %vm735, %v2970, 0.0
      %v3007 = vadd.f32 %v3005, %v3006
      %v3008 = vsel %vm735, %v2971, 0.0
      %v3009 = vadd.f32 %v3007, %v3008
      %v3010 = vsel %vm735, %v2972, 0.0
      %v3011 = vadd.f32 %v3009, %v3010
      %v3012 = vsel %vm735, %v2973, 0.0
      %v3013 = vadd.f32 %v3011, %v3012
      %v3014 = vsel %vm735, %v2974, 0.0
      %v3015 = vadd.f32 %v3013, %v3014
      %v3016 = vsel %vm735, %v2975, 0.0
      %v3017 = vadd.f32 %v3015, %v3016
      %v3018 = vsel %vm735, %v2976, 0.0
      %v3019 = vadd.f32 %v3017, %v3018
      %v3020 = vsel %vm735, %v2977, 0.0
      %v3021 = vadd.f32 %v3019, %v3020
      %v3022 = vsel %vm735, %v2978, 0.0
      %v3023 = vadd.f32 %v3021, %v3022
      %v3024 = vsel %vm735, %v2979, 0.0
      %v3025 = vadd.f32 %v3023, %v3024
      %v3026 = vsel %vm735, %v2980, 0.0
      %v3027 = vadd.f32 %v3025, %v3026
      %v3028 = vsel %vm735, %v2981, 0.0
      %v3029 = vadd.f32 %v3027, %v3028
      %v3030 = vsel %vm735, %v2982, 0.0
      %v3031 = vadd.f32 %v3029, %v3030
      %v3032 = vsel %vm735, %v2983, 0.0
      %v3033 = vadd.f32 %v3031, %v3032
      %v3034 = vsel %vm735, %v2984, 0.0
      %v3035 = vadd.f32 %v3033, %v3034
      %v3036 = vsel %vm735, %v2985, 0.0
      %v3037 = vadd.f32 %v3035, %v3036
      %v3038 = vsel %vm735, %v2986, 0.0
      %v3039 = vadd.f32 %v3037, %v3038
      %v3040 = vsel %vm735, %v2987, 0.0
      %v3041 = vadd.f32 %v3039, %v3040
      %v3042 = vsel %vm735, %v2988, 0.0
      %v3043 = vadd.f32 %v3041, %v3042
      %v3044 = vsel %vm735, %v2989, 0.0
      %v3045 = vadd.f32 %v3043, %v3044
      %v3046 = vsel %vm735, %v2990, 0.0
      %v3047 = vadd.f32 %v3045, %v3046
      %v3048 = vsel %vm735, %v2991, 0.0
      %v3049 = vadd.f32 %v3047, %v3048
      %v3050 = vsel %vm735, %v2992, 0.0
      %v3051 = vadd.f32 %v3049, %v3050
      %v3052 = vsel %vm735, %v2993, 0.0
      %v3053 = vadd.f32 %v3051, %v3052
      %v3054 = vsel %vm735, %v2994, 0.0
      %v3055 = vadd.f32 %v3053, %v3054
      %v3056 = vsel %vm735, %v2995, 0.0
      %v3057 = vadd.f32 %v3055, %v3056
      %v3058 = vsel %vm735, %v2996, 0.0
      %v3059 = vadd.f32 %v3057, %v3058
      %v3060 = vrot.slane %v3059, 4
      %v3061 = vadd.f32 %v3059, %v3060
      %v3062 = vrot.slane %v3061, 2
      %v3063 = vadd.f32 %v3061, %v3062
      %v3064 = vrot.slane %v3063, 1
      %v3065 = vadd.f32 %v3063, %v3064
      %vm3066 = vcmask 24576
      %3067 = vst.msk [vmem:[%s238] sm:$0x1] %vm3066, %v3065
      %v3068 = vmul.f32 %v2965, %v2965
      %v3069 = vmul.f32 %v2966, %v2966
      %v3070 = vmul.f32 %v2967, %v2967
      %v3071 = vmul.f32 %v2968, %v2968
      %v3072 = vmul.f32 %v2969, %v2969
      %v3073 = vmul.f32 %v2970, %v2970
      %v3074 = vmul.f32 %v2971, %v2971
      %v3075 = vmul.f32 %v2972, %v2972
      %v3076 = vmul.f32 %v2973, %v2973
      %v3077 = vmul.f32 %v2974, %v2974
      %v3078 = vmul.f32 %v2975, %v2975
      %v3079 = vmul.f32 %v2976, %v2976
      %v3080 = vmul.f32 %v2977, %v2977
      %v3081 = vmul.f32 %v2978, %v2978
      %v3082 = vmul.f32 %v2979, %v2979
      %v3083 = vmul.f32 %v2980, %v2980
      %v3084 = vmul.f32 %v2981, %v2981
      %v3085 = vmul.f32 %v2982, %v2982
      %v3086 = vmul.f32 %v2983, %v2983
      %v3087 = vmul.f32 %v2984, %v2984
      %v3088 = vmul.f32 %v2985, %v2985
      %v3089 = vmul.f32 %v2986, %v2986
      %v3090 = vmul.f32 %v2987, %v2987
      %v3091 = vmul.f32 %v2988, %v2988
      %v3092 = vmul.f32 %v2989, %v2989
      %v3093 = vmul.f32 %v2990, %v2990
      %v3094 = vmul.f32 %v2991, %v2991
      %v3095 = vmul.f32 %v2992, %v2992
      %v3096 = vmul.f32 %v2993, %v2993
      %v3097 = vmul.f32 %v2994, %v2994
      %v3098 = vmul.f32 %v2995, %v2995
      %v3099 = vmul.f32 %v2996, %v2996
      %v3100 = vsel %vm735, %v3068, 0.0
      %v3101 = vsel %vm735, %v3069, 0.0
      %v3102 = vadd.f32 %v3100, %v3101
      %v3103 = vsel %vm735, %v3070, 0.0
      %v3104 = vadd.f32 %v3102, %v3103
      %v3105 = vsel %vm735, %v3071, 0.0
      %v3106 = vadd.f32 %v3104, %v3105
      %v3107 = vsel %vm735, %v3072, 0.0
      %v3108 = vadd.f32 %v3106, %v3107
      %v3109 = vsel %vm735, %v3073, 0.0
      %v3110 = vadd.f32 %v3108, %v3109
      %v3111 = vsel %vm735, %v3074, 0.0
      %v3112 = vadd.f32 %v3110, %v3111
      %v3113 = vsel %vm735, %v3075, 0.0
      %v3114 = vadd.f32 %v3112, %v3113
      %v3115 = vsel %vm735, %v3076, 0.0
      %v3116 = vadd.f32 %v3114, %v3115
      %v3117 = vsel %vm735, %v3077, 0.0
      %v3118 = vadd.f32 %v3116, %v3117
      %v3119 = vsel %vm735, %v3078, 0.0
      %v3120 = vadd.f32 %v3118, %v3119
      %v3121 = vsel %vm735, %v3079, 0.0
      %v3122 = vadd.f32 %v3120, %v3121
      %v3123 = vsel %vm735, %v3080, 0.0
      %v3124 = vadd.f32 %v3122, %v3123
      %v3125 = vsel %vm735, %v3081, 0.0
      %v3126 = vadd.f32 %v3124, %v3125
      %v3127 = vsel %vm735, %v3082, 0.0
      %v3128 = vadd.f32 %v3126, %v3127
      %v3129 = vsel %vm735, %v3083, 0.0
      %v3130 = vadd.f32 %v3128, %v3129
      %v3131 = vsel %vm735, %v3084, 0.0
      %v3132 = vadd.f32 %v3130, %v3131
      %v3133 = vsel %vm735, %v3085, 0.0
      %v3134 = vadd.f32 %v3132, %v3133
      %v3135 = vsel %vm735, %v3086, 0.0
      %v3136 = vadd.f32 %v3134, %v3135
      %v3137 = vsel %vm735, %v3087, 0.0
      %v3138 = vadd.f32 %v3136, %v3137
      %v3139 = vsel %vm735, %v3088, 0.0
      %v3140 = vadd.f32 %v3138, %v3139
      %v3141 = vsel %vm735, %v3089, 0.0
      %v3142 = vadd.f32 %v3140, %v3141
      %v3143 = vsel %vm735, %v3090, 0.0
      %v3144 = vadd.f32 %v3142, %v3143
      %v3145 = vsel %vm735, %v3091, 0.0
      %v3146 = vadd.f32 %v3144, %v3145
      %v3147 = vsel %vm735, %v3092, 0.0
      %v3148 = vadd.f32 %v3146, %v3147
      %v3149 = vsel %vm735, %v3093, 0.0
      %v3150 = vadd.f32 %v3148, %v3149
      %v3151 = vsel %vm735, %v3094, 0.0
      %v3152 = vadd.f32 %v3150, %v3151
      %v3153 = vsel %vm735, %v3095, 0.0
      %v3154 = vadd.f32 %v3152, %v3153
      %v3155 = vsel %vm735, %v3096, 0.0
      %v3156 = vadd.f32 %v3154, %v3155
      %v3157 = vsel %vm735, %v3097, 0.0
      %v3158 = vadd.f32 %v3156, %v3157
      %v3159 = vsel %vm735, %v3098, 0.0
      %v3160 = vadd.f32 %v3158, %v3159
      %v3161 = vsel %vm735, %v3099, 0.0
      %v3162 = vadd.f32 %v3160, %v3161
      %v3163 = vrot.slane %v3162, 4
      %v3164 = vadd.f32 %v3162, %v3163
      %v3165 = vrot.slane %v3164, 2
      %v3166 = vadd.f32 %v3164, %v3165
      %v3167 = vrot.slane %v3166, 1
      %v3168 = vadd.f32 %v3166, %v3167
      %3169 = vst.msk [vmem:[%s241] sm:$0x1] %vm3066, %v3168
      %vm3170 = vcmask 27648
      %3171 = vst.msk [vmem:[%s235] sm:$0xf] %vm3170, 0
      %3172 = vst.msk [vmem:[%s235 + $0x4] sm:$0xf] %vm3170, 0
      %3173 = vst.msk [vmem:[%s235 + $0x8] sm:$0x1] %vm3066, 0
      %3174 = vst.msk [vmem:[%s235 + $0xc] sm:$0xf] %vm3170, 0
      %3175 = vst.msk [vmem:[%s235 + $0x10] sm:$0xf] %vm3170, 0
      %3176 = vst.msk [vmem:[%s235 + $0x14] sm:$0x1] %vm3066, 0
      %3177 = vst.msk [vmem:[%s235 + $0x18] sm:$0xf] %vm3170, 0
      %3178 = vst.msk [vmem:[%s235 + $0x1c] sm:$0xf] %vm3170, 0
      %3179 = vst.msk [vmem:[%s235 + $0x20] sm:$0x1] %vm3066, 0
      %3180 = vst.msk [vmem:[%s235 + $0x24] sm:$0xf] %vm3170, 0
      %3181 = vst.msk [vmem:[%s235 + $0x28] sm:$0xf] %vm3170, 0
      %3182 = vst.msk [vmem:[%s235 + $0x2c] sm:$0x1] %vm3066, 0
      %3183 = vst.msk [vmem:[%s235 + $0x30] sm:$0xf] %vm3170, 0
      %3184 = vst.msk [vmem:[%s235 + $0x34] sm:$0xf] %vm3170, 0
      %3185 = vst.msk [vmem:[%s235 + $0x38] sm:$0x1] %vm3066, 0
      %3186 = vst.msk [vmem:[%s235 + $0x3c] sm:$0xf] %vm3170, 0
      %3187 = vst.msk [vmem:[%s235 + $0x40] sm:$0xf] %vm3170, 0
      %3188 = vst.msk [vmem:[%s235 + $0x44] sm:$0x1] %vm3066, 0
      %3189 = vst.msk [vmem:[%s235 + $0x48] sm:$0xf] %vm3170, 0
      %3190 = vst.msk [vmem:[%s235 + $0x4c] sm:$0xf] %vm3170, 0
      %3191 = vst.msk [vmem:[%s235 + $0x50] sm:$0x1] %vm3066, 0
      %3192 = vst.msk [vmem:[%s235 + $0x54] sm:$0xf] %vm3170, 0
      %3193 = vst.msk [vmem:[%s235 + $0x58] sm:$0xf] %vm3170, 0
      %3194 = vst.msk [vmem:[%s235 + $0x5c] sm:$0x1] %vm3066, 0
      %3195 = vst.msk [vmem:[%s235 + $0x60] sm:$0xf] %vm3170, 0
      %3196 = vst.msk [vmem:[%s235 + $0x64] sm:$0xf] %vm3170, 0
      %3197 = vst.msk [vmem:[%s235 + $0x68] sm:$0x1] %vm3066, 0
      %3198 = vst.msk [vmem:[%s235 + $0x6c] sm:$0xf] %vm3170, 0
      %3199 = vst.msk [vmem:[%s235 + $0x70] sm:$0xf] %vm3170, 0
      %3200 = vst.msk [vmem:[%s235 + $0x74] sm:$0x1] %vm3066, 0
      %3201 = vst.msk [vmem:[%s235 + $0x78] sm:$0xf] %vm3170, 0
      %3202 = vst.msk [vmem:[%s235 + $0x7c] sm:$0xf] %vm3170, 0
      %3203 = vst.msk [vmem:[%s235 + $0x80] sm:$0x1] %vm3066, 0
      %3204 = vst.msk [vmem:[%s235 + $0x84] sm:$0xf] %vm3170, 0
      %3205 = vst.msk [vmem:[%s235 + $0x88] sm:$0xf] %vm3170, 0
      %3206 = vst.msk [vmem:[%s235 + $0x8c] sm:$0x1] %vm3066, 0
      %3207 = vst.msk [vmem:[%s235 + $0x90] sm:$0xf] %vm3170, 0
      %3208 = vst.msk [vmem:[%s235 + $0x94] sm:$0xf] %vm3170, 0
      %3209 = vst.msk [vmem:[%s235 + $0x98] sm:$0x1] %vm3066, 0
      %3210 = vst.msk [vmem:[%s235 + $0x9c] sm:$0xf] %vm3170, 0
      %3211 = vst.msk [vmem:[%s235 + $0xa0] sm:$0xf] %vm3170, 0
      %3212 = vst.msk [vmem:[%s235 + $0xa4] sm:$0x1] %vm3066, 0
      %3213 = vst.msk [vmem:[%s235 + $0xa8] sm:$0xf] %vm3170, 0
      %3214 = vst.msk [vmem:[%s235 + $0xac] sm:$0xf] %vm3170, 0
      %3215 = vst.msk [vmem:[%s235 + $0xb0] sm:$0x1] %vm3066, 0
      %3216 = vst.msk [vmem:[%s235 + $0xb4] sm:$0xf] %vm3170, 0
      %3217 = vst.msk [vmem:[%s235 + $0xb8] sm:$0xf] %vm3170, 0
      %3218 = vst.msk [vmem:[%s235 + $0xbc] sm:$0x1] %vm3066, 0
      %3219 = vst.msk [vmem:[%s235 + $0xc0] sm:$0xf] %vm3170, 0
      %3220 = vst.msk [vmem:[%s235 + $0xc4] sm:$0xf] %vm3170, 0
      %3221 = vst.msk [vmem:[%s235 + $0xc8] sm:$0x1] %vm3066, 0
      %3222 = vst.msk [vmem:[%s235 + $0xcc] sm:$0xf] %vm3170, 0
      %3223 = vst.msk [vmem:[%s235 + $0xd0] sm:$0xf] %vm3170, 0
      %3224 = vst.msk [vmem:[%s235 + $0xd4] sm:$0x1] %vm3066, 0
      %v3225 = vpack.c.bf16 %v2966, %v2965
      %v3226 = vpack.c.bf16 %v2968, %v2967
      %v3227 = vpack.c.bf16 %v2970, %v2969
      %v3228 = vpack.c.bf16 %v2972, %v2971
      %v3229 = vpack.c.bf16 %v2974, %v2973
      %v3230 = vpack.c.bf16 %v2976, %v2975
      %v3231 = vpack.c.bf16 %v2978, %v2977
      %v3232 = vpack.c.bf16 %v2980, %v2979
      %v3233 = vpack.c.bf16 %v2982, %v2981
      %v3234 = vpack.c.bf16 %v2984, %v2983
      %v3235 = vpack.c.bf16 %v2986, %v2985
      %v3236 = vpack.c.bf16 %v2988, %v2987
      %v3237 = vpack.c.bf16 %v2990, %v2989
      %v3238 = vpack.c.bf16 %v2992, %v2991
      %v3239 = vpack.c.bf16 %v2994, %v2993
      %v3240 = vpack.c.bf16 %v2996, %v2995
      %v3257 = vunpack.c.l.b16 %v3225
      %v3258 = vunpack.c.h.b16 %v3225
      %v3259 = vunpack.c.l.b16 %v3226
      %v3260 = vunpack.c.h.b16 %v3226
      %v3261 = vunpack.c.l.b16 %v3227
      %v3262 = vunpack.c.h.b16 %v3227
      %v3263 = vunpack.c.l.b16 %v3228
      %v3264 = vunpack.c.h.b16 %v3228
      %v3265 = vunpack.c.l.b16 %v3229
      %v3266 = vunpack.c.h.b16 %v3229
      %v3267 = vunpack.c.l.b16 %v3230
      %v3268 = vunpack.c.h.b16 %v3230
      %v3269 = vunpack.c.l.b16 %v3231
      %v3270 = vunpack.c.h.b16 %v3231
      %v3271 = vunpack.c.l.b16 %v3232
      %v3272 = vunpack.c.h.b16 %v3232
      %v3273 = vunpack.c.l.b16 %v3233
      %v3274 = vunpack.c.h.b16 %v3233
      %v3275 = vunpack.c.l.b16 %v3234
      %v3276 = vunpack.c.h.b16 %v3234
      %v3277 = vunpack.c.l.b16 %v3235
      %v3278 = vunpack.c.h.b16 %v3235
      %v3279 = vunpack.c.l.b16 %v3236
      %v3280 = vunpack.c.h.b16 %v3236
      %v3281 = vunpack.c.l.b16 %v3237
      %v3282 = vunpack.c.h.b16 %v3237
      %v3283 = vunpack.c.l.b16 %v3238
      %v3284 = vunpack.c.h.b16 %v3238
      %v3285 = vunpack.c.l.b16 %v3239
      %v3286 = vunpack.c.h.b16 %v3239
      %v3287 = vunpack.c.l.b16 %v3240
      %v3288 = vunpack.c.h.b16 %v3240
      %v3289 = vpack.c.b16 %v3257, %v3257
      %v3290 = vpack.c.b16 %v3258, %v3258
      %v3291 = vpack.c.b16 %v3259, %v3259
      %v3292 = vpack.c.b16 %v3260, %v3260
      %v3293 = vpack.c.b16 %v3261, %v3261
      %v3294 = vpack.c.b16 %v3262, %v3262
      %v3295 = vpack.c.b16 %v3263, %v3263
      %v3296 = vpack.c.b16 %v3264, %v3264
      %v3297 = vpack.c.b16 %v3265, %v3265
      %v3298 = vpack.c.b16 %v3266, %v3266
      %v3299 = vpack.c.b16 %v3267, %v3267
      %v3300 = vpack.c.b16 %v3268, %v3268
      %v3301 = vpack.c.b16 %v3269, %v3269
      %v3302 = vpack.c.b16 %v3270, %v3270
      %v3303 = vpack.c.b16 %v3271, %v3271
      %v3304 = vpack.c.b16 %v3272, %v3272
      %v3305 = vpack.c.b16 %v3273, %v3273
      %v3306 = vpack.c.b16 %v3274, %v3274
      %v3307 = vpack.c.b16 %v3275, %v3275
      %v3308 = vpack.c.b16 %v3276, %v3276
      %v3309 = vpack.c.b16 %v3277, %v3277
      %v3310 = vpack.c.b16 %v3278, %v3278
      %v3311 = vpack.c.b16 %v3279, %v3279
      %v3312 = vpack.c.b16 %v3280, %v3280
      %v3313 = vpack.c.b16 %v3281, %v3281
      %v3314 = vpack.c.b16 %v3282, %v3282
      %v3315 = vpack.c.b16 %v3283, %v3283
      %v3316 = vpack.c.b16 %v3284, %v3284
      %v3317 = vpack.c.b16 %v3285, %v3285
      %v3318 = vpack.c.b16 %v3286, %v3286
      %v3319 = vpack.c.b16 %v3287, %v3287
      %v3320 = vpack.c.b16 %v3288, %v3288
      %vm3321 = vsmask.f32 256
      %vm3322 = vsmask.f32 4368
      %vm3323 = vmor %vm3321, %vm3322
      %v3325 = vshrl.u32 %v3289, 16
      %v3327 = vrot.slane %v3325, 7
      %v3328 = vshll.u32 %v3289, 16
      %v3330 = vor.u32 %v3327, %v3328
      %v3331 = vrot.slane %v3327, 4
      %v3333 = vshrl.u32 %v3290, 16
      %v3335 = vrot.slane %v3333, 7
      %v3336 = vshll.u32 %v3290, 16
      %v3338 = vor.u32 %v3335, %v3336
      %v3339 = vsel %vm3323, %v3331, %v3338
      %v3340 = vrot.slane %v3335, 4
      %v3342 = vshrl.u32 %v3291, 16
      %v3344 = vrot.slane %v3342, 7
      %v3345 = vshll.u32 %v3291, 16
      %v3347 = vor.u32 %v3344, %v3345
      %v3348 = vrot.slane %v3344, 4
      %v3350 = vshrl.u32 %v3292, 16
      %v3352 = vrot.slane %v3350, 7
      %v3353 = vshll.u32 %v3292, 16
      %v3355 = vor.u32 %v3352, %v3353
      %v3356 = vsel %vm3323, %v3348, %v3355
      %v3357 = vrot.slane %v3352, 4
      %v3359 = vshrl.u32 %v3293, 16
      %v3361 = vrot.slane %v3359, 7
      %v3362 = vshll.u32 %v3293, 16
      %v3364 = vor.u32 %v3361, %v3362
      %v3365 = vrot.slane %v3361, 4
      %v3367 = vshrl.u32 %v3294, 16
      %v3369 = vrot.slane %v3367, 7
      %v3370 = vshll.u32 %v3294, 16
      %v3372 = vor.u32 %v3369, %v3370
      %v3373 = vsel %vm3323, %v3365, %v3372
      %v3374 = vrot.slane %v3369, 4
      %v3376 = vshrl.u32 %v3295, 16
      %v3378 = vrot.slane %v3376, 7
      %v3379 = vshll.u32 %v3295, 16
      %v3381 = vor.u32 %v3378, %v3379
      %v3382 = vrot.slane %v3378, 4
      %v3384 = vshrl.u32 %v3296, 16
      %v3386 = vrot.slane %v3384, 7
      %v3387 = vshll.u32 %v3296, 16
      %v3389 = vor.u32 %v3386, %v3387
      %v3390 = vsel %vm3323, %v3382, %v3389
      %v3391 = vrot.slane %v3386, 4
      %v3393 = vshrl.u32 %v3297, 16
      %v3395 = vrot.slane %v3393, 7
      %v3396 = vshll.u32 %v3297, 16
      %v3398 = vor.u32 %v3395, %v3396
      %v3399 = vrot.slane %v3395, 4
      %v3401 = vshrl.u32 %v3298, 16
      %v3403 = vrot.slane %v3401, 7
      %v3404 = vshll.u32 %v3298, 16
      %v3406 = vor.u32 %v3403, %v3404
      %v3407 = vsel %vm3323, %v3399, %v3406
      %v3408 = vrot.slane %v3403, 4
      %v3410 = vshrl.u32 %v3299, 16
      %v3412 = vrot.slane %v3410, 7
      %v3413 = vshll.u32 %v3299, 16
      %v3415 = vor.u32 %v3412, %v3413
      %v3416 = vrot.slane %v3412, 4
      %v3418 = vshrl.u32 %v3300, 16
      %v3420 = vrot.slane %v3418, 7
      %v3421 = vshll.u32 %v3300, 16
      %v3423 = vor.u32 %v3420, %v3421
      %v3424 = vsel %vm3323, %v3416, %v3423
      %v3425 = vrot.slane %v3420, 4
      %v3427 = vshrl.u32 %v3301, 16
      %v3429 = vrot.slane %v3427, 7
      %v3430 = vshll.u32 %v3301, 16
      %v3432 = vor.u32 %v3429, %v3430
      %v3433 = vrot.slane %v3429, 4
      %v3435 = vshrl.u32 %v3302, 16
      %v3437 = vrot.slane %v3435, 7
      %v3438 = vshll.u32 %v3302, 16
      %v3440 = vor.u32 %v3437, %v3438
      %v3441 = vsel %vm3323, %v3433, %v3440
      %v3442 = vrot.slane %v3437, 4
      %v3444 = vshrl.u32 %v3303, 16
      %v3446 = vrot.slane %v3444, 7
      %v3447 = vshll.u32 %v3303, 16
      %v3449 = vor.u32 %v3446, %v3447
      %v3450 = vrot.slane %v3446, 4
      %v3452 = vshrl.u32 %v3304, 16
      %v3454 = vrot.slane %v3452, 7
      %v3455 = vshll.u32 %v3304, 16
      %v3457 = vor.u32 %v3454, %v3455
      %v3458 = vsel %vm3323, %v3450, %v3457
      %v3459 = vrot.slane %v3454, 4
      %v3461 = vshrl.u32 %v3305, 16
      %v3463 = vrot.slane %v3461, 7
      %v3464 = vshll.u32 %v3305, 16
      %v3466 = vor.u32 %v3463, %v3464
      %v3467 = vrot.slane %v3463, 4
      %v3469 = vshrl.u32 %v3306, 16
      %v3471 = vrot.slane %v3469, 7
      %v3472 = vshll.u32 %v3306, 16
      %v3474 = vor.u32 %v3471, %v3472
      %v3475 = vsel %vm3323, %v3467, %v3474
      %v3476 = vrot.slane %v3471, 4
      %v3478 = vshrl.u32 %v3307, 16
      %v3480 = vrot.slane %v3478, 7
      %v3481 = vshll.u32 %v3307, 16
      %v3483 = vor.u32 %v3480, %v3481
      %v3484 = vrot.slane %v3480, 4
      %v3486 = vshrl.u32 %v3308, 16
      %v3488 = vrot.slane %v3486, 7
      %v3489 = vshll.u32 %v3308, 16
      %v3491 = vor.u32 %v3488, %v3489
      %v3492 = vsel %vm3323, %v3484, %v3491
      %v3493 = vrot.slane %v3488, 4
      %v3495 = vshrl.u32 %v3309, 16
      %v3497 = vrot.slane %v3495, 7
      %v3498 = vshll.u32 %v3309, 16
      %v3500 = vor.u32 %v3497, %v3498
      %v3501 = vrot.slane %v3497, 4
      %v3503 = vshrl.u32 %v3310, 16
      %v3505 = vrot.slane %v3503, 7
      %v3506 = vshll.u32 %v3310, 16
      %v3508 = vor.u32 %v3505, %v3506
      %v3509 = vsel %vm3323, %v3501, %v3508
      %v3510 = vrot.slane %v3505, 4
      %v3512 = vshrl.u32 %v3311, 16
      %v3514 = vrot.slane %v3512, 7
      %v3515 = vshll.u32 %v3311, 16
      %v3517 = vor.u32 %v3514, %v3515
      %v3518 = vrot.slane %v3514, 4
      %v3520 = vshrl.u32 %v3312, 16
      %v3522 = vrot.slane %v3520, 7
      %v3523 = vshll.u32 %v3312, 16
      %v3525 = vor.u32 %v3522, %v3523
      %v3526 = vsel %vm3323, %v3518, %v3525
      %v3527 = vrot.slane %v3522, 4
      %v3529 = vshrl.u32 %v3313, 16
      %v3531 = vrot.slane %v3529, 7
      %v3532 = vshll.u32 %v3313, 16
      %v3534 = vor.u32 %v3531, %v3532
      %v3535 = vrot.slane %v3531, 4
      %v3537 = vshrl.u32 %v3314, 16
      %v3539 = vrot.slane %v3537, 7
      %v3540 = vshll.u32 %v3314, 16
      %v3542 = vor.u32 %v3539, %v3540
      %v3543 = vsel %vm3323, %v3535, %v3542
      %v3544 = vrot.slane %v3539, 4
      %v3546 = vshrl.u32 %v3315, 16
      %v3548 = vrot.slane %v3546, 7
      %v3549 = vshll.u32 %v3315, 16
      %v3551 = vor.u32 %v3548, %v3549
      %v3552 = vrot.slane %v3548, 4
      %v3554 = vshrl.u32 %v3316, 16
      %v3556 = vrot.slane %v3554, 7
      %v3557 = vshll.u32 %v3316, 16
      %v3559 = vor.u32 %v3556, %v3557
      %v3560 = vsel %vm3323, %v3552, %v3559
      %v3561 = vrot.slane %v3556, 4
      %v3563 = vshrl.u32 %v3317, 16
      %v3565 = vrot.slane %v3563, 7
      %v3566 = vshll.u32 %v3317, 16
      %v3568 = vor.u32 %v3565, %v3566
      %v3569 = vrot.slane %v3565, 4
      %v3571 = vshrl.u32 %v3318, 16
      %v3573 = vrot.slane %v3571, 7
      %v3574 = vshll.u32 %v3318, 16
      %v3576 = vor.u32 %v3573, %v3574
      %v3577 = vsel %vm3323, %v3569, %v3576
      %v3578 = vrot.slane %v3573, 4
      %v3580 = vshrl.u32 %v3319, 16
      %v3582 = vrot.slane %v3580, 7
      %v3583 = vshll.u32 %v3319, 16
      %v3585 = vor.u32 %v3582, %v3583
      %v3586 = vrot.slane %v3582, 4
      %v3588 = vshrl.u32 %v3320, 16
      %v3590 = vrot.slane %v3588, 7
      %v3591 = vshll.u32 %v3320, 16
      %v3593 = vor.u32 %v3590, %v3591
      %v3594 = vsel %vm3323, %v3586, %v3593
      %v3595 = vrot.slane %v3590, 4
      %s3644 = scalar_lea.vmem %s235, 12
      %vm3645 = vcmask 27648
      %vm3646 = vsmask.f32 7938
      %vm3647 = vmand %vm3645, %vm3646
      %v3648 = vld [vmem:[%s3644] sm:$0xf]
      %v3649 = vsel %vm3647, %v3330, %v3648
      %3650 = vst [vmem:[%s3644] sm:$0xf] %v3649
      %3651 = vst.msk [vmem:[%s3644 + $0x4] sm:$0xf] %vm3170, %v3339
      %vm3652 = vcmask 24576
      %vm3653 = vmand %vm3652, %vm3321
      %v3654 = vld [vmem:[%s3644 + $0x8] sm:$0x1]
      %v3655 = vsel %vm3653, %v3340, %v3654
      %3656 = vst [vmem:[%s3644 + $0x8] sm:$0x1] %v3655
      %v3657 = vld [vmem:[%s3644 + $0xc] sm:$0xf]
      %v3658 = vsel %vm3647, %v3347, %v3657
      %3659 = vst [vmem:[%s3644 + $0xc] sm:$0xf] %v3658
      %3660 = vst.msk [vmem:[%s3644 + $0x10] sm:$0xf] %vm3170, %v3356
      %v3661 = vld [vmem:[%s3644 + $0x14] sm:$0x1]
      %v3662 = vsel %vm3653, %v3357, %v3661
      %3663 = vst [vmem:[%s3644 + $0x14] sm:$0x1] %v3662
      %v3664 = vld [vmem:[%s3644 + $0x18] sm:$0xf]
      %v3665 = vsel %vm3647, %v3364, %v3664
      %3666 = vst [vmem:[%s3644 + $0x18] sm:$0xf] %v3665
      %3667 = vst.msk [vmem:[%s3644 + $0x1c] sm:$0xf] %vm3170, %v3373
      %v3668 = vld [vmem:[%s3644 + $0x20] sm:$0x1]
      %v3669 = vsel %vm3653, %v3374, %v3668
      %3670 = vst [vmem:[%s3644 + $0x20] sm:$0x1] %v3669
      %v3671 = vld [vmem:[%s3644 + $0x24] sm:$0xf]
      %v3672 = vsel %vm3647, %v3381, %v3671
      %3673 = vst [vmem:[%s3644 + $0x24] sm:$0xf] %v3672
      %3674 = vst.msk [vmem:[%s3644 + $0x28] sm:$0xf] %vm3170, %v3390
      %v3675 = vld [vmem:[%s3644 + $0x2c] sm:$0x1]
      %v3676 = vsel %vm3653, %v3391, %v3675
      %3677 = vst [vmem:[%s3644 + $0x2c] sm:$0x1] %v3676
      %v3678 = vld [vmem:[%s3644 + $0x30] sm:$0xf]
      %v3679 = vsel %vm3647, %v3398, %v3678
      %3680 = vst [vmem:[%s3644 + $0x30] sm:$0xf] %v3679
      %3681 = vst.msk [vmem:[%s3644 + $0x34] sm:$0xf] %vm3170, %v3407
      %v3682 = vld [vmem:[%s3644 + $0x38] sm:$0x1]
      %v3683 = vsel %vm3653, %v3408, %v3682
      %3684 = vst [vmem:[%s3644 + $0x38] sm:$0x1] %v3683
      %v3685 = vld [vmem:[%s3644 + $0x3c] sm:$0xf]
      %v3686 = vsel %vm3647, %v3415, %v3685
      %3687 = vst [vmem:[%s3644 + $0x3c] sm:$0xf] %v3686
      %3688 = vst.msk [vmem:[%s3644 + $0x40] sm:$0xf] %vm3170, %v3424
      %v3689 = vld [vmem:[%s3644 + $0x44] sm:$0x1]
      %v3690 = vsel %vm3653, %v3425, %v3689
      %3691 = vst [vmem:[%s3644 + $0x44] sm:$0x1] %v3690
      %v3692 = vld [vmem:[%s3644 + $0x48] sm:$0xf]
      %v3693 = vsel %vm3647, %v3432, %v3692
      %3694 = vst [vmem:[%s3644 + $0x48] sm:$0xf] %v3693
      %3695 = vst.msk [vmem:[%s3644 + $0x4c] sm:$0xf] %vm3170, %v3441
      %v3696 = vld [vmem:[%s3644 + $0x50] sm:$0x1]
      %v3697 = vsel %vm3653, %v3442, %v3696
      %3698 = vst [vmem:[%s3644 + $0x50] sm:$0x1] %v3697
      %v3699 = vld [vmem:[%s3644 + $0x54] sm:$0xf]
      %v3700 = vsel %vm3647, %v3449, %v3699
      %3701 = vst [vmem:[%s3644 + $0x54] sm:$0xf] %v3700
      %3702 = vst.msk [vmem:[%s3644 + $0x58] sm:$0xf] %vm3170, %v3458
      %v3703 = vld [vmem:[%s3644 + $0x5c] sm:$0x1]
      %v3704 = vsel %vm3653, %v3459, %v3703
      %3705 = vst [vmem:[%s3644 + $0x5c] sm:$0x1] %v3704
      %v3706 = vld [vmem:[%s3644 + $0x60] sm:$0xf]
      %v3707 = vsel %vm3647, %v3466, %v3706
      %3708 = vst [vmem:[%s3644 + $0x60] sm:$0xf] %v3707
      %3709 = vst.msk [vmem:[%s3644 + $0x64] sm:$0xf] %vm3170, %v3475
      %v3710 = vld [vmem:[%s3644 + $0x68] sm:$0x1]
      %v3711 = vsel %vm3653, %v3476, %v3710
      %3712 = vst [vmem:[%s3644 + $0x68] sm:$0x1] %v3711
      %v3713 = vld [vmem:[%s3644 + $0x6c] sm:$0xf]
      %v3714 = vsel %vm3647, %v3483, %v3713
      %3715 = vst [vmem:[%s3644 + $0x6c] sm:$0xf] %v3714
      %3716 = vst.msk [vmem:[%s3644 + $0x70] sm:$0xf] %vm3170, %v3492
      %v3717 = vld [vmem:[%s3644 + $0x74] sm:$0x1]
      %v3718 = vsel %vm3653, %v3493, %v3717
      %3719 = vst [vmem:[%s3644 + $0x74] sm:$0x1] %v3718
      %v3720 = vld [vmem:[%s3644 + $0x78] sm:$0xf]
      %v3721 = vsel %vm3647, %v3500, %v3720
      %3722 = vst [vmem:[%s3644 + $0x78] sm:$0xf] %v3721
      %3723 = vst.msk [vmem:[%s3644 + $0x7c] sm:$0xf] %vm3170, %v3509
      %v3724 = vld [vmem:[%s3644 + $0x80] sm:$0x1]
      %v3725 = vsel %vm3653, %v3510, %v3724
      %3726 = vst [vmem:[%s3644 + $0x80] sm:$0x1] %v3725
      %v3727 = vld [vmem:[%s3644 + $0x84] sm:$0xf]
      %v3728 = vsel %vm3647, %v3517, %v3727
      %3729 = vst [vmem:[%s3644 + $0x84] sm:$0xf] %v3728
      %3730 = vst.msk [vmem:[%s3644 + $0x88] sm:$0xf] %vm3170, %v3526
      %v3731 = vld [vmem:[%s3644 + $0x8c] sm:$0x1]
      %v3732 = vsel %vm3653, %v3527, %v3731
      %3733 = vst [vmem:[%s3644 + $0x8c] sm:$0x1] %v3732
      %v3734 = vld [vmem:[%s3644 + $0x90] sm:$0xf]
      %v3735 = vsel %vm3647, %v3534, %v3734
      %3736 = vst [vmem:[%s3644 + $0x90] sm:$0xf] %v3735
      %3737 = vst.msk [vmem:[%s3644 + $0x94] sm:$0xf] %vm3170, %v3543
      %v3738 = vld [vmem:[%s3644 + $0x98] sm:$0x1]
      %v3739 = vsel %vm3653, %v3544, %v3738
      %3740 = vst [vmem:[%s3644 + $0x98] sm:$0x1] %v3739
      %v3741 = vld [vmem:[%s3644 + $0x9c] sm:$0xf]
      %v3742 = vsel %vm3647, %v3551, %v3741
      %3743 = vst [vmem:[%s3644 + $0x9c] sm:$0xf] %v3742
      %3744 = vst.msk [vmem:[%s3644 + $0xa0] sm:$0xf] %vm3170, %v3560
      %v3745 = vld [vmem:[%s3644 + $0xa4] sm:$0x1]
      %v3746 = vsel %vm3653, %v3561, %v3745
      %3747 = vst [vmem:[%s3644 + $0xa4] sm:$0x1] %v3746
      %v3748 = vld [vmem:[%s3644 + $0xa8] sm:$0xf]
      %v3749 = vsel %vm3647, %v3568, %v3748
      %3750 = vst [vmem:[%s3644 + $0xa8] sm:$0xf] %v3749
      %3751 = vst.msk [vmem:[%s3644 + $0xac] sm:$0xf] %vm3170, %v3577
      %v3752 = vld [vmem:[%s3644 + $0xb0] sm:$0x1]
      %v3753 = vsel %vm3653, %v3578, %v3752
      %3754 = vst [vmem:[%s3644 + $0xb0] sm:$0x1] %v3753
      %v3755 = vld [vmem:[%s3644 + $0xb4] sm:$0xf]
      %v3756 = vsel %vm3647, %v3585, %v3755
      %3757 = vst [vmem:[%s3644 + $0xb4] sm:$0xf] %v3756
      %3758 = vst.msk [vmem:[%s3644 + $0xb8] sm:$0xf] %vm3170, %v3594
      %v3759 = vld [vmem:[%s3644 + $0xbc] sm:$0x1]
      %v3760 = vsel %vm3653, %v3595, %v3759
      %3761 = vst [vmem:[%s3644 + $0xbc] sm:$0x1] %v3760
      %p3762 = scmp.lt.s32.totalorder %s17, 1
      %s3763 = scalar_select %p3762, %s17, 1
      %s3764 = smul.addr %s3763, 54
      %s3765 = smul.addr %s3764, 4
      %s3766 = scalar_lea.vmem %s3, %s3765
      %p3767 = scmp.lt.s32.totalorder %s17, 1
      %s3768 = scalar_select %p3767, %s17, 1
      %s3769 = scalar_lea.vmem %s4, %s3768
      %p3770 = scmp.lt.s32.totalorder %s17, 1
      %s3771 = scalar_select %p3770, %s17, 1
      %s3772 = scalar_lea.vmem %s5, %s3771
      // Predicated region
      $region33: #{residual_forward.3} parent=31 // pred_check
        %p3773 = pneg %p103
      $region34: #{residual_forward.3} parent=31 // pred_check_branch
        %3775 = sbr.rel (%p3773) target = $region36
      $region35: #{residual_forward.3} parent=31 // pred_region
        _
      $region36: #{residual_forward.3} parent=31 // pred_fallthru
        _
      // Predicated region
      $region37: #{residual_forward.3} parent=31 // pred_check
        %p3776 = pneg %p129
      $region38: #{residual_forward.3} parent=31 // pred_check_branch
        %3778 = sbr.rel (%p3776) target = $region40
      $region39: #{residual_forward.3} parent=31 // pred_region
        _
      $region40: #{residual_forward.3} parent=31 // pred_fallthru
        _
      // Predicated region
      $region41: #{residual_forward.3} parent=31 // pred_check
        %p3779 = pneg %p155
      $region42: #{residual_forward.3} parent=31 // pred_check_branch
        %3781 = sbr.rel (%p3779) target = $region44
      $region43: #{residual_forward.3} parent=31 // pred_region
        _
      $region44: #{residual_forward.3} parent=31 // pred_fallthru
        _
    $region32: #{residual_forward.3} parent=5 // pred_fallthru
      _
    %p3782 = scmp.le.s32.totalorder 2, %s12
    // Predicated region
    $region45: #{residual_forward.3} parent=5 // pred_check
      %p3783 = pneg %p3782
    $region46: #{residual_forward.3} parent=5 // pred_check_branch
      %3785 = sbr.rel (%p3783) target = $region48
    $region47: #{residual_forward.3} parent=5 // pred_region
      %s3786 = ssub.s32 %s12, 2
      // Predicated region
      $region49: #{residual_forward.3} parent=47 // pred_check
        %p3787 = pneg %p109
      $region50: #{residual_forward.3} parent=47 // pred_check_branch
        %3789 = sbr.rel (%p3787) target = $region52
      $region51: #{residual_forward.3} parent=47 // pred_region
        %p3790 = scmp.lt.s32.totalorder %s18, 1
        %s3791 = scalar_select %p3790, %s18, 1
        %s3792 = smul.addr %s3791, 54
        %s3793 = smul.addr %s3792, 4
        %s3794 = scalar_lea.vmem %s3, %s3793
      $region52: #{residual_forward.3} parent=47 // pred_fallthru
        _
      // Predicated region
      $region53: #{residual_forward.3} parent=47 // pred_check
        %p3795 = pneg %p135
      $region54: #{residual_forward.3} parent=47 // pred_check_branch
        %3797 = sbr.rel (%p3795) target = $region56
      $region55: #{residual_forward.3} parent=47 // pred_region
        %p3798 = scmp.lt.s32.totalorder %s18, 1
        %s3799 = scalar_select %p3798, %s18, 1
        %s3800 = scalar_lea.vmem %s4, %s3799
      $region56: #{residual_forward.3} parent=47 // pred_fallthru
        _
      // Predicated region
      $region57: #{residual_forward.3} parent=47 // pred_check
        %p3801 = pneg %p161
      $region58: #{residual_forward.3} parent=47 // pred_check_branch
        %3803 = sbr.rel (%p3801) target = $region60
      $region59: #{residual_forward.3} parent=47 // pred_region
        %p3804 = scmp.lt.s32.totalorder %s18, 1
        %s3805 = scalar_select %p3804, %s18, 1
        %s3806 = scalar_lea.vmem %s5, %s3805
      $region60: #{residual_forward.3} parent=47 // pred_fallthru
        _
    $region48: #{residual_forward.3} parent=5 // pred_fallthru
      _
  $region6: #{residual_forward.3} parent=0 // loop_footer
    %s16 = sadd.s32 1, %s12
  $region7: #{residual_forward.3} parent=0 // loop_footer_branch
    %11 = sbr.rel target = $region3
  $region8: #{residual_forward.3} parent=0 // loop_exit
    _

</llo_original>
